<compile_context>
chip_gen: v6e
topology: v6e:2x2x1
jax: 0.10.0
libtpu: 0.0.40
codegen_flags: <defaults>
</compile_context>

<pallas_src>
import functools

import jax
import jax.numpy as jnp
from jax.experimental import pallas as pl
from jax.experimental.pallas import tpu as pltpu

LAYER_SIZES = [1024, 512, 512, 512, 256]
BN_EPS = 1e-5
# Encoder-weight K tile (rows per DMA chunk).  Use 2048-4096 for realistic
# flattened-image sizes; 512 here so the small demo exercises the
# double-buffered multi-chunk path.
ENC_TK = 512


def _enc_chunks(flat_in):
    out, k0 = [], 0
    while k0 < flat_in:
        sz = min(ENC_TK, flat_in - k0)
        out.append((k0, sz))
        k0 += sz
    return tuple(out)


# ------------------------------ fused kernel --------------------------------


def _fused_siamese_kernel(x_ref, pp_ref, enc_w_hbm, *rest,
                          has_recon, n_fc, batch, chunk_bounds):
    # ---- unpack refs ----
    fc_w_hbm = rest[:n_fc]                     # per-layer weights, bf16, HBM
    o_ref = rest[n_fc]                         # (B, LAYER_SIZES[-1]) f32
    enc_w_buf = rest[n_fc + 1]                 # (2, ENC_TK, F) bf16 VMEM
    w_bufs = rest[n_fc + 2: 2 * n_fc + 2]      # per-layer VMEM weight buffers
    sem = rest[2 * n_fc + 2]                   # DMA semaphores (2 + n_fc,)

    F = enc_w_buf.shape[-1]
    n_chunks = len(chunk_bounds)

    # ---- DMA descriptors; at most ~2 copies in flight at any time ----
    def enc_copy(ci):
        k0, sz = chunk_bounds[ci]
        slot = ci % 2
        if sz == enc_w_buf.shape[1]:
            dst = enc_w_buf.at[slot]
        else:
            dst = enc_w_buf.at[slot, pl.ds(0, sz)]
        return pltpu.make_async_copy(enc_w_hbm.at[pl.ds(k0, sz)], dst,
                                     sem.at[slot])

    def fc_copy(i):
        rows = w_bufs[i].shape[0]
        if rows == fc_w_hbm[i].shape[0]:
            src = fc_w_hbm[i]
        else:
            src = fc_w_hbm[i].at[pl.ds(0, rows)]   # no-recon: top half of FC1 only
        return pltpu.make_async_copy(src, w_bufs[i], sem.at[2 + i])

    # ---- encoder: K-tiled linear (+ bias, ReLU) ----
    enc_copy(0).start()
    M = x_ref.shape[0]
    z = jnp.zeros((M, F), jnp.float32)
    for ci in range(n_chunks):
        k0, sz = chunk_bounds[ci]
        slot = ci % 2
        enc_copy(ci).wait()
        # keep the next transfer on the wire while this chunk is multiplied
        if ci + 1 < n_chunks:
            enc_copy(ci + 1).start()
        else:
            fc_copy(0).start()
        if sz == enc_w_buf.shape[1]:
            w_chunk = enc_w_buf[slot]
        else:
            w_chunk = enc_w_buf[slot, pl.ds(0, sz), :]
        x_chunk = x_ref[:, pl.ds(k0, sz)]
        z += jnp.dot(x_chunk, w_chunk, preferred_element_type=jnp.float32)

    enc_b = pp_ref[0:1, :F]
    z = jnp.maximum(z + enc_b, 0.0)

    if has_recon:
        # rows [0:B] = target features, rows [B:2B] = recon features
        feats = jnp.concatenate([z[:batch], z[batch:]], axis=1)
    else:
        # recon features are all zero -> FC1 only needs its top F rows
        # (handled by the half-size w_bufs[0] / fc_copy(0) above).
        feats = z

    # ---- 5 x (Linear -> ReLU -> BatchNorm1d in train mode), fused ----
    inv_b = 1.0 / batch
    for i in range(n_fc):
        curr = w_bufs[i].shape[1]
        fc_copy(i).wait()
        if i + 1 < n_fc:
            fc_copy(i + 1).start()
        y = jnp.dot(feats.astype(jnp.bfloat16), w_bufs[i][...],
                    preferred_element_type=jnp.float32)
        b_i = pp_ref[1 + i:2 + i, :curr]
        g_i = pp_ref[1 + n_fc + i:2 + n_fc + i, :curr]
        bt_i = pp_ref[1 + 2 * n_fc + i:2 + 2 * n_fc + i, :curr]
        y = jnp.maximum(y + b_i, 0.0)                              # ReLU
        # single-pass batch stats (f32), folded scale/shift
        mean = jnp.sum(y, axis=0, keepdims=True) * inv_b
        var = jnp.sum(y * y, axis=0, keepdims=True) * inv_b - mean * mean
        scale = g_i * jax.lax.rsqrt(var + BN_EPS)
        shift = bt_i - mean * scale
        feats = y * scale + shift

    o_ref[...] = feats.astype(o_ref.dtype)


# ------------------------------ kernel wrapper -------------------------------


def _full_spec(shape):
    return pl.BlockSpec(shape, lambda i, _n=len(shape): (0,) * _n)


def siamese_fused_call(params, x_stacked, has_recon):
    n_fc = len(LAYER_SIZES)
    M, flat_in = x_stacked.shape
    B = M // 2 if has_recon else M
    enc_w = params["enc_w"]
    F = enc_w.shape[1]
    pp = params["packed"]
    fc_w = [params["fc"][i]["w"] for i in range(n_fc)]

    chunk_bounds = _enc_chunks(flat_in)
    enc_tk = max(sz for _, sz in chunk_bounds)

    # FC weight VMEM buffer shapes (layer 0 halved in the no-recon branch).
    fc_buf_dims = []
    prev = 2 * F
    for i, curr in enumerate(LAYER_SIZES):
        rows = F if (i == 0 and not has_recon) else prev
        fc_buf_dims.append((rows, curr))
        prev = curr

    inputs = [x_stacked, pp, enc_w] + fc_w

    in_specs = [
        _full_spec((M, flat_in)),              # stacked bf16 activations -> VMEM
        _full_spec(pp.shape),                  # packed enc_b/bias/gamma/beta block
        pl.BlockSpec(memory_space=pl.ANY),     # enc_w stays in HBM (manual DMA)
    ] + [pl.BlockSpec(memory_space=pl.ANY)] * n_fc   # fc weights (HBM)

    scratch_shapes = (
        [pltpu.VMEM((2, enc_tk, F), jnp.bfloat16)]
        + [pltpu.VMEM(d, jnp.bfloat16) for d in fc_buf_dims]
        + [pltpu.SemaphoreType.DMA((2 + n_fc,))]
    )

    # VMEM budget from actual buffer sizes (x2 for double-buffering of the
    # BlockSpec'd inputs/output), plus headroom; well under 64 MiB physical.
    vmem_bytes = (
        2 * (M * flat_in * 2 + pp.size * 4 + B * LAYER_SIZES[-1] * 4)
        + 2 * enc_tk * F * 2
        + sum(r * c * 2 for r, c in fc_buf_dims)
    )
    vmem_limit = min(int(vmem_bytes * 1.5) + (2 << 20), 48 << 20)

    kernel = functools.partial(
        _fused_siamese_kernel, has_recon=has_recon, n_fc=n_fc,
        batch=B, chunk_bounds=chunk_bounds)

    return pl.pallas_call(
        kernel,
        out_shape=jax.ShapeDtypeStruct((B, LAYER_SIZES[-1]), jnp.float32),
        grid=(1,),
        in_specs=in_specs,
        out_specs=_full_spec((B, LAYER_SIZES[-1])),
        scratch_shapes=scratch_shapes,
        compiler_params=pltpu.CompilerParams(
            dimension_semantics=("arbitrary",),
            vmem_limit_bytes=vmem_limit,
        ),
    )(*inputs)


# ----------------------------- parameter setup ------------------------------


def init_params(key, flat_in_dim, encoder_feature_size):
    """Deterministic synthetic parameters (shapes follow the module __init__)."""
    n_fc = len(LAYER_SIZES)
    F = encoder_feature_size
    P = max(max(LAYER_SIZES), F)

    key, kw = jax.random.split(key)
    enc_w = (jax.random.normal(kw, (flat_in_dim, F), jnp.float32) * 0.02
             ).astype(jnp.bfloat16)                        # streamed in bf16
    enc_b = jnp.zeros((F,), jnp.float32)

    # One packed (1 + 3*n_fc, P) f32 block: row 0 = enc bias, rows 1..n_fc =
    # fc biases, then gammas, then betas (each padded to P lanes).
    packed = jnp.zeros((1 + 3 * n_fc, P), jnp.float32)
    packed = packed.at[0, :F].set(enc_b)

    fc = []
    prev = 2 * F                                           # initial_layer_size
    for i, curr in enumerate(LAYER_SIZES):
        key, kw, kb = jax.random.split(key, 3)
        w = (jax.random.normal(kw, (prev, curr), jnp.float32) * 0.02
             ).astype(jnp.bfloat16)
        b = jax.random.normal(kb, (curr,), jnp.float32) * 0.02
        gamma = jnp.ones((curr,), jnp.float32)             # BatchNorm1d weight init
        beta = jnp.zeros((curr,), jnp.float32)             # BatchNorm1d bias init
        packed = packed.at[1 + i, :curr].set(b)
        packed = packed.at[1 + n_fc + i, :curr].set(gamma)
        packed = packed.at[1 + 2 * n_fc + i, :curr].set(beta)
        fc.append({"w": w})
        prev = curr

    return {"enc_w": enc_w, "fc": fc, "packed": packed}


# ------------------------------- forward pass -------------------------------


def siamese_encoder_forward(params, target_input, initial_recon_input=None):
    """Matches SiameseEncoder.forward: encode, concat, 5x (Linear->ReLU->BN)."""
    # TODO(synk): the real `encoder` is an externally injected nn.Module; only its
    # (features, _, _) output contract is reproduced here (flatten->linear->ReLU).
    B = target_input.shape[0]
    tgt_flat = target_input.reshape(B, -1).astype(jnp.bfloat16)
    if initial_recon_input is not None:
        rec_flat = initial_recon_input.reshape(B, -1).astype(jnp.bfloat16)
        x_stacked = jnp.concatenate([tgt_flat, rec_flat], axis=0)  # one encoder pass
        return siamese_fused_call(params, x_stacked, has_recon=True)
    return siamese_fused_call(params, tgt_flat, has_recon=False)


# ----------------------------------- main ------------------------------------

if __name__ == "__main__":
    # Small shapes consistent with the module: NCHW encoder input, and an
    # encoder_feature_size of 512 so 2 * feature_size matches the 1024-in
    # first FC layer.  B=8 fills one f32 sublane tile and gives valid
    # BatchNorm batch statistics.
    B, C, H, W = 8, 4, 16, 16
    ENCODER_FEATURE_SIZE = 512
    FLAT_IN = C * H * W

    key = jax.random.PRNGKey(0)
    key, k_tgt, k_rec, k_par = jax.random.split(key, 4)

    target_input = jax.random.normal(k_tgt, (B, C, H, W), jnp.float32)
    initial_recon_input = jax.random.normal(k_rec, (B, C, H, W), jnp.float32)

    params = init_params(k_par, FLAT_IN, ENCODER_FEATURE_SIZE)

    fwd = jax.jit(lambda t, r: siamese_encoder_forward(params, t, r))
    out = jax.block_until_ready(fwd(target_input, initial_recon_input))
    assert out.shape == (B, LAYER_SIZES[-1]), out.shape
    assert out.dtype == jnp.float32

    # Also exercise the `initial_recon_input is None` branch (zero recon
    # features; only the top half of FC1 is streamed/multiplied).
    fwd_none = jax.jit(lambda t: siamese_encoder_forward(params, t))
    out_none = jax.block_until_ready(fwd_none(target_input))
    assert out_none.shape == (B, LAYER_SIZES[-1])

    print("KERNEL_OK")
</pallas_src>

<mosaic_0001>
module attributes {stable_mosaic.version = 11 : i64} {
  func.func @_fused_siamese_kernel(%arg0: i32, %arg1: memref<16x1024xbf16, #tpu.memory_space<vmem>>, %arg2: memref<16x1024xf32, #tpu.memory_space<vmem>>, %arg3: memref<1024x512xbf16, #tpu.memory_space<any>>, %arg4: memref<1024x1024xbf16, #tpu.memory_space<any>>, %arg5: memref<1024x512xbf16, #tpu.memory_space<any>>, %arg6: memref<512x512xbf16, #tpu.memory_space<any>>, %arg7: memref<512x512xbf16, #tpu.memory_space<any>>, %arg8: memref<512x256xbf16, #tpu.memory_space<any>>, %arg9: memref<8x256xf32, #tpu.memory_space<vmem>>, %arg10: memref<2x512x512xbf16, #tpu.memory_space<vmem>>, %arg11: memref<1024x1024xbf16, #tpu.memory_space<vmem>>, %arg12: memref<1024x512xbf16, #tpu.memory_space<vmem>>, %arg13: memref<512x512xbf16, #tpu.memory_space<vmem>>, %arg14: memref<512x512xbf16, #tpu.memory_space<vmem>>, %arg15: memref<512x256xbf16, #tpu.memory_space<vmem>>, %arg16: memref<7x!tpu.dma_semaphore, #tpu.memory_space<semaphore_mem>>) attributes {dimension_semantics = [#tpu.dimension_semantics<arbitrary>], iteration_bounds = array<i64: 1>, scalar_prefetch = 0 : i64, scratch_operands = 7 : i64, tpu.core_type = #tpu.core_type<tc>, window_params = [{pipeline_mode = #tpu.pipeline_mode<synchronous>, transform_indices = @transform_0, window_bounds = array<i64: 16, 1024>}, {pipeline_mode = #tpu.pipeline_mode<synchronous>, transform_indices = @transform_1, window_bounds = array<i64: 16, 1024>}, {}, {}, {}, {}, {}, {}, {pipeline_mode = #tpu.pipeline_mode<synchronous>, transform_indices = @transform_8, window_bounds = array<i64: 8, 256>}]} {
    %c0_i32 = arith.constant 0 : i32
    %c0_i32_0 = arith.constant 0 : i32
    %c0_i32_1 = arith.constant 0 : i32
    %c0_i32_2 = arith.constant 0 : i32
    %0 = tpu.memref_slice %arg3[%c0_i32_1, %c0_i32_2] : memref<1024x512xbf16, #tpu.memory_space<any>> -> memref<512x512xbf16, #tpu.memory_space<any>>
    %c0_i32_3 = arith.constant 0 : i32
    %c0_i32_4 = arith.constant 0 : i32
    %1 = tpu.memref_slice %arg10[%c0_i32, %c0_i32_3, %c0_i32_4] : memref<2x512x512xbf16, #tpu.memory_space<vmem>> -> memref<1x512x512xbf16, #tpu.memory_space<vmem>>
    %2 = tpu.memref_squeeze %1 : memref<1x512x512xbf16, #tpu.memory_space<vmem>> -> memref<512x512xbf16, #tpu.memory_space<vmem>>
    %3 = tpu.memref_slice %arg16[%c0_i32_0] : memref<7x!tpu.dma_semaphore, #tpu.memory_space<semaphore_mem>> -> memref<1x!tpu.dma_semaphore, #tpu.memory_space<semaphore_mem>>
    %4 = tpu.memref_squeeze %3 : memref<1x!tpu.dma_semaphore, #tpu.memory_space<semaphore_mem>> -> memref<!tpu.dma_semaphore, #tpu.memory_space<semaphore_mem>>
    tpu.enqueue_dma source(%0 : memref<512x512xbf16, #tpu.memory_space<any>>) target(%2 : memref<512x512xbf16, #tpu.memory_space<vmem>>) target_semaphore(%4 : memref<!tpu.dma_semaphore, #tpu.memory_space<semaphore_mem>>)
    %cst = arith.constant 0.000000e+00 : f32
    %5 = vector.broadcast %cst : f32 to vector<16x512xf32>
    %c0_i32_5 = arith.constant 0 : i32
    %c0_i32_6 = arith.constant 0 : i32
    %c0_i32_7 = arith.constant 0 : i32
    %c0_i32_8 = arith.constant 0 : i32
    %6 = tpu.memref_slice %arg3[%c0_i32_7, %c0_i32_8] : memref<1024x512xbf16, #tpu.memory_space<any>> -> memref<512x512xbf16, #tpu.memory_space<any>>
    %c0_i32_9 = arith.constant 0 : i32
    %c0_i32_10 = arith.constant 0 : i32
    %7 = tpu.memref_slice %arg10[%c0_i32_5, %c0_i32_9, %c0_i32_10] : memref<2x512x512xbf16, #tpu.memory_space<vmem>> -> memref<1x512x512xbf16, #tpu.memory_space<vmem>>
    %8 = tpu.memref_squeeze %7 : memref<1x512x512xbf16, #tpu.memory_space<vmem>> -> memref<512x512xbf16, #tpu.memory_space<vmem>>
    %9 = tpu.memref_slice %arg16[%c0_i32_6] : memref<7x!tpu.dma_semaphore, #tpu.memory_space<semaphore_mem>> -> memref<1x!tpu.dma_semaphore, #tpu.memory_space<semaphore_mem>>
    %10 = tpu.memref_squeeze %9 : memref<1x!tpu.dma_semaphore, #tpu.memory_space<semaphore_mem>> -> memref<!tpu.dma_semaphore, #tpu.memory_space<semaphore_mem>>
    tpu.wait_dma2 semaphore(%10 : memref<!tpu.dma_semaphore, #tpu.memory_space<semaphore_mem>>) src(%6 : memref<512x512xbf16, #tpu.memory_space<any>>) dst(%8 : memref<512x512xbf16, #tpu.memory_space<vmem>>)
    %c1_i32 = arith.constant 1 : i32
    %c1_i32_11 = arith.constant 1 : i32
    %c512_i32 = arith.constant 512 : i32
    %c0_i32_12 = arith.constant 0 : i32
    %11 = tpu.memref_slice %arg3[%c512_i32, %c0_i32_12] : memref<1024x512xbf16, #tpu.memory_space<any>> -> memref<512x512xbf16, #tpu.memory_space<any>>
    %c0_i32_13 = arith.constant 0 : i32
    %c0_i32_14 = arith.constant 0 : i32
    %12 = tpu.memref_slice %arg10[%c1_i32, %c0_i32_13, %c0_i32_14] : memref<2x512x512xbf16, #tpu.memory_space<vmem>> -> memref<1x512x512xbf16, #tpu.memory_space<vmem>>
    %13 = tpu.memref_squeeze %12 : memref<1x512x512xbf16, #tpu.memory_space<vmem>> -> memref<512x512xbf16, #tpu.memory_space<vmem>>
    %14 = tpu.memref_slice %arg16[%c1_i32_11] : memref<7x!tpu.dma_semaphore, #tpu.memory_space<semaphore_mem>> -> memref<1x!tpu.dma_semaphore, #tpu.memory_space<semaphore_mem>>
    %15 = tpu.memref_squeeze %14 : memref<1x!tpu.dma_semaphore, #tpu.memory_space<semaphore_mem>> -> memref<!tpu.dma_semaphore, #tpu.memory_space<semaphore_mem>>
    tpu.enqueue_dma source(%11 : memref<512x512xbf16, #tpu.memory_space<any>>) target(%13 : memref<512x512xbf16, #tpu.memory_space<vmem>>) target_semaphore(%15 : memref<!tpu.dma_semaphore, #tpu.memory_space<semaphore_mem>>)
    %c0 = arith.constant 0 : index
    %c0_15 = arith.constant 0 : index
    %c0_16 = arith.constant 0 : index
    %16 = vector.load %arg10[%c0, %c0_15, %c0_16] : memref<2x512x512xbf16, #tpu.memory_space<vmem>>, vector<1x512x512xbf16>
    %17 = vector.shape_cast %16 : vector<1x512x512xbf16> to vector<512x512xbf16>
    %c0_17 = arith.constant 0 : index
    %c0_18 = arith.constant 0 : index
    %18 = vector.load %arg1[%c0_17, %c0_18] : memref<16x1024xbf16, #tpu.memory_space<vmem>>, vector<16x512xbf16>
    %cst_19 = arith.constant dense<0.000000e+00> : vector<16x512xf32>
    %19 = tpu.matmul %18, %17, %cst_19 {dimension_numbers = #tpu.dot_dimension_numbers<[1], [0], [0], [1], [0, 0, 1, 1], [], []>} : vector<16x512xbf16>, vector<512x512xbf16>, vector<16x512xf32> -> vector<16x512xf32>
    %20 = arith.addf %5, %19 : vector<16x512xf32>
    %c1_i32_20 = arith.constant 1 : i32
    %c1_i32_21 = arith.constant 1 : i32
    %c512_i32_22 = arith.constant 512 : i32
    %c0_i32_23 = arith.constant 0 : i32
    %21 = tpu.memref_slice %arg3[%c512_i32_22, %c0_i32_23] : memref<1024x512xbf16, #tpu.memory_space<any>> -> memref<512x512xbf16, #tpu.memory_space<any>>
    %c0_i32_24 = arith.constant 0 : i32
    %c0_i32_25 = arith.constant 0 : i32
    %22 = tpu.memref_slice %arg10[%c1_i32_20, %c0_i32_24, %c0_i32_25] : memref<2x512x512xbf16, #tpu.memory_space<vmem>> -> memref<1x512x512xbf16, #tpu.memory_space<vmem>>
    %23 = tpu.memref_squeeze %22 : memref<1x512x512xbf16, #tpu.memory_space<vmem>> -> memref<512x512xbf16, #tpu.memory_space<vmem>>
    %24 = tpu.memref_slice %arg16[%c1_i32_21] : memref<7x!tpu.dma_semaphore, #tpu.memory_space<semaphore_mem>> -> memref<1x!tpu.dma_semaphore, #tpu.memory_space<semaphore_mem>>
    %25 = tpu.memref_squeeze %24 : memref<1x!tpu.dma_semaphore, #tpu.memory_space<semaphore_mem>> -> memref<!tpu.dma_semaphore, #tpu.memory_space<semaphore_mem>>
    tpu.wait_dma2 semaphore(%25 : memref<!tpu.dma_semaphore, #tpu.memory_space<semaphore_mem>>) src(%21 : memref<512x512xbf16, #tpu.memory_space<any>>) dst(%23 : memref<512x512xbf16, #tpu.memory_space<vmem>>)
    %c2_i32 = arith.constant 2 : i32
    %26 = tpu.memref_slice %arg16[%c2_i32] : memref<7x!tpu.dma_semaphore, #tpu.memory_space<semaphore_mem>> -> memref<1x!tpu.dma_semaphore, #tpu.memory_space<semaphore_mem>>
    %27 = tpu.memref_squeeze %26 : memref<1x!tpu.dma_semaphore, #tpu.memory_space<semaphore_mem>> -> memref<!tpu.dma_semaphore, #tpu.memory_space<semaphore_mem>>
    tpu.enqueue_dma source(%arg4 : memref<1024x1024xbf16, #tpu.memory_space<any>>) target(%arg11 : memref<1024x1024xbf16, #tpu.memory_space<vmem>>) target_semaphore(%27 : memref<!tpu.dma_semaphore, #tpu.memory_space<semaphore_mem>>)
    %c1 = arith.constant 1 : index
    %c0_26 = arith.constant 0 : index
    %c0_27 = arith.constant 0 : index
    %28 = vector.load %arg10[%c1, %c0_26, %c0_27] : memref<2x512x512xbf16, #tpu.memory_space<vmem>>, vector<1x512x512xbf16>
    %29 = vector.shape_cast %28 : vector<1x512x512xbf16> to vector<512x512xbf16>
    %c0_28 = arith.constant 0 : index
    %c512 = arith.constant 512 : index
    %30 = vector.load %arg1[%c0_28, %c512] : memref<16x1024xbf16, #tpu.memory_space<vmem>>, vector<16x512xbf16>
    %cst_29 = arith.constant dense<0.000000e+00> : vector<16x512xf32>
    %31 = tpu.matmul %30, %29, %cst_29 {dimension_numbers = #tpu.dot_dimension_numbers<[1], [0], [0], [1], [0, 0, 1, 1], [], []>} : vector<16x512xbf16>, vector<512x512xbf16>, vector<16x512xf32> -> vector<16x512xf32>
    %32 = arith.addf %20, %31 : vector<16x512xf32>
    %c0_30 = arith.constant 0 : index
    %c0_31 = arith.constant 0 : index
    %33 = vector.load %arg2[%c0_30, %c0_31] : memref<16x1024xf32, #tpu.memory_space<vmem>>, vector<1x512xf32>
    %34 = vector.broadcast %33 : vector<1x512xf32> to vector<16x512xf32>
    %35 = arith.addf %32, %34 : vector<16x512xf32>
    %cst_32 = arith.constant 0.000000e+00 : f32
    %36 = vector.broadcast %cst_32 : f32 to vector<16x512xf32>
    %37 = arith.maximumf %35, %36 : vector<16x512xf32>
    %38 = vector.extract_strided_slice %37 {offsets = [0, 0], sizes = [8, 512], strides = [1, 1]} : vector<16x512xf32> to vector<8x512xf32>
    %39 = vector.extract_strided_slice %37 {offsets = [8, 0], sizes = [8, 512], strides = [1, 1]} : vector<16x512xf32> to vector<8x512xf32>
    %40 = tpu.concatenate %38, %39 in 1 : vector<8x512xf32>, vector<8x512xf32> -> vector<8x1024xf32>
    %c2_i32_33 = arith.constant 2 : i32
    %41 = tpu.memref_slice %arg16[%c2_i32_33] : memref<7x!tpu.dma_semaphore, #tpu.memory_space<semaphore_mem>> -> memref<1x!tpu.dma_semaphore, #tpu.memory_space<semaphore_mem>>
    %42 = tpu.memref_squeeze %41 : memref<1x!tpu.dma_semaphore, #tpu.memory_space<semaphore_mem>> -> memref<!tpu.dma_semaphore, #tpu.memory_space<semaphore_mem>>
    tpu.wait_dma2 semaphore(%42 : memref<!tpu.dma_semaphore, #tpu.memory_space<semaphore_mem>>) src(%arg4 : memref<1024x1024xbf16, #tpu.memory_space<any>>) dst(%arg11 : memref<1024x1024xbf16, #tpu.memory_space<vmem>>)
    %c3_i32 = arith.constant 3 : i32
    %43 = tpu.memref_slice %arg16[%c3_i32] : memref<7x!tpu.dma_semaphore, #tpu.memory_space<semaphore_mem>> -> memref<1x!tpu.dma_semaphore, #tpu.memory_space<semaphore_mem>>
    %44 = tpu.memref_squeeze %43 : memref<1x!tpu.dma_semaphore, #tpu.memory_space<semaphore_mem>> -> memref<!tpu.dma_semaphore, #tpu.memory_space<semaphore_mem>>
    tpu.enqueue_dma source(%arg5 : memref<1024x512xbf16, #tpu.memory_space<any>>) target(%arg12 : memref<1024x512xbf16, #tpu.memory_space<vmem>>) target_semaphore(%44 : memref<!tpu.dma_semaphore, #tpu.memory_space<semaphore_mem>>)
    %45 = arith.truncf %40 : vector<8x1024xf32> to vector<8x1024xbf16>
    %c0_34 = arith.constant 0 : index
    %c0_35 = arith.constant 0 : index
    %46 = vector.load %arg11[%c0_34, %c0_35] : memref<1024x1024xbf16, #tpu.memory_space<vmem>>, vector<1024x1024xbf16>
    %cst_36 = arith.constant dense<0.000000e+00> : vector<8x1024xf32>
    %47 = tpu.matmul %45, %46, %cst_36 {dimension_numbers = #tpu.dot_dimension_numbers<[1], [0], [0], [1], [0, 0, 1, 1], [], []>} : vector<8x1024xbf16>, vector<1024x1024xbf16>, vector<8x1024xf32> -> vector<8x1024xf32>
    %c1_37 = arith.constant 1 : index
    %c0_38 = arith.constant 0 : index
    %48 = vector.load %arg2[%c1_37, %c0_38] : memref<16x1024xf32, #tpu.memory_space<vmem>>, vector<1x1024xf32>
    %c6 = arith.constant 6 : index
    %c0_39 = arith.constant 0 : index
    %49 = vector.load %arg2[%c6, %c0_39] : memref<16x1024xf32, #tpu.memory_space<vmem>>, vector<1x1024xf32>
    %c11 = arith.constant 11 : index
    %c0_40 = arith.constant 0 : index
    %50 = vector.load %arg2[%c11, %c0_40] : memref<16x1024xf32, #tpu.memory_space<vmem>>, vector<1x1024xf32>
    %51 = vector.broadcast %48 : vector<1x1024xf32> to vector<8x1024xf32>
    %52 = arith.addf %47, %51 : vector<8x1024xf32>
    %cst_41 = arith.constant 0.000000e+00 : f32
    %53 = vector.broadcast %cst_41 : f32 to vector<8x1024xf32>
    %54 = arith.maximumf %52, %53 : vector<8x1024xf32>
    %cst_42 = arith.constant dense<0.000000e+00> : vector<1024xf32>
    %55 = vector.multi_reduction <add>, %54, %cst_42 [0] : vector<8x1024xf32> to vector<1024xf32>
    %56 = vector.shape_cast %55 : vector<1024xf32> to vector<1x1024xf32>
    %cst_43 = arith.constant 1.250000e-01 : f32
    %57 = vector.broadcast %cst_43 : f32 to vector<1x1024xf32>
    %58 = arith.mulf %56, %57 : vector<1x1024xf32>
    %59 = arith.mulf %54, %54 : vector<8x1024xf32>
    %cst_44 = arith.constant dense<0.000000e+00> : vector<1024xf32>
    %60 = vector.multi_reduction <add>, %59, %cst_44 [0] : vector<8x1024xf32> to vector<1024xf32>
    %61 = vector.shape_cast %60 : vector<1024xf32> to vector<1x1024xf32>
    %cst_45 = arith.constant 1.250000e-01 : f32
    %62 = vector.broadcast %cst_45 : f32 to vector<1x1024xf32>
    %63 = arith.mulf %61, %62 : vector<1x1024xf32>
    %64 = arith.mulf %58, %58 : vector<1x1024xf32>
    %65 = arith.subf %63, %64 : vector<1x1024xf32>
    %cst_46 = arith.constant 9.99999974E-6 : f32
    %66 = vector.broadcast %cst_46 : f32 to vector<1x1024xf32>
    %67 = arith.addf %65, %66 : vector<1x1024xf32>
    %68 = math.rsqrt %67 : vector<1x1024xf32>
    %69 = arith.mulf %49, %68 : vector<1x1024xf32>
    %70 = arith.mulf %58, %69 : vector<1x1024xf32>
    %71 = arith.subf %50, %70 : vector<1x1024xf32>
    %72 = vector.broadcast %69 : vector<1x1024xf32> to vector<8x1024xf32>
    %73 = arith.mulf %54, %72 : vector<8x1024xf32>
    %74 = vector.broadcast %71 : vector<1x1024xf32> to vector<8x1024xf32>
    %75 = arith.addf %73, %74 : vector<8x1024xf32>
    %c3_i32_47 = arith.constant 3 : i32
    %76 = tpu.memref_slice %arg16[%c3_i32_47] : memref<7x!tpu.dma_semaphore, #tpu.memory_space<semaphore_mem>> -> memref<1x!tpu.dma_semaphore, #tpu.memory_space<semaphore_mem>>
    %77 = tpu.memref_squeeze %76 : memref<1x!tpu.dma_semaphore, #tpu.memory_space<semaphore_mem>> -> memref<!tpu.dma_semaphore, #tpu.memory_space<semaphore_mem>>
    tpu.wait_dma2 semaphore(%77 : memref<!tpu.dma_semaphore, #tpu.memory_space<semaphore_mem>>) src(%arg5 : memref<1024x512xbf16, #tpu.memory_space<any>>) dst(%arg12 : memref<1024x512xbf16, #tpu.memory_space<vmem>>)
    %c4_i32 = arith.constant 4 : i32
    %78 = tpu.memref_slice %arg16[%c4_i32] : memref<7x!tpu.dma_semaphore, #tpu.memory_space<semaphore_mem>> -> memref<1x!tpu.dma_semaphore, #tpu.memory_space<semaphore_mem>>
    %79 = tpu.memref_squeeze %78 : memref<1x!tpu.dma_semaphore, #tpu.memory_space<semaphore_mem>> -> memref<!tpu.dma_semaphore, #tpu.memory_space<semaphore_mem>>
    tpu.enqueue_dma source(%arg6 : memref<512x512xbf16, #tpu.memory_space<any>>) target(%arg13 : memref<512x512xbf16, #tpu.memory_space<vmem>>) target_semaphore(%79 : memref<!tpu.dma_semaphore, #tpu.memory_space<semaphore_mem>>)
    %80 = arith.truncf %75 : vector<8x1024xf32> to vector<8x1024xbf16>
    %c0_48 = arith.constant 0 : index
    %c0_49 = arith.constant 0 : index
    %81 = vector.load %arg12[%c0_48, %c0_49] : memref<1024x512xbf16, #tpu.memory_space<vmem>>, vector<1024x512xbf16>
    %cst_50 = arith.constant dense<0.000000e+00> : vector<8x512xf32>
    %82 = tpu.matmul %80, %81, %cst_50 {dimension_numbers = #tpu.dot_dimension_numbers<[1], [0], [0], [1], [0, 0, 1, 1], [], []>} : vector<8x1024xbf16>, vector<1024x512xbf16>, vector<8x512xf32> -> vector<8x512xf32>
    %c2 = arith.constant 2 : index
    %c0_51 = arith.constant 0 : index
    %83 = vector.load %arg2[%c2, %c0_51] : memref<16x1024xf32, #tpu.memory_space<vmem>>, vector<1x512xf32>
    %c7 = arith.constant 7 : index
    %c0_52 = arith.constant 0 : index
    %84 = vector.load %arg2[%c7, %c0_52] : memref<16x1024xf32, #tpu.memory_space<vmem>>, vector<1x512xf32>
    %c12 = arith.constant 12 : index
    %c0_53 = arith.constant 0 : index
    %85 = vector.load %arg2[%c12, %c0_53] : memref<16x1024xf32, #tpu.memory_space<vmem>>, vector<1x512xf32>
    %86 = vector.broadcast %83 : vector<1x512xf32> to vector<8x512xf32>
    %87 = arith.addf %82, %86 : vector<8x512xf32>
    %cst_54 = arith.constant 0.000000e+00 : f32
    %88 = vector.broadcast %cst_54 : f32 to vector<8x512xf32>
    %89 = arith.maximumf %87, %88 : vector<8x512xf32>
    %cst_55 = arith.constant dense<0.000000e+00> : vector<512xf32>
    %90 = vector.multi_reduction <add>, %89, %cst_55 [0] : vector<8x512xf32> to vector<512xf32>
    %91 = vector.shape_cast %90 : vector<512xf32> to vector<1x512xf32>
    %cst_56 = arith.constant 1.250000e-01 : f32
    %92 = vector.broadcast %cst_56 : f32 to vector<1x512xf32>
    %93 = arith.mulf %91, %92 : vector<1x512xf32>
    %94 = arith.mulf %89, %89 : vector<8x512xf32>
    %cst_57 = arith.constant dense<0.000000e+00> : vector<512xf32>
    %95 = vector.multi_reduction <add>, %94, %cst_57 [0] : vector<8x512xf32> to vector<512xf32>
    %96 = vector.shape_cast %95 : vector<512xf32> to vector<1x512xf32>
    %cst_58 = arith.constant 1.250000e-01 : f32
    %97 = vector.broadcast %cst_58 : f32 to vector<1x512xf32>
    %98 = arith.mulf %96, %97 : vector<1x512xf32>
    %99 = arith.mulf %93, %93 : vector<1x512xf32>
    %100 = arith.subf %98, %99 : vector<1x512xf32>
    %cst_59 = arith.constant 9.99999974E-6 : f32
    %101 = vector.broadcast %cst_59 : f32 to vector<1x512xf32>
    %102 = arith.addf %100, %101 : vector<1x512xf32>
    %103 = math.rsqrt %102 : vector<1x512xf32>
    %104 = arith.mulf %84, %103 : vector<1x512xf32>
    %105 = arith.mulf %93, %104 : vector<1x512xf32>
    %106 = arith.subf %85, %105 : vector<1x512xf32>
    %107 = vector.broadcast %104 : vector<1x512xf32> to vector<8x512xf32>
    %108 = arith.mulf %89, %107 : vector<8x512xf32>
    %109 = vector.broadcast %106 : vector<1x512xf32> to vector<8x512xf32>
    %110 = arith.addf %108, %109 : vector<8x512xf32>
    %c4_i32_60 = arith.constant 4 : i32
    %111 = tpu.memref_slice %arg16[%c4_i32_60] : memref<7x!tpu.dma_semaphore, #tpu.memory_space<semaphore_mem>> -> memref<1x!tpu.dma_semaphore, #tpu.memory_space<semaphore_mem>>
    %112 = tpu.memref_squeeze %111 : memref<1x!tpu.dma_semaphore, #tpu.memory_space<semaphore_mem>> -> memref<!tpu.dma_semaphore, #tpu.memory_space<semaphore_mem>>
    tpu.wait_dma2 semaphore(%112 : memref<!tpu.dma_semaphore, #tpu.memory_space<semaphore_mem>>) src(%arg6 : memref<512x512xbf16, #tpu.memory_space<any>>) dst(%arg13 : memref<512x512xbf16, #tpu.memory_space<vmem>>)
    %c5_i32 = arith.constant 5 : i32
    %113 = tpu.memref_slice %arg16[%c5_i32] : memref<7x!tpu.dma_semaphore, #tpu.memory_space<semaphore_mem>> -> memref<1x!tpu.dma_semaphore, #tpu.memory_space<semaphore_mem>>
    %114 = tpu.memref_squeeze %113 : memref<1x!tpu.dma_semaphore, #tpu.memory_space<semaphore_mem>> -> memref<!tpu.dma_semaphore, #tpu.memory_space<semaphore_mem>>
    tpu.enqueue_dma source(%arg7 : memref<512x512xbf16, #tpu.memory_space<any>>) target(%arg14 : memref<512x512xbf16, #tpu.memory_space<vmem>>) target_semaphore(%114 : memref<!tpu.dma_semaphore, #tpu.memory_space<semaphore_mem>>)
    %115 = arith.truncf %110 : vector<8x512xf32> to vector<8x512xbf16>
    %c0_61 = arith.constant 0 : index
    %c0_62 = arith.constant 0 : index
    %116 = vector.load %arg13[%c0_61, %c0_62] : memref<512x512xbf16, #tpu.memory_space<vmem>>, vector<512x512xbf16>
    %cst_63 = arith.constant dense<0.000000e+00> : vector<8x512xf32>
    %117 = tpu.matmul %115, %116, %cst_63 {dimension_numbers = #tpu.dot_dimension_numbers<[1], [0], [0], [1], [0, 0, 1, 1], [], []>} : vector<8x512xbf16>, vector<512x512xbf16>, vector<8x512xf32> -> vector<8x512xf32>
    %c3 = arith.constant 3 : index
    %c0_64 = arith.constant 0 : index
    %118 = vector.load %arg2[%c3, %c0_64] : memref<16x1024xf32, #tpu.memory_space<vmem>>, vector<1x512xf32>
    %c8 = arith.constant 8 : index
    %c0_65 = arith.constant 0 : index
    %119 = vector.load %arg2[%c8, %c0_65] : memref<16x1024xf32, #tpu.memory_space<vmem>>, vector<1x512xf32>
    %c13 = arith.constant 13 : index
    %c0_66 = arith.constant 0 : index
    %120 = vector.load %arg2[%c13, %c0_66] : memref<16x1024xf32, #tpu.memory_space<vmem>>, vector<1x512xf32>
    %121 = vector.broadcast %118 : vector<1x512xf32> to vector<8x512xf32>
    %122 = arith.addf %117, %121 : vector<8x512xf32>
    %cst_67 = arith.constant 0.000000e+00 : f32
    %123 = vector.broadcast %cst_67 : f32 to vector<8x512xf32>
    %124 = arith.maximumf %122, %123 : vector<8x512xf32>
    %cst_68 = arith.constant dense<0.000000e+00> : vector<512xf32>
    %125 = vector.multi_reduction <add>, %124, %cst_68 [0] : vector<8x512xf32> to vector<512xf32>
    %126 = vector.shape_cast %125 : vector<512xf32> to vector<1x512xf32>
    %cst_69 = arith.constant 1.250000e-01 : f32
    %127 = vector.broadcast %cst_69 : f32 to vector<1x512xf32>
    %128 = arith.mulf %126, %127 : vector<1x512xf32>
    %129 = arith.mulf %124, %124 : vector<8x512xf32>
    %cst_70 = arith.constant dense<0.000000e+00> : vector<512xf32>
    %130 = vector.multi_reduction <add>, %129, %cst_70 [0] : vector<8x512xf32> to vector<512xf32>
    %131 = vector.shape_cast %130 : vector<512xf32> to vector<1x512xf32>
    %cst_71 = arith.constant 1.250000e-01 : f32
    %132 = vector.broadcast %cst_71 : f32 to vector<1x512xf32>
    %133 = arith.mulf %131, %132 : vector<1x512xf32>
    %134 = arith.mulf %128, %128 : vector<1x512xf32>
    %135 = arith.subf %133, %134 : vector<1x512xf32>
    %cst_72 = arith.constant 9.99999974E-6 : f32
    %136 = vector.broadcast %cst_72 : f32 to vector<1x512xf32>
    %137 = arith.addf %135, %136 : vector<1x512xf32>
    %138 = math.rsqrt %137 : vector<1x512xf32>
    %139 = arith.mulf %119, %138 : vector<1x512xf32>
    %140 = arith.mulf %128, %139 : vector<1x512xf32>
    %141 = arith.subf %120, %140 : vector<1x512xf32>
    %142 = vector.broadcast %139 : vector<1x512xf32> to vector<8x512xf32>
    %143 = arith.mulf %124, %142 : vector<8x512xf32>
    %144 = vector.broadcast %141 : vector<1x512xf32> to vector<8x512xf32>
    %145 = arith.addf %143, %144 : vector<8x512xf32>
    %c5_i32_73 = arith.constant 5 : i32
    %146 = tpu.memref_slice %arg16[%c5_i32_73] : memref<7x!tpu.dma_semaphore, #tpu.memory_space<semaphore_mem>> -> memref<1x!tpu.dma_semaphore, #tpu.memory_space<semaphore_mem>>
    %147 = tpu.memref_squeeze %146 : memref<1x!tpu.dma_semaphore, #tpu.memory_space<semaphore_mem>> -> memref<!tpu.dma_semaphore, #tpu.memory_space<semaphore_mem>>
    tpu.wait_dma2 semaphore(%147 : memref<!tpu.dma_semaphore, #tpu.memory_space<semaphore_mem>>) src(%arg7 : memref<512x512xbf16, #tpu.memory_space<any>>) dst(%arg14 : memref<512x512xbf16, #tpu.memory_space<vmem>>)
    %c6_i32 = arith.constant 6 : i32
    %148 = tpu.memref_slice %arg16[%c6_i32] : memref<7x!tpu.dma_semaphore, #tpu.memory_space<semaphore_mem>> -> memref<1x!tpu.dma_semaphore, #tpu.memory_space<semaphore_mem>>
    %149 = tpu.memref_squeeze %148 : memref<1x!tpu.dma_semaphore, #tpu.memory_space<semaphore_mem>> -> memref<!tpu.dma_semaphore, #tpu.memory_space<semaphore_mem>>
    tpu.enqueue_dma source(%arg8 : memref<512x256xbf16, #tpu.memory_space<any>>) target(%arg15 : memref<512x256xbf16, #tpu.memory_space<vmem>>) target_semaphore(%149 : memref<!tpu.dma_semaphore, #tpu.memory_space<semaphore_mem>>)
    %150 = arith.truncf %145 : vector<8x512xf32> to vector<8x512xbf16>
    %c0_74 = arith.constant 0 : index
    %c0_75 = arith.constant 0 : index
    %151 = vector.load %arg14[%c0_74, %c0_75] : memref<512x512xbf16, #tpu.memory_space<vmem>>, vector<512x512xbf16>
    %cst_76 = arith.constant dense<0.000000e+00> : vector<8x512xf32>
    %152 = tpu.matmul %150, %151, %cst_76 {dimension_numbers = #tpu.dot_dimension_numbers<[1], [0], [0], [1], [0, 0, 1, 1], [], []>} : vector<8x512xbf16>, vector<512x512xbf16>, vector<8x512xf32> -> vector<8x512xf32>
    %c4 = arith.constant 4 : index
    %c0_77 = arith.constant 0 : index
    %153 = vector.load %arg2[%c4, %c0_77] : memref<16x1024xf32, #tpu.memory_space<vmem>>, vector<1x512xf32>
    %c9 = arith.constant 9 : index
    %c0_78 = arith.constant 0 : index
    %154 = vector.load %arg2[%c9, %c0_78] : memref<16x1024xf32, #tpu.memory_space<vmem>>, vector<1x512xf32>
    %c14 = arith.constant 14 : index
    %c0_79 = arith.constant 0 : index
    %155 = vector.load %arg2[%c14, %c0_79] : memref<16x1024xf32, #tpu.memory_space<vmem>>, vector<1x512xf32>
    %156 = vector.broadcast %153 : vector<1x512xf32> to vector<8x512xf32>
    %157 = arith.addf %152, %156 : vector<8x512xf32>
    %cst_80 = arith.constant 0.000000e+00 : f32
    %158 = vector.broadcast %cst_80 : f32 to vector<8x512xf32>
    %159 = arith.maximumf %157, %158 : vector<8x512xf32>
    %cst_81 = arith.constant dense<0.000000e+00> : vector<512xf32>
    %160 = vector.multi_reduction <add>, %159, %cst_81 [0] : vector<8x512xf32> to vector<512xf32>
    %161 = vector.shape_cast %160 : vector<512xf32> to vector<1x512xf32>
    %cst_82 = arith.constant 1.250000e-01 : f32
    %162 = vector.broadcast %cst_82 : f32 to vector<1x512xf32>
    %163 = arith.mulf %161, %162 : vector<1x512xf32>
    %164 = arith.mulf %159, %159 : vector<8x512xf32>
    %cst_83 = arith.constant dense<0.000000e+00> : vector<512xf32>
    %165 = vector.multi_reduction <add>, %164, %cst_83 [0] : vector<8x512xf32> to vector<512xf32>
    %166 = vector.shape_cast %165 : vector<512xf32> to vector<1x512xf32>
    %cst_84 = arith.constant 1.250000e-01 : f32
    %167 = vector.broadcast %cst_84 : f32 to vector<1x512xf32>
    %168 = arith.mulf %166, %167 : vector<1x512xf32>
    %169 = arith.mulf %163, %163 : vector<1x512xf32>
    %170 = arith.subf %168, %169 : vector<1x512xf32>
    %cst_85 = arith.constant 9.99999974E-6 : f32
    %171 = vector.broadcast %cst_85 : f32 to vector<1x512xf32>
    %172 = arith.addf %170, %171 : vector<1x512xf32>
    %173 = math.rsqrt %172 : vector<1x512xf32>
    %174 = arith.mulf %154, %173 : vector<1x512xf32>
    %175 = arith.mulf %163, %174 : vector<1x512xf32>
    %176 = arith.subf %155, %175 : vector<1x512xf32>
    %177 = vector.broadcast %174 : vector<1x512xf32> to vector<8x512xf32>
    %178 = arith.mulf %159, %177 : vector<8x512xf32>
    %179 = vector.broadcast %176 : vector<1x512xf32> to vector<8x512xf32>
    %180 = arith.addf %178, %179 : vector<8x512xf32>
    %c6_i32_86 = arith.constant 6 : i32
    %181 = tpu.memref_slice %arg16[%c6_i32_86] : memref<7x!tpu.dma_semaphore, #tpu.memory_space<semaphore_mem>> -> memref<1x!tpu.dma_semaphore, #tpu.memory_space<semaphore_mem>>
    %182 = tpu.memref_squeeze %181 : memref<1x!tpu.dma_semaphore, #tpu.memory_space<semaphore_mem>> -> memref<!tpu.dma_semaphore, #tpu.memory_space<semaphore_mem>>
    tpu.wait_dma2 semaphore(%182 : memref<!tpu.dma_semaphore, #tpu.memory_space<semaphore_mem>>) src(%arg8 : memref<512x256xbf16, #tpu.memory_space<any>>) dst(%arg15 : memref<512x256xbf16, #tpu.memory_space<vmem>>)
    %183 = arith.truncf %180 : vector<8x512xf32> to vector<8x512xbf16>
    %c0_87 = arith.constant 0 : index
    %c0_88 = arith.constant 0 : index
    %184 = vector.load %arg15[%c0_87, %c0_88] : memref<512x256xbf16, #tpu.memory_space<vmem>>, vector<512x256xbf16>
    %cst_89 = arith.constant dense<0.000000e+00> : vector<8x256xf32>
    %185 = tpu.matmul %183, %184, %cst_89 {dimension_numbers = #tpu.dot_dimension_numbers<[1], [0], [0], [1], [0, 0, 1, 1], [], []>} : vector<8x512xbf16>, vector<512x256xbf16>, vector<8x256xf32> -> vector<8x256xf32>
    %c5 = arith.constant 5 : index
    %c0_90 = arith.constant 0 : index
    %186 = vector.load %arg2[%c5, %c0_90] : memref<16x1024xf32, #tpu.memory_space<vmem>>, vector<1x256xf32>
    %c10 = arith.constant 10 : index
    %c0_91 = arith.constant 0 : index
    %187 = vector.load %arg2[%c10, %c0_91] : memref<16x1024xf32, #tpu.memory_space<vmem>>, vector<1x256xf32>
    %c15 = arith.constant 15 : index
    %c0_92 = arith.constant 0 : index
    %188 = vector.load %arg2[%c15, %c0_92] : memref<16x1024xf32, #tpu.memory_space<vmem>>, vector<1x256xf32>
    %189 = vector.broadcast %186 : vector<1x256xf32> to vector<8x256xf32>
    %190 = arith.addf %185, %189 : vector<8x256xf32>
    %cst_93 = arith.constant 0.000000e+00 : f32
    %191 = vector.broadcast %cst_93 : f32 to vector<8x256xf32>
    %192 = arith.maximumf %190, %191 : vector<8x256xf32>
    %cst_94 = arith.constant dense<0.000000e+00> : vector<256xf32>
    %193 = vector.multi_reduction <add>, %192, %cst_94 [0] : vector<8x256xf32> to vector<256xf32>
    %194 = vector.shape_cast %193 : vector<256xf32> to vector<1x256xf32>
    %cst_95 = arith.constant 1.250000e-01 : f32
    %195 = vector.broadcast %cst_95 : f32 to vector<1x256xf32>
    %196 = arith.mulf %194, %195 : vector<1x256xf32>
    %197 = arith.mulf %192, %192 : vector<8x256xf32>
    %cst_96 = arith.constant dense<0.000000e+00> : vector<256xf32>
    %198 = vector.multi_reduction <add>, %197, %cst_96 [0] : vector<8x256xf32> to vector<256xf32>
    %199 = vector.shape_cast %198 : vector<256xf32> to vector<1x256xf32>
    %cst_97 = arith.constant 1.250000e-01 : f32
    %200 = vector.broadcast %cst_97 : f32 to vector<1x256xf32>
    %201 = arith.mulf %199, %200 : vector<1x256xf32>
    %202 = arith.mulf %196, %196 : vector<1x256xf32>
    %203 = arith.subf %201, %202 : vector<1x256xf32>
    %cst_98 = arith.constant 9.99999974E-6 : f32
    %204 = vector.broadcast %cst_98 : f32 to vector<1x256xf32>
    %205 = arith.addf %203, %204 : vector<1x256xf32>
    %206 = math.rsqrt %205 : vector<1x256xf32>
    %207 = arith.mulf %187, %206 : vector<1x256xf32>
    %208 = arith.mulf %196, %207 : vector<1x256xf32>
    %209 = arith.subf %188, %208 : vector<1x256xf32>
    %210 = vector.broadcast %207 : vector<1x256xf32> to vector<8x256xf32>
    %211 = arith.mulf %192, %210 : vector<8x256xf32>
    %212 = vector.broadcast %209 : vector<1x256xf32> to vector<8x256xf32>
    %213 = arith.addf %211, %212 : vector<8x256xf32>
    %c0_99 = arith.constant 0 : index
    %c0_100 = arith.constant 0 : index
    %214 = vector.load %arg9[%c0_99, %c0_100] : memref<8x256xf32, #tpu.memory_space<vmem>>, vector<8x256xf32>
    tpu.vector_store %arg9[%c0_99, %c0_100], %213 {strides = array<i32>} : memref<8x256xf32, #tpu.memory_space<vmem>>, vector<8x256xf32>,
    return
  }
  func.func @transform_0(%arg0: i32) -> (i32, i32) {
    %c0_i32 = arith.constant 0 : i32
    %c0_i32_0 = arith.constant 0 : i32
    %c0_i32_1 = arith.constant 0 : i32
    return %c0_i32, %c0_i32_0 : i32, i32
  }
  func.func @transform_1(%arg0: i32) -> (i32, i32) {
    %c0_i32 = arith.constant 0 : i32
    %c0_i32_0 = arith.constant 0 : i32
    %c0_i32_1 = arith.constant 0 : i32
    return %c0_i32, %c0_i32_0 : i32, i32
  }
  func.func @transform_8(%arg0: i32) -> (i32, i32) {
    %c0_i32 = arith.constant 0 : i32
    %c0_i32_0 = arith.constant 0 : i32
    %c0_i32_1 = arith.constant 0 : i32
    return %c0_i32, %c0_i32_0 : i32, i32
  }
}

</mosaic_0001>

<llo_original>
// kernel: _lambda_.1
$region0: #{_lambda_.1}
  #allocation0 [shape = 'u32[]', space=smem, size = 0x4, offset = 0x4, fixed_abs, tag = 'smem constant byte address 0x4 - core index']
  #allocation1 [shape = 'u32[144,128]{1,0:T(1,128)}', space=vmem, size = 0x12000, scoped, tag = 'internal scratch']
  #allocation2 [shape = 'bf16[2,512,512]{2,1,0:T(8,128)(2,1)}', space=vmem, size = 0x100000, scoped, tag = 'scratch operand']
  #allocation3 [shape = 'bf16[1024,1024]{1,0:T(8,128)(2,1)}', space=vmem, size = 0x200000, scoped, tag = 'scratch operand']
  #allocation4 [shape = 'bf16[1024,512]{1,0:T(8,128)(2,1)}', space=vmem, size = 0x100000, scoped, tag = 'scratch operand']
  #allocation5 [shape = 'bf16[512,512]{1,0:T(8,128)(2,1)}', space=vmem, size = 0x80000, scoped, tag = 'scratch operand']
  #allocation6 [shape = 'bf16[512,512]{1,0:T(8,128)(2,1)}', space=vmem, size = 0x80000, scoped, tag = 'scratch operand']
  #allocation7 [shape = 'bf16[512,256]{1,0:T(8,128)(2,1)}', space=vmem, size = 0x40000, scoped, tag = 'scratch operand']
  #allocation8 [shape = 's32[7]{0}', space=sflag, size = 0x1c, scoped, tag = 'scratch operand']
  #allocation13 [shape = 's32[]', space=sflag, size = 0x4, offset = 0, fixed_abs, tag = 'sflag constant byte address 0x0 - dummy sync flag']
  #allocation14 [shape = 's32[]', space=sflag, size = 0x4, offset = 0, fixed_abs, tag = 'sflag constant byte address 0x0 - dummy sync flag']
  #allocation15 [shape = 'u32[]', space=smem, size = 0x4, offset = 0x44, fixed_abs, tag = 'smem constant byte address 0x44 - assertion arg 0']
  #allocation16 [shape = 'u32[]', space=smem, size = 0x4, offset = 0x48, fixed_abs, tag = 'smem constant byte address 0x48 - assertion arg 1']
  #allocation17 [shape = 's32[]', space=sflag, size = 0x4, offset = 0, fixed_abs, tag = 'sflag constant byte address 0x0 - dummy sync flag']
  #allocation18 [shape = 's32[]', space=sflag, size = 0x4, offset = 0, fixed_abs, tag = 'sflag constant byte address 0x0 - dummy sync flag']
  #allocation19 [shape = 's32[]', space=sflag, size = 0x4, offset = 0, fixed_abs, tag = 'sflag constant byte address 0x0 - dummy sync flag']
  #allocation20 [shape = 's32[]', space=sflag, size = 0x4, offset = 0, fixed_abs, tag = 'sflag constant byte address 0x0 - dummy sync flag']
  #allocation21 [shape = 's32[]', space=sflag, size = 0x4, offset = 0, fixed_abs, tag = 'sflag constant byte address 0x0 - dummy sync flag']
  #allocation22 [shape = 's32[]', space=sflag, size = 0x4, offset = 0, fixed_abs, tag = 'sflag constant byte address 0x0 - dummy sync flag']
  #allocation23 [shape = 's32[]', space=sflag, size = 0x4, offset = 0, fixed_abs, tag = 'sflag constant byte address 0x0 - dummy sync flag']
  #allocation24 [shape = 's32[]', space=sflag, size = 0x4, offset = 0, fixed_abs, tag = 'sflag constant byte address 0x0 - dummy sync flag']
  #allocation25 [shape = 's32[]', space=sflag, size = 0x4, offset = 0, fixed_abs, tag = 'sflag constant byte address 0x0 - dummy sync flag']
  #allocation26 [shape = 's32[]', space=sflag, size = 0x4, offset = 0, fixed_abs, tag = 'sflag constant byte address 0x0 - dummy sync flag']
  #allocation27 [shape = 's32[]', space=sflag, size = 0x4, offset = 0, fixed_abs, tag = 'sflag constant byte address 0x0 - dummy sync flag']
  %s0 = inlined_call_operand.vmem [shape: bf16[16,1024], index: 0, kind: input, shape index: {}]
  %s1 = inlined_call_operand.hbm [shape: f32[16,1024], index: 1, kind: input, shape index: {}]
  %s2 = inlined_call_operand.hbm [shape: bf16[1024,512], index: 2, kind: input, shape index: {}]
  %s3 = inlined_call_operand.hbm [shape: bf16[1024,1024], index: 3, kind: input, shape index: {}]
  %s4 = inlined_call_operand.vmem [shape: bf16[1024,512], index: 4, kind: input, shape index: {}]
  %s5 = inlined_call_operand.hbm [shape: bf16[512,512], index: 5, kind: input, shape index: {}]
  %s6 = inlined_call_operand.hbm [shape: bf16[512,512], index: 6, kind: input, shape index: {}]
  %s7 = inlined_call_operand.hbm [shape: bf16[512,256], index: 7, kind: input, shape index: {}]
  %s8 = inlined_call_operand.hbm [shape: f32[8,256], index: 8, kind: output, shape index: {}]
  %s9 = sld [smem:[#allocation0]]
  $region80: #{_lambda_.1} parent=0
    _
  %s11 = ssub.s32 1, %s9
  %s12 = scalar_select 0, %s11, %s9
  $region1: #{_lambda_.1} parent=0
    #allocation9 [shape = 'u8[65536]{0}', space=vmem, size = 0x10000, scoped, tag = 'input window, operand 1, single buffered']
    #allocation10 [shape = 's32[1]{0}', space=sflag, size = 0x4, scoped, tag = 'scoped memory for _lambda_.1']
    #allocation11 [shape = 's32[1]{0}', space=sflag, size = 0x4, scoped, tag = 'scoped memory for _lambda_.1']
    #allocation12 [shape = 'u8[8192]{0}', space=vmem, size = 0x2000, scoped, tag = 'output window, operand 0, single buffered']
    %13 = vsyncpa [#allocation10], 0
    %14 = vsyncpa [#allocation11], 0
    // Predicated region
    $region2: #{_lambda_.1} parent=1 // pred_check
      _
    $region3: #{_lambda_.1} parent=1 // pred_check_branch
      %16 = sbr.rel (0) target = $region5
    $region4: #{_lambda_.1} parent=1 // pred_region
      _
    $region5: #{_lambda_.1} parent=1 // pred_fallthru
      _
    // Predicated region
    $region6: #{_lambda_.1} parent=1 // pred_check
      _
    $region7: #{_lambda_.1} parent=1 // pred_check_branch
      %18 = sbr.rel (0) target = $region9
    $region8: #{_lambda_.1} parent=1 // pred_region
      %s20 = ssub.s32 2048, 2048
      %21 = vsyncadd [#allocation10], %s20
      %s22 = sshll.u32 [#allocation9], 4
      %s23 = int_to_ptr.vmem [resolvable:$true] %s22
      %28 = dma.hbm_to_vmem [thread:$0]  %s1, 2048, %s23, [#allocation10], 1024, 1024, 64
    $region9: #{_lambda_.1} parent=1 // pred_fallthru
      _
    // Predicated region
    $region10: #{_lambda_.1} parent=1 // pred_check
      _
    $region11: #{_lambda_.1} parent=1 // pred_check_branch
      %30 = sbr.rel (0) target = $region13
    $region12: #{_lambda_.1} parent=1 // pred_region
      %31 = dma.done [#allocation10], 2048
    $region13: #{_lambda_.1} parent=1 // pred_fallthru
      _
    // Predicated region
    $region14: #{_lambda_.1} parent=1 // pred_check
      _
    $region15: #{_lambda_.1} parent=1 // pred_check_branch
      %33 = sbr.rel target = $region17
    $region16: #{_lambda_.1} parent=1 // pred_region
      %34 = sst [smem:[#allocation15]] [#allocation14]
      %35 = sst [smem:[#allocation16]] [#allocation13]
    $region17: #{_lambda_.1} parent=1 // pred_fallthru
      _
    %37 = shalt.err (0)
    %s39 = sshll.u32 [#allocation2], 4
    %s40 = int_to_ptr.vmem [resolvable:$true] %s39
    %42 = dma.hbm_to_vmem [thread:$0]  %s2, 16384, %s40, [#allocation8]
    %s43 = smul.u32 4, 64
    %s44 = smul.u32 %s43, 4
    %s45 = sshll.u32 %s44, 4
    %46 = dma.done [#allocation8], %s45
    %s47 = scalar_lea.hbm %s2, 16384
    %s48 = scalar_lea.vmem [#allocation2], 1024
    %s49 = scalar_lea.sflag [#allocation8], 1
    // Predicated region
    $region18: #{_lambda_.1} parent=1 // pred_check
      _
    $region19: #{_lambda_.1} parent=1 // pred_check_branch
      %51 = sbr.rel target = $region21
    $region20: #{_lambda_.1} parent=1 // pred_region
      %52 = sst [smem:[#allocation15]] [#allocation18]
      %53 = sst [smem:[#allocation16]] [#allocation17]
    $region21: #{_lambda_.1} parent=1 // pred_fallthru
      _
    %55 = shalt.err (0)
    %s57 = sshll.u32 %s48, 4
    %s58 = int_to_ptr.vmem [resolvable:$true] %s57
    %60 = dma.hbm_to_vmem [thread:$0]  %s47, 16384, %s58, %s49
    %v61 = vld [vmem:[#allocation2] sm:$0xff]
    %v62 = vld [vmem:[#allocation2 + $0x8] sm:$0xff]
    %v63 = vld [vmem:[#allocation2 + $0x10] sm:$0xff]
    %v64 = vld [vmem:[#allocation2 + $0x18] sm:$0xff]
    %v65 = vld [vmem:[#allocation2 + $0x20] sm:$0xff]
    %v66 = vld [vmem:[#allocation2 + $0x28] sm:$0xff]
    %v67 = vld [vmem:[#allocation2 + $0x30] sm:$0xff]
    %v68 = vld [vmem:[#allocation2 + $0x38] sm:$0xff]
    %v69 = vld [vmem:[#allocation2 + $0x40] sm:$0xff]
    %v70 = vld [vmem:[#allocation2 + $0x48] sm:$0xff]
    %v71 = vld [vmem:[#allocation2 + $0x50] sm:$0xff]
    %v72 = vld [vmem:[#allocation2 + $0x58] sm:$0xff]
    %v73 = vld [vmem:[#allocation2 + $0x60] sm:$0xff]
    %v74 = vld [vmem:[#allocation2 + $0x68] sm:$0xff]
    %v75 = vld [vmem:[#allocation2 + $0x70] sm:$0xff]
    %v76 = vld [vmem:[#allocation2 + $0x78] sm:$0xff]
    %v77 = vld [vmem:[#allocation2 + $0x80] sm:$0xff]
    %v78 = vld [vmem:[#allocation2 + $0x88] sm:$0xff]
    %v79 = vld [vmem:[#allocation2 + $0x90] sm:$0xff]
    %v80 = vld [vmem:[#allocation2 + $0x98] sm:$0xff]
    %v81 = vld [vmem:[#allocation2 + $0xa0] sm:$0xff]
    %v82 = vld [vmem:[#allocation2 + $0xa8] sm:$0xff]
    %v83 = vld [vmem:[#allocation2 + $0xb0] sm:$0xff]
    %v84 = vld [vmem:[#allocation2 + $0xb8] sm:$0xff]
    %v85 = vld [vmem:[#allocation2 + $0xc0] sm:$0xff]
    %v86 = vld [vmem:[#allocation2 + $0xc8] sm:$0xff]
    %v87 = vld [vmem:[#allocation2 + $0xd0] sm:$0xff]
    %v88 = vld [vmem:[#allocation2 + $0xd8] sm:$0xff]
    %v89 = vld [vmem:[#allocation2 + $0xe0] sm:$0xff]
    %v90 = vld [vmem:[#allocation2 + $0xe8] sm:$0xff]
    %v91 = vld [vmem:[#allocation2 + $0xf0] sm:$0xff]
    %v92 = vld [vmem:[#allocation2 + $0xf8] sm:$0xff]
    %v93 = vld [vmem:[#allocation2 + $0x100] sm:$0xff]
    %v94 = vld [vmem:[#allocation2 + $0x108] sm:$0xff]
    %v95 = vld [vmem:[#allocation2 + $0x110] sm:$0xff]
    %v96 = vld [vmem:[#allocation2 + $0x118] sm:$0xff]
    %v97 = vld [vmem:[#allocation2 + $0x120] sm:$0xff]
    %v98 = vld [vmem:[#allocation2 + $0x128] sm:$0xff]
    %v99 = vld [vmem:[#allocation2 + $0x130] sm:$0xff]
    %v100 = vld [vmem:[#allocation2 + $0x138] sm:$0xff]
    %v101 = vld [vmem:[#allocation2 + $0x140] sm:$0xff]
    %v102 = vld [vmem:[#allocation2 + $0x148] sm:$0xff]
    %v103 = vld [vmem:[#allocation2 + $0x150] sm:$0xff]
    %v104 = vld [vmem:[#allocation2 + $0x158] sm:$0xff]
    %v105 = vld [vmem:[#allocation2 + $0x160] sm:$0xff]
    %v106 = vld [vmem:[#allocation2 + $0x168] sm:$0xff]
    %v107 = vld [vmem:[#allocation2 + $0x170] sm:$0xff]
    %v108 = vld [vmem:[#allocation2 + $0x178] sm:$0xff]
    %v109 = vld [vmem:[#allocation2 + $0x180] sm:$0xff]
    %v110 = vld [vmem:[#allocation2 + $0x188] sm:$0xff]
    %v111 = vld [vmem:[#allocation2 + $0x190] sm:$0xff]
    %v112 = vld [vmem:[#allocation2 + $0x198] sm:$0xff]
    %v113 = vld [vmem:[#allocation2 + $0x1a0] sm:$0xff]
    %v114 = vld [vmem:[#allocation2 + $0x1a8] sm:$0xff]
    %v115 = vld [vmem:[#allocation2 + $0x1b0] sm:$0xff]
    %v116 = vld [vmem:[#allocation2 + $0x1b8] sm:$0xff]
    %v117 = vld [vmem:[#allocation2 + $0x1c0] sm:$0xff]
    %v118 = vld [vmem:[#allocation2 + $0x1c8] sm:$0xff]
    %v119 = vld [vmem:[#allocation2 + $0x1d0] sm:$0xff]
    %v120 = vld [vmem:[#allocation2 + $0x1d8] sm:$0xff]
    %v121 = vld [vmem:[#allocation2 + $0x1e0] sm:$0xff]
    %v122 = vld [vmem:[#allocation2 + $0x1e8] sm:$0xff]
    %v123 = vld [vmem:[#allocation2 + $0x1f0] sm:$0xff]
    %v124 = vld [vmem:[#allocation2 + $0x1f8] sm:$0xff]
    %v125 = vld [vmem:[#allocation2 + $0x200] sm:$0xff]
    %v126 = vld [vmem:[#allocation2 + $0x208] sm:$0xff]
    %v127 = vld [vmem:[#allocation2 + $0x210] sm:$0xff]
    %v128 = vld [vmem:[#allocation2 + $0x218] sm:$0xff]
    %v129 = vld [vmem:[#allocation2 + $0x220] sm:$0xff]
    %v130 = vld [vmem:[#allocation2 + $0x228] sm:$0xff]
    %v131 = vld [vmem:[#allocation2 + $0x230] sm:$0xff]
    %v132 = vld [vmem:[#allocation2 + $0x238] sm:$0xff]
    %v133 = vld [vmem:[#allocation2 + $0x240] sm:$0xff]
    %v134 = vld [vmem:[#allocation2 + $0x248] sm:$0xff]
    %v135 = vld [vmem:[#allocation2 + $0x250] sm:$0xff]
    %v136 = vld [vmem:[#allocation2 + $0x258] sm:$0xff]
    %v137 = vld [vmem:[#allocation2 + $0x260] sm:$0xff]
    %v138 = vld [vmem:[#allocation2 + $0x268] sm:$0xff]
    %v139 = vld [vmem:[#allocation2 + $0x270] sm:$0xff]
    %v140 = vld [vmem:[#allocation2 + $0x278] sm:$0xff]
    %v141 = vld [vmem:[#allocation2 + $0x280] sm:$0xff]
    %v142 = vld [vmem:[#allocation2 + $0x288] sm:$0xff]
    %v143 = vld [vmem:[#allocation2 + $0x290] sm:$0xff]
    %v144 = vld [vmem:[#allocation2 + $0x298] sm:$0xff]
    %v145 = vld [vmem:[#allocation2 + $0x2a0] sm:$0xff]
    %v146 = vld [vmem:[#allocation2 + $0x2a8] sm:$0xff]
    %v147 = vld [vmem:[#allocation2 + $0x2b0] sm:$0xff]
    %v148 = vld [vmem:[#allocation2 + $0x2b8] sm:$0xff]
    %v149 = vld [vmem:[#allocation2 + $0x2c0] sm:$0xff]
    %v150 = vld [vmem:[#allocation2 + $0x2c8] sm:$0xff]
    %v151 = vld [vmem:[#allocation2 + $0x2d0] sm:$0xff]
    %v152 = vld [vmem:[#allocation2 + $0x2d8] sm:$0xff]
    %v153 = vld [vmem:[#allocation2 + $0x2e0] sm:$0xff]
    %v154 = vld [vmem:[#allocation2 + $0x2e8] sm:$0xff]
    %v155 = vld [vmem:[#allocation2 + $0x2f0] sm:$0xff]
    %v156 = vld [vmem:[#allocation2 + $0x2f8] sm:$0xff]
    %v157 = vld [vmem:[#allocation2 + $0x300] sm:$0xff]
    %v158 = vld [vmem:[#allocation2 + $0x308] sm:$0xff]
    %v159 = vld [vmem:[#allocation2 + $0x310] sm:$0xff]
    %v160 = vld [vmem:[#allocation2 + $0x318] sm:$0xff]
    %v161 = vld [vmem:[#allocation2 + $0x320] sm:$0xff]
    %v162 = vld [vmem:[#allocation2 + $0x328] sm:$0xff]
    %v163 = vld [vmem:[#allocation2 + $0x330] sm:$0xff]
    %v164 = vld [vmem:[#allocation2 + $0x338] sm:$0xff]
    %v165 = vld [vmem:[#allocation2 + $0x340] sm:$0xff]
    %v166 = vld [vmem:[#allocation2 + $0x348] sm:$0xff]
    %v167 = vld [vmem:[#allocation2 + $0x350] sm:$0xff]
    %v168 = vld [vmem:[#allocation2 + $0x358] sm:$0xff]
    %v169 = vld [vmem:[#allocation2 + $0x360] sm:$0xff]
    %v170 = vld [vmem:[#allocation2 + $0x368] sm:$0xff]
    %v171 = vld [vmem:[#allocation2 + $0x370] sm:$0xff]
    %v172 = vld [vmem:[#allocation2 + $0x378] sm:$0xff]
    %v173 = vld [vmem:[#allocation2 + $0x380] sm:$0xff]
    %v174 = vld [vmem:[#allocation2 + $0x388] sm:$0xff]
    %v175 = vld [vmem:[#allocation2 + $0x390] sm:$0xff]
    %v176 = vld [vmem:[#allocation2 + $0x398] sm:$0xff]
    %v177 = vld [vmem:[#allocation2 + $0x3a0] sm:$0xff]
    %v178 = vld [vmem:[#allocation2 + $0x3a8] sm:$0xff]
    %v179 = vld [vmem:[#allocation2 + $0x3b0] sm:$0xff]
    %v180 = vld [vmem:[#allocation2 + $0x3b8] sm:$0xff]
    %v181 = vld [vmem:[#allocation2 + $0x3c0] sm:$0xff]
    %v182 = vld [vmem:[#allocation2 + $0x3c8] sm:$0xff]
    %v183 = vld [vmem:[#allocation2 + $0x3d0] sm:$0xff]
    %v184 = vld [vmem:[#allocation2 + $0x3d8] sm:$0xff]
    %v185 = vld [vmem:[#allocation2 + $0x3e0] sm:$0xff]
    %v186 = vld [vmem:[#allocation2 + $0x3e8] sm:$0xff]
    %v187 = vld [vmem:[#allocation2 + $0x3f0] sm:$0xff]
    %v188 = vld [vmem:[#allocation2 + $0x3f8] sm:$0xff]
    %v189 = vld [vmem:[%s0] sm:$0xff]
    %v190 = vld [vmem:[%s0 + $0x8] sm:$0xff]
    %v191 = vld [vmem:[%s0 + $0x20] sm:$0xff]
    %v192 = vld [vmem:[%s0 + $0x28] sm:$0xff]
    %s193 = sshll.u32 %s44, 4
    %194 = dma.done %s49, %s193
    %s195 = scalar_lea.sflag [#allocation8], 2
    // Predicated region
    $region22: #{_lambda_.1} parent=1 // pred_check
      _
    $region23: #{_lambda_.1} parent=1 // pred_check_branch
      %197 = sbr.rel target = $region25
    $region24: #{_lambda_.1} parent=1 // pred_region
      %198 = sst [smem:[#allocation15]] [#allocation20]
      %199 = sst [smem:[#allocation16]] [#allocation19]
    $region25: #{_lambda_.1} parent=1 // pred_fallthru
      _
    %201 = shalt.err (0)
    %s203 = sshll.u32 [#allocation3], 4
    %s204 = int_to_ptr.vmem [resolvable:$true] %s203
    %206 = dma.hbm_to_vmem [thread:$0]  %s3, 65536, %s204, %s195
    %v207 = vld [vmem:[%s48] sm:$0xff]
    %v208 = vld [vmem:[%s48 + $0x8] sm:$0xff]
    %v209 = vld [vmem:[%s48 + $0x10] sm:$0xff]
    %v210 = vld [vmem:[%s48 + $0x18] sm:$0xff]
    %v211 = vld [vmem:[%s48 + $0x20] sm:$0xff]
    %v212 = vld [vmem:[%s48 + $0x28] sm:$0xff]
    %v213 = vld [vmem:[%s48 + $0x30] sm:$0xff]
    %v214 = vld [vmem:[%s48 + $0x38] sm:$0xff]
    %v215 = vld [vmem:[%s48 + $0x40] sm:$0xff]
    %v216 = vld [vmem:[%s48 + $0x48] sm:$0xff]
    %v217 = vld [vmem:[%s48 + $0x50] sm:$0xff]
    %v218 = vld [vmem:[%s48 + $0x58] sm:$0xff]
    %v219 = vld [vmem:[%s48 + $0x60] sm:$0xff]
    %v220 = vld [vmem:[%s48 + $0x68] sm:$0xff]
    %v221 = vld [vmem:[%s48 + $0x70] sm:$0xff]
    %v222 = vld [vmem:[%s48 + $0x78] sm:$0xff]
    %v223 = vld [vmem:[%s48 + $0x80] sm:$0xff]
    %v224 = vld [vmem:[%s48 + $0x88] sm:$0xff]
    %v225 = vld [vmem:[%s48 + $0x90] sm:$0xff]
    %v226 = vld [vmem:[%s48 + $0x98] sm:$0xff]
    %v227 = vld [vmem:[%s48 + $0xa0] sm:$0xff]
    %v228 = vld [vmem:[%s48 + $0xa8] sm:$0xff]
    %v229 = vld [vmem:[%s48 + $0xb0] sm:$0xff]
    %v230 = vld [vmem:[%s48 + $0xb8] sm:$0xff]
    %v231 = vld [vmem:[%s48 + $0xc0] sm:$0xff]
    %v232 = vld [vmem:[%s48 + $0xc8] sm:$0xff]
    %v233 = vld [vmem:[%s48 + $0xd0] sm:$0xff]
    %v234 = vld [vmem:[%s48 + $0xd8] sm:$0xff]
    %v235 = vld [vmem:[%s48 + $0xe0] sm:$0xff]
    %v236 = vld [vmem:[%s48 + $0xe8] sm:$0xff]
    %v237 = vld [vmem:[%s48 + $0xf0] sm:$0xff]
    %v238 = vld [vmem:[%s48 + $0xf8] sm:$0xff]
    %v239 = vld [vmem:[%s48 + $0x100] sm:$0xff]
    %v240 = vld [vmem:[%s48 + $0x108] sm:$0xff]
    %v241 = vld [vmem:[%s48 + $0x110] sm:$0xff]
    %v242 = vld [vmem:[%s48 + $0x118] sm:$0xff]
    %v243 = vld [vmem:[%s48 + $0x120] sm:$0xff]
    %v244 = vld [vmem:[%s48 + $0x128] sm:$0xff]
    %v245 = vld [vmem:[%s48 + $0x130] sm:$0xff]
    %v246 = vld [vmem:[%s48 + $0x138] sm:$0xff]
    %v247 = vld [vmem:[%s48 + $0x140] sm:$0xff]
    %v248 = vld [vmem:[%s48 + $0x148] sm:$0xff]
    %v249 = vld [vmem:[%s48 + $0x150] sm:$0xff]
    %v250 = vld [vmem:[%s48 + $0x158] sm:$0xff]
    %v251 = vld [vmem:[%s48 + $0x160] sm:$0xff]
    %v252 = vld [vmem:[%s48 + $0x168] sm:$0xff]
    %v253 = vld [vmem:[%s48 + $0x170] sm:$0xff]
    %v254 = vld [vmem:[%s48 + $0x178] sm:$0xff]
    %v255 = vld [vmem:[%s48 + $0x180] sm:$0xff]
    %v256 = vld [vmem:[%s48 + $0x188] sm:$0xff]
    %v257 = vld [vmem:[%s48 + $0x190] sm:$0xff]
    %v258 = vld [vmem:[%s48 + $0x198] sm:$0xff]
    %v259 = vld [vmem:[%s48 + $0x1a0] sm:$0xff]
    %v260 = vld [vmem:[%s48 + $0x1a8] sm:$0xff]
    %v261 = vld [vmem:[%s48 + $0x1b0] sm:$0xff]
    %v262 = vld [vmem:[%s48 + $0x1b8] sm:$0xff]
    %v263 = vld [vmem:[%s48 + $0x1c0] sm:$0xff]
    %v264 = vld [vmem:[%s48 + $0x1c8] sm:$0xff]
    %v265 = vld [vmem:[%s48 + $0x1d0] sm:$0xff]
    %v266 = vld [vmem:[%s48 + $0x1d8] sm:$0xff]
    %v267 = vld [vmem:[%s48 + $0x1e0] sm:$0xff]
    %v268 = vld [vmem:[%s48 + $0x1e8] sm:$0xff]
    %v269 = vld [vmem:[%s48 + $0x1f0] sm:$0xff]
    %v270 = vld [vmem:[%s48 + $0x1f8] sm:$0xff]
    %v271 = vld [vmem:[%s48 + $0x200] sm:$0xff]
    %v272 = vld [vmem:[%s48 + $0x208] sm:$0xff]
    %v273 = vld [vmem:[%s48 + $0x210] sm:$0xff]
    %v274 = vld [vmem:[%s48 + $0x218] sm:$0xff]
    %v275 = vld [vmem:[%s48 + $0x220] sm:$0xff]
    %v276 = vld [vmem:[%s48 + $0x228] sm:$0xff]
    %v277 = vld [vmem:[%s48 + $0x230] sm:$0xff]
    %v278 = vld [vmem:[%s48 + $0x238] sm:$0xff]
    %v279 = vld [vmem:[%s48 + $0x240] sm:$0xff]
    %v280 = vld [vmem:[%s48 + $0x248] sm:$0xff]
    %v281 = vld [vmem:[%s48 + $0x250] sm:$0xff]
    %v282 = vld [vmem:[%s48 + $0x258] sm:$0xff]
    %v283 = vld [vmem:[%s48 + $0x260] sm:$0xff]
    %v284 = vld [vmem:[%s48 + $0x268] sm:$0xff]
    %v285 = vld [vmem:[%s48 + $0x270] sm:$0xff]
    %v286 = vld [vmem:[%s48 + $0x278] sm:$0xff]
    %v287 = vld [vmem:[%s48 + $0x280] sm:$0xff]
    %v288 = vld [vmem:[%s48 + $0x288] sm:$0xff]
    %v289 = vld [vmem:[%s48 + $0x290] sm:$0xff]
    %v290 = vld [vmem:[%s48 + $0x298] sm:$0xff]
    %v291 = vld [vmem:[%s48 + $0x2a0] sm:$0xff]
    %v292 = vld [vmem:[%s48 + $0x2a8] sm:$0xff]
    %v293 = vld [vmem:[%s48 + $0x2b0] sm:$0xff]
    %v294 = vld [vmem:[%s48 + $0x2b8] sm:$0xff]
    %v295 = vld [vmem:[%s48 + $0x2c0] sm:$0xff]
    %v296 = vld [vmem:[%s48 + $0x2c8] sm:$0xff]
    %v297 = vld [vmem:[%s48 + $0x2d0] sm:$0xff]
    %v298 = vld [vmem:[%s48 + $0x2d8] sm:$0xff]
    %v299 = vld [vmem:[%s48 + $0x2e0] sm:$0xff]
    %v300 = vld [vmem:[%s48 + $0x2e8] sm:$0xff]
    %v301 = vld [vmem:[%s48 + $0x2f0] sm:$0xff]
    %v302 = vld [vmem:[%s48 + $0x2f8] sm:$0xff]
    %v303 = vld [vmem:[%s48 + $0x300] sm:$0xff]
    %v304 = vld [vmem:[%s48 + $0x308] sm:$0xff]
    %v305 = vld [vmem:[%s48 + $0x310] sm:$0xff]
    %v306 = vld [vmem:[%s48 + $0x318] sm:$0xff]
    %v307 = vld [vmem:[%s48 + $0x320] sm:$0xff]
    %v308 = vld [vmem:[%s48 + $0x328] sm:$0xff]
    %v309 = vld [vmem:[%s48 + $0x330] sm:$0xff]
    %v310 = vld [vmem:[%s48 + $0x338] sm:$0xff]
    %v311 = vld [vmem:[%s48 + $0x340] sm:$0xff]
    %v312 = vld [vmem:[%s48 + $0x348] sm:$0xff]
    %v313 = vld [vmem:[%s48 + $0x350] sm:$0xff]
    %v314 = vld [vmem:[%s48 + $0x358] sm:$0xff]
    %v315 = vld [vmem:[%s48 + $0x360] sm:$0xff]
    %v316 = vld [vmem:[%s48 + $0x368] sm:$0xff]
    %v317 = vld [vmem:[%s48 + $0x370] sm:$0xff]
    %v318 = vld [vmem:[%s48 + $0x378] sm:$0xff]
    %v319 = vld [vmem:[%s48 + $0x380] sm:$0xff]
    %v320 = vld [vmem:[%s48 + $0x388] sm:$0xff]
    %v321 = vld [vmem:[%s48 + $0x390] sm:$0xff]
    %v322 = vld [vmem:[%s48 + $0x398] sm:$0xff]
    %v323 = vld [vmem:[%s48 + $0x3a0] sm:$0xff]
    %v324 = vld [vmem:[%s48 + $0x3a8] sm:$0xff]
    %v325 = vld [vmem:[%s48 + $0x3b0] sm:$0xff]
    %v326 = vld [vmem:[%s48 + $0x3b8] sm:$0xff]
    %v327 = vld [vmem:[%s48 + $0x3c0] sm:$0xff]
    %v328 = vld [vmem:[%s48 + $0x3c8] sm:$0xff]
    %v329 = vld [vmem:[%s48 + $0x3d0] sm:$0xff]
    %v330 = vld [vmem:[%s48 + $0x3d8] sm:$0xff]
    %v331 = vld [vmem:[%s48 + $0x3e0] sm:$0xff]
    %v332 = vld [vmem:[%s48 + $0x3e8] sm:$0xff]
    %v333 = vld [vmem:[%s48 + $0x3f0] sm:$0xff]
    %v334 = vld [vmem:[%s48 + $0x3f8] sm:$0xff]
    %v335 = vld [vmem:[%s0 + $0x10] sm:$0xff]
    %v336 = vld [vmem:[%s0 + $0x18] sm:$0xff]
    %v337 = vld [vmem:[%s0 + $0x30] sm:$0xff]
    %v338 = vld [vmem:[%s0 + $0x38] sm:$0xff]
    %v343 = vunpack.c.l.b16 %v335
    %v344 = vunpack.c.h.b16 %v335
    %v345 = vunpack.c.l.b16 %v336
    %v346 = vunpack.c.h.b16 %v336
    %v347 = vunpack.c.l.b16 %v337
    %v348 = vunpack.c.h.b16 %v337
    %v349 = vunpack.c.l.b16 %v338
    %v350 = vunpack.c.h.b16 %v338
    %v351 = vpack.c.b16 %v347, %v343
    %v352 = vpack.c.b16 %v348, %v344
    %v353 = vpack.c.b16 %v349, %v345
    %v354 = vpack.c.b16 %v350, %v346
    %v487 = vunpack.c.l.b16 %v207
    %v488 = vunpack.c.h.b16 %v207
    %v489 = vunpack.c.l.b16 %v208
    %v490 = vunpack.c.h.b16 %v208
    %v491 = vunpack.c.l.b16 %v209
    %v492 = vunpack.c.h.b16 %v209
    %v493 = vunpack.c.l.b16 %v210
    %v494 = vunpack.c.h.b16 %v210
    %v495 = vunpack.c.l.b16 %v211
    %v496 = vunpack.c.h.b16 %v211
    %v497 = vunpack.c.l.b16 %v212
    %v498 = vunpack.c.h.b16 %v212
    %v499 = vunpack.c.l.b16 %v213
    %v500 = vunpack.c.h.b16 %v213
    %v501 = vunpack.c.l.b16 %v214
    %v502 = vunpack.c.h.b16 %v214
    %v503 = vunpack.c.l.b16 %v215
    %v504 = vunpack.c.h.b16 %v215
    %v505 = vunpack.c.l.b16 %v216
    %v506 = vunpack.c.h.b16 %v216
    %v507 = vunpack.c.l.b16 %v217
    %v508 = vunpack.c.h.b16 %v217
    %v509 = vunpack.c.l.b16 %v218
    %v510 = vunpack.c.h.b16 %v218
    %v511 = vunpack.c.l.b16 %v219
    %v512 = vunpack.c.h.b16 %v219
    %v513 = vunpack.c.l.b16 %v220
    %v514 = vunpack.c.h.b16 %v220
    %v515 = vunpack.c.l.b16 %v221
    %v516 = vunpack.c.h.b16 %v221
    %v517 = vunpack.c.l.b16 %v222
    %v518 = vunpack.c.h.b16 %v222
    %v519 = vunpack.c.l.b16 %v223
    %v520 = vunpack.c.h.b16 %v223
    %v521 = vunpack.c.l.b16 %v224
    %v522 = vunpack.c.h.b16 %v224
    %v523 = vunpack.c.l.b16 %v225
    %v524 = vunpack.c.h.b16 %v225
    %v525 = vunpack.c.l.b16 %v226
    %v526 = vunpack.c.h.b16 %v226
    %v527 = vunpack.c.l.b16 %v227
    %v528 = vunpack.c.h.b16 %v227
    %v529 = vunpack.c.l.b16 %v228
    %v530 = vunpack.c.h.b16 %v228
    %v531 = vunpack.c.l.b16 %v229
    %v532 = vunpack.c.h.b16 %v229
    %v533 = vunpack.c.l.b16 %v230
    %v534 = vunpack.c.h.b16 %v230
    %v535 = vunpack.c.l.b16 %v231
    %v536 = vunpack.c.h.b16 %v231
    %v537 = vunpack.c.l.b16 %v232
    %v538 = vunpack.c.h.b16 %v232
    %v539 = vunpack.c.l.b16 %v233
    %v540 = vunpack.c.h.b16 %v233
    %v541 = vunpack.c.l.b16 %v234
    %v542 = vunpack.c.h.b16 %v234
    %v543 = vunpack.c.l.b16 %v235
    %v544 = vunpack.c.h.b16 %v235
    %v545 = vunpack.c.l.b16 %v236
    %v546 = vunpack.c.h.b16 %v236
    %v547 = vunpack.c.l.b16 %v237
    %v548 = vunpack.c.h.b16 %v237
    %v549 = vunpack.c.l.b16 %v238
    %v550 = vunpack.c.h.b16 %v238
    %v551 = vunpack.c.l.b16 %v239
    %v552 = vunpack.c.h.b16 %v239
    %v553 = vunpack.c.l.b16 %v240
    %v554 = vunpack.c.h.b16 %v240
    %v555 = vunpack.c.l.b16 %v241
    %v556 = vunpack.c.h.b16 %v241
    %v557 = vunpack.c.l.b16 %v242
    %v558 = vunpack.c.h.b16 %v242
    %v559 = vunpack.c.l.b16 %v243
    %v560 = vunpack.c.h.b16 %v243
    %v561 = vunpack.c.l.b16 %v244
    %v562 = vunpack.c.h.b16 %v244
    %v563 = vunpack.c.l.b16 %v245
    %v564 = vunpack.c.h.b16 %v245
    %v565 = vunpack.c.l.b16 %v246
    %v566 = vunpack.c.h.b16 %v246
    %v567 = vunpack.c.l.b16 %v247
    %v568 = vunpack.c.h.b16 %v247
    %v569 = vunpack.c.l.b16 %v248
    %v570 = vunpack.c.h.b16 %v248
    %v571 = vunpack.c.l.b16 %v249
    %v572 = vunpack.c.h.b16 %v249
    %v573 = vunpack.c.l.b16 %v250
    %v574 = vunpack.c.h.b16 %v250
    %v575 = vunpack.c.l.b16 %v251
    %v576 = vunpack.c.h.b16 %v251
    %v577 = vunpack.c.l.b16 %v252
    %v578 = vunpack.c.h.b16 %v252
    %v579 = vunpack.c.l.b16 %v253
    %v580 = vunpack.c.h.b16 %v253
    %v581 = vunpack.c.l.b16 %v254
    %v582 = vunpack.c.h.b16 %v254
    %v583 = vunpack.c.l.b16 %v255
    %v584 = vunpack.c.h.b16 %v255
    %v585 = vunpack.c.l.b16 %v256
    %v586 = vunpack.c.h.b16 %v256
    %v587 = vunpack.c.l.b16 %v257
    %v588 = vunpack.c.h.b16 %v257
    %v589 = vunpack.c.l.b16 %v258
    %v590 = vunpack.c.h.b16 %v258
    %v591 = vunpack.c.l.b16 %v259
    %v592 = vunpack.c.h.b16 %v259
    %v593 = vunpack.c.l.b16 %v260
    %v594 = vunpack.c.h.b16 %v260
    %v595 = vunpack.c.l.b16 %v261
    %v596 = vunpack.c.h.b16 %v261
    %v597 = vunpack.c.l.b16 %v262
    %v598 = vunpack.c.h.b16 %v262
    %v599 = vunpack.c.l.b16 %v263
    %v600 = vunpack.c.h.b16 %v263
    %v601 = vunpack.c.l.b16 %v264
    %v602 = vunpack.c.h.b16 %v264
    %v603 = vunpack.c.l.b16 %v265
    %v604 = vunpack.c.h.b16 %v265
    %v605 = vunpack.c.l.b16 %v266
    %v606 = vunpack.c.h.b16 %v266
    %v607 = vunpack.c.l.b16 %v267
    %v608 = vunpack.c.h.b16 %v267
    %v609 = vunpack.c.l.b16 %v268
    %v610 = vunpack.c.h.b16 %v268
    %v611 = vunpack.c.l.b16 %v269
    %v612 = vunpack.c.h.b16 %v269
    %v613 = vunpack.c.l.b16 %v270
    %v614 = vunpack.c.h.b16 %v270
    %v615 = vunpack.c.l.b16 %v271
    %v616 = vunpack.c.h.b16 %v271
    %v617 = vunpack.c.l.b16 %v272
    %v618 = vunpack.c.h.b16 %v272
    %v619 = vunpack.c.l.b16 %v273
    %v620 = vunpack.c.h.b16 %v273
    %v621 = vunpack.c.l.b16 %v274
    %v622 = vunpack.c.h.b16 %v274
    %v623 = vunpack.c.l.b16 %v275
    %v624 = vunpack.c.h.b16 %v275
    %v625 = vunpack.c.l.b16 %v276
    %v626 = vunpack.c.h.b16 %v276
    %v627 = vunpack.c.l.b16 %v277
    %v628 = vunpack.c.h.b16 %v277
    %v629 = vunpack.c.l.b16 %v278
    %v630 = vunpack.c.h.b16 %v278
    %v631 = vunpack.c.l.b16 %v279
    %v632 = vunpack.c.h.b16 %v279
    %v633 = vunpack.c.l.b16 %v280
    %v634 = vunpack.c.h.b16 %v280
    %v635 = vunpack.c.l.b16 %v281
    %v636 = vunpack.c.h.b16 %v281
    %v637 = vunpack.c.l.b16 %v282
    %v638 = vunpack.c.h.b16 %v282
    %v639 = vunpack.c.l.b16 %v283
    %v640 = vunpack.c.h.b16 %v283
    %v641 = vunpack.c.l.b16 %v284
    %v642 = vunpack.c.h.b16 %v284
    %v643 = vunpack.c.l.b16 %v285
    %v644 = vunpack.c.h.b16 %v285
    %v645 = vunpack.c.l.b16 %v286
    %v646 = vunpack.c.h.b16 %v286
    %v647 = vunpack.c.l.b16 %v287
    %v648 = vunpack.c.h.b16 %v287
    %v649 = vunpack.c.l.b16 %v288
    %v650 = vunpack.c.h.b16 %v288
    %v651 = vunpack.c.l.b16 %v289
    %v652 = vunpack.c.h.b16 %v289
    %v653 = vunpack.c.l.b16 %v290
    %v654 = vunpack.c.h.b16 %v290
    %v655 = vunpack.c.l.b16 %v291
    %v656 = vunpack.c.h.b16 %v291
    %v657 = vunpack.c.l.b16 %v292
    %v658 = vunpack.c.h.b16 %v292
    %v659 = vunpack.c.l.b16 %v293
    %v660 = vunpack.c.h.b16 %v293
    %v661 = vunpack.c.l.b16 %v294
    %v662 = vunpack.c.h.b16 %v294
    %v663 = vunpack.c.l.b16 %v295
    %v664 = vunpack.c.h.b16 %v295
    %v665 = vunpack.c.l.b16 %v296
    %v666 = vunpack.c.h.b16 %v296
    %v667 = vunpack.c.l.b16 %v297
    %v668 = vunpack.c.h.b16 %v297
    %v669 = vunpack.c.l.b16 %v298
    %v670 = vunpack.c.h.b16 %v298
    %v671 = vunpack.c.l.b16 %v299
    %v672 = vunpack.c.h.b16 %v299
    %v673 = vunpack.c.l.b16 %v300
    %v674 = vunpack.c.h.b16 %v300
    %v675 = vunpack.c.l.b16 %v301
    %v676 = vunpack.c.h.b16 %v301
    %v677 = vunpack.c.l.b16 %v302
    %v678 = vunpack.c.h.b16 %v302
    %v679 = vunpack.c.l.b16 %v303
    %v680 = vunpack.c.h.b16 %v303
    %v681 = vunpack.c.l.b16 %v304
    %v682 = vunpack.c.h.b16 %v304
    %v683 = vunpack.c.l.b16 %v305
    %v684 = vunpack.c.h.b16 %v305
    %v685 = vunpack.c.l.b16 %v306
    %v686 = vunpack.c.h.b16 %v306
    %v687 = vunpack.c.l.b16 %v307
    %v688 = vunpack.c.h.b16 %v307
    %v689 = vunpack.c.l.b16 %v308
    %v690 = vunpack.c.h.b16 %v308
    %v691 = vunpack.c.l.b16 %v309
    %v692 = vunpack.c.h.b16 %v309
    %v693 = vunpack.c.l.b16 %v310
    %v694 = vunpack.c.h.b16 %v310
    %v695 = vunpack.c.l.b16 %v311
    %v696 = vunpack.c.h.b16 %v311
    %v697 = vunpack.c.l.b16 %v312
    %v698 = vunpack.c.h.b16 %v312
    %v699 = vunpack.c.l.b16 %v313
    %v700 = vunpack.c.h.b16 %v313
    %v701 = vunpack.c.l.b16 %v314
    %v702 = vunpack.c.h.b16 %v314
    %v703 = vunpack.c.l.b16 %v315
    %v704 = vunpack.c.h.b16 %v315
    %v705 = vunpack.c.l.b16 %v316
    %v706 = vunpack.c.h.b16 %v316
    %v707 = vunpack.c.l.b16 %v317
    %v708 = vunpack.c.h.b16 %v317
    %v709 = vunpack.c.l.b16 %v318
    %v710 = vunpack.c.h.b16 %v318
    %v711 = vunpack.c.l.b16 %v319
    %v712 = vunpack.c.h.b16 %v319
    %v713 = vunpack.c.l.b16 %v320
    %v714 = vunpack.c.h.b16 %v320
    %v715 = vunpack.c.l.b16 %v321
    %v716 = vunpack.c.h.b16 %v321
    %v717 = vunpack.c.l.b16 %v322
    %v718 = vunpack.c.h.b16 %v322
    %v719 = vunpack.c.l.b16 %v323
    %v720 = vunpack.c.h.b16 %v323
    %v721 = vunpack.c.l.b16 %v324
    %v722 = vunpack.c.h.b16 %v324
    %v723 = vunpack.c.l.b16 %v325
    %v724 = vunpack.c.h.b16 %v325
    %v725 = vunpack.c.l.b16 %v326
    %v726 = vunpack.c.h.b16 %v326
    %v727 = vunpack.c.l.b16 %v327
    %v728 = vunpack.c.h.b16 %v327
    %v729 = vunpack.c.l.b16 %v328
    %v730 = vunpack.c.h.b16 %v328
    %v731 = vunpack.c.l.b16 %v329
    %v732 = vunpack.c.h.b16 %v329
    %v733 = vunpack.c.l.b16 %v330
    %v734 = vunpack.c.h.b16 %v330
    %v735 = vunpack.c.l.b16 %v331
    %v736 = vunpack.c.h.b16 %v331
    %v737 = vunpack.c.l.b16 %v332
    %v738 = vunpack.c.h.b16 %v332
    %v739 = vunpack.c.l.b16 %v333
    %v740 = vunpack.c.h.b16 %v333
    %v741 = vunpack.c.l.b16 %v334
    %v742 = vunpack.c.h.b16 %v334
    %v743 = vpack.c.b16 %v491, %v487
    %v744 = vpack.c.b16 %v492, %v488
    %v745 = vpack.c.b16 %v493, %v489
    %v746 = vpack.c.b16 %v494, %v490
    %v747 = vpack.c.b16 %v499, %v495
    %v748 = vpack.c.b16 %v500, %v496
    %v749 = vpack.c.b16 %v501, %v497
    %v750 = vpack.c.b16 %v502, %v498
    %v751 = vpack.c.b16 %v507, %v503
    %v752 = vpack.c.b16 %v508, %v504
    %v753 = vpack.c.b16 %v509, %v505
    %v754 = vpack.c.b16 %v510, %v506
    %v755 = vpack.c.b16 %v515, %v511
    %v756 = vpack.c.b16 %v516, %v512
    %v757 = vpack.c.b16 %v517, %v513
    %v758 = vpack.c.b16 %v518, %v514
    %v759 = vpack.c.b16 %v523, %v519
    %v760 = vpack.c.b16 %v524, %v520
    %v761 = vpack.c.b16 %v525, %v521
    %v762 = vpack.c.b16 %v526, %v522
    %v763 = vpack.c.b16 %v531, %v527
    %v764 = vpack.c.b16 %v532, %v528
    %v765 = vpack.c.b16 %v533, %v529
    %v766 = vpack.c.b16 %v534, %v530
    %v767 = vpack.c.b16 %v539, %v535
    %v768 = vpack.c.b16 %v540, %v536
    %v769 = vpack.c.b16 %v541, %v537
    %v770 = vpack.c.b16 %v542, %v538
    %v771 = vpack.c.b16 %v547, %v543
    %v772 = vpack.c.b16 %v548, %v544
    %v773 = vpack.c.b16 %v549, %v545
    %v774 = vpack.c.b16 %v550, %v546
    %v775 = vpack.c.b16 %v555, %v551
    %v776 = vpack.c.b16 %v556, %v552
    %v777 = vpack.c.b16 %v557, %v553
    %v778 = vpack.c.b16 %v558, %v554
    %v779 = vpack.c.b16 %v563, %v559
    %v780 = vpack.c.b16 %v564, %v560
    %v781 = vpack.c.b16 %v565, %v561
    %v782 = vpack.c.b16 %v566, %v562
    %v783 = vpack.c.b16 %v571, %v567
    %v784 = vpack.c.b16 %v572, %v568
    %v785 = vpack.c.b16 %v573, %v569
    %v786 = vpack.c.b16 %v574, %v570
    %v787 = vpack.c.b16 %v579, %v575
    %v788 = vpack.c.b16 %v580, %v576
    %v789 = vpack.c.b16 %v581, %v577
    %v790 = vpack.c.b16 %v582, %v578
    %v791 = vpack.c.b16 %v587, %v583
    %v792 = vpack.c.b16 %v588, %v584
    %v793 = vpack.c.b16 %v589, %v585
    %v794 = vpack.c.b16 %v590, %v586
    %v795 = vpack.c.b16 %v595, %v591
    %v796 = vpack.c.b16 %v596, %v592
    %v797 = vpack.c.b16 %v597, %v593
    %v798 = vpack.c.b16 %v598, %v594
    %v799 = vpack.c.b16 %v603, %v599
    %v800 = vpack.c.b16 %v604, %v600
    %v801 = vpack.c.b16 %v605, %v601
    %v802 = vpack.c.b16 %v606, %v602
    %v803 = vpack.c.b16 %v611, %v607
    %v804 = vpack.c.b16 %v612, %v608
    %v805 = vpack.c.b16 %v613, %v609
    %v806 = vpack.c.b16 %v614, %v610
    %v807 = vpack.c.b16 %v619, %v615
    %v808 = vpack.c.b16 %v620, %v616
    %v809 = vpack.c.b16 %v621, %v617
    %v810 = vpack.c.b16 %v622, %v618
    %v811 = vpack.c.b16 %v627, %v623
    %v812 = vpack.c.b16 %v628, %v624
    %v813 = vpack.c.b16 %v629, %v625
    %v814 = vpack.c.b16 %v630, %v626
    %v815 = vpack.c.b16 %v635, %v631
    %v816 = vpack.c.b16 %v636, %v632
    %v817 = vpack.c.b16 %v637, %v633
    %v818 = vpack.c.b16 %v638, %v634
    %v819 = vpack.c.b16 %v643, %v639
    %v820 = vpack.c.b16 %v644, %v640
    %v821 = vpack.c.b16 %v645, %v641
    %v822 = vpack.c.b16 %v646, %v642
    %v823 = vpack.c.b16 %v651, %v647
    %v824 = vpack.c.b16 %v652, %v648
    %v825 = vpack.c.b16 %v653, %v649
    %v826 = vpack.c.b16 %v654, %v650
    %v827 = vpack.c.b16 %v659, %v655
    %v828 = vpack.c.b16 %v660, %v656
    %v829 = vpack.c.b16 %v661, %v657
    %v830 = vpack.c.b16 %v662, %v658
    %v831 = vpack.c.b16 %v667, %v663
    %v832 = vpack.c.b16 %v668, %v664
    %v833 = vpack.c.b16 %v669, %v665
    %v834 = vpack.c.b16 %v670, %v666
    %v835 = vpack.c.b16 %v675, %v671
    %v836 = vpack.c.b16 %v676, %v672
    %v837 = vpack.c.b16 %v677, %v673
    %v838 = vpack.c.b16 %v678, %v674
    %v839 = vpack.c.b16 %v683, %v679
    %v840 = vpack.c.b16 %v684, %v680
    %v841 = vpack.c.b16 %v685, %v681
    %v842 = vpack.c.b16 %v686, %v682
    %v843 = vpack.c.b16 %v691, %v687
    %v844 = vpack.c.b16 %v692, %v688
    %v845 = vpack.c.b16 %v693, %v689
    %v846 = vpack.c.b16 %v694, %v690
    %v847 = vpack.c.b16 %v699, %v695
    %v848 = vpack.c.b16 %v700, %v696
    %v849 = vpack.c.b16 %v701, %v697
    %v850 = vpack.c.b16 %v702, %v698
    %v851 = vpack.c.b16 %v707, %v703
    %v852 = vpack.c.b16 %v708, %v704
    %v853 = vpack.c.b16 %v709, %v705
    %v854 = vpack.c.b16 %v710, %v706
    %v855 = vpack.c.b16 %v715, %v711
    %v856 = vpack.c.b16 %v716, %v712
    %v857 = vpack.c.b16 %v717, %v713
    %v858 = vpack.c.b16 %v718, %v714
    %v859 = vpack.c.b16 %v723, %v719
    %v860 = vpack.c.b16 %v724, %v720
    %v861 = vpack.c.b16 %v725, %v721
    %v862 = vpack.c.b16 %v726, %v722
    %v863 = vpack.c.b16 %v731, %v727
    %v864 = vpack.c.b16 %v732, %v728
    %v865 = vpack.c.b16 %v733, %v729
    %v866 = vpack.c.b16 %v734, %v730
    %v867 = vpack.c.b16 %v739, %v735
    %v868 = vpack.c.b16 %v740, %v736
    %v869 = vpack.c.b16 %v741, %v737
    %v870 = vpack.c.b16 %v742, %v738
    %999 = vmatprep.subr.bf16.mxu0 %v772
    %1000 = vmatpush1.bf16.msra.mxu0 %v771
    %1001 = vmatprep.subr.bf16.mxu0 %v768
    %1002 = vmatpush1.bf16.msra.mxu0 %v767
    %1003 = vmatprep.subr.bf16.mxu0 %v764
    %1004 = vmatpush1.bf16.msra.mxu0 %v763
    %1005 = vmatprep.subr.bf16.mxu0 %v760
    %1006 = vmatpush1.bf16.msra.mxu0 %v759
    %1007 = vmatprep.subr.bf16.mxu0 %v756
    %1008 = vmatpush1.bf16.msra.mxu0 %v755
    %1009 = vmatprep.subr.bf16.mxu0 %v752
    %1010 = vmatpush1.bf16.msra.mxu0 %v751
    %1011 = vmatprep.subr.bf16.mxu0 %v748
    %1012 = vmatpush1.bf16.msra.mxu0 %v747
    %1013 = vmatprep.subr.bf16.mxu0 %v744
    %1014 = vmatpush1.bf16.msra.mxu0 %v743
    %1015 = vmatprep.subr.bf16.mxu0 %v804
    %1016 = vmatpush2.bf16.msra.mxu0 %v803
    %1017 = vmatprep.subr.bf16.mxu0 %v800
    %1018 = vmatpush2.bf16.msra.mxu0 %v799
    %1019 = vmatprep.subr.bf16.mxu0 %v796
    %1020 = vmatpush2.bf16.msra.mxu0 %v795
    %1021 = vmatprep.subr.bf16.mxu0 %v792
    %1022 = vmatpush2.bf16.msra.mxu0 %v791
    %1023 = vmatprep.subr.bf16.mxu0 %v788
    %1024 = vmatpush2.bf16.msra.mxu0 %v787
    %1025 = vmatprep.subr.bf16.mxu0 %v784
    %1026 = vmatpush2.bf16.msra.mxu0 %v783
    %1027 = vmatprep.subr.bf16.mxu0 %v780
    %1028 = vmatpush2.bf16.msra.mxu0 %v779
    %1029 = vmatprep.subr.bf16.mxu0 %v776
    %1030 = vmatpush2.bf16.msra.mxu0 %v775
    %1031 = vmatprep.mubr.bf16.mxu0 %v352
    %1032 = vmatmul.mubr.bf16.gmra.mxu0 %v351
    %v1033 = vpop.f32.mrf.mxu0
    %v1034 = vadd.f32 0.0, %v1033
    %v1035 = vpop.f32.mrf.mxu0
    %v1036 = vadd.f32 0.0, %v1035
    %v1037 = vpop.f32.mrf.mxu0
    %v1038 = vadd.f32 0.0, %v1037
    %v1039 = vpop.f32.mrf.mxu0
    %v1040 = vadd.f32 0.0, %v1039
    %1041 = vdwg.mxu0
    %1042 = vmatprep.subr.bf16.mxu0 %v836
    %1043 = vmatpush1.bf16.msra.mxu0 %v835
    %1044 = vmatprep.subr.bf16.mxu0 %v832
    %1045 = vmatpush1.bf16.msra.mxu0 %v831
    %1046 = vmatprep.subr.bf16.mxu0 %v828
    %1047 = vmatpush1.bf16.msra.mxu0 %v827
    %1048 = vmatprep.subr.bf16.mxu0 %v824
    %1049 = vmatpush1.bf16.msra.mxu0 %v823
    %1050 = vmatprep.subr.bf16.mxu0 %v820
    %1051 = vmatpush1.bf16.msra.mxu0 %v819
    %1052 = vmatprep.subr.bf16.mxu0 %v816
    %1053 = vmatpush1.bf16.msra.mxu0 %v815
    %1054 = vmatprep.subr.bf16.mxu0 %v812
    %1055 = vmatpush1.bf16.msra.mxu0 %v811
    %1056 = vmatprep.subr.bf16.mxu0 %v808
    %1057 = vmatpush1.bf16.msra.mxu0 %v807
    %1058 = vmatprep.subr.bf16.mxu0 %v868
    %1059 = vmatpush2.bf16.msra.mxu0 %v867
    %1060 = vmatprep.subr.bf16.mxu0 %v864
    %1061 = vmatpush2.bf16.msra.mxu0 %v863
    %1062 = vmatprep.subr.bf16.mxu0 %v860
    %1063 = vmatpush2.bf16.msra.mxu0 %v859
    %1064 = vmatprep.subr.bf16.mxu0 %v856
    %1065 = vmatpush2.bf16.msra.mxu0 %v855
    %1066 = vmatprep.subr.bf16.mxu0 %v852
    %1067 = vmatpush2.bf16.msra.mxu0 %v851
    %1068 = vmatprep.subr.bf16.mxu0 %v848
    %1069 = vmatpush2.bf16.msra.mxu0 %v847
    %1070 = vmatprep.subr.bf16.mxu0 %v844
    %1071 = vmatpush2.bf16.msra.mxu0 %v843
    %1072 = vmatprep.subr.bf16.mxu0 %v840
    %1073 = vmatpush2.bf16.msra.mxu0 %v839
    %1074 = vmatprep.mubr.bf16.mxu0 %v354
    %1075 = vmatmul.mubr.bf16.gmra.mxu0 %v353
    %v1076 = vpop.f32.mrf.mxu0
    %v1077 = vadd.f32 %v1034, %v1076
    %v1078 = vpop.f32.mrf.mxu0
    %v1079 = vadd.f32 %v1036, %v1078
    %v1080 = vpop.f32.mrf.mxu0
    %v1081 = vadd.f32 %v1038, %v1080
    %v1082 = vpop.f32.mrf.mxu0
    %v1083 = vadd.f32 %v1040, %v1082
    %1084 = vdwg.mxu0
    %1085 = vmatprep.subr.bf16.mxu0 %v774
    %1086 = vmatpush1.bf16.msra.mxu0 %v773
    %1087 = vmatprep.subr.bf16.mxu0 %v770
    %1088 = vmatpush1.bf16.msra.mxu0 %v769
    %1089 = vmatprep.subr.bf16.mxu0 %v766
    %1090 = vmatpush1.bf16.msra.mxu0 %v765
    %1091 = vmatprep.subr.bf16.mxu0 %v762
    %1092 = vmatpush1.bf16.msra.mxu0 %v761
    %1093 = vmatprep.subr.bf16.mxu0 %v758
    %1094 = vmatpush1.bf16.msra.mxu0 %v757
    %1095 = vmatprep.subr.bf16.mxu0 %v754
    %1096 = vmatpush1.bf16.msra.mxu0 %v753
    %1097 = vmatprep.subr.bf16.mxu0 %v750
    %1098 = vmatpush1.bf16.msra.mxu0 %v749
    %1099 = vmatprep.subr.bf16.mxu0 %v746
    %1100 = vmatpush1.bf16.msra.mxu0 %v745
    %1101 = vmatprep.subr.bf16.mxu0 %v806
    %1102 = vmatpush2.bf16.msra.mxu0 %v805
    %1103 = vmatprep.subr.bf16.mxu0 %v802
    %1104 = vmatpush2.bf16.msra.mxu0 %v801
    %1105 = vmatprep.subr.bf16.mxu0 %v798
    %1106 = vmatpush2.bf16.msra.mxu0 %v797
    %1107 = vmatprep.subr.bf16.mxu0 %v794
    %1108 = vmatpush2.bf16.msra.mxu0 %v793
    %1109 = vmatprep.subr.bf16.mxu0 %v790
    %1110 = vmatpush2.bf16.msra.mxu0 %v789
    %1111 = vmatprep.subr.bf16.mxu0 %v786
    %1112 = vmatpush2.bf16.msra.mxu0 %v785
    %1113 = vmatprep.subr.bf16.mxu0 %v782
    %1114 = vmatpush2.bf16.msra.mxu0 %v781
    %1115 = vmatprep.subr.bf16.mxu0 %v778
    %1116 = vmatpush2.bf16.msra.mxu0 %v777
    %1117 = vmatprep.mubr.bf16.mxu0 %v352
    %1118 = vmatmul.mubr.bf16.gmra.mxu0 %v351
    %v1119 = vpop.f32.mrf.mxu0
    %v1120 = vadd.f32 0.0, %v1119
    %v1121 = vpop.f32.mrf.mxu0
    %v1122 = vadd.f32 0.0, %v1121
    %v1123 = vpop.f32.mrf.mxu0
    %v1124 = vadd.f32 0.0, %v1123
    %v1125 = vpop.f32.mrf.mxu0
    %v1126 = vadd.f32 0.0, %v1125
    %1127 = vdwg.mxu0
    %1128 = vmatprep.subr.bf16.mxu0 %v838
    %1129 = vmatpush1.bf16.msra.mxu0 %v837
    %1130 = vmatprep.subr.bf16.mxu0 %v834
    %1131 = vmatpush1.bf16.msra.mxu0 %v833
    %1132 = vmatprep.subr.bf16.mxu0 %v830
    %1133 = vmatpush1.bf16.msra.mxu0 %v829
    %1134 = vmatprep.subr.bf16.mxu0 %v826
    %1135 = vmatpush1.bf16.msra.mxu0 %v825
    %1136 = vmatprep.subr.bf16.mxu0 %v822
    %1137 = vmatpush1.bf16.msra.mxu0 %v821
    %1138 = vmatprep.subr.bf16.mxu0 %v818
    %1139 = vmatpush1.bf16.msra.mxu0 %v817
    %1140 = vmatprep.subr.bf16.mxu0 %v814
    %1141 = vmatpush1.bf16.msra.mxu0 %v813
    %1142 = vmatprep.subr.bf16.mxu0 %v810
    %1143 = vmatpush1.bf16.msra.mxu0 %v809
    %1144 = vmatprep.subr.bf16.mxu0 %v870
    %1145 = vmatpush2.bf16.msra.mxu0 %v869
    %1146 = vmatprep.subr.bf16.mxu0 %v866
    %1147 = vmatpush2.bf16.msra.mxu0 %v865
    %1148 = vmatprep.subr.bf16.mxu0 %v862
    %1149 = vmatpush2.bf16.msra.mxu0 %v861
    %1150 = vmatprep.subr.bf16.mxu0 %v858
    %1151 = vmatpush2.bf16.msra.mxu0 %v857
    %1152 = vmatprep.subr.bf16.mxu0 %v854
    %1153 = vmatpush2.bf16.msra.mxu0 %v853
    %1154 = vmatprep.subr.bf16.mxu0 %v850
    %1155 = vmatpush2.bf16.msra.mxu0 %v849
    %1156 = vmatprep.subr.bf16.mxu0 %v846
    %1157 = vmatpush2.bf16.msra.mxu0 %v845
    %1158 = vmatprep.subr.bf16.mxu0 %v842
    %1159 = vmatpush2.bf16.msra.mxu0 %v841
    %1160 = vmatprep.mubr.bf16.mxu0 %v354
    %1161 = vmatmul.mubr.bf16.gmra.mxu0 %v353
    %v1162 = vpop.f32.mrf.mxu0
    %v1163 = vadd.f32 %v1120, %v1162
    %v1164 = vpop.f32.mrf.mxu0
    %v1165 = vadd.f32 %v1122, %v1164
    %v1166 = vpop.f32.mrf.mxu0
    %v1167 = vadd.f32 %v1124, %v1166
    %v1168 = vpop.f32.mrf.mxu0
    %v1169 = vadd.f32 %v1126, %v1168
    %1170 = vdwg.mxu0
    %v1175 = vunpack.c.l.b16 %v189
    %v1176 = vunpack.c.h.b16 %v189
    %v1177 = vunpack.c.l.b16 %v190
    %v1178 = vunpack.c.h.b16 %v190
    %v1179 = vunpack.c.l.b16 %v191
    %v1180 = vunpack.c.h.b16 %v191
    %v1181 = vunpack.c.l.b16 %v192
    %v1182 = vunpack.c.h.b16 %v192
    %v1183 = vpack.c.b16 %v1179, %v1175
    %v1184 = vpack.c.b16 %v1180, %v1176
    %v1185 = vpack.c.b16 %v1181, %v1177
    %v1186 = vpack.c.b16 %v1182, %v1178
    %v1319 = vunpack.c.l.b16 %v61
    %v1320 = vunpack.c.h.b16 %v61
    %v1321 = vunpack.c.l.b16 %v62
    %v1322 = vunpack.c.h.b16 %v62
    %v1323 = vunpack.c.l.b16 %v63
    %v1324 = vunpack.c.h.b16 %v63
    %v1325 = vunpack.c.l.b16 %v64
    %v1326 = vunpack.c.h.b16 %v64
    %v1327 = vunpack.c.l.b16 %v65
    %v1328 = vunpack.c.h.b16 %v65
    %v1329 = vunpack.c.l.b16 %v66
    %v1330 = vunpack.c.h.b16 %v66
    %v1331 = vunpack.c.l.b16 %v67
    %v1332 = vunpack.c.h.b16 %v67
    %v1333 = vunpack.c.l.b16 %v68
    %v1334 = vunpack.c.h.b16 %v68
    %v1335 = vunpack.c.l.b16 %v69
    %v1336 = vunpack.c.h.b16 %v69
    %v1337 = vunpack.c.l.b16 %v70
    %v1338 = vunpack.c.h.b16 %v70
    %v1339 = vunpack.c.l.b16 %v71
    %v1340 = vunpack.c.h.b16 %v71
    %v1341 = vunpack.c.l.b16 %v72
    %v1342 = vunpack.c.h.b16 %v72
    %v1343 = vunpack.c.l.b16 %v73
    %v1344 = vunpack.c.h.b16 %v73
    %v1345 = vunpack.c.l.b16 %v74
    %v1346 = vunpack.c.h.b16 %v74
    %v1347 = vunpack.c.l.b16 %v75
    %v1348 = vunpack.c.h.b16 %v75
    %v1349 = vunpack.c.l.b16 %v76
    %v1350 = vunpack.c.h.b16 %v76
    %v1351 = vunpack.c.l.b16 %v77
    %v1352 = vunpack.c.h.b16 %v77
    %v1353 = vunpack.c.l.b16 %v78
    %v1354 = vunpack.c.h.b16 %v78
    %v1355 = vunpack.c.l.b16 %v79
    %v1356 = vunpack.c.h.b16 %v79
    %v1357 = vunpack.c.l.b16 %v80
    %v1358 = vunpack.c.h.b16 %v80
    %v1359 = vunpack.c.l.b16 %v81
    %v1360 = vunpack.c.h.b16 %v81
    %v1361 = vunpack.c.l.b16 %v82
    %v1362 = vunpack.c.h.b16 %v82
    %v1363 = vunpack.c.l.b16 %v83
    %v1364 = vunpack.c.h.b16 %v83
    %v1365 = vunpack.c.l.b16 %v84
    %v1366 = vunpack.c.h.b16 %v84
    %v1367 = vunpack.c.l.b16 %v85
    %v1368 = vunpack.c.h.b16 %v85
    %v1369 = vunpack.c.l.b16 %v86
    %v1370 = vunpack.c.h.b16 %v86
    %v1371 = vunpack.c.l.b16 %v87
    %v1372 = vunpack.c.h.b16 %v87
    %v1373 = vunpack.c.l.b16 %v88
    %v1374 = vunpack.c.h.b16 %v88
    %v1375 = vunpack.c.l.b16 %v89
    %v1376 = vunpack.c.h.b16 %v89
    %v1377 = vunpack.c.l.b16 %v90
    %v1378 = vunpack.c.h.b16 %v90
    %v1379 = vunpack.c.l.b16 %v91
    %v1380 = vunpack.c.h.b16 %v91
    %v1381 = vunpack.c.l.b16 %v92
    %v1382 = vunpack.c.h.b16 %v92
    %v1383 = vunpack.c.l.b16 %v93
    %v1384 = vunpack.c.h.b16 %v93
    %v1385 = vunpack.c.l.b16 %v94
    %v1386 = vunpack.c.h.b16 %v94
    %v1387 = vunpack.c.l.b16 %v95
    %v1388 = vunpack.c.h.b16 %v95
    %v1389 = vunpack.c.l.b16 %v96
    %v1390 = vunpack.c.h.b16 %v96
    %v1391 = vunpack.c.l.b16 %v97
    %v1392 = vunpack.c.h.b16 %v97
    %v1393 = vunpack.c.l.b16 %v98
    %v1394 = vunpack.c.h.b16 %v98
    %v1395 = vunpack.c.l.b16 %v99
    %v1396 = vunpack.c.h.b16 %v99
    %v1397 = vunpack.c.l.b16 %v100
    %v1398 = vunpack.c.h.b16 %v100
    %v1399 = vunpack.c.l.b16 %v101
    %v1400 = vunpack.c.h.b16 %v101
    %v1401 = vunpack.c.l.b16 %v102
    %v1402 = vunpack.c.h.b16 %v102
    %v1403 = vunpack.c.l.b16 %v103
    %v1404 = vunpack.c.h.b16 %v103
    %v1405 = vunpack.c.l.b16 %v104
    %v1406 = vunpack.c.h.b16 %v104
    %v1407 = vunpack.c.l.b16 %v105
    %v1408 = vunpack.c.h.b16 %v105
    %v1409 = vunpack.c.l.b16 %v106
    %v1410 = vunpack.c.h.b16 %v106
    %v1411 = vunpack.c.l.b16 %v107
    %v1412 = vunpack.c.h.b16 %v107
    %v1413 = vunpack.c.l.b16 %v108
    %v1414 = vunpack.c.h.b16 %v108
    %v1415 = vunpack.c.l.b16 %v109
    %v1416 = vunpack.c.h.b16 %v109
    %v1417 = vunpack.c.l.b16 %v110
    %v1418 = vunpack.c.h.b16 %v110
    %v1419 = vunpack.c.l.b16 %v111
    %v1420 = vunpack.c.h.b16 %v111
    %v1421 = vunpack.c.l.b16 %v112
    %v1422 = vunpack.c.h.b16 %v112
    %v1423 = vunpack.c.l.b16 %v113
    %v1424 = vunpack.c.h.b16 %v113
    %v1425 = vunpack.c.l.b16 %v114
    %v1426 = vunpack.c.h.b16 %v114
    %v1427 = vunpack.c.l.b16 %v115
    %v1428 = vunpack.c.h.b16 %v115
    %v1429 = vunpack.c.l.b16 %v116
    %v1430 = vunpack.c.h.b16 %v116
    %v1431 = vunpack.c.l.b16 %v117
    %v1432 = vunpack.c.h.b16 %v117
    %v1433 = vunpack.c.l.b16 %v118
    %v1434 = vunpack.c.h.b16 %v118
    %v1435 = vunpack.c.l.b16 %v119
    %v1436 = vunpack.c.h.b16 %v119
    %v1437 = vunpack.c.l.b16 %v120
    %v1438 = vunpack.c.h.b16 %v120
    %v1439 = vunpack.c.l.b16 %v121
    %v1440 = vunpack.c.h.b16 %v121
    %v1441 = vunpack.c.l.b16 %v122
    %v1442 = vunpack.c.h.b16 %v122
    %v1443 = vunpack.c.l.b16 %v123
    %v1444 = vunpack.c.h.b16 %v123
    %v1445 = vunpack.c.l.b16 %v124
    %v1446 = vunpack.c.h.b16 %v124
    %v1447 = vunpack.c.l.b16 %v125
    %v1448 = vunpack.c.h.b16 %v125
    %v1449 = vunpack.c.l.b16 %v126
    %v1450 = vunpack.c.h.b16 %v126
    %v1451 = vunpack.c.l.b16 %v127
    %v1452 = vunpack.c.h.b16 %v127
    %v1453 = vunpack.c.l.b16 %v128
    %v1454 = vunpack.c.h.b16 %v128
    %v1455 = vunpack.c.l.b16 %v129
    %v1456 = vunpack.c.h.b16 %v129
    %v1457 = vunpack.c.l.b16 %v130
    %v1458 = vunpack.c.h.b16 %v130
    %v1459 = vunpack.c.l.b16 %v131
    %v1460 = vunpack.c.h.b16 %v131
    %v1461 = vunpack.c.l.b16 %v132
    %v1462 = vunpack.c.h.b16 %v132
    %v1463 = vunpack.c.l.b16 %v133
    %v1464 = vunpack.c.h.b16 %v133
    %v1465 = vunpack.c.l.b16 %v134
    %v1466 = vunpack.c.h.b16 %v134
    %v1467 = vunpack.c.l.b16 %v135
    %v1468 = vunpack.c.h.b16 %v135
    %v1469 = vunpack.c.l.b16 %v136
    %v1470 = vunpack.c.h.b16 %v136
    %v1471 = vunpack.c.l.b16 %v137
    %v1472 = vunpack.c.h.b16 %v137
    %v1473 = vunpack.c.l.b16 %v138
    %v1474 = vunpack.c.h.b16 %v138
    %v1475 = vunpack.c.l.b16 %v139
    %v1476 = vunpack.c.h.b16 %v139
    %v1477 = vunpack.c.l.b16 %v140
    %v1478 = vunpack.c.h.b16 %v140
    %v1479 = vunpack.c.l.b16 %v141
    %v1480 = vunpack.c.h.b16 %v141
    %v1481 = vunpack.c.l.b16 %v142
    %v1482 = vunpack.c.h.b16 %v142
    %v1483 = vunpack.c.l.b16 %v143
    %v1484 = vunpack.c.h.b16 %v143
    %v1485 = vunpack.c.l.b16 %v144
    %v1486 = vunpack.c.h.b16 %v144
    %v1487 = vunpack.c.l.b16 %v145
    %v1488 = vunpack.c.h.b16 %v145
    %v1489 = vunpack.c.l.b16 %v146
    %v1490 = vunpack.c.h.b16 %v146
    %v1491 = vunpack.c.l.b16 %v147
    %v1492 = vunpack.c.h.b16 %v147
    %v1493 = vunpack.c.l.b16 %v148
    %v1494 = vunpack.c.h.b16 %v148
    %v1495 = vunpack.c.l.b16 %v149
    %v1496 = vunpack.c.h.b16 %v149
    %v1497 = vunpack.c.l.b16 %v150
    %v1498 = vunpack.c.h.b16 %v150
    %v1499 = vunpack.c.l.b16 %v151
    %v1500 = vunpack.c.h.b16 %v151
    %v1501 = vunpack.c.l.b16 %v152
    %v1502 = vunpack.c.h.b16 %v152
    %v1503 = vunpack.c.l.b16 %v153
    %v1504 = vunpack.c.h.b16 %v153
    %v1505 = vunpack.c.l.b16 %v154
    %v1506 = vunpack.c.h.b16 %v154
    %v1507 = vunpack.c.l.b16 %v155
    %v1508 = vunpack.c.h.b16 %v155
    %v1509 = vunpack.c.l.b16 %v156
    %v1510 = vunpack.c.h.b16 %v156
    %v1511 = vunpack.c.l.b16 %v157
    %v1512 = vunpack.c.h.b16 %v157
    %v1513 = vunpack.c.l.b16 %v158
    %v1514 = vunpack.c.h.b16 %v158
    %v1515 = vunpack.c.l.b16 %v159
    %v1516 = vunpack.c.h.b16 %v159
    %v1517 = vunpack.c.l.b16 %v160
    %v1518 = vunpack.c.h.b16 %v160
    %v1519 = vunpack.c.l.b16 %v161
    %v1520 = vunpack.c.h.b16 %v161
    %v1521 = vunpack.c.l.b16 %v162
    %v1522 = vunpack.c.h.b16 %v162
    %v1523 = vunpack.c.l.b16 %v163
    %v1524 = vunpack.c.h.b16 %v163
    %v1525 = vunpack.c.l.b16 %v164
    %v1526 = vunpack.c.h.b16 %v164
    %v1527 = vunpack.c.l.b16 %v165
    %v1528 = vunpack.c.h.b16 %v165
    %v1529 = vunpack.c.l.b16 %v166
    %v1530 = vunpack.c.h.b16 %v166
    %v1531 = vunpack.c.l.b16 %v167
    %v1532 = vunpack.c.h.b16 %v167
    %v1533 = vunpack.c.l.b16 %v168
    %v1534 = vunpack.c.h.b16 %v168
    %v1535 = vunpack.c.l.b16 %v169
    %v1536 = vunpack.c.h.b16 %v169
    %v1537 = vunpack.c.l.b16 %v170
    %v1538 = vunpack.c.h.b16 %v170
    %v1539 = vunpack.c.l.b16 %v171
    %v1540 = vunpack.c.h.b16 %v171
    %v1541 = vunpack.c.l.b16 %v172
    %v1542 = vunpack.c.h.b16 %v172
    %v1543 = vunpack.c.l.b16 %v173
    %v1544 = vunpack.c.h.b16 %v173
    %v1545 = vunpack.c.l.b16 %v174
    %v1546 = vunpack.c.h.b16 %v174
    %v1547 = vunpack.c.l.b16 %v175
    %v1548 = vunpack.c.h.b16 %v175
    %v1549 = vunpack.c.l.b16 %v176
    %v1550 = vunpack.c.h.b16 %v176
    %v1551 = vunpack.c.l.b16 %v177
    %v1552 = vunpack.c.h.b16 %v177
    %v1553 = vunpack.c.l.b16 %v178
    %v1554 = vunpack.c.h.b16 %v178
    %v1555 = vunpack.c.l.b16 %v179
    %v1556 = vunpack.c.h.b16 %v179
    %v1557 = vunpack.c.l.b16 %v180
    %v1558 = vunpack.c.h.b16 %v180
    %v1559 = vunpack.c.l.b16 %v181
    %v1560 = vunpack.c.h.b16 %v181
    %v1561 = vunpack.c.l.b16 %v182
    %v1562 = vunpack.c.h.b16 %v182
    %v1563 = vunpack.c.l.b16 %v183
    %v1564 = vunpack.c.h.b16 %v183
    %v1565 = vunpack.c.l.b16 %v184
    %v1566 = vunpack.c.h.b16 %v184
    %v1567 = vunpack.c.l.b16 %v185
    %v1568 = vunpack.c.h.b16 %v185
    %v1569 = vunpack.c.l.b16 %v186
    %v1570 = vunpack.c.h.b16 %v186
    %v1571 = vunpack.c.l.b16 %v187
    %v1572 = vunpack.c.h.b16 %v187
    %v1573 = vunpack.c.l.b16 %v188
    %v1574 = vunpack.c.h.b16 %v188
    %v1575 = vpack.c.b16 %v1323, %v1319
    %v1576 = vpack.c.b16 %v1324, %v1320
    %v1577 = vpack.c.b16 %v1325, %v1321
    %v1578 = vpack.c.b16 %v1326, %v1322
    %v1579 = vpack.c.b16 %v1331, %v1327
    %v1580 = vpack.c.b16 %v1332, %v1328
    %v1581 = vpack.c.b16 %v1333, %v1329
    %v1582 = vpack.c.b16 %v1334, %v1330
    %v1583 = vpack.c.b16 %v1339, %v1335
    %v1584 = vpack.c.b16 %v1340, %v1336
    %v1585 = vpack.c.b16 %v1341, %v1337
    %v1586 = vpack.c.b16 %v1342, %v1338
    %v1587 = vpack.c.b16 %v1347, %v1343
    %v1588 = vpack.c.b16 %v1348, %v1344
    %v1589 = vpack.c.b16 %v1349, %v1345
    %v1590 = vpack.c.b16 %v1350, %v1346
    %v1591 = vpack.c.b16 %v1355, %v1351
    %v1592 = vpack.c.b16 %v1356, %v1352
    %v1593 = vpack.c.b16 %v1357, %v1353
    %v1594 = vpack.c.b16 %v1358, %v1354
    %v1595 = vpack.c.b16 %v1363, %v1359
    %v1596 = vpack.c.b16 %v1364, %v1360
    %v1597 = vpack.c.b16 %v1365, %v1361
    %v1598 = vpack.c.b16 %v1366, %v1362
    %v1599 = vpack.c.b16 %v1371, %v1367
    %v1600 = vpack.c.b16 %v1372, %v1368
    %v1601 = vpack.c.b16 %v1373, %v1369
    %v1602 = vpack.c.b16 %v1374, %v1370
    %v1603 = vpack.c.b16 %v1379, %v1375
    %v1604 = vpack.c.b16 %v1380, %v1376
    %v1605 = vpack.c.b16 %v1381, %v1377
    %v1606 = vpack.c.b16 %v1382, %v1378
    %v1607 = vpack.c.b16 %v1387, %v1383
    %v1608 = vpack.c.b16 %v1388, %v1384
    %v1609 = vpack.c.b16 %v1389, %v1385
    %v1610 = vpack.c.b16 %v1390, %v1386
    %v1611 = vpack.c.b16 %v1395, %v1391
    %v1612 = vpack.c.b16 %v1396, %v1392
    %v1613 = vpack.c.b16 %v1397, %v1393
    %v1614 = vpack.c.b16 %v1398, %v1394
    %v1615 = vpack.c.b16 %v1403, %v1399
    %v1616 = vpack.c.b16 %v1404, %v1400
    %v1617 = vpack.c.b16 %v1405, %v1401
    %v1618 = vpack.c.b16 %v1406, %v1402
    %v1619 = vpack.c.b16 %v1411, %v1407
    %v1620 = vpack.c.b16 %v1412, %v1408
    %v1621 = vpack.c.b16 %v1413, %v1409
    %v1622 = vpack.c.b16 %v1414, %v1410
    %v1623 = vpack.c.b16 %v1419, %v1415
    %v1624 = vpack.c.b16 %v1420, %v1416
    %v1625 = vpack.c.b16 %v1421, %v1417
    %v1626 = vpack.c.b16 %v1422, %v1418
    %v1627 = vpack.c.b16 %v1427, %v1423
    %v1628 = vpack.c.b16 %v1428, %v1424
    %v1629 = vpack.c.b16 %v1429, %v1425
    %v1630 = vpack.c.b16 %v1430, %v1426
    %v1631 = vpack.c.b16 %v1435, %v1431
    %v1632 = vpack.c.b16 %v1436, %v1432
    %v1633 = vpack.c.b16 %v1437, %v1433
    %v1634 = vpack.c.b16 %v1438, %v1434
    %v1635 = vpack.c.b16 %v1443, %v1439
    %v1636 = vpack.c.b16 %v1444, %v1440
    %v1637 = vpack.c.b16 %v1445, %v1441
    %v1638 = vpack.c.b16 %v1446, %v1442
    %v1639 = vpack.c.b16 %v1451, %v1447
    %v1640 = vpack.c.b16 %v1452, %v1448
    %v1641 = vpack.c.b16 %v1453, %v1449
    %v1642 = vpack.c.b16 %v1454, %v1450
    %v1643 = vpack.c.b16 %v1459, %v1455
    %v1644 = vpack.c.b16 %v1460, %v1456
    %v1645 = vpack.c.b16 %v1461, %v1457
    %v1646 = vpack.c.b16 %v1462, %v1458
    %v1647 = vpack.c.b16 %v1467, %v1463
    %v1648 = vpack.c.b16 %v1468, %v1464
    %v1649 = vpack.c.b16 %v1469, %v1465
    %v1650 = vpack.c.b16 %v1470, %v1466
    %v1651 = vpack.c.b16 %v1475, %v1471
    %v1652 = vpack.c.b16 %v1476, %v1472
    %v1653 = vpack.c.b16 %v1477, %v1473
    %v1654 = vpack.c.b16 %v1478, %v1474
    %v1655 = vpack.c.b16 %v1483, %v1479
    %v1656 = vpack.c.b16 %v1484, %v1480
    %v1657 = vpack.c.b16 %v1485, %v1481
    %v1658 = vpack.c.b16 %v1486, %v1482
    %v1659 = vpack.c.b16 %v1491, %v1487
    %v1660 = vpack.c.b16 %v1492, %v1488
    %v1661 = vpack.c.b16 %v1493, %v1489
    %v1662 = vpack.c.b16 %v1494, %v1490
    %v1663 = vpack.c.b16 %v1499, %v1495
    %v1664 = vpack.c.b16 %v1500, %v1496
    %v1665 = vpack.c.b16 %v1501, %v1497
    %v1666 = vpack.c.b16 %v1502, %v1498
    %v1667 = vpack.c.b16 %v1507, %v1503
    %v1668 = vpack.c.b16 %v1508, %v1504
    %v1669 = vpack.c.b16 %v1509, %v1505
    %v1670 = vpack.c.b16 %v1510, %v1506
    %v1671 = vpack.c.b16 %v1515, %v1511
    %v1672 = vpack.c.b16 %v1516, %v1512
    %v1673 = vpack.c.b16 %v1517, %v1513
    %v1674 = vpack.c.b16 %v1518, %v1514
    %v1675 = vpack.c.b16 %v1523, %v1519
    %v1676 = vpack.c.b16 %v1524, %v1520
    %v1677 = vpack.c.b16 %v1525, %v1521
    %v1678 = vpack.c.b16 %v1526, %v1522
    %v1679 = vpack.c.b16 %v1531, %v1527
    %v1680 = vpack.c.b16 %v1532, %v1528
    %v1681 = vpack.c.b16 %v1533, %v1529
    %v1682 = vpack.c.b16 %v1534, %v1530
    %v1683 = vpack.c.b16 %v1539, %v1535
    %v1684 = vpack.c.b16 %v1540, %v1536
    %v1685 = vpack.c.b16 %v1541, %v1537
    %v1686 = vpack.c.b16 %v1542, %v1538
    %v1687 = vpack.c.b16 %v1547, %v1543
    %v1688 = vpack.c.b16 %v1548, %v1544
    %v1689 = vpack.c.b16 %v1549, %v1545
    %v1690 = vpack.c.b16 %v1550, %v1546
    %v1691 = vpack.c.b16 %v1555, %v1551
    %v1692 = vpack.c.b16 %v1556, %v1552
    %v1693 = vpack.c.b16 %v1557, %v1553
    %v1694 = vpack.c.b16 %v1558, %v1554
    %v1695 = vpack.c.b16 %v1563, %v1559
    %v1696 = vpack.c.b16 %v1564, %v1560
    %v1697 = vpack.c.b16 %v1565, %v1561
    %v1698 = vpack.c.b16 %v1566, %v1562
    %v1699 = vpack.c.b16 %v1571, %v1567
    %v1700 = vpack.c.b16 %v1572, %v1568
    %v1701 = vpack.c.b16 %v1573, %v1569
    %v1702 = vpack.c.b16 %v1574, %v1570
    %1831 = vmatprep.subr.bf16.mxu0 %v1604
    %1832 = vmatpush1.bf16.msra.mxu0 %v1603
    %1833 = vmatprep.subr.bf16.mxu0 %v1600
    %1834 = vmatpush1.bf16.msra.mxu0 %v1599
    %1835 = vmatprep.subr.bf16.mxu0 %v1596
    %1836 = vmatpush1.bf16.msra.mxu0 %v1595
    %1837 = vmatprep.subr.bf16.mxu0 %v1592
    %1838 = vmatpush1.bf16.msra.mxu0 %v1591
    %1839 = vmatprep.subr.bf16.mxu0 %v1588
    %1840 = vmatpush1.bf16.msra.mxu0 %v1587
    %1841 = vmatprep.subr.bf16.mxu0 %v1584
    %1842 = vmatpush1.bf16.msra.mxu0 %v1583
    %1843 = vmatprep.subr.bf16.mxu0 %v1580
    %1844 = vmatpush1.bf16.msra.mxu0 %v1579
    %1845 = vmatprep.subr.bf16.mxu0 %v1576
    %1846 = vmatpush1.bf16.msra.mxu0 %v1575
    %1847 = vmatprep.subr.bf16.mxu0 %v1636
    %1848 = vmatpush2.bf16.msra.mxu0 %v1635
    %1849 = vmatprep.subr.bf16.mxu0 %v1632
    %1850 = vmatpush2.bf16.msra.mxu0 %v1631
    %1851 = vmatprep.subr.bf16.mxu0 %v1628
    %1852 = vmatpush2.bf16.msra.mxu0 %v1627
    %1853 = vmatprep.subr.bf16.mxu0 %v1624
    %1854 = vmatpush2.bf16.msra.mxu0 %v1623
    %1855 = vmatprep.subr.bf16.mxu0 %v1620
    %1856 = vmatpush2.bf16.msra.mxu0 %v1619
    %1857 = vmatprep.subr.bf16.mxu0 %v1616
    %1858 = vmatpush2.bf16.msra.mxu0 %v1615
    %1859 = vmatprep.subr.bf16.mxu0 %v1612
    %1860 = vmatpush2.bf16.msra.mxu0 %v1611
    %1861 = vmatprep.subr.bf16.mxu0 %v1608
    %1862 = vmatpush2.bf16.msra.mxu0 %v1607
    %1863 = vmatprep.mubr.bf16.mxu0 %v1184
    %1864 = vmatmul.mubr.bf16.gmra.mxu0 %v1183
    %v1865 = vpop.f32.mrf.mxu0
    %v1866 = vadd.f32 %v1077, %v1865
    %v1867 = vpop.f32.mrf.mxu0
    %v1868 = vadd.f32 %v1079, %v1867
    %v1869 = vpop.f32.mrf.mxu0
    %v1870 = vadd.f32 %v1081, %v1869
    %v1871 = vpop.f32.mrf.mxu0
    %v1872 = vadd.f32 %v1083, %v1871
    %1873 = vdwg.mxu0
    %1874 = vmatprep.subr.bf16.mxu0 %v1668
    %1875 = vmatpush1.bf16.msra.mxu0 %v1667
    %1876 = vmatprep.subr.bf16.mxu0 %v1664
    %1877 = vmatpush1.bf16.msra.mxu0 %v1663
    %1878 = vmatprep.subr.bf16.mxu0 %v1660
    %1879 = vmatpush1.bf16.msra.mxu0 %v1659
    %1880 = vmatprep.subr.bf16.mxu0 %v1656
    %1881 = vmatpush1.bf16.msra.mxu0 %v1655
    %1882 = vmatprep.subr.bf16.mxu0 %v1652
    %1883 = vmatpush1.bf16.msra.mxu0 %v1651
    %1884 = vmatprep.subr.bf16.mxu0 %v1648
    %1885 = vmatpush1.bf16.msra.mxu0 %v1647
    %1886 = vmatprep.subr.bf16.mxu0 %v1644
    %1887 = vmatpush1.bf16.msra.mxu0 %v1643
    %1888 = vmatprep.subr.bf16.mxu0 %v1640
    %1889 = vmatpush1.bf16.msra.mxu0 %v1639
    %1890 = vmatprep.subr.bf16.mxu0 %v1700
    %1891 = vmatpush2.bf16.msra.mxu0 %v1699
    %1892 = vmatprep.subr.bf16.mxu0 %v1696
    %1893 = vmatpush2.bf16.msra.mxu0 %v1695
    %1894 = vmatprep.subr.bf16.mxu0 %v1692
    %1895 = vmatpush2.bf16.msra.mxu0 %v1691
    %1896 = vmatprep.subr.bf16.mxu0 %v1688
    %1897 = vmatpush2.bf16.msra.mxu0 %v1687
    %1898 = vmatprep.subr.bf16.mxu0 %v1684
    %1899 = vmatpush2.bf16.msra.mxu0 %v1683
    %1900 = vmatprep.subr.bf16.mxu0 %v1680
    %1901 = vmatpush2.bf16.msra.mxu0 %v1679
    %1902 = vmatprep.subr.bf16.mxu0 %v1676
    %1903 = vmatpush2.bf16.msra.mxu0 %v1675
    %1904 = vmatprep.subr.bf16.mxu0 %v1672
    %1905 = vmatpush2.bf16.msra.mxu0 %v1671
    %1906 = vmatprep.mubr.bf16.mxu0 %v1186
    %1907 = vmatmul.mubr.bf16.gmra.mxu0 %v1185
    %v1908 = vpop.f32.mrf.mxu0
    %v1909 = vadd.f32 %v1866, %v1908
    %v1910 = vpop.f32.mrf.mxu0
    %v1911 = vadd.f32 %v1868, %v1910
    %v1912 = vpop.f32.mrf.mxu0
    %v1913 = vadd.f32 %v1870, %v1912
    %v1914 = vpop.f32.mrf.mxu0
    %v1915 = vadd.f32 %v1872, %v1914
    %1916 = vdwg.mxu0
    %1917 = vmatprep.subr.bf16.mxu0 %v1606
    %1918 = vmatpush1.bf16.msra.mxu0 %v1605
    %1919 = vmatprep.subr.bf16.mxu0 %v1602
    %1920 = vmatpush1.bf16.msra.mxu0 %v1601
    %1921 = vmatprep.subr.bf16.mxu0 %v1598
    %1922 = vmatpush1.bf16.msra.mxu0 %v1597
    %1923 = vmatprep.subr.bf16.mxu0 %v1594
    %1924 = vmatpush1.bf16.msra.mxu0 %v1593
    %1925 = vmatprep.subr.bf16.mxu0 %v1590
    %1926 = vmatpush1.bf16.msra.mxu0 %v1589
    %1927 = vmatprep.subr.bf16.mxu0 %v1586
    %1928 = vmatpush1.bf16.msra.mxu0 %v1585
    %1929 = vmatprep.subr.bf16.mxu0 %v1582
    %1930 = vmatpush1.bf16.msra.mxu0 %v1581
    %1931 = vmatprep.subr.bf16.mxu0 %v1578
    %1932 = vmatpush1.bf16.msra.mxu0 %v1577
    %1933 = vmatprep.subr.bf16.mxu0 %v1638
    %1934 = vmatpush2.bf16.msra.mxu0 %v1637
    %1935 = vmatprep.subr.bf16.mxu0 %v1634
    %1936 = vmatpush2.bf16.msra.mxu0 %v1633
    %1937 = vmatprep.subr.bf16.mxu0 %v1630
    %1938 = vmatpush2.bf16.msra.mxu0 %v1629
    %1939 = vmatprep.subr.bf16.mxu0 %v1626
    %1940 = vmatpush2.bf16.msra.mxu0 %v1625
    %1941 = vmatprep.subr.bf16.mxu0 %v1622
    %1942 = vmatpush2.bf16.msra.mxu0 %v1621
    %1943 = vmatprep.subr.bf16.mxu0 %v1618
    %1944 = vmatpush2.bf16.msra.mxu0 %v1617
    %1945 = vmatprep.subr.bf16.mxu0 %v1614
    %1946 = vmatpush2.bf16.msra.mxu0 %v1613
    %1947 = vmatprep.subr.bf16.mxu0 %v1610
    %1948 = vmatpush2.bf16.msra.mxu0 %v1609
    %1949 = vmatprep.mubr.bf16.mxu0 %v1184
    %1950 = vmatmul.mubr.bf16.gmra.mxu0 %v1183
    %v1951 = vpop.f32.mrf.mxu0
    %v1952 = vadd.f32 %v1163, %v1951
    %v1953 = vpop.f32.mrf.mxu0
    %v1954 = vadd.f32 %v1165, %v1953
    %v1955 = vpop.f32.mrf.mxu0
    %v1956 = vadd.f32 %v1167, %v1955
    %v1957 = vpop.f32.mrf.mxu0
    %v1958 = vadd.f32 %v1169, %v1957
    %1959 = vdwg.mxu0
    %1960 = vmatprep.subr.bf16.mxu0 %v1670
    %1961 = vmatpush1.bf16.msra.mxu0 %v1669
    %1962 = vmatprep.subr.bf16.mxu0 %v1666
    %1963 = vmatpush1.bf16.msra.mxu0 %v1665
    %1964 = vmatprep.subr.bf16.mxu0 %v1662
    %1965 = vmatpush1.bf16.msra.mxu0 %v1661
    %1966 = vmatprep.subr.bf16.mxu0 %v1658
    %1967 = vmatpush1.bf16.msra.mxu0 %v1657
    %1968 = vmatprep.subr.bf16.mxu0 %v1654
    %1969 = vmatpush1.bf16.msra.mxu0 %v1653
    %1970 = vmatprep.subr.bf16.mxu0 %v1650
    %1971 = vmatpush1.bf16.msra.mxu0 %v1649
    %1972 = vmatprep.subr.bf16.mxu0 %v1646
    %1973 = vmatpush1.bf16.msra.mxu0 %v1645
    %1974 = vmatprep.subr.bf16.mxu0 %v1642
    %1975 = vmatpush1.bf16.msra.mxu0 %v1641
    %1976 = vmatprep.subr.bf16.mxu0 %v1702
    %1977 = vmatpush2.bf16.msra.mxu0 %v1701
    %1978 = vmatprep.subr.bf16.mxu0 %v1698
    %1979 = vmatpush2.bf16.msra.mxu0 %v1697
    %1980 = vmatprep.subr.bf16.mxu0 %v1694
    %1981 = vmatpush2.bf16.msra.mxu0 %v1693
    %1982 = vmatprep.subr.bf16.mxu0 %v1690
    %1983 = vmatpush2.bf16.msra.mxu0 %v1689
    %1984 = vmatprep.subr.bf16.mxu0 %v1686
    %1985 = vmatpush2.bf16.msra.mxu0 %v1685
    %1986 = vmatprep.subr.bf16.mxu0 %v1682
    %1987 = vmatpush2.bf16.msra.mxu0 %v1681
    %1988 = vmatprep.subr.bf16.mxu0 %v1678
    %1989 = vmatpush2.bf16.msra.mxu0 %v1677
    %1990 = vmatprep.subr.bf16.mxu0 %v1674
    %1991 = vmatpush2.bf16.msra.mxu0 %v1673
    %1992 = vmatprep.mubr.bf16.mxu0 %v1186
    %1993 = vmatmul.mubr.bf16.gmra.mxu0 %v1185
    %v1994 = vpop.f32.mrf.mxu0
    %v1995 = vadd.f32 %v1952, %v1994
    %v1996 = vpop.f32.mrf.mxu0
    %v1997 = vadd.f32 %v1954, %v1996
    %v1998 = vpop.f32.mrf.mxu0
    %v1999 = vadd.f32 %v1956, %v1998
    %v2000 = vpop.f32.mrf.mxu0
    %v2001 = vadd.f32 %v1958, %v2000
    %2002 = vdwg.mxu0
    %v2003 = vld [vmem:[#allocation9] ss:$8 sm:$0xf]
    %v2005 = vlaneseq
    %v2006 = vshrl.u32 %v2005, 7
    %v2007 = vsub.s32 0, %v2006
    %v2008 = vrot.slane %v2003, %v2007
    %v2009 = vlaneseq
    %v2010 = vshrl.u32 %v2009, 7
    %v2011 = vsub.s32 1, %v2010
    %v2012 = vrot.slane %v2003, %v2011
    %v2013 = vlaneseq
    %v2014 = vshrl.u32 %v2013, 7
    %v2015 = vsub.s32 2, %v2014
    %v2016 = vrot.slane %v2003, %v2015
    %v2017 = vlaneseq
    %v2018 = vshrl.u32 %v2017, 7
    %v2019 = vsub.s32 3, %v2018
    %v2020 = vrot.slane %v2003, %v2019
    %v2025 = vadd.f32 %v1909, %v2008
    %v2026 = vadd.f32 %v1911, %v2012
    %v2027 = vadd.f32 %v1995, %v2016
    %v2028 = vadd.f32 %v1997, %v2020
    %v2029 = vadd.f32 %v1913, %v2008
    %v2030 = vadd.f32 %v1915, %v2012
    %v2031 = vadd.f32 %v1999, %v2016
    %v2032 = vadd.f32 %v2001, %v2020
    %v2033 = vmax.f32 %v2025, 0.0
    %v2034 = vmax.f32 %v2026, 0.0
    %v2035 = vmax.f32 %v2027, 0.0
    %v2036 = vmax.f32 %v2028, 0.0
    %v2037 = vmax.f32 %v2029, 0.0
    %v2038 = vmax.f32 %v2030, 0.0
    %v2039 = vmax.f32 %v2031, 0.0
    %v2040 = vmax.f32 %v2032, 0.0
    %s2041 = smul.u32 4, 128
    %s2042 = smul.u32 %s2041, 8
    %s2043 = sshll.u32 %s2042, 4
    %2044 = dma.done %s195, %s2043
    %s2045 = scalar_lea.sflag [#allocation8], 3
    %p2047 = scmp.lt.u32.totalorder 2048, 8
    %p2048 = pneg %p2047
    // Predicated region
    $region26: #{_lambda_.1} parent=1 // pred_check
      _
    $region27: #{_lambda_.1} parent=1 // pred_check_branch
      %2050 = sbr.rel (%p2047) target = $region29
    $region28: #{_lambda_.1} parent=1 // pred_region
      %s2066 = sand.u32 2048, 7
      %p2067 = scmp.eq.s32.totalorder %s2066, 0
      // Predicated region
      $region41: #{_lambda_.1} parent=28 // pred_check
        %p2068 = pneg %p2067
      $region42: #{_lambda_.1} parent=28 // pred_check_branch
        %2070 = sbr.rel (%p2068) target = $region44
      $region43: #{_lambda_.1} parent=28 // pred_region
        loop: start=0, step=1, limit=1
        $region45: #{_lambda_.1} parent=43 // loop_pre_header
          _
        $region46: #{_lambda_.1} parent=43 // loop_header
          %s2072 = sphi 0, %s2076
          %p2073 = scmp.ge.s32.totalorder %s2072, 1
          %s2077 = sphi %s4, %s4
          %s2078 = sphi [#allocation4], [#allocation4]
        $region47: #{_lambda_.1} parent=43 // loop_header_branch
          %2075 = sbr.rel (%p2073) target = $region51
        $region48: #{_lambda_.1} parent=43 // loop_body
          %v2079 = vld [vmem:[%s2077] sm:$0xff]
          %2080 = vst [vmem:[%s2078] sm:$0xff] %v2079
          %v2081 = vld [vmem:[%s2077 + $0x8] sm:$0xff]
          %2082 = vst [vmem:[%s2078 + $0x8] sm:$0xff] %v2081
          %v2083 = vld [vmem:[%s2077 + $0x10] sm:$0xff]
          %2084 = vst [vmem:[%s2078 + $0x10] sm:$0xff] %v2083
          %v2085 = vld [vmem:[%s2077 + $0x18] sm:$0xff]
          %2086 = vst [vmem:[%s2078 + $0x18] sm:$0xff] %v2085
          %v2087 = vld [vmem:[%s2077 + $0x20] sm:$0xff]
          %2088 = vst [vmem:[%s2078 + $0x20] sm:$0xff] %v2087
          %v2089 = vld [vmem:[%s2077 + $0x28] sm:$0xff]
          %2090 = vst [vmem:[%s2078 + $0x28] sm:$0xff] %v2089
          %v2091 = vld [vmem:[%s2077 + $0x30] sm:$0xff]
          %2092 = vst [vmem:[%s2078 + $0x30] sm:$0xff] %v2091
          %v2093 = vld [vmem:[%s2077 + $0x38] sm:$0xff]
          %2094 = vst [vmem:[%s2078 + $0x38] sm:$0xff] %v2093
          %v2095 = vld [vmem:[%s2077 + $0x40] sm:$0xff]
          %2096 = vst [vmem:[%s2078 + $0x40] sm:$0xff] %v2095
          %v2097 = vld [vmem:[%s2077 + $0x48] sm:$0xff]
          %2098 = vst [vmem:[%s2078 + $0x48] sm:$0xff] %v2097
          %v2099 = vld [vmem:[%s2077 + $0x50] sm:$0xff]
          %2100 = vst [vmem:[%s2078 + $0x50] sm:$0xff] %v2099
          %v2101 = vld [vmem:[%s2077 + $0x58] sm:$0xff]
          %2102 = vst [vmem:[%s2078 + $0x58] sm:$0xff] %v2101
          %v2103 = vld [vmem:[%s2077 + $0x60] sm:$0xff]
          %2104 = vst [vmem:[%s2078 + $0x60] sm:$0xff] %v2103
          %v2105 = vld [vmem:[%s2077 + $0x68] sm:$0xff]
          %2106 = vst [vmem:[%s2078 + $0x68] sm:$0xff] %v2105
          %v2107 = vld [vmem:[%s2077 + $0x70] sm:$0xff]
          %2108 = vst [vmem:[%s2078 + $0x70] sm:$0xff] %v2107
          %v2109 = vld [vmem:[%s2077 + $0x78] sm:$0xff]
          %2110 = vst [vmem:[%s2078 + $0x78] sm:$0xff] %v2109
          %v2111 = vld [vmem:[%s2077 + $0x80] sm:$0xff]
          %2112 = vst [vmem:[%s2078 + $0x80] sm:$0xff] %v2111
          %v2113 = vld [vmem:[%s2077 + $0x88] sm:$0xff]
          %2114 = vst [vmem:[%s2078 + $0x88] sm:$0xff] %v2113
          %v2115 = vld [vmem:[%s2077 + $0x90] sm:$0xff]
          %2116 = vst [vmem:[%s2078 + $0x90] sm:$0xff] %v2115
          %v2117 = vld [vmem:[%s2077 + $0x98] sm:$0xff]
          %2118 = vst [vmem:[%s2078 + $0x98] sm:$0xff] %v2117
          %v2119 = vld [vmem:[%s2077 + $0xa0] sm:$0xff]
          %2120 = vst [vmem:[%s2078 + $0xa0] sm:$0xff] %v2119
          %v2121 = vld [vmem:[%s2077 + $0xa8] sm:$0xff]
          %2122 = vst [vmem:[%s2078 + $0xa8] sm:$0xff] %v2121
          %v2123 = vld [vmem:[%s2077 + $0xb0] sm:$0xff]
          %2124 = vst [vmem:[%s2078 + $0xb0] sm:$0xff] %v2123
          %v2125 = vld [vmem:[%s2077 + $0xb8] sm:$0xff]
          %2126 = vst [vmem:[%s2078 + $0xb8] sm:$0xff] %v2125
          %v2127 = vld [vmem:[%s2077 + $0xc0] sm:$0xff]
          %2128 = vst [vmem:[%s2078 + $0xc0] sm:$0xff] %v2127
          %v2129 = vld [vmem:[%s2077 + $0xc8] sm:$0xff]
          %2130 = vst [vmem:[%s2078 + $0xc8] sm:$0xff] %v2129
          %v2131 = vld [vmem:[%s2077 + $0xd0] sm:$0xff]
          %2132 = vst [vmem:[%s2078 + $0xd0] sm:$0xff] %v2131
          %v2133 = vld [vmem:[%s2077 + $0xd8] sm:$0xff]
          %2134 = vst [vmem:[%s2078 + $0xd8] sm:$0xff] %v2133
          %v2135 = vld [vmem:[%s2077 + $0xe0] sm:$0xff]
          %2136 = vst [vmem:[%s2078 + $0xe0] sm:$0xff] %v2135
          %v2137 = vld [vmem:[%s2077 + $0xe8] sm:$0xff]
          %2138 = vst [vmem:[%s2078 + $0xe8] sm:$0xff] %v2137
          %v2139 = vld [vmem:[%s2077 + $0xf0] sm:$0xff]
          %2140 = vst [vmem:[%s2078 + $0xf0] sm:$0xff] %v2139
          %v2141 = vld [vmem:[%s2077 + $0xf8] sm:$0xff]
          %2142 = vst [vmem:[%s2078 + $0xf8] sm:$0xff] %v2141
          %v2143 = vld [vmem:[%s2077 + $0x100] sm:$0xff]
          %2144 = vst [vmem:[%s2078 + $0x100] sm:$0xff] %v2143
          %v2145 = vld [vmem:[%s2077 + $0x108] sm:$0xff]
          %2146 = vst [vmem:[%s2078 + $0x108] sm:$0xff] %v2145
          %v2147 = vld [vmem:[%s2077 + $0x110] sm:$0xff]
          %2148 = vst [vmem:[%s2078 + $0x110] sm:$0xff] %v2147
          %v2149 = vld [vmem:[%s2077 + $0x118] sm:$0xff]
          %2150 = vst [vmem:[%s2078 + $0x118] sm:$0xff] %v2149
          %v2151 = vld [vmem:[%s2077 + $0x120] sm:$0xff]
          %2152 = vst [vmem:[%s2078 + $0x120] sm:$0xff] %v2151
          %v2153 = vld [vmem:[%s2077 + $0x128] sm:$0xff]
          %2154 = vst [vmem:[%s2078 + $0x128] sm:$0xff] %v2153
          %v2155 = vld [vmem:[%s2077 + $0x130] sm:$0xff]
          %2156 = vst [vmem:[%s2078 + $0x130] sm:$0xff] %v2155
          %v2157 = vld [vmem:[%s2077 + $0x138] sm:$0xff]
          %2158 = vst [vmem:[%s2078 + $0x138] sm:$0xff] %v2157
          %v2159 = vld [vmem:[%s2077 + $0x140] sm:$0xff]
          %2160 = vst [vmem:[%s2078 + $0x140] sm:$0xff] %v2159
          %v2161 = vld [vmem:[%s2077 + $0x148] sm:$0xff]
          %2162 = vst [vmem:[%s2078 + $0x148] sm:$0xff] %v2161
          %v2163 = vld [vmem:[%s2077 + $0x150] sm:$0xff]
          %2164 = vst [vmem:[%s2078 + $0x150] sm:$0xff] %v2163
          %v2165 = vld [vmem:[%s2077 + $0x158] sm:$0xff]
          %2166 = vst [vmem:[%s2078 + $0x158] sm:$0xff] %v2165
          %v2167 = vld [vmem:[%s2077 + $0x160] sm:$0xff]
          %2168 = vst [vmem:[%s2078 + $0x160] sm:$0xff] %v2167
          %v2169 = vld [vmem:[%s2077 + $0x168] sm:$0xff]
          %2170 = vst [vmem:[%s2078 + $0x168] sm:$0xff] %v2169
          %v2171 = vld [vmem:[%s2077 + $0x170] sm:$0xff]
          %2172 = vst [vmem:[%s2078 + $0x170] sm:$0xff] %v2171
          %v2173 = vld [vmem:[%s2077 + $0x178] sm:$0xff]
          %2174 = vst [vmem:[%s2078 + $0x178] sm:$0xff] %v2173
          %v2175 = vld [vmem:[%s2077 + $0x180] sm:$0xff]
          %2176 = vst [vmem:[%s2078 + $0x180] sm:$0xff] %v2175
          %v2177 = vld [vmem:[%s2077 + $0x188] sm:$0xff]
          %2178 = vst [vmem:[%s2078 + $0x188] sm:$0xff] %v2177
          %v2179 = vld [vmem:[%s2077 + $0x190] sm:$0xff]
          %2180 = vst [vmem:[%s2078 + $0x190] sm:$0xff] %v2179
          %v2181 = vld [vmem:[%s2077 + $0x198] sm:$0xff]
          %2182 = vst [vmem:[%s2078 + $0x198] sm:$0xff] %v2181
          %v2183 = vld [vmem:[%s2077 + $0x1a0] sm:$0xff]
          %2184 = vst [vmem:[%s2078 + $0x1a0] sm:$0xff] %v2183
          %v2185 = vld [vmem:[%s2077 + $0x1a8] sm:$0xff]
          %2186 = vst [vmem:[%s2078 + $0x1a8] sm:$0xff] %v2185
          %v2187 = vld [vmem:[%s2077 + $0x1b0] sm:$0xff]
          %2188 = vst [vmem:[%s2078 + $0x1b0] sm:$0xff] %v2187
          %v2189 = vld [vmem:[%s2077 + $0x1b8] sm:$0xff]
          %2190 = vst [vmem:[%s2078 + $0x1b8] sm:$0xff] %v2189
          %v2191 = vld [vmem:[%s2077 + $0x1c0] sm:$0xff]
          %2192 = vst [vmem:[%s2078 + $0x1c0] sm:$0xff] %v2191
          %v2193 = vld [vmem:[%s2077 + $0x1c8] sm:$0xff]
          %2194 = vst [vmem:[%s2078 + $0x1c8] sm:$0xff] %v2193
          %v2195 = vld [vmem:[%s2077 + $0x1d0] sm:$0xff]
          %2196 = vst [vmem:[%s2078 + $0x1d0] sm:$0xff] %v2195
          %v2197 = vld [vmem:[%s2077 + $0x1d8] sm:$0xff]
          %2198 = vst [vmem:[%s2078 + $0x1d8] sm:$0xff] %v2197
          %v2199 = vld [vmem:[%s2077 + $0x1e0] sm:$0xff]
          %2200 = vst [vmem:[%s2078 + $0x1e0] sm:$0xff] %v2199
          %v2201 = vld [vmem:[%s2077 + $0x1e8] sm:$0xff]
          %2202 = vst [vmem:[%s2078 + $0x1e8] sm:$0xff] %v2201
          %v2203 = vld [vmem:[%s2077 + $0x1f0] sm:$0xff]
          %2204 = vst [vmem:[%s2078 + $0x1f0] sm:$0xff] %v2203
          %v2205 = vld [vmem:[%s2077 + $0x1f8] sm:$0xff]
          %2206 = vst [vmem:[%s2078 + $0x1f8] sm:$0xff] %v2205
          %v2207 = vld [vmem:[%s2077 + $0x200] sm:$0xff]
          %2208 = vst [vmem:[%s2078 + $0x200] sm:$0xff] %v2207
          %v2209 = vld [vmem:[%s2077 + $0x208] sm:$0xff]
          %2210 = vst [vmem:[%s2078 + $0x208] sm:$0xff] %v2209
          %v2211 = vld [vmem:[%s2077 + $0x210] sm:$0xff]
          %2212 = vst [vmem:[%s2078 + $0x210] sm:$0xff] %v2211
          %v2213 = vld [vmem:[%s2077 + $0x218] sm:$0xff]
          %2214 = vst [vmem:[%s2078 + $0x218] sm:$0xff] %v2213
          %v2215 = vld [vmem:[%s2077 + $0x220] sm:$0xff]
          %2216 = vst [vmem:[%s2078 + $0x220] sm:$0xff] %v2215
          %v2217 = vld [vmem:[%s2077 + $0x228] sm:$0xff]
          %2218 = vst [vmem:[%s2078 + $0x228] sm:$0xff] %v2217
          %v2219 = vld [vmem:[%s2077 + $0x230] sm:$0xff]
          %2220 = vst [vmem:[%s2078 + $0x230] sm:$0xff] %v2219
          %v2221 = vld [vmem:[%s2077 + $0x238] sm:$0xff]
          %2222 = vst [vmem:[%s2078 + $0x238] sm:$0xff] %v2221
          %v2223 = vld [vmem:[%s2077 + $0x240] sm:$0xff]
          %2224 = vst [vmem:[%s2078 + $0x240] sm:$0xff] %v2223
          %v2225 = vld [vmem:[%s2077 + $0x248] sm:$0xff]
          %2226 = vst [vmem:[%s2078 + $0x248] sm:$0xff] %v2225
          %v2227 = vld [vmem:[%s2077 + $0x250] sm:$0xff]
          %2228 = vst [vmem:[%s2078 + $0x250] sm:$0xff] %v2227
          %v2229 = vld [vmem:[%s2077 + $0x258] sm:$0xff]
          %2230 = vst [vmem:[%s2078 + $0x258] sm:$0xff] %v2229
          %v2231 = vld [vmem:[%s2077 + $0x260] sm:$0xff]
          %2232 = vst [vmem:[%s2078 + $0x260] sm:$0xff] %v2231
          %v2233 = vld [vmem:[%s2077 + $0x268] sm:$0xff]
          %2234 = vst [vmem:[%s2078 + $0x268] sm:$0xff] %v2233
          %v2235 = vld [vmem:[%s2077 + $0x270] sm:$0xff]
          %2236 = vst [vmem:[%s2078 + $0x270] sm:$0xff] %v2235
          %v2237 = vld [vmem:[%s2077 + $0x278] sm:$0xff]
          %2238 = vst [vmem:[%s2078 + $0x278] sm:$0xff] %v2237
          %v2239 = vld [vmem:[%s2077 + $0x280] sm:$0xff]
          %2240 = vst [vmem:[%s2078 + $0x280] sm:$0xff] %v2239
          %v2241 = vld [vmem:[%s2077 + $0x288] sm:$0xff]
          %2242 = vst [vmem:[%s2078 + $0x288] sm:$0xff] %v2241
          %v2243 = vld [vmem:[%s2077 + $0x290] sm:$0xff]
          %2244 = vst [vmem:[%s2078 + $0x290] sm:$0xff] %v2243
          %v2245 = vld [vmem:[%s2077 + $0x298] sm:$0xff]
          %2246 = vst [vmem:[%s2078 + $0x298] sm:$0xff] %v2245
          %v2247 = vld [vmem:[%s2077 + $0x2a0] sm:$0xff]
          %2248 = vst [vmem:[%s2078 + $0x2a0] sm:$0xff] %v2247
          %v2249 = vld [vmem:[%s2077 + $0x2a8] sm:$0xff]
          %2250 = vst [vmem:[%s2078 + $0x2a8] sm:$0xff] %v2249
          %v2251 = vld [vmem:[%s2077 + $0x2b0] sm:$0xff]
          %2252 = vst [vmem:[%s2078 + $0x2b0] sm:$0xff] %v2251
          %v2253 = vld [vmem:[%s2077 + $0x2b8] sm:$0xff]
          %2254 = vst [vmem:[%s2078 + $0x2b8] sm:$0xff] %v2253
          %v2255 = vld [vmem:[%s2077 + $0x2c0] sm:$0xff]
          %2256 = vst [vmem:[%s2078 + $0x2c0] sm:$0xff] %v2255
          %v2257 = vld [vmem:[%s2077 + $0x2c8] sm:$0xff]
          %2258 = vst [vmem:[%s2078 + $0x2c8] sm:$0xff] %v2257
          %v2259 = vld [vmem:[%s2077 + $0x2d0] sm:$0xff]
          %2260 = vst [vmem:[%s2078 + $0x2d0] sm:$0xff] %v2259
          %v2261 = vld [vmem:[%s2077 + $0x2d8] sm:$0xff]
          %2262 = vst [vmem:[%s2078 + $0x2d8] sm:$0xff] %v2261
          %v2263 = vld [vmem:[%s2077 + $0x2e0] sm:$0xff]
          %2264 = vst [vmem:[%s2078 + $0x2e0] sm:$0xff] %v2263
          %v2265 = vld [vmem:[%s2077 + $0x2e8] sm:$0xff]
          %2266 = vst [vmem:[%s2078 + $0x2e8] sm:$0xff] %v2265
          %v2267 = vld [vmem:[%s2077 + $0x2f0] sm:$0xff]
          %2268 = vst [vmem:[%s2078 + $0x2f0] sm:$0xff] %v2267
          %v2269 = vld [vmem:[%s2077 + $0x2f8] sm:$0xff]
          %2270 = vst [vmem:[%s2078 + $0x2f8] sm:$0xff] %v2269
          %v2271 = vld [vmem:[%s2077 + $0x300] sm:$0xff]
          %2272 = vst [vmem:[%s2078 + $0x300] sm:$0xff] %v2271
          %v2273 = vld [vmem:[%s2077 + $0x308] sm:$0xff]
          %2274 = vst [vmem:[%s2078 + $0x308] sm:$0xff] %v2273
          %v2275 = vld [vmem:[%s2077 + $0x310] sm:$0xff]
          %2276 = vst [vmem:[%s2078 + $0x310] sm:$0xff] %v2275
          %v2277 = vld [vmem:[%s2077 + $0x318] sm:$0xff]
          %2278 = vst [vmem:[%s2078 + $0x318] sm:$0xff] %v2277
          %v2279 = vld [vmem:[%s2077 + $0x320] sm:$0xff]
          %2280 = vst [vmem:[%s2078 + $0x320] sm:$0xff] %v2279
          %v2281 = vld [vmem:[%s2077 + $0x328] sm:$0xff]
          %2282 = vst [vmem:[%s2078 + $0x328] sm:$0xff] %v2281
          %v2283 = vld [vmem:[%s2077 + $0x330] sm:$0xff]
          %2284 = vst [vmem:[%s2078 + $0x330] sm:$0xff] %v2283
          %v2285 = vld [vmem:[%s2077 + $0x338] sm:$0xff]
          %2286 = vst [vmem:[%s2078 + $0x338] sm:$0xff] %v2285
          %v2287 = vld [vmem:[%s2077 + $0x340] sm:$0xff]
          %2288 = vst [vmem:[%s2078 + $0x340] sm:$0xff] %v2287
          %v2289 = vld [vmem:[%s2077 + $0x348] sm:$0xff]
          %2290 = vst [vmem:[%s2078 + $0x348] sm:$0xff] %v2289
          %v2291 = vld [vmem:[%s2077 + $0x350] sm:$0xff]
          %2292 = vst [vmem:[%s2078 + $0x350] sm:$0xff] %v2291
          %v2293 = vld [vmem:[%s2077 + $0x358] sm:$0xff]
          %2294 = vst [vmem:[%s2078 + $0x358] sm:$0xff] %v2293
          %v2295 = vld [vmem:[%s2077 + $0x360] sm:$0xff]
          %2296 = vst [vmem:[%s2078 + $0x360] sm:$0xff] %v2295
          %v2297 = vld [vmem:[%s2077 + $0x368] sm:$0xff]
          %2298 = vst [vmem:[%s2078 + $0x368] sm:$0xff] %v2297
          %v2299 = vld [vmem:[%s2077 + $0x370] sm:$0xff]
          %2300 = vst [vmem:[%s2078 + $0x370] sm:$0xff] %v2299
          %v2301 = vld [vmem:[%s2077 + $0x378] sm:$0xff]
          %2302 = vst [vmem:[%s2078 + $0x378] sm:$0xff] %v2301
          %v2303 = vld [vmem:[%s2077 + $0x380] sm:$0xff]
          %2304 = vst [vmem:[%s2078 + $0x380] sm:$0xff] %v2303
          %v2305 = vld [vmem:[%s2077 + $0x388] sm:$0xff]
          %2306 = vst [vmem:[%s2078 + $0x388] sm:$0xff] %v2305
          %v2307 = vld [vmem:[%s2077 + $0x390] sm:$0xff]
          %2308 = vst [vmem:[%s2078 + $0x390] sm:$0xff] %v2307
          %v2309 = vld [vmem:[%s2077 + $0x398] sm:$0xff]
          %2310 = vst [vmem:[%s2078 + $0x398] sm:$0xff] %v2309
          %v2311 = vld [vmem:[%s2077 + $0x3a0] sm:$0xff]
          %2312 = vst [vmem:[%s2078 + $0x3a0] sm:$0xff] %v2311
          %v2313 = vld [vmem:[%s2077 + $0x3a8] sm:$0xff]
          %2314 = vst [vmem:[%s2078 + $0x3a8] sm:$0xff] %v2313
          %v2315 = vld [vmem:[%s2077 + $0x3b0] sm:$0xff]
          %2316 = vst [vmem:[%s2078 + $0x3b0] sm:$0xff] %v2315
          %v2317 = vld [vmem:[%s2077 + $0x3b8] sm:$0xff]
          %2318 = vst [vmem:[%s2078 + $0x3b8] sm:$0xff] %v2317
          %v2319 = vld [vmem:[%s2077 + $0x3c0] sm:$0xff]
          %2320 = vst [vmem:[%s2078 + $0x3c0] sm:$0xff] %v2319
          %v2321 = vld [vmem:[%s2077 + $0x3c8] sm:$0xff]
          %2322 = vst [vmem:[%s2078 + $0x3c8] sm:$0xff] %v2321
          %v2323 = vld [vmem:[%s2077 + $0x3d0] sm:$0xff]
          %2324 = vst [vmem:[%s2078 + $0x3d0] sm:$0xff] %v2323
          %v2325 = vld [vmem:[%s2077 + $0x3d8] sm:$0xff]
          %2326 = vst [vmem:[%s2078 + $0x3d8] sm:$0xff] %v2325
          %v2327 = vld [vmem:[%s2077 + $0x3e0] sm:$0xff]
          %2328 = vst [vmem:[%s2078 + $0x3e0] sm:$0xff] %v2327
          %v2329 = vld [vmem:[%s2077 + $0x3e8] sm:$0xff]
          %2330 = vst [vmem:[%s2078 + $0x3e8] sm:$0xff] %v2329
          %v2331 = vld [vmem:[%s2077 + $0x3f0] sm:$0xff]
          %2332 = vst [vmem:[%s2078 + $0x3f0] sm:$0xff] %v2331
          %v2333 = vld [vmem:[%s2077 + $0x3f8] sm:$0xff]
          %2334 = vst [vmem:[%s2078 + $0x3f8] sm:$0xff] %v2333
          %v2335 = vld [vmem:[%s2077 + $0x400] sm:$0xff]
          %2336 = vst [vmem:[%s2078 + $0x400] sm:$0xff] %v2335
          %v2337 = vld [vmem:[%s2077 + $0x408] sm:$0xff]
          %2338 = vst [vmem:[%s2078 + $0x408] sm:$0xff] %v2337
          %v2339 = vld [vmem:[%s2077 + $0x410] sm:$0xff]
          %2340 = vst [vmem:[%s2078 + $0x410] sm:$0xff] %v2339
          %v2341 = vld [vmem:[%s2077 + $0x418] sm:$0xff]
          %2342 = vst [vmem:[%s2078 + $0x418] sm:$0xff] %v2341
          %v2343 = vld [vmem:[%s2077 + $0x420] sm:$0xff]
          %2344 = vst [vmem:[%s2078 + $0x420] sm:$0xff] %v2343
          %v2345 = vld [vmem:[%s2077 + $0x428] sm:$0xff]
          %2346 = vst [vmem:[%s2078 + $0x428] sm:$0xff] %v2345
          %v2347 = vld [vmem:[%s2077 + $0x430] sm:$0xff]
          %2348 = vst [vmem:[%s2078 + $0x430] sm:$0xff] %v2347
          %v2349 = vld [vmem:[%s2077 + $0x438] sm:$0xff]
          %2350 = vst [vmem:[%s2078 + $0x438] sm:$0xff] %v2349
          %v2351 = vld [vmem:[%s2077 + $0x440] sm:$0xff]
          %2352 = vst [vmem:[%s2078 + $0x440] sm:$0xff] %v2351
          %v2353 = vld [vmem:[%s2077 + $0x448] sm:$0xff]
          %2354 = vst [vmem:[%s2078 + $0x448] sm:$0xff] %v2353
          %v2355 = vld [vmem:[%s2077 + $0x450] sm:$0xff]
          %2356 = vst [vmem:[%s2078 + $0x450] sm:$0xff] %v2355
          %v2357 = vld [vmem:[%s2077 + $0x458] sm:$0xff]
          %2358 = vst [vmem:[%s2078 + $0x458] sm:$0xff] %v2357
          %v2359 = vld [vmem:[%s2077 + $0x460] sm:$0xff]
          %2360 = vst [vmem:[%s2078 + $0x460] sm:$0xff] %v2359
          %v2361 = vld [vmem:[%s2077 + $0x468] sm:$0xff]
          %2362 = vst [vmem:[%s2078 + $0x468] sm:$0xff] %v2361
          %v2363 = vld [vmem:[%s2077 + $0x470] sm:$0xff]
          %2364 = vst [vmem:[%s2078 + $0x470] sm:$0xff] %v2363
          %v2365 = vld [vmem:[%s2077 + $0x478] sm:$0xff]
          %2366 = vst [vmem:[%s2078 + $0x478] sm:$0xff] %v2365
          %v2367 = vld [vmem:[%s2077 + $0x480] sm:$0xff]
          %2368 = vst [vmem:[%s2078 + $0x480] sm:$0xff] %v2367
          %v2369 = vld [vmem:[%s2077 + $0x488] sm:$0xff]
          %2370 = vst [vmem:[%s2078 + $0x488] sm:$0xff] %v2369
          %v2371 = vld [vmem:[%s2077 + $0x490] sm:$0xff]
          %2372 = vst [vmem:[%s2078 + $0x490] sm:$0xff] %v2371
          %v2373 = vld [vmem:[%s2077 + $0x498] sm:$0xff]
          %2374 = vst [vmem:[%s2078 + $0x498] sm:$0xff] %v2373
          %v2375 = vld [vmem:[%s2077 + $0x4a0] sm:$0xff]
          %2376 = vst [vmem:[%s2078 + $0x4a0] sm:$0xff] %v2375
          %v2377 = vld [vmem:[%s2077 + $0x4a8] sm:$0xff]
          %2378 = vst [vmem:[%s2078 + $0x4a8] sm:$0xff] %v2377
          %v2379 = vld [vmem:[%s2077 + $0x4b0] sm:$0xff]
          %2380 = vst [vmem:[%s2078 + $0x4b0] sm:$0xff] %v2379
          %v2381 = vld [vmem:[%s2077 + $0x4b8] sm:$0xff]
          %2382 = vst [vmem:[%s2078 + $0x4b8] sm:$0xff] %v2381
          %v2383 = vld [vmem:[%s2077 + $0x4c0] sm:$0xff]
          %2384 = vst [vmem:[%s2078 + $0x4c0] sm:$0xff] %v2383
          %v2385 = vld [vmem:[%s2077 + $0x4c8] sm:$0xff]
          %2386 = vst [vmem:[%s2078 + $0x4c8] sm:$0xff] %v2385
          %v2387 = vld [vmem:[%s2077 + $0x4d0] sm:$0xff]
          %2388 = vst [vmem:[%s2078 + $0x4d0] sm:$0xff] %v2387
          %v2389 = vld [vmem:[%s2077 + $0x4d8] sm:$0xff]
          %2390 = vst [vmem:[%s2078 + $0x4d8] sm:$0xff] %v2389
          %v2391 = vld [vmem:[%s2077 + $0x4e0] sm:$0xff]
          %2392 = vst [vmem:[%s2078 + $0x4e0] sm:$0xff] %v2391
          %v2393 = vld [vmem:[%s2077 + $0x4e8] sm:$0xff]
          %2394 = vst [vmem:[%s2078 + $0x4e8] sm:$0xff] %v2393
          %v2395 = vld [vmem:[%s2077 + $0x4f0] sm:$0xff]
          %2396 = vst [vmem:[%s2078 + $0x4f0] sm:$0xff] %v2395
          %v2397 = vld [vmem:[%s2077 + $0x4f8] sm:$0xff]
          %2398 = vst [vmem:[%s2078 + $0x4f8] sm:$0xff] %v2397
          %v2399 = vld [vmem:[%s2077 + $0x500] sm:$0xff]
          %2400 = vst [vmem:[%s2078 + $0x500] sm:$0xff] %v2399
          %v2401 = vld [vmem:[%s2077 + $0x508] sm:$0xff]
          %2402 = vst [vmem:[%s2078 + $0x508] sm:$0xff] %v2401
          %v2403 = vld [vmem:[%s2077 + $0x510] sm:$0xff]
          %2404 = vst [vmem:[%s2078 + $0x510] sm:$0xff] %v2403
          %v2405 = vld [vmem:[%s2077 + $0x518] sm:$0xff]
          %2406 = vst [vmem:[%s2078 + $0x518] sm:$0xff] %v2405
          %v2407 = vld [vmem:[%s2077 + $0x520] sm:$0xff]
          %2408 = vst [vmem:[%s2078 + $0x520] sm:$0xff] %v2407
          %v2409 = vld [vmem:[%s2077 + $0x528] sm:$0xff]
          %2410 = vst [vmem:[%s2078 + $0x528] sm:$0xff] %v2409
          %v2411 = vld [vmem:[%s2077 + $0x530] sm:$0xff]
          %2412 = vst [vmem:[%s2078 + $0x530] sm:$0xff] %v2411
          %v2413 = vld [vmem:[%s2077 + $0x538] sm:$0xff]
          %2414 = vst [vmem:[%s2078 + $0x538] sm:$0xff] %v2413
          %v2415 = vld [vmem:[%s2077 + $0x540] sm:$0xff]
          %2416 = vst [vmem:[%s2078 + $0x540] sm:$0xff] %v2415
          %v2417 = vld [vmem:[%s2077 + $0x548] sm:$0xff]
          %2418 = vst [vmem:[%s2078 + $0x548] sm:$0xff] %v2417
          %v2419 = vld [vmem:[%s2077 + $0x550] sm:$0xff]
          %2420 = vst [vmem:[%s2078 + $0x550] sm:$0xff] %v2419
          %v2421 = vld [vmem:[%s2077 + $0x558] sm:$0xff]
          %2422 = vst [vmem:[%s2078 + $0x558] sm:$0xff] %v2421
          %v2423 = vld [vmem:[%s2077 + $0x560] sm:$0xff]
          %2424 = vst [vmem:[%s2078 + $0x560] sm:$0xff] %v2423
          %v2425 = vld [vmem:[%s2077 + $0x568] sm:$0xff]
          %2426 = vst [vmem:[%s2078 + $0x568] sm:$0xff] %v2425
          %v2427 = vld [vmem:[%s2077 + $0x570] sm:$0xff]
          %2428 = vst [vmem:[%s2078 + $0x570] sm:$0xff] %v2427
          %v2429 = vld [vmem:[%s2077 + $0x578] sm:$0xff]
          %2430 = vst [vmem:[%s2078 + $0x578] sm:$0xff] %v2429
          %v2431 = vld [vmem:[%s2077 + $0x580] sm:$0xff]
          %2432 = vst [vmem:[%s2078 + $0x580] sm:$0xff] %v2431
          %v2433 = vld [vmem:[%s2077 + $0x588] sm:$0xff]
          %2434 = vst [vmem:[%s2078 + $0x588] sm:$0xff] %v2433
          %v2435 = vld [vmem:[%s2077 + $0x590] sm:$0xff]
          %2436 = vst [vmem:[%s2078 + $0x590] sm:$0xff] %v2435
          %v2437 = vld [vmem:[%s2077 + $0x598] sm:$0xff]
          %2438 = vst [vmem:[%s2078 + $0x598] sm:$0xff] %v2437
          %v2439 = vld [vmem:[%s2077 + $0x5a0] sm:$0xff]
          %2440 = vst [vmem:[%s2078 + $0x5a0] sm:$0xff] %v2439
          %v2441 = vld [vmem:[%s2077 + $0x5a8] sm:$0xff]
          %2442 = vst [vmem:[%s2078 + $0x5a8] sm:$0xff] %v2441
          %v2443 = vld [vmem:[%s2077 + $0x5b0] sm:$0xff]
          %2444 = vst [vmem:[%s2078 + $0x5b0] sm:$0xff] %v2443
          %v2445 = vld [vmem:[%s2077 + $0x5b8] sm:$0xff]
          %2446 = vst [vmem:[%s2078 + $0x5b8] sm:$0xff] %v2445
          %v2447 = vld [vmem:[%s2077 + $0x5c0] sm:$0xff]
          %2448 = vst [vmem:[%s2078 + $0x5c0] sm:$0xff] %v2447
          %v2449 = vld [vmem:[%s2077 + $0x5c8] sm:$0xff]
          %2450 = vst [vmem:[%s2078 + $0x5c8] sm:$0xff] %v2449
          %v2451 = vld [vmem:[%s2077 + $0x5d0] sm:$0xff]
          %2452 = vst [vmem:[%s2078 + $0x5d0] sm:$0xff] %v2451
          %v2453 = vld [vmem:[%s2077 + $0x5d8] sm:$0xff]
          %2454 = vst [vmem:[%s2078 + $0x5d8] sm:$0xff] %v2453
          %v2455 = vld [vmem:[%s2077 + $0x5e0] sm:$0xff]
          %2456 = vst [vmem:[%s2078 + $0x5e0] sm:$0xff] %v2455
          %v2457 = vld [vmem:[%s2077 + $0x5e8] sm:$0xff]
          %2458 = vst [vmem:[%s2078 + $0x5e8] sm:$0xff] %v2457
          %v2459 = vld [vmem:[%s2077 + $0x5f0] sm:$0xff]
          %2460 = vst [vmem:[%s2078 + $0x5f0] sm:$0xff] %v2459
          %v2461 = vld [vmem:[%s2077 + $0x5f8] sm:$0xff]
          %2462 = vst [vmem:[%s2078 + $0x5f8] sm:$0xff] %v2461
          %v2463 = vld [vmem:[%s2077 + $0x600] sm:$0xff]
          %2464 = vst [vmem:[%s2078 + $0x600] sm:$0xff] %v2463
          %v2465 = vld [vmem:[%s2077 + $0x608] sm:$0xff]
          %2466 = vst [vmem:[%s2078 + $0x608] sm:$0xff] %v2465
          %v2467 = vld [vmem:[%s2077 + $0x610] sm:$0xff]
          %2468 = vst [vmem:[%s2078 + $0x610] sm:$0xff] %v2467
          %v2469 = vld [vmem:[%s2077 + $0x618] sm:$0xff]
          %2470 = vst [vmem:[%s2078 + $0x618] sm:$0xff] %v2469
          %v2471 = vld [vmem:[%s2077 + $0x620] sm:$0xff]
          %2472 = vst [vmem:[%s2078 + $0x620] sm:$0xff] %v2471
          %v2473 = vld [vmem:[%s2077 + $0x628] sm:$0xff]
          %2474 = vst [vmem:[%s2078 + $0x628] sm:$0xff] %v2473
          %v2475 = vld [vmem:[%s2077 + $0x630] sm:$0xff]
          %2476 = vst [vmem:[%s2078 + $0x630] sm:$0xff] %v2475
          %v2477 = vld [vmem:[%s2077 + $0x638] sm:$0xff]
          %2478 = vst [vmem:[%s2078 + $0x638] sm:$0xff] %v2477
          %v2479 = vld [vmem:[%s2077 + $0x640] sm:$0xff]
          %2480 = vst [vmem:[%s2078 + $0x640] sm:$0xff] %v2479
          %v2481 = vld [vmem:[%s2077 + $0x648] sm:$0xff]
          %2482 = vst [vmem:[%s2078 + $0x648] sm:$0xff] %v2481
          %v2483 = vld [vmem:[%s2077 + $0x650] sm:$0xff]
          %2484 = vst [vmem:[%s2078 + $0x650] sm:$0xff] %v2483
          %v2485 = vld [vmem:[%s2077 + $0x658] sm:$0xff]
          %2486 = vst [vmem:[%s2078 + $0x658] sm:$0xff] %v2485
          %v2487 = vld [vmem:[%s2077 + $0x660] sm:$0xff]
          %2488 = vst [vmem:[%s2078 + $0x660] sm:$0xff] %v2487
          %v2489 = vld [vmem:[%s2077 + $0x668] sm:$0xff]
          %2490 = vst [vmem:[%s2078 + $0x668] sm:$0xff] %v2489
          %v2491 = vld [vmem:[%s2077 + $0x670] sm:$0xff]
          %2492 = vst [vmem:[%s2078 + $0x670] sm:$0xff] %v2491
          %v2493 = vld [vmem:[%s2077 + $0x678] sm:$0xff]
          %2494 = vst [vmem:[%s2078 + $0x678] sm:$0xff] %v2493
          %v2495 = vld [vmem:[%s2077 + $0x680] sm:$0xff]
          %2496 = vst [vmem:[%s2078 + $0x680] sm:$0xff] %v2495
          %v2497 = vld [vmem:[%s2077 + $0x688] sm:$0xff]
          %2498 = vst [vmem:[%s2078 + $0x688] sm:$0xff] %v2497
          %v2499 = vld [vmem:[%s2077 + $0x690] sm:$0xff]
          %2500 = vst [vmem:[%s2078 + $0x690] sm:$0xff] %v2499
          %v2501 = vld [vmem:[%s2077 + $0x698] sm:$0xff]
          %2502 = vst [vmem:[%s2078 + $0x698] sm:$0xff] %v2501
          %v2503 = vld [vmem:[%s2077 + $0x6a0] sm:$0xff]
          %2504 = vst [vmem:[%s2078 + $0x6a0] sm:$0xff] %v2503
          %v2505 = vld [vmem:[%s2077 + $0x6a8] sm:$0xff]
          %2506 = vst [vmem:[%s2078 + $0x6a8] sm:$0xff] %v2505
          %v2507 = vld [vmem:[%s2077 + $0x6b0] sm:$0xff]
          %2508 = vst [vmem:[%s2078 + $0x6b0] sm:$0xff] %v2507
          %v2509 = vld [vmem:[%s2077 + $0x6b8] sm:$0xff]
          %2510 = vst [vmem:[%s2078 + $0x6b8] sm:$0xff] %v2509
          %v2511 = vld [vmem:[%s2077 + $0x6c0] sm:$0xff]
          %2512 = vst [vmem:[%s2078 + $0x6c0] sm:$0xff] %v2511
          %v2513 = vld [vmem:[%s2077 + $0x6c8] sm:$0xff]
          %2514 = vst [vmem:[%s2078 + $0x6c8] sm:$0xff] %v2513
          %v2515 = vld [vmem:[%s2077 + $0x6d0] sm:$0xff]
          %2516 = vst [vmem:[%s2078 + $0x6d0] sm:$0xff] %v2515
          %v2517 = vld [vmem:[%s2077 + $0x6d8] sm:$0xff]
          %2518 = vst [vmem:[%s2078 + $0x6d8] sm:$0xff] %v2517
          %v2519 = vld [vmem:[%s2077 + $0x6e0] sm:$0xff]
          %2520 = vst [vmem:[%s2078 + $0x6e0] sm:$0xff] %v2519
          %v2521 = vld [vmem:[%s2077 + $0x6e8] sm:$0xff]
          %2522 = vst [vmem:[%s2078 + $0x6e8] sm:$0xff] %v2521
          %v2523 = vld [vmem:[%s2077 + $0x6f0] sm:$0xff]
          %2524 = vst [vmem:[%s2078 + $0x6f0] sm:$0xff] %v2523
          %v2525 = vld [vmem:[%s2077 + $0x6f8] sm:$0xff]
          %2526 = vst [vmem:[%s2078 + $0x6f8] sm:$0xff] %v2525
          %v2527 = vld [vmem:[%s2077 + $0x700] sm:$0xff]
          %2528 = vst [vmem:[%s2078 + $0x700] sm:$0xff] %v2527
          %v2529 = vld [vmem:[%s2077 + $0x708] sm:$0xff]
          %2530 = vst [vmem:[%s2078 + $0x708] sm:$0xff] %v2529
          %v2531 = vld [vmem:[%s2077 + $0x710] sm:$0xff]
          %2532 = vst [vmem:[%s2078 + $0x710] sm:$0xff] %v2531
          %v2533 = vld [vmem:[%s2077 + $0x718] sm:$0xff]
          %2534 = vst [vmem:[%s2078 + $0x718] sm:$0xff] %v2533
          %v2535 = vld [vmem:[%s2077 + $0x720] sm:$0xff]
          %2536 = vst [vmem:[%s2078 + $0x720] sm:$0xff] %v2535
          %v2537 = vld [vmem:[%s2077 + $0x728] sm:$0xff]
          %2538 = vst [vmem:[%s2078 + $0x728] sm:$0xff] %v2537
          %v2539 = vld [vmem:[%s2077 + $0x730] sm:$0xff]
          %2540 = vst [vmem:[%s2078 + $0x730] sm:$0xff] %v2539
          %v2541 = vld [vmem:[%s2077 + $0x738] sm:$0xff]
          %2542 = vst [vmem:[%s2078 + $0x738] sm:$0xff] %v2541
          %v2543 = vld [vmem:[%s2077 + $0x740] sm:$0xff]
          %2544 = vst [vmem:[%s2078 + $0x740] sm:$0xff] %v2543
          %v2545 = vld [vmem:[%s2077 + $0x748] sm:$0xff]
          %2546 = vst [vmem:[%s2078 + $0x748] sm:$0xff] %v2545
          %v2547 = vld [vmem:[%s2077 + $0x750] sm:$0xff]
          %2548 = vst [vmem:[%s2078 + $0x750] sm:$0xff] %v2547
          %v2549 = vld [vmem:[%s2077 + $0x758] sm:$0xff]
          %2550 = vst [vmem:[%s2078 + $0x758] sm:$0xff] %v2549
          %v2551 = vld [vmem:[%s2077 + $0x760] sm:$0xff]
          %2552 = vst [vmem:[%s2078 + $0x760] sm:$0xff] %v2551
          %v2553 = vld [vmem:[%s2077 + $0x768] sm:$0xff]
          %2554 = vst [vmem:[%s2078 + $0x768] sm:$0xff] %v2553
          %v2555 = vld [vmem:[%s2077 + $0x770] sm:$0xff]
          %2556 = vst [vmem:[%s2078 + $0x770] sm:$0xff] %v2555
          %v2557 = vld [vmem:[%s2077 + $0x778] sm:$0xff]
          %2558 = vst [vmem:[%s2078 + $0x778] sm:$0xff] %v2557
          %v2559 = vld [vmem:[%s2077 + $0x780] sm:$0xff]
          %2560 = vst [vmem:[%s2078 + $0x780] sm:$0xff] %v2559
          %v2561 = vld [vmem:[%s2077 + $0x788] sm:$0xff]
          %2562 = vst [vmem:[%s2078 + $0x788] sm:$0xff] %v2561
          %v2563 = vld [vmem:[%s2077 + $0x790] sm:$0xff]
          %2564 = vst [vmem:[%s2078 + $0x790] sm:$0xff] %v2563
          %v2565 = vld [vmem:[%s2077 + $0x798] sm:$0xff]
          %2566 = vst [vmem:[%s2078 + $0x798] sm:$0xff] %v2565
          %v2567 = vld [vmem:[%s2077 + $0x7a0] sm:$0xff]
          %2568 = vst [vmem:[%s2078 + $0x7a0] sm:$0xff] %v2567
          %v2569 = vld [vmem:[%s2077 + $0x7a8] sm:$0xff]
          %2570 = vst [vmem:[%s2078 + $0x7a8] sm:$0xff] %v2569
          %v2571 = vld [vmem:[%s2077 + $0x7b0] sm:$0xff]
          %2572 = vst [vmem:[%s2078 + $0x7b0] sm:$0xff] %v2571
          %v2573 = vld [vmem:[%s2077 + $0x7b8] sm:$0xff]
          %2574 = vst [vmem:[%s2078 + $0x7b8] sm:$0xff] %v2573
          %v2575 = vld [vmem:[%s2077 + $0x7c0] sm:$0xff]
          %2576 = vst [vmem:[%s2078 + $0x7c0] sm:$0xff] %v2575
          %v2577 = vld [vmem:[%s2077 + $0x7c8] sm:$0xff]
          %2578 = vst [vmem:[%s2078 + $0x7c8] sm:$0xff] %v2577
          %v2579 = vld [vmem:[%s2077 + $0x7d0] sm:$0xff]
          %2580 = vst [vmem:[%s2078 + $0x7d0] sm:$0xff] %v2579
          %v2581 = vld [vmem:[%s2077 + $0x7d8] sm:$0xff]
          %2582 = vst [vmem:[%s2078 + $0x7d8] sm:$0xff] %v2581
          %v2583 = vld [vmem:[%s2077 + $0x7e0] sm:$0xff]
          %2584 = vst [vmem:[%s2078 + $0x7e0] sm:$0xff] %v2583
          %v2585 = vld [vmem:[%s2077 + $0x7e8] sm:$0xff]
          %2586 = vst [vmem:[%s2078 + $0x7e8] sm:$0xff] %v2585
          %v2587 = vld [vmem:[%s2077 + $0x7f0] sm:$0xff]
          %2588 = vst [vmem:[%s2078 + $0x7f0] sm:$0xff] %v2587
          %v2589 = vld [vmem:[%s2077 + $0x7f8] sm:$0xff]
          %2590 = vst [vmem:[%s2078 + $0x7f8] sm:$0xff] %v2589
        $region49: #{_lambda_.1} parent=43 // loop_footer
          %s2076 = sadd.s32 1, %s2072
        $region50: #{_lambda_.1} parent=43 // loop_footer_branch
          %2071 = sbr.rel target = $region46
        $region51: #{_lambda_.1} parent=43 // loop_exit
          _
      $region44: #{_lambda_.1} parent=28 // pred_fallthru
        _
      %p2591 = pneg %p2067
      // Predicated region
      $region52: #{_lambda_.1} parent=28 // pred_check
        _
      $region53: #{_lambda_.1} parent=28 // pred_check_branch
        %2593 = sbr.rel (%p2067) target = $region55
      $region54: #{_lambda_.1} parent=28 // pred_region
        %s2594 = sand.u32 2048, 7
      $region55: #{_lambda_.1} parent=28 // pred_fallthru
        _
    $region29: #{_lambda_.1} parent=1 // pred_fallthru
      _
    // Predicated region
    $region30: #{_lambda_.1} parent=1 // pred_check
      %p2051 = pneg %p2047
    $region31: #{_lambda_.1} parent=1 // pred_check_branch
      %2053 = sbr.rel (%p2051) target = $region33
    $region32: #{_lambda_.1} parent=1 // pred_region
      %s2054 = sshll.u32 1, 2048
      %s2055 = ssub.s32 %s2054, 1
      loop: start=0, step=1, limit=1
      $region34: #{_lambda_.1} parent=32 // loop_pre_header
        _
      $region35: #{_lambda_.1} parent=32 // loop_header
        %s2057 = sphi 0, %s2061
        %p2058 = scmp.ge.s32.totalorder %s2057, 1
        %s2062 = sphi %s4, %s4
        %s2063 = sphi [#allocation4], [#allocation4]
      $region36: #{_lambda_.1} parent=32 // loop_header_branch
        %2060 = sbr.rel (%p2058) target = $region40
      $region37: #{_lambda_.1} parent=32 // loop_body
        %v2064 = vld [vmem:[%s2062] sm:%s2055]
        %2065 = vst [vmem:[%s2063] sm:%s2055] %v2064
      $region38: #{_lambda_.1} parent=32 // loop_footer
        %s2061 = sadd.s32 1, %s2057
      $region39: #{_lambda_.1} parent=32 // loop_footer_branch
        %2056 = sbr.rel target = $region35
      $region40: #{_lambda_.1} parent=32 // loop_exit
        _
    $region33: #{_lambda_.1} parent=1 // pred_fallthru
      _
    // Predicated region
    $region56: #{_lambda_.1} parent=1 // pred_check
      _
    $region57: #{_lambda_.1} parent=1 // pred_check_branch
      %2597 = sbr.rel (0) target = $region59
    $region58: #{_lambda_.1} parent=1 // pred_region
      %2598 = vsyncadd %s2045, 32768
    $region59: #{_lambda_.1} parent=1 // pred_fallthru
      _
    %v2599 = vpack.c.bf16 %v2033, %v2033
    %v2600 = vpack.c.bf16 %v2034, %v2034
    %v2601 = vpack.c.bf16 %v2035, %v2035
    %v2602 = vpack.c.bf16 %v2036, %v2036
    %v2603 = vpack.c.bf16 %v2037, %v2037
    %v2604 = vpack.c.bf16 %v2038, %v2038
    %v2605 = vpack.c.bf16 %v2039, %v2039
    %v2606 = vpack.c.bf16 %v2040, %v2040
    %v2607 = vld [vmem:[#allocation3] sm:$0xff]
    %v2608 = vld [vmem:[#allocation3 + $0x8] sm:$0xff]
    %v2609 = vld [vmem:[#allocation3 + $0x10] sm:$0xff]
    %v2610 = vld [vmem:[#allocation3 + $0x18] sm:$0xff]
    %v2611 = vld [vmem:[#allocation3 + $0x20] sm:$0xff]
    %v2612 = vld [vmem:[#allocation3 + $0x28] sm:$0xff]
    %v2613 = vld [vmem:[#allocation3 + $0x30] sm:$0xff]
    %v2614 = vld [vmem:[#allocation3 + $0x38] sm:$0xff]
    %v2615 = vld [vmem:[#allocation3 + $0x40] sm:$0xff]
    %v2616 = vld [vmem:[#allocation3 + $0x48] sm:$0xff]
    %v2617 = vld [vmem:[#allocation3 + $0x50] sm:$0xff]
    %v2618 = vld [vmem:[#allocation3 + $0x58] sm:$0xff]
    %v2619 = vld [vmem:[#allocation3 + $0x60] sm:$0xff]
    %v2620 = vld [vmem:[#allocation3 + $0x68] sm:$0xff]
    %v2621 = vld [vmem:[#allocation3 + $0x70] sm:$0xff]
    %v2622 = vld [vmem:[#allocation3 + $0x78] sm:$0xff]
    %v2623 = vld [vmem:[#allocation3 + $0x80] sm:$0xff]
    %v2624 = vld [vmem:[#allocation3 + $0x88] sm:$0xff]
    %v2625 = vld [vmem:[#allocation3 + $0x90] sm:$0xff]
    %v2626 = vld [vmem:[#allocation3 + $0x98] sm:$0xff]
    %v2627 = vld [vmem:[#allocation3 + $0xa0] sm:$0xff]
    %v2628 = vld [vmem:[#allocation3 + $0xa8] sm:$0xff]
    %v2629 = vld [vmem:[#allocation3 + $0xb0] sm:$0xff]
    %v2630 = vld [vmem:[#allocation3 + $0xb8] sm:$0xff]
    %v2631 = vld [vmem:[#allocation3 + $0xc0] sm:$0xff]
    %v2632 = vld [vmem:[#allocation3 + $0xc8] sm:$0xff]
    %v2633 = vld [vmem:[#allocation3 + $0xd0] sm:$0xff]
    %v2634 = vld [vmem:[#allocation3 + $0xd8] sm:$0xff]
    %v2635 = vld [vmem:[#allocation3 + $0xe0] sm:$0xff]
    %v2636 = vld [vmem:[#allocation3 + $0xe8] sm:$0xff]
    %v2637 = vld [vmem:[#allocation3 + $0xf0] sm:$0xff]
    %v2638 = vld [vmem:[#allocation3 + $0xf8] sm:$0xff]
    %v2639 = vld [vmem:[#allocation3 + $0x100] sm:$0xff]
    %v2640 = vld [vmem:[#allocation3 + $0x108] sm:$0xff]
    %v2641 = vld [vmem:[#allocation3 + $0x110] sm:$0xff]
    %v2642 = vld [vmem:[#allocation3 + $0x118] sm:$0xff]
    %v2643 = vld [vmem:[#allocation3 + $0x120] sm:$0xff]
    %v2644 = vld [vmem:[#allocation3 + $0x128] sm:$0xff]
    %v2645 = vld [vmem:[#allocation3 + $0x130] sm:$0xff]
    %v2646 = vld [vmem:[#allocation3 + $0x138] sm:$0xff]
    %v2647 = vld [vmem:[#allocation3 + $0x140] sm:$0xff]
    %v2648 = vld [vmem:[#allocation3 + $0x148] sm:$0xff]
    %v2649 = vld [vmem:[#allocation3 + $0x150] sm:$0xff]
    %v2650 = vld [vmem:[#allocation3 + $0x158] sm:$0xff]
    %v2651 = vld [vmem:[#allocation3 + $0x160] sm:$0xff]
    %v2652 = vld [vmem:[#allocation3 + $0x168] sm:$0xff]
    %v2653 = vld [vmem:[#allocation3 + $0x170] sm:$0xff]
    %v2654 = vld [vmem:[#allocation3 + $0x178] sm:$0xff]
    %v2655 = vld [vmem:[#allocation3 + $0x180] sm:$0xff]
    %v2656 = vld [vmem:[#allocation3 + $0x188] sm:$0xff]
    %v2657 = vld [vmem:[#allocation3 + $0x190] sm:$0xff]
    %v2658 = vld [vmem:[#allocation3 + $0x198] sm:$0xff]
    %v2659 = vld [vmem:[#allocation3 + $0x1a0] sm:$0xff]
    %v2660 = vld [vmem:[#allocation3 + $0x1a8] sm:$0xff]
    %v2661 = vld [vmem:[#allocation3 + $0x1b0] sm:$0xff]
    %v2662 = vld [vmem:[#allocation3 + $0x1b8] sm:$0xff]
    %v2663 = vld [vmem:[#allocation3 + $0x1c0] sm:$0xff]
    %v2664 = vld [vmem:[#allocation3 + $0x1c8] sm:$0xff]
    %v2665 = vld [vmem:[#allocation3 + $0x1d0] sm:$0xff]
    %v2666 = vld [vmem:[#allocation3 + $0x1d8] sm:$0xff]
    %v2667 = vld [vmem:[#allocation3 + $0x1e0] sm:$0xff]
    %v2668 = vld [vmem:[#allocation3 + $0x1e8] sm:$0xff]
    %v2669 = vld [vmem:[#allocation3 + $0x1f0] sm:$0xff]
    %v2670 = vld [vmem:[#allocation3 + $0x1f8] sm:$0xff]
    %v2671 = vld [vmem:[#allocation3 + $0x200] sm:$0xff]
    %v2672 = vld [vmem:[#allocation3 + $0x208] sm:$0xff]
    %v2673 = vld [vmem:[#allocation3 + $0x210] sm:$0xff]
    %v2674 = vld [vmem:[#allocation3 + $0x218] sm:$0xff]
    %v2675 = vld [vmem:[#allocation3 + $0x220] sm:$0xff]
    %v2676 = vld [vmem:[#allocation3 + $0x228] sm:$0xff]
    %v2677 = vld [vmem:[#allocation3 + $0x230] sm:$0xff]
    %v2678 = vld [vmem:[#allocation3 + $0x238] sm:$0xff]
    %v2679 = vld [vmem:[#allocation3 + $0x240] sm:$0xff]
    %v2680 = vld [vmem:[#allocation3 + $0x248] sm:$0xff]
    %v2681 = vld [vmem:[#allocation3 + $0x250] sm:$0xff]
    %v2682 = vld [vmem:[#allocation3 + $0x258] sm:$0xff]
    %v2683 = vld [vmem:[#allocation3 + $0x260] sm:$0xff]
    %v2684 = vld [vmem:[#allocation3 + $0x268] sm:$0xff]
    %v2685 = vld [vmem:[#allocation3 + $0x270] sm:$0xff]
    %v2686 = vld [vmem:[#allocation3 + $0x278] sm:$0xff]
    %v2687 = vld [vmem:[#allocation3 + $0x280] sm:$0xff]
    %v2688 = vld [vmem:[#allocation3 + $0x288] sm:$0xff]
    %v2689 = vld [vmem:[#allocation3 + $0x290] sm:$0xff]
    %v2690 = vld [vmem:[#allocation3 + $0x298] sm:$0xff]
    %v2691 = vld [vmem:[#allocation3 + $0x2a0] sm:$0xff]
    %v2692 = vld [vmem:[#allocation3 + $0x2a8] sm:$0xff]
    %v2693 = vld [vmem:[#allocation3 + $0x2b0] sm:$0xff]
    %v2694 = vld [vmem:[#allocation3 + $0x2b8] sm:$0xff]
    %v2695 = vld [vmem:[#allocation3 + $0x2c0] sm:$0xff]
    %v2696 = vld [vmem:[#allocation3 + $0x2c8] sm:$0xff]
    %v2697 = vld [vmem:[#allocation3 + $0x2d0] sm:$0xff]
    %v2698 = vld [vmem:[#allocation3 + $0x2d8] sm:$0xff]
    %v2699 = vld [vmem:[#allocation3 + $0x2e0] sm:$0xff]
    %v2700 = vld [vmem:[#allocation3 + $0x2e8] sm:$0xff]
    %v2701 = vld [vmem:[#allocation3 + $0x2f0] sm:$0xff]
    %v2702 = vld [vmem:[#allocation3 + $0x2f8] sm:$0xff]
    %v2703 = vld [vmem:[#allocation3 + $0x300] sm:$0xff]
    %v2704 = vld [vmem:[#allocation3 + $0x308] sm:$0xff]
    %v2705 = vld [vmem:[#allocation3 + $0x310] sm:$0xff]
    %v2706 = vld [vmem:[#allocation3 + $0x318] sm:$0xff]
    %v2707 = vld [vmem:[#allocation3 + $0x320] sm:$0xff]
    %v2708 = vld [vmem:[#allocation3 + $0x328] sm:$0xff]
    %v2709 = vld [vmem:[#allocation3 + $0x330] sm:$0xff]
    %v2710 = vld [vmem:[#allocation3 + $0x338] sm:$0xff]
    %v2711 = vld [vmem:[#allocation3 + $0x340] sm:$0xff]
    %v2712 = vld [vmem:[#allocation3 + $0x348] sm:$0xff]
    %v2713 = vld [vmem:[#allocation3 + $0x350] sm:$0xff]
    %v2714 = vld [vmem:[#allocation3 + $0x358] sm:$0xff]
    %v2715 = vld [vmem:[#allocation3 + $0x360] sm:$0xff]
    %v2716 = vld [vmem:[#allocation3 + $0x368] sm:$0xff]
    %v2717 = vld [vmem:[#allocation3 + $0x370] sm:$0xff]
    %v2718 = vld [vmem:[#allocation3 + $0x378] sm:$0xff]
    %v2719 = vld [vmem:[#allocation3 + $0x380] sm:$0xff]
    %v2720 = vld [vmem:[#allocation3 + $0x388] sm:$0xff]
    %v2721 = vld [vmem:[#allocation3 + $0x390] sm:$0xff]
    %v2722 = vld [vmem:[#allocation3 + $0x398] sm:$0xff]
    %v2723 = vld [vmem:[#allocation3 + $0x3a0] sm:$0xff]
    %v2724 = vld [vmem:[#allocation3 + $0x3a8] sm:$0xff]
    %v2725 = vld [vmem:[#allocation3 + $0x3b0] sm:$0xff]
    %v2726 = vld [vmem:[#allocation3 + $0x3b8] sm:$0xff]
    %v2727 = vld [vmem:[#allocation3 + $0x3c0] sm:$0xff]
    %v2728 = vld [vmem:[#allocation3 + $0x3c8] sm:$0xff]
    %v2729 = vld [vmem:[#allocation3 + $0x3d0] sm:$0xff]
    %v2730 = vld [vmem:[#allocation3 + $0x3d8] sm:$0xff]
    %v2731 = vld [vmem:[#allocation3 + $0x3e0] sm:$0xff]
    %v2732 = vld [vmem:[#allocation3 + $0x3e8] sm:$0xff]
    %v2733 = vld [vmem:[#allocation3 + $0x3f0] sm:$0xff]
    %v2734 = vld [vmem:[#allocation3 + $0x3f8] sm:$0xff]
    %v2735 = vld [vmem:[#allocation3 + $0x400] sm:$0xff]
    %v2736 = vld [vmem:[#allocation3 + $0x408] sm:$0xff]
    %v2737 = vld [vmem:[#allocation3 + $0x410] sm:$0xff]
    %v2738 = vld [vmem:[#allocation3 + $0x418] sm:$0xff]
    %v2739 = vld [vmem:[#allocation3 + $0x420] sm:$0xff]
    %v2740 = vld [vmem:[#allocation3 + $0x428] sm:$0xff]
    %v2741 = vld [vmem:[#allocation3 + $0x430] sm:$0xff]
    %v2742 = vld [vmem:[#allocation3 + $0x438] sm:$0xff]
    %v2743 = vld [vmem:[#allocation3 + $0x440] sm:$0xff]
    %v2744 = vld [vmem:[#allocation3 + $0x448] sm:$0xff]
    %v2745 = vld [vmem:[#allocation3 + $0x450] sm:$0xff]
    %v2746 = vld [vmem:[#allocation3 + $0x458] sm:$0xff]
    %v2747 = vld [vmem:[#allocation3 + $0x460] sm:$0xff]
    %v2748 = vld [vmem:[#allocation3 + $0x468] sm:$0xff]
    %v2749 = vld [vmem:[#allocation3 + $0x470] sm:$0xff]
    %v2750 = vld [vmem:[#allocation3 + $0x478] sm:$0xff]
    %v2751 = vld [vmem:[#allocation3 + $0x480] sm:$0xff]
    %v2752 = vld [vmem:[#allocation3 + $0x488] sm:$0xff]
    %v2753 = vld [vmem:[#allocation3 + $0x490] sm:$0xff]
    %v2754 = vld [vmem:[#allocation3 + $0x498] sm:$0xff]
    %v2755 = vld [vmem:[#allocation3 + $0x4a0] sm:$0xff]
    %v2756 = vld [vmem:[#allocation3 + $0x4a8] sm:$0xff]
    %v2757 = vld [vmem:[#allocation3 + $0x4b0] sm:$0xff]
    %v2758 = vld [vmem:[#allocation3 + $0x4b8] sm:$0xff]
    %v2759 = vld [vmem:[#allocation3 + $0x4c0] sm:$0xff]
    %v2760 = vld [vmem:[#allocation3 + $0x4c8] sm:$0xff]
    %v2761 = vld [vmem:[#allocation3 + $0x4d0] sm:$0xff]
    %v2762 = vld [vmem:[#allocation3 + $0x4d8] sm:$0xff]
    %v2763 = vld [vmem:[#allocation3 + $0x4e0] sm:$0xff]
    %v2764 = vld [vmem:[#allocation3 + $0x4e8] sm:$0xff]
    %v2765 = vld [vmem:[#allocation3 + $0x4f0] sm:$0xff]
    %v2766 = vld [vmem:[#allocation3 + $0x4f8] sm:$0xff]
    %v2767 = vld [vmem:[#allocation3 + $0x500] sm:$0xff]
    %v2768 = vld [vmem:[#allocation3 + $0x508] sm:$0xff]
    %v2769 = vld [vmem:[#allocation3 + $0x510] sm:$0xff]
    %v2770 = vld [vmem:[#allocation3 + $0x518] sm:$0xff]
    %v2771 = vld [vmem:[#allocation3 + $0x520] sm:$0xff]
    %v2772 = vld [vmem:[#allocation3 + $0x528] sm:$0xff]
    %v2773 = vld [vmem:[#allocation3 + $0x530] sm:$0xff]
    %v2774 = vld [vmem:[#allocation3 + $0x538] sm:$0xff]
    %v2775 = vld [vmem:[#allocation3 + $0x540] sm:$0xff]
    %v2776 = vld [vmem:[#allocation3 + $0x548] sm:$0xff]
    %v2777 = vld [vmem:[#allocation3 + $0x550] sm:$0xff]
    %v2778 = vld [vmem:[#allocation3 + $0x558] sm:$0xff]
    %v2779 = vld [vmem:[#allocation3 + $0x560] sm:$0xff]
    %v2780 = vld [vmem:[#allocation3 + $0x568] sm:$0xff]
    %v2781 = vld [vmem:[#allocation3 + $0x570] sm:$0xff]
    %v2782 = vld [vmem:[#allocation3 + $0x578] sm:$0xff]
    %v2783 = vld [vmem:[#allocation3 + $0x580] sm:$0xff]
    %v2784 = vld [vmem:[#allocation3 + $0x588] sm:$0xff]
    %v2785 = vld [vmem:[#allocation3 + $0x590] sm:$0xff]
    %v2786 = vld [vmem:[#allocation3 + $0x598] sm:$0xff]
    %v2787 = vld [vmem:[#allocation3 + $0x5a0] sm:$0xff]
    %v2788 = vld [vmem:[#allocation3 + $0x5a8] sm:$0xff]
    %v2789 = vld [vmem:[#allocation3 + $0x5b0] sm:$0xff]
    %v2790 = vld [vmem:[#allocation3 + $0x5b8] sm:$0xff]
    %v2791 = vld [vmem:[#allocation3 + $0x5c0] sm:$0xff]
    %v2792 = vld [vmem:[#allocation3 + $0x5c8] sm:$0xff]
    %v2793 = vld [vmem:[#allocation3 + $0x5d0] sm:$0xff]
    %v2794 = vld [vmem:[#allocation3 + $0x5d8] sm:$0xff]
    %v2795 = vld [vmem:[#allocation3 + $0x5e0] sm:$0xff]
    %v2796 = vld [vmem:[#allocation3 + $0x5e8] sm:$0xff]
    %v2797 = vld [vmem:[#allocation3 + $0x5f0] sm:$0xff]
    %v2798 = vld [vmem:[#allocation3 + $0x5f8] sm:$0xff]
    %v2799 = vld [vmem:[#allocation3 + $0x600] sm:$0xff]
    %v2800 = vld [vmem:[#allocation3 + $0x608] sm:$0xff]
    %v2801 = vld [vmem:[#allocation3 + $0x610] sm:$0xff]
    %v2802 = vld [vmem:[#allocation3 + $0x618] sm:$0xff]
    %v2803 = vld [vmem:[#allocation3 + $0x620] sm:$0xff]
    %v2804 = vld [vmem:[#allocation3 + $0x628] sm:$0xff]
    %v2805 = vld [vmem:[#allocation3 + $0x630] sm:$0xff]
    %v2806 = vld [vmem:[#allocation3 + $0x638] sm:$0xff]
    %v2807 = vld [vmem:[#allocation3 + $0x640] sm:$0xff]
    %v2808 = vld [vmem:[#allocation3 + $0x648] sm:$0xff]
    %v2809 = vld [vmem:[#allocation3 + $0x650] sm:$0xff]
    %v2810 = vld [vmem:[#allocation3 + $0x658] sm:$0xff]
    %v2811 = vld [vmem:[#allocation3 + $0x660] sm:$0xff]
    %v2812 = vld [vmem:[#allocation3 + $0x668] sm:$0xff]
    %v2813 = vld [vmem:[#allocation3 + $0x670] sm:$0xff]
    %v2814 = vld [vmem:[#allocation3 + $0x678] sm:$0xff]
    %v2815 = vld [vmem:[#allocation3 + $0x680] sm:$0xff]
    %v2816 = vld [vmem:[#allocation3 + $0x688] sm:$0xff]
    %v2817 = vld [vmem:[#allocation3 + $0x690] sm:$0xff]
    %v2818 = vld [vmem:[#allocation3 + $0x698] sm:$0xff]
    %v2819 = vld [vmem:[#allocation3 + $0x6a0] sm:$0xff]
    %v2820 = vld [vmem:[#allocation3 + $0x6a8] sm:$0xff]
    %v2821 = vld [vmem:[#allocation3 + $0x6b0] sm:$0xff]
    %v2822 = vld [vmem:[#allocation3 + $0x6b8] sm:$0xff]
    %v2823 = vld [vmem:[#allocation3 + $0x6c0] sm:$0xff]
    %v2824 = vld [vmem:[#allocation3 + $0x6c8] sm:$0xff]
    %v2825 = vld [vmem:[#allocation3 + $0x6d0] sm:$0xff]
    %v2826 = vld [vmem:[#allocation3 + $0x6d8] sm:$0xff]
    %v2827 = vld [vmem:[#allocation3 + $0x6e0] sm:$0xff]
    %v2828 = vld [vmem:[#allocation3 + $0x6e8] sm:$0xff]
    %v2829 = vld [vmem:[#allocation3 + $0x6f0] sm:$0xff]
    %v2830 = vld [vmem:[#allocation3 + $0x6f8] sm:$0xff]
    %v2831 = vld [vmem:[#allocation3 + $0x700] sm:$0xff]
    %v2832 = vld [vmem:[#allocation3 + $0x708] sm:$0xff]
    %v2833 = vld [vmem:[#allocation3 + $0x710] sm:$0xff]
    %v2834 = vld [vmem:[#allocation3 + $0x718] sm:$0xff]
    %v2835 = vld [vmem:[#allocation3 + $0x720] sm:$0xff]
    %v2836 = vld [vmem:[#allocation3 + $0x728] sm:$0xff]
    %v2837 = vld [vmem:[#allocation3 + $0x730] sm:$0xff]
    %v2838 = vld [vmem:[#allocation3 + $0x738] sm:$0xff]
    %v2839 = vld [vmem:[#allocation3 + $0x740] sm:$0xff]
    %v2840 = vld [vmem:[#allocation3 + $0x748] sm:$0xff]
    %v2841 = vld [vmem:[#allocation3 + $0x750] sm:$0xff]
    %v2842 = vld [vmem:[#allocation3 + $0x758] sm:$0xff]
    %v2843 = vld [vmem:[#allocation3 + $0x760] sm:$0xff]
    %v2844 = vld [vmem:[#allocation3 + $0x768] sm:$0xff]
    %v2845 = vld [vmem:[#allocation3 + $0x770] sm:$0xff]
    %v2846 = vld [vmem:[#allocation3 + $0x778] sm:$0xff]
    %v2847 = vld [vmem:[#allocation3 + $0x780] sm:$0xff]
    %v2848 = vld [vmem:[#allocation3 + $0x788] sm:$0xff]
    %v2849 = vld [vmem:[#allocation3 + $0x790] sm:$0xff]
    %v2850 = vld [vmem:[#allocation3 + $0x798] sm:$0xff]
    %v2851 = vld [vmem:[#allocation3 + $0x7a0] sm:$0xff]
    %v2852 = vld [vmem:[#allocation3 + $0x7a8] sm:$0xff]
    %v2853 = vld [vmem:[#allocation3 + $0x7b0] sm:$0xff]
    %v2854 = vld [vmem:[#allocation3 + $0x7b8] sm:$0xff]
    %v2855 = vld [vmem:[#allocation3 + $0x7c0] sm:$0xff]
    %v2856 = vld [vmem:[#allocation3 + $0x7c8] sm:$0xff]
    %v2857 = vld [vmem:[#allocation3 + $0x7d0] sm:$0xff]
    %v2858 = vld [vmem:[#allocation3 + $0x7d8] sm:$0xff]
    %v2859 = vld [vmem:[#allocation3 + $0x7e0] sm:$0xff]
    %v2860 = vld [vmem:[#allocation3 + $0x7e8] sm:$0xff]
    %v2861 = vld [vmem:[#allocation3 + $0x7f0] sm:$0xff]
    %v2862 = vld [vmem:[#allocation3 + $0x7f8] sm:$0xff]
    %v2863 = vld [vmem:[#allocation3 + $0x800] sm:$0xff]
    %v2864 = vld [vmem:[#allocation3 + $0x808] sm:$0xff]
    %v2865 = vld [vmem:[#allocation3 + $0x810] sm:$0xff]
    %v2866 = vld [vmem:[#allocation3 + $0x818] sm:$0xff]
    %v2867 = vld [vmem:[#allocation3 + $0x820] sm:$0xff]
    %v2868 = vld [vmem:[#allocation3 + $0x828] sm:$0xff]
    %v2869 = vld [vmem:[#allocation3 + $0x830] sm:$0xff]
    %v2870 = vld [vmem:[#allocation3 + $0x838] sm:$0xff]
    %v2871 = vld [vmem:[#allocation3 + $0x840] sm:$0xff]
    %v2872 = vld [vmem:[#allocation3 + $0x848] sm:$0xff]
    %v2873 = vld [vmem:[#allocation3 + $0x850] sm:$0xff]
    %v2874 = vld [vmem:[#allocation3 + $0x858] sm:$0xff]
    %v2875 = vld [vmem:[#allocation3 + $0x860] sm:$0xff]
    %v2876 = vld [vmem:[#allocation3 + $0x868] sm:$0xff]
    %v2877 = vld [vmem:[#allocation3 + $0x870] sm:$0xff]
    %v2878 = vld [vmem:[#allocation3 + $0x878] sm:$0xff]
    %v2879 = vld [vmem:[#allocation3 + $0x880] sm:$0xff]
    %v2880 = vld [vmem:[#allocation3 + $0x888] sm:$0xff]
    %v2881 = vld [vmem:[#allocation3 + $0x890] sm:$0xff]
    %v2882 = vld [vmem:[#allocation3 + $0x898] sm:$0xff]
    %v2883 = vld [vmem:[#allocation3 + $0x8a0] sm:$0xff]
    %v2884 = vld [vmem:[#allocation3 + $0x8a8] sm:$0xff]
    %v2885 = vld [vmem:[#allocation3 + $0x8b0] sm:$0xff]
    %v2886 = vld [vmem:[#allocation3 + $0x8b8] sm:$0xff]
    %v2887 = vld [vmem:[#allocation3 + $0x8c0] sm:$0xff]
    %v2888 = vld [vmem:[#allocation3 + $0x8c8] sm:$0xff]
    %v2889 = vld [vmem:[#allocation3 + $0x8d0] sm:$0xff]
    %v2890 = vld [vmem:[#allocation3 + $0x8d8] sm:$0xff]
    %v2891 = vld [vmem:[#allocation3 + $0x8e0] sm:$0xff]
    %v2892 = vld [vmem:[#allocation3 + $0x8e8] sm:$0xff]
    %v2893 = vld [vmem:[#allocation3 + $0x8f0] sm:$0xff]
    %v2894 = vld [vmem:[#allocation3 + $0x8f8] sm:$0xff]
    %v2895 = vld [vmem:[#allocation3 + $0x900] sm:$0xff]
    %v2896 = vld [vmem:[#allocation3 + $0x908] sm:$0xff]
    %v2897 = vld [vmem:[#allocation3 + $0x910] sm:$0xff]
    %v2898 = vld [vmem:[#allocation3 + $0x918] sm:$0xff]
    %v2899 = vld [vmem:[#allocation3 + $0x920] sm:$0xff]
    %v2900 = vld [vmem:[#allocation3 + $0x928] sm:$0xff]
    %v2901 = vld [vmem:[#allocation3 + $0x930] sm:$0xff]
    %v2902 = vld [vmem:[#allocation3 + $0x938] sm:$0xff]
    %v2903 = vld [vmem:[#allocation3 + $0x940] sm:$0xff]
    %v2904 = vld [vmem:[#allocation3 + $0x948] sm:$0xff]
    %v2905 = vld [vmem:[#allocation3 + $0x950] sm:$0xff]
    %v2906 = vld [vmem:[#allocation3 + $0x958] sm:$0xff]
    %v2907 = vld [vmem:[#allocation3 + $0x960] sm:$0xff]
    %v2908 = vld [vmem:[#allocation3 + $0x968] sm:$0xff]
    %v2909 = vld [vmem:[#allocation3 + $0x970] sm:$0xff]
    %v2910 = vld [vmem:[#allocation3 + $0x978] sm:$0xff]
    %v2911 = vld [vmem:[#allocation3 + $0x980] sm:$0xff]
    %v2912 = vld [vmem:[#allocation3 + $0x988] sm:$0xff]
    %v2913 = vld [vmem:[#allocation3 + $0x990] sm:$0xff]
    %v2914 = vld [vmem:[#allocation3 + $0x998] sm:$0xff]
    %v2915 = vld [vmem:[#allocation3 + $0x9a0] sm:$0xff]
    %v2916 = vld [vmem:[#allocation3 + $0x9a8] sm:$0xff]
    %v2917 = vld [vmem:[#allocation3 + $0x9b0] sm:$0xff]
    %v2918 = vld [vmem:[#allocation3 + $0x9b8] sm:$0xff]
    %v2919 = vld [vmem:[#allocation3 + $0x9c0] sm:$0xff]
    %v2920 = vld [vmem:[#allocation3 + $0x9c8] sm:$0xff]
    %v2921 = vld [vmem:[#allocation3 + $0x9d0] sm:$0xff]
    %v2922 = vld [vmem:[#allocation3 + $0x9d8] sm:$0xff]
    %v2923 = vld [vmem:[#allocation3 + $0x9e0] sm:$0xff]
    %v2924 = vld [vmem:[#allocation3 + $0x9e8] sm:$0xff]
    %v2925 = vld [vmem:[#allocation3 + $0x9f0] sm:$0xff]
    %v2926 = vld [vmem:[#allocation3 + $0x9f8] sm:$0xff]
    %v2927 = vld [vmem:[#allocation3 + $0xa00] sm:$0xff]
    %v2928 = vld [vmem:[#allocation3 + $0xa08] sm:$0xff]
    %v2929 = vld [vmem:[#allocation3 + $0xa10] sm:$0xff]
    %v2930 = vld [vmem:[#allocation3 + $0xa18] sm:$0xff]
    %v2931 = vld [vmem:[#allocation3 + $0xa20] sm:$0xff]
    %v2932 = vld [vmem:[#allocation3 + $0xa28] sm:$0xff]
    %v2933 = vld [vmem:[#allocation3 + $0xa30] sm:$0xff]
    %v2934 = vld [vmem:[#allocation3 + $0xa38] sm:$0xff]
    %v2935 = vld [vmem:[#allocation3 + $0xa40] sm:$0xff]
    %v2936 = vld [vmem:[#allocation3 + $0xa48] sm:$0xff]
    %v2937 = vld [vmem:[#allocation3 + $0xa50] sm:$0xff]
    %v2938 = vld [vmem:[#allocation3 + $0xa58] sm:$0xff]
    %v2939 = vld [vmem:[#allocation3 + $0xa60] sm:$0xff]
    %v2940 = vld [vmem:[#allocation3 + $0xa68] sm:$0xff]
    %v2941 = vld [vmem:[#allocation3 + $0xa70] sm:$0xff]
    %v2942 = vld [vmem:[#allocation3 + $0xa78] sm:$0xff]
    %v2943 = vld [vmem:[#allocation3 + $0xa80] sm:$0xff]
    %v2944 = vld [vmem:[#allocation3 + $0xa88] sm:$0xff]
    %v2945 = vld [vmem:[#allocation3 + $0xa90] sm:$0xff]
    %v2946 = vld [vmem:[#allocation3 + $0xa98] sm:$0xff]
    %v2947 = vld [vmem:[#allocation3 + $0xaa0] sm:$0xff]
    %v2948 = vld [vmem:[#allocation3 + $0xaa8] sm:$0xff]
    %v2949 = vld [vmem:[#allocation3 + $0xab0] sm:$0xff]
    %v2950 = vld [vmem:[#allocation3 + $0xab8] sm:$0xff]
    %v2951 = vld [vmem:[#allocation3 + $0xac0] sm:$0xff]
    %v2952 = vld [vmem:[#allocation3 + $0xac8] sm:$0xff]
    %v2953 = vld [vmem:[#allocation3 + $0xad0] sm:$0xff]
    %v2954 = vld [vmem:[#allocation3 + $0xad8] sm:$0xff]
    %v2955 = vld [vmem:[#allocation3 + $0xae0] sm:$0xff]
    %v2956 = vld [vmem:[#allocation3 + $0xae8] sm:$0xff]
    %v2957 = vld [vmem:[#allocation3 + $0xaf0] sm:$0xff]
    %v2958 = vld [vmem:[#allocation3 + $0xaf8] sm:$0xff]
    %v2959 = vld [vmem:[#allocation3 + $0xb00] sm:$0xff]
    %v2960 = vld [vmem:[#allocation3 + $0xb08] sm:$0xff]
    %v2961 = vld [vmem:[#allocation3 + $0xb10] sm:$0xff]
    %v2962 = vld [vmem:[#allocation3 + $0xb18] sm:$0xff]
    %v2963 = vld [vmem:[#allocation3 + $0xb20] sm:$0xff]
    %v2964 = vld [vmem:[#allocation3 + $0xb28] sm:$0xff]
    %v2965 = vld [vmem:[#allocation3 + $0xb30] sm:$0xff]
    %v2966 = vld [vmem:[#allocation3 + $0xb38] sm:$0xff]
    %v2967 = vld [vmem:[#allocation3 + $0xb40] sm:$0xff]
    %v2968 = vld [vmem:[#allocation3 + $0xb48] sm:$0xff]
    %v2969 = vld [vmem:[#allocation3 + $0xb50] sm:$0xff]
    %v2970 = vld [vmem:[#allocation3 + $0xb58] sm:$0xff]
    %v2971 = vld [vmem:[#allocation3 + $0xb60] sm:$0xff]
    %v2972 = vld [vmem:[#allocation3 + $0xb68] sm:$0xff]
    %v2973 = vld [vmem:[#allocation3 + $0xb70] sm:$0xff]
    %v2974 = vld [vmem:[#allocation3 + $0xb78] sm:$0xff]
    %v2975 = vld [vmem:[#allocation3 + $0xb80] sm:$0xff]
    %v2976 = vld [vmem:[#allocation3 + $0xb88] sm:$0xff]
    %v2977 = vld [vmem:[#allocation3 + $0xb90] sm:$0xff]
    %v2978 = vld [vmem:[#allocation3 + $0xb98] sm:$0xff]
    %v2979 = vld [vmem:[#allocation3 + $0xba0] sm:$0xff]
    %v2980 = vld [vmem:[#allocation3 + $0xba8] sm:$0xff]
    %v2981 = vld [vmem:[#allocation3 + $0xbb0] sm:$0xff]
    %v2982 = vld [vmem:[#allocation3 + $0xbb8] sm:$0xff]
    %v2983 = vld [vmem:[#allocation3 + $0xbc0] sm:$0xff]
    %v2984 = vld [vmem:[#allocation3 + $0xbc8] sm:$0xff]
    %v2985 = vld [vmem:[#allocation3 + $0xbd0] sm:$0xff]
    %v2986 = vld [vmem:[#allocation3 + $0xbd8] sm:$0xff]
    %v2987 = vld [vmem:[#allocation3 + $0xbe0] sm:$0xff]
    %v2988 = vld [vmem:[#allocation3 + $0xbe8] sm:$0xff]
    %v2989 = vld [vmem:[#allocation3 + $0xbf0] sm:$0xff]
    %v2990 = vld [vmem:[#allocation3 + $0xbf8] sm:$0xff]
    %v2991 = vld [vmem:[#allocation3 + $0xc00] sm:$0xff]
    %v2992 = vld [vmem:[#allocation3 + $0xc08] sm:$0xff]
    %v2993 = vld [vmem:[#allocation3 + $0xc10] sm:$0xff]
    %v2994 = vld [vmem:[#allocation3 + $0xc18] sm:$0xff]
    %v2995 = vld [vmem:[#allocation3 + $0xc20] sm:$0xff]
    %v2996 = vld [vmem:[#allocation3 + $0xc28] sm:$0xff]
    %v2997 = vld [vmem:[#allocation3 + $0xc30] sm:$0xff]
    %v2998 = vld [vmem:[#allocation3 + $0xc38] sm:$0xff]
    %v2999 = vld [vmem:[#allocation3 + $0xc40] sm:$0xff]
    %v3000 = vld [vmem:[#allocation3 + $0xc48] sm:$0xff]
    %v3001 = vld [vmem:[#allocation3 + $0xc50] sm:$0xff]
    %v3002 = vld [vmem:[#allocation3 + $0xc58] sm:$0xff]
    %v3003 = vld [vmem:[#allocation3 + $0xc60] sm:$0xff]
    %v3004 = vld [vmem:[#allocation3 + $0xc68] sm:$0xff]
    %v3005 = vld [vmem:[#allocation3 + $0xc70] sm:$0xff]
    %v3006 = vld [vmem:[#allocation3 + $0xc78] sm:$0xff]
    %v3007 = vld [vmem:[#allocation3 + $0xc80] sm:$0xff]
    %v3008 = vld [vmem:[#allocation3 + $0xc88] sm:$0xff]
    %v3009 = vld [vmem:[#allocation3 + $0xc90] sm:$0xff]
    %v3010 = vld [vmem:[#allocation3 + $0xc98] sm:$0xff]
    %v3011 = vld [vmem:[#allocation3 + $0xca0] sm:$0xff]
    %v3012 = vld [vmem:[#allocation3 + $0xca8] sm:$0xff]
    %v3013 = vld [vmem:[#allocation3 + $0xcb0] sm:$0xff]
    %v3014 = vld [vmem:[#allocation3 + $0xcb8] sm:$0xff]
    %v3015 = vld [vmem:[#allocation3 + $0xcc0] sm:$0xff]
    %v3016 = vld [vmem:[#allocation3 + $0xcc8] sm:$0xff]
    %v3017 = vld [vmem:[#allocation3 + $0xcd0] sm:$0xff]
    %v3018 = vld [vmem:[#allocation3 + $0xcd8] sm:$0xff]
    %v3019 = vld [vmem:[#allocation3 + $0xce0] sm:$0xff]
    %v3020 = vld [vmem:[#allocation3 + $0xce8] sm:$0xff]
    %v3021 = vld [vmem:[#allocation3 + $0xcf0] sm:$0xff]
    %v3022 = vld [vmem:[#allocation3 + $0xcf8] sm:$0xff]
    %v3023 = vld [vmem:[#allocation3 + $0xd00] sm:$0xff]
    %v3024 = vld [vmem:[#allocation3 + $0xd08] sm:$0xff]
    %v3025 = vld [vmem:[#allocation3 + $0xd10] sm:$0xff]
    %v3026 = vld [vmem:[#allocation3 + $0xd18] sm:$0xff]
    %v3027 = vld [vmem:[#allocation3 + $0xd20] sm:$0xff]
    %v3028 = vld [vmem:[#allocation3 + $0xd28] sm:$0xff]
    %v3029 = vld [vmem:[#allocation3 + $0xd30] sm:$0xff]
    %v3030 = vld [vmem:[#allocation3 + $0xd38] sm:$0xff]
    %v3031 = vld [vmem:[#allocation3 + $0xd40] sm:$0xff]
    %v3032 = vld [vmem:[#allocation3 + $0xd48] sm:$0xff]
    %v3033 = vld [vmem:[#allocation3 + $0xd50] sm:$0xff]
    %v3034 = vld [vmem:[#allocation3 + $0xd58] sm:$0xff]
    %v3035 = vld [vmem:[#allocation3 + $0xd60] sm:$0xff]
    %v3036 = vld [vmem:[#allocation3 + $0xd68] sm:$0xff]
    %v3037 = vld [vmem:[#allocation3 + $0xd70] sm:$0xff]
    %v3038 = vld [vmem:[#allocation3 + $0xd78] sm:$0xff]
    %v3039 = vld [vmem:[#allocation3 + $0xd80] sm:$0xff]
    %v3040 = vld [vmem:[#allocation3 + $0xd88] sm:$0xff]
    %v3041 = vld [vmem:[#allocation3 + $0xd90] sm:$0xff]
    %v3042 = vld [vmem:[#allocation3 + $0xd98] sm:$0xff]
    %v3043 = vld [vmem:[#allocation3 + $0xda0] sm:$0xff]
    %v3044 = vld [vmem:[#allocation3 + $0xda8] sm:$0xff]
    %v3045 = vld [vmem:[#allocation3 + $0xdb0] sm:$0xff]
    %v3046 = vld [vmem:[#allocation3 + $0xdb8] sm:$0xff]
    %v3047 = vld [vmem:[#allocation3 + $0xdc0] sm:$0xff]
    %v3048 = vld [vmem:[#allocation3 + $0xdc8] sm:$0xff]
    %v3049 = vld [vmem:[#allocation3 + $0xdd0] sm:$0xff]
    %v3050 = vld [vmem:[#allocation3 + $0xdd8] sm:$0xff]
    %v3051 = vld [vmem:[#allocation3 + $0xde0] sm:$0xff]
    %v3052 = vld [vmem:[#allocation3 + $0xde8] sm:$0xff]
    %v3053 = vld [vmem:[#allocation3 + $0xdf0] sm:$0xff]
    %v3054 = vld [vmem:[#allocation3 + $0xdf8] sm:$0xff]
    %v3055 = vld [vmem:[#allocation3 + $0xe00] sm:$0xff]
    %v3056 = vld [vmem:[#allocation3 + $0xe08] sm:$0xff]
    %v3057 = vld [vmem:[#allocation3 + $0xe10] sm:$0xff]
    %v3058 = vld [vmem:[#allocation3 + $0xe18] sm:$0xff]
    %v3059 = vld [vmem:[#allocation3 + $0xe20] sm:$0xff]
    %v3060 = vld [vmem:[#allocation3 + $0xe28] sm:$0xff]
    %v3061 = vld [vmem:[#allocation3 + $0xe30] sm:$0xff]
    %v3062 = vld [vmem:[#allocation3 + $0xe38] sm:$0xff]
    %v3063 = vld [vmem:[#allocation3 + $0xe40] sm:$0xff]
    %v3064 = vld [vmem:[#allocation3 + $0xe48] sm:$0xff]
    %v3065 = vld [vmem:[#allocation3 + $0xe50] sm:$0xff]
    %v3066 = vld [vmem:[#allocation3 + $0xe58] sm:$0xff]
    %v3067 = vld [vmem:[#allocation3 + $0xe60] sm:$0xff]
    %v3068 = vld [vmem:[#allocation3 + $0xe68] sm:$0xff]
    %v3069 = vld [vmem:[#allocation3 + $0xe70] sm:$0xff]
    %v3070 = vld [vmem:[#allocation3 + $0xe78] sm:$0xff]
    %v3071 = vld [vmem:[#allocation3 + $0xe80] sm:$0xff]
    %v3072 = vld [vmem:[#allocation3 + $0xe88] sm:$0xff]
    %v3073 = vld [vmem:[#allocation3 + $0xe90] sm:$0xff]
    %v3074 = vld [vmem:[#allocation3 + $0xe98] sm:$0xff]
    %v3075 = vld [vmem:[#allocation3 + $0xea0] sm:$0xff]
    %v3076 = vld [vmem:[#allocation3 + $0xea8] sm:$0xff]
    %v3077 = vld [vmem:[#allocation3 + $0xeb0] sm:$0xff]
    %v3078 = vld [vmem:[#allocation3 + $0xeb8] sm:$0xff]
    %v3079 = vld [vmem:[#allocation3 + $0xec0] sm:$0xff]
    %v3080 = vld [vmem:[#allocation3 + $0xec8] sm:$0xff]
    %v3081 = vld [vmem:[#allocation3 + $0xed0] sm:$0xff]
    %v3082 = vld [vmem:[#allocation3 + $0xed8] sm:$0xff]
    %v3083 = vld [vmem:[#allocation3 + $0xee0] sm:$0xff]
    %v3084 = vld [vmem:[#allocation3 + $0xee8] sm:$0xff]
    %v3085 = vld [vmem:[#allocation3 + $0xef0] sm:$0xff]
    %v3086 = vld [vmem:[#allocation3 + $0xef8] sm:$0xff]
    %v3087 = vld [vmem:[#allocation3 + $0xf00] sm:$0xff]
    %v3088 = vld [vmem:[#allocation3 + $0xf08] sm:$0xff]
    %v3089 = vld [vmem:[#allocation3 + $0xf10] sm:$0xff]
    %v3090 = vld [vmem:[#allocation3 + $0xf18] sm:$0xff]
    %v3091 = vld [vmem:[#allocation3 + $0xf20] sm:$0xff]
    %v3092 = vld [vmem:[#allocation3 + $0xf28] sm:$0xff]
    %v3093 = vld [vmem:[#allocation3 + $0xf30] sm:$0xff]
    %v3094 = vld [vmem:[#allocation3 + $0xf38] sm:$0xff]
    %v3095 = vld [vmem:[#allocation3 + $0xf40] sm:$0xff]
    %v3096 = vld [vmem:[#allocation3 + $0xf48] sm:$0xff]
    %v3097 = vld [vmem:[#allocation3 + $0xf50] sm:$0xff]
    %v3098 = vld [vmem:[#allocation3 + $0xf58] sm:$0xff]
    %v3099 = vld [vmem:[#allocation3 + $0xf60] sm:$0xff]
    %v3100 = vld [vmem:[#allocation3 + $0xf68] sm:$0xff]
    %v3101 = vld [vmem:[#allocation3 + $0xf70] sm:$0xff]
    %v3102 = vld [vmem:[#allocation3 + $0xf78] sm:$0xff]
    %v3103 = vld [vmem:[#allocation3 + $0xf80] sm:$0xff]
    %v3104 = vld [vmem:[#allocation3 + $0xf88] sm:$0xff]
    %v3105 = vld [vmem:[#allocation3 + $0xf90] sm:$0xff]
    %v3106 = vld [vmem:[#allocation3 + $0xf98] sm:$0xff]
    %v3107 = vld [vmem:[#allocation3 + $0xfa0] sm:$0xff]
    %v3108 = vld [vmem:[#allocation3 + $0xfa8] sm:$0xff]
    %v3109 = vld [vmem:[#allocation3 + $0xfb0] sm:$0xff]
    %v3110 = vld [vmem:[#allocation3 + $0xfb8] sm:$0xff]
    %v3111 = vld [vmem:[#allocation3 + $0xfc0] sm:$0xff]
    %v3112 = vld [vmem:[#allocation3 + $0xfc8] sm:$0xff]
    %v3113 = vld [vmem:[#allocation3 + $0xfd0] sm:$0xff]
    %v3114 = vld [vmem:[#allocation3 + $0xfd8] sm:$0xff]
    %v3115 = vld [vmem:[#allocation3 + $0xfe0] sm:$0xff]
    %v3116 = vld [vmem:[#allocation3 + $0xfe8] sm:$0xff]
    %v3117 = vld [vmem:[#allocation3 + $0xff0] sm:$0xff]
    %v3118 = vld [vmem:[#allocation3 + $0xff8] sm:$0xff]
    %s3119 = scalar_lea.vmem [#allocation9], 1
    %v3120 = vld [vmem:[%s3119] ss:$8 sm:$0xf]
    %v3121 = vld [vmem:[%s3119] ss:$8 sm:$0xf0]
    %v3122 = vor.u32 %v3120, %v3121
    %s3123 = scalar_lea.vmem [#allocation9], 6
    %v3124 = vld [vmem:[%s3123] ss:$8 sm:$0xf]
    %v3125 = vld [vmem:[%s3123] ss:$8 sm:$0xf0]
    %v3126 = vor.u32 %v3124, %v3125
    %s3127 = scalar_lea.vmem [#allocation9], 67
    %v3128 = vld [vmem:[%s3127] ss:$8 sm:$0xf]
    %v3129 = vld [vmem:[%s3127] ss:$8 sm:$0xf0]
    %v3130 = vor.u32 %v3128, %v3129
    %v3132 = vlaneseq
    %v3133 = vshrl.u32 %v3132, 7
    %v3134 = vsub.s32 0, %v3133
    %v3135 = vrot.slane %v3122, %v3134
    %v3136 = vlaneseq
    %v3137 = vshrl.u32 %v3136, 7
    %v3138 = vsub.s32 1, %v3137
    %v3139 = vrot.slane %v3122, %v3138
    %v3140 = vlaneseq
    %v3141 = vshrl.u32 %v3140, 7
    %v3142 = vsub.s32 2, %v3141
    %v3143 = vrot.slane %v3122, %v3142
    %v3144 = vlaneseq
    %v3145 = vshrl.u32 %v3144, 7
    %v3146 = vsub.s32 3, %v3145
    %v3147 = vrot.slane %v3122, %v3146
    %v3148 = vlaneseq
    %v3149 = vshrl.u32 %v3148, 7
    %v3150 = vsub.s32 4, %v3149
    %v3151 = vrot.slane %v3122, %v3150
    %v3152 = vlaneseq
    %v3153 = vshrl.u32 %v3152, 7
    %v3154 = vsub.s32 5, %v3153
    %v3155 = vrot.slane %v3122, %v3154
    %v3156 = vlaneseq
    %v3157 = vshrl.u32 %v3156, 7
    %v3158 = vsub.s32 6, %v3157
    %v3159 = vrot.slane %v3122, %v3158
    %v3160 = vlaneseq
    %v3161 = vshrl.u32 %v3160, 7
    %v3162 = vsub.s32 7, %v3161
    %v3163 = vrot.slane %v3122, %v3162
    %v3684 = vunpack.c.l.b16 %v2607
    %v3685 = vunpack.c.h.b16 %v2607
    %v3686 = vunpack.c.l.b16 %v2608
    %v3687 = vunpack.c.h.b16 %v2608
    %v3688 = vunpack.c.l.b16 %v2609
    %v3689 = vunpack.c.h.b16 %v2609
    %v3690 = vunpack.c.l.b16 %v2610
    %v3691 = vunpack.c.h.b16 %v2610
    %v3692 = vunpack.c.l.b16 %v2611
    %v3693 = vunpack.c.h.b16 %v2611
    %v3694 = vunpack.c.l.b16 %v2612
    %v3695 = vunpack.c.h.b16 %v2612
    %v3696 = vunpack.c.l.b16 %v2613
    %v3697 = vunpack.c.h.b16 %v2613
    %v3698 = vunpack.c.l.b16 %v2614
    %v3699 = vunpack.c.h.b16 %v2614
    %v3700 = vunpack.c.l.b16 %v2615
    %v3701 = vunpack.c.h.b16 %v2615
    %v3702 = vunpack.c.l.b16 %v2616
    %v3703 = vunpack.c.h.b16 %v2616
    %v3704 = vunpack.c.l.b16 %v2617
    %v3705 = vunpack.c.h.b16 %v2617
    %v3706 = vunpack.c.l.b16 %v2618
    %v3707 = vunpack.c.h.b16 %v2618
    %v3708 = vunpack.c.l.b16 %v2619
    %v3709 = vunpack.c.h.b16 %v2619
    %v3710 = vunpack.c.l.b16 %v2620
    %v3711 = vunpack.c.h.b16 %v2620
    %v3712 = vunpack.c.l.b16 %v2621
    %v3713 = vunpack.c.h.b16 %v2621
    %v3714 = vunpack.c.l.b16 %v2622
    %v3715 = vunpack.c.h.b16 %v2622
    %v3716 = vunpack.c.l.b16 %v2623
    %v3717 = vunpack.c.h.b16 %v2623
    %v3718 = vunpack.c.l.b16 %v2624
    %v3719 = vunpack.c.h.b16 %v2624
    %v3720 = vunpack.c.l.b16 %v2625
    %v3721 = vunpack.c.h.b16 %v2625
    %v3722 = vunpack.c.l.b16 %v2626
    %v3723 = vunpack.c.h.b16 %v2626
    %v3724 = vunpack.c.l.b16 %v2627
    %v3725 = vunpack.c.h.b16 %v2627
    %v3726 = vunpack.c.l.b16 %v2628
    %v3727 = vunpack.c.h.b16 %v2628
    %v3728 = vunpack.c.l.b16 %v2629
    %v3729 = vunpack.c.h.b16 %v2629
    %v3730 = vunpack.c.l.b16 %v2630
    %v3731 = vunpack.c.h.b16 %v2630
    %v3732 = vunpack.c.l.b16 %v2631
    %v3733 = vunpack.c.h.b16 %v2631
    %v3734 = vunpack.c.l.b16 %v2632
    %v3735 = vunpack.c.h.b16 %v2632
    %v3736 = vunpack.c.l.b16 %v2633
    %v3737 = vunpack.c.h.b16 %v2633
    %v3738 = vunpack.c.l.b16 %v2634
    %v3739 = vunpack.c.h.b16 %v2634
    %v3740 = vunpack.c.l.b16 %v2635
    %v3741 = vunpack.c.h.b16 %v2635
    %v3742 = vunpack.c.l.b16 %v2636
    %v3743 = vunpack.c.h.b16 %v2636
    %v3744 = vunpack.c.l.b16 %v2637
    %v3745 = vunpack.c.h.b16 %v2637
    %v3746 = vunpack.c.l.b16 %v2638
    %v3747 = vunpack.c.h.b16 %v2638
    %v3748 = vunpack.c.l.b16 %v2639
    %v3749 = vunpack.c.h.b16 %v2639
    %v3750 = vunpack.c.l.b16 %v2640
    %v3751 = vunpack.c.h.b16 %v2640
    %v3752 = vunpack.c.l.b16 %v2641
    %v3753 = vunpack.c.h.b16 %v2641
    %v3754 = vunpack.c.l.b16 %v2642
    %v3755 = vunpack.c.h.b16 %v2642
    %v3756 = vunpack.c.l.b16 %v2643
    %v3757 = vunpack.c.h.b16 %v2643
    %v3758 = vunpack.c.l.b16 %v2644
    %v3759 = vunpack.c.h.b16 %v2644
    %v3760 = vunpack.c.l.b16 %v2645
    %v3761 = vunpack.c.h.b16 %v2645
    %v3762 = vunpack.c.l.b16 %v2646
    %v3763 = vunpack.c.h.b16 %v2646
    %v3764 = vunpack.c.l.b16 %v2647
    %v3765 = vunpack.c.h.b16 %v2647
    %v3766 = vunpack.c.l.b16 %v2648
    %v3767 = vunpack.c.h.b16 %v2648
    %v3768 = vunpack.c.l.b16 %v2649
    %v3769 = vunpack.c.h.b16 %v2649
    %v3770 = vunpack.c.l.b16 %v2650
    %v3771 = vunpack.c.h.b16 %v2650
    %v3772 = vunpack.c.l.b16 %v2651
    %v3773 = vunpack.c.h.b16 %v2651
    %v3774 = vunpack.c.l.b16 %v2652
    %v3775 = vunpack.c.h.b16 %v2652
    %v3776 = vunpack.c.l.b16 %v2653
    %v3777 = vunpack.c.h.b16 %v2653
    %v3778 = vunpack.c.l.b16 %v2654
    %v3779 = vunpack.c.h.b16 %v2654
    %v3780 = vunpack.c.l.b16 %v2655
    %v3781 = vunpack.c.h.b16 %v2655
    %v3782 = vunpack.c.l.b16 %v2656
    %v3783 = vunpack.c.h.b16 %v2656
    %v3784 = vunpack.c.l.b16 %v2657
    %v3785 = vunpack.c.h.b16 %v2657
    %v3786 = vunpack.c.l.b16 %v2658
    %v3787 = vunpack.c.h.b16 %v2658
    %v3788 = vunpack.c.l.b16 %v2659
    %v3789 = vunpack.c.h.b16 %v2659
    %v3790 = vunpack.c.l.b16 %v2660
    %v3791 = vunpack.c.h.b16 %v2660
    %v3792 = vunpack.c.l.b16 %v2661
    %v3793 = vunpack.c.h.b16 %v2661
    %v3794 = vunpack.c.l.b16 %v2662
    %v3795 = vunpack.c.h.b16 %v2662
    %v3796 = vunpack.c.l.b16 %v2663
    %v3797 = vunpack.c.h.b16 %v2663
    %v3798 = vunpack.c.l.b16 %v2664
    %v3799 = vunpack.c.h.b16 %v2664
    %v3800 = vunpack.c.l.b16 %v2665
    %v3801 = vunpack.c.h.b16 %v2665
    %v3802 = vunpack.c.l.b16 %v2666
    %v3803 = vunpack.c.h.b16 %v2666
    %v3804 = vunpack.c.l.b16 %v2667
    %v3805 = vunpack.c.h.b16 %v2667
    %v3806 = vunpack.c.l.b16 %v2668
    %v3807 = vunpack.c.h.b16 %v2668
    %v3808 = vunpack.c.l.b16 %v2669
    %v3809 = vunpack.c.h.b16 %v2669
    %v3810 = vunpack.c.l.b16 %v2670
    %v3811 = vunpack.c.h.b16 %v2670
    %v3812 = vunpack.c.l.b16 %v2671
    %v3813 = vunpack.c.h.b16 %v2671
    %v3814 = vunpack.c.l.b16 %v2672
    %v3815 = vunpack.c.h.b16 %v2672
    %v3816 = vunpack.c.l.b16 %v2673
    %v3817 = vunpack.c.h.b16 %v2673
    %v3818 = vunpack.c.l.b16 %v2674
    %v3819 = vunpack.c.h.b16 %v2674
    %v3820 = vunpack.c.l.b16 %v2675
    %v3821 = vunpack.c.h.b16 %v2675
    %v3822 = vunpack.c.l.b16 %v2676
    %v3823 = vunpack.c.h.b16 %v2676
    %v3824 = vunpack.c.l.b16 %v2677
    %v3825 = vunpack.c.h.b16 %v2677
    %v3826 = vunpack.c.l.b16 %v2678
    %v3827 = vunpack.c.h.b16 %v2678
    %v3828 = vunpack.c.l.b16 %v2679
    %v3829 = vunpack.c.h.b16 %v2679
    %v3830 = vunpack.c.l.b16 %v2680
    %v3831 = vunpack.c.h.b16 %v2680
    %v3832 = vunpack.c.l.b16 %v2681
    %v3833 = vunpack.c.h.b16 %v2681
    %v3834 = vunpack.c.l.b16 %v2682
    %v3835 = vunpack.c.h.b16 %v2682
    %v3836 = vunpack.c.l.b16 %v2683
    %v3837 = vunpack.c.h.b16 %v2683
    %v3838 = vunpack.c.l.b16 %v2684
    %v3839 = vunpack.c.h.b16 %v2684
    %v3840 = vunpack.c.l.b16 %v2685
    %v3841 = vunpack.c.h.b16 %v2685
    %v3842 = vunpack.c.l.b16 %v2686
    %v3843 = vunpack.c.h.b16 %v2686
    %v3844 = vunpack.c.l.b16 %v2687
    %v3845 = vunpack.c.h.b16 %v2687
    %v3846 = vunpack.c.l.b16 %v2688
    %v3847 = vunpack.c.h.b16 %v2688
    %v3848 = vunpack.c.l.b16 %v2689
    %v3849 = vunpack.c.h.b16 %v2689
    %v3850 = vunpack.c.l.b16 %v2690
    %v3851 = vunpack.c.h.b16 %v2690
    %v3852 = vunpack.c.l.b16 %v2691
    %v3853 = vunpack.c.h.b16 %v2691
    %v3854 = vunpack.c.l.b16 %v2692
    %v3855 = vunpack.c.h.b16 %v2692
    %v3856 = vunpack.c.l.b16 %v2693
    %v3857 = vunpack.c.h.b16 %v2693
    %v3858 = vunpack.c.l.b16 %v2694
    %v3859 = vunpack.c.h.b16 %v2694
    %v3860 = vunpack.c.l.b16 %v2695
    %v3861 = vunpack.c.h.b16 %v2695
    %v3862 = vunpack.c.l.b16 %v2696
    %v3863 = vunpack.c.h.b16 %v2696
    %v3864 = vunpack.c.l.b16 %v2697
    %v3865 = vunpack.c.h.b16 %v2697
    %v3866 = vunpack.c.l.b16 %v2698
    %v3867 = vunpack.c.h.b16 %v2698
    %v3868 = vunpack.c.l.b16 %v2699
    %v3869 = vunpack.c.h.b16 %v2699
    %v3870 = vunpack.c.l.b16 %v2700
    %v3871 = vunpack.c.h.b16 %v2700
    %v3872 = vunpack.c.l.b16 %v2701
    %v3873 = vunpack.c.h.b16 %v2701
    %v3874 = vunpack.c.l.b16 %v2702
    %v3875 = vunpack.c.h.b16 %v2702
    %v3876 = vunpack.c.l.b16 %v2703
    %v3877 = vunpack.c.h.b16 %v2703
    %v3878 = vunpack.c.l.b16 %v2704
    %v3879 = vunpack.c.h.b16 %v2704
    %v3880 = vunpack.c.l.b16 %v2705
    %v3881 = vunpack.c.h.b16 %v2705
    %v3882 = vunpack.c.l.b16 %v2706
    %v3883 = vunpack.c.h.b16 %v2706
    %v3884 = vunpack.c.l.b16 %v2707
    %v3885 = vunpack.c.h.b16 %v2707
    %v3886 = vunpack.c.l.b16 %v2708
    %v3887 = vunpack.c.h.b16 %v2708
    %v3888 = vunpack.c.l.b16 %v2709
    %v3889 = vunpack.c.h.b16 %v2709
    %v3890 = vunpack.c.l.b16 %v2710
    %v3891 = vunpack.c.h.b16 %v2710
    %v3892 = vunpack.c.l.b16 %v2711
    %v3893 = vunpack.c.h.b16 %v2711
    %v3894 = vunpack.c.l.b16 %v2712
    %v3895 = vunpack.c.h.b16 %v2712
    %v3896 = vunpack.c.l.b16 %v2713
    %v3897 = vunpack.c.h.b16 %v2713
    %v3898 = vunpack.c.l.b16 %v2714
    %v3899 = vunpack.c.h.b16 %v2714
    %v3900 = vunpack.c.l.b16 %v2715
    %v3901 = vunpack.c.h.b16 %v2715
    %v3902 = vunpack.c.l.b16 %v2716
    %v3903 = vunpack.c.h.b16 %v2716
    %v3904 = vunpack.c.l.b16 %v2717
    %v3905 = vunpack.c.h.b16 %v2717
    %v3906 = vunpack.c.l.b16 %v2718
    %v3907 = vunpack.c.h.b16 %v2718
    %v3908 = vunpack.c.l.b16 %v2719
    %v3909 = vunpack.c.h.b16 %v2719
    %v3910 = vunpack.c.l.b16 %v2720
    %v3911 = vunpack.c.h.b16 %v2720
    %v3912 = vunpack.c.l.b16 %v2721
    %v3913 = vunpack.c.h.b16 %v2721
    %v3914 = vunpack.c.l.b16 %v2722
    %v3915 = vunpack.c.h.b16 %v2722
    %v3916 = vunpack.c.l.b16 %v2723
    %v3917 = vunpack.c.h.b16 %v2723
    %v3918 = vunpack.c.l.b16 %v2724
    %v3919 = vunpack.c.h.b16 %v2724
    %v3920 = vunpack.c.l.b16 %v2725
    %v3921 = vunpack.c.h.b16 %v2725
    %v3922 = vunpack.c.l.b16 %v2726
    %v3923 = vunpack.c.h.b16 %v2726
    %v3924 = vunpack.c.l.b16 %v2727
    %v3925 = vunpack.c.h.b16 %v2727
    %v3926 = vunpack.c.l.b16 %v2728
    %v3927 = vunpack.c.h.b16 %v2728
    %v3928 = vunpack.c.l.b16 %v2729
    %v3929 = vunpack.c.h.b16 %v2729
    %v3930 = vunpack.c.l.b16 %v2730
    %v3931 = vunpack.c.h.b16 %v2730
    %v3932 = vunpack.c.l.b16 %v2731
    %v3933 = vunpack.c.h.b16 %v2731
    %v3934 = vunpack.c.l.b16 %v2732
    %v3935 = vunpack.c.h.b16 %v2732
    %v3936 = vunpack.c.l.b16 %v2733
    %v3937 = vunpack.c.h.b16 %v2733
    %v3938 = vunpack.c.l.b16 %v2734
    %v3939 = vunpack.c.h.b16 %v2734
    %v3940 = vunpack.c.l.b16 %v2735
    %v3941 = vunpack.c.h.b16 %v2735
    %v3942 = vunpack.c.l.b16 %v2736
    %v3943 = vunpack.c.h.b16 %v2736
    %v3944 = vunpack.c.l.b16 %v2737
    %v3945 = vunpack.c.h.b16 %v2737
    %v3946 = vunpack.c.l.b16 %v2738
    %v3947 = vunpack.c.h.b16 %v2738
    %v3948 = vunpack.c.l.b16 %v2739
    %v3949 = vunpack.c.h.b16 %v2739
    %v3950 = vunpack.c.l.b16 %v2740
    %v3951 = vunpack.c.h.b16 %v2740
    %v3952 = vunpack.c.l.b16 %v2741
    %v3953 = vunpack.c.h.b16 %v2741
    %v3954 = vunpack.c.l.b16 %v2742
    %v3955 = vunpack.c.h.b16 %v2742
    %v3956 = vunpack.c.l.b16 %v2743
    %v3957 = vunpack.c.h.b16 %v2743
    %v3958 = vunpack.c.l.b16 %v2744
    %v3959 = vunpack.c.h.b16 %v2744
    %v3960 = vunpack.c.l.b16 %v2745
    %v3961 = vunpack.c.h.b16 %v2745
    %v3962 = vunpack.c.l.b16 %v2746
    %v3963 = vunpack.c.h.b16 %v2746
    %v3964 = vunpack.c.l.b16 %v2747
    %v3965 = vunpack.c.h.b16 %v2747
    %v3966 = vunpack.c.l.b16 %v2748
    %v3967 = vunpack.c.h.b16 %v2748
    %v3968 = vunpack.c.l.b16 %v2749
    %v3969 = vunpack.c.h.b16 %v2749
    %v3970 = vunpack.c.l.b16 %v2750
    %v3971 = vunpack.c.h.b16 %v2750
    %v3972 = vunpack.c.l.b16 %v2751
    %v3973 = vunpack.c.h.b16 %v2751
    %v3974 = vunpack.c.l.b16 %v2752
    %v3975 = vunpack.c.h.b16 %v2752
    %v3976 = vunpack.c.l.b16 %v2753
    %v3977 = vunpack.c.h.b16 %v2753
    %v3978 = vunpack.c.l.b16 %v2754
    %v3979 = vunpack.c.h.b16 %v2754
    %v3980 = vunpack.c.l.b16 %v2755
    %v3981 = vunpack.c.h.b16 %v2755
    %v3982 = vunpack.c.l.b16 %v2756
    %v3983 = vunpack.c.h.b16 %v2756
    %v3984 = vunpack.c.l.b16 %v2757
    %v3985 = vunpack.c.h.b16 %v2757
    %v3986 = vunpack.c.l.b16 %v2758
    %v3987 = vunpack.c.h.b16 %v2758
    %v3988 = vunpack.c.l.b16 %v2759
    %v3989 = vunpack.c.h.b16 %v2759
    %v3990 = vunpack.c.l.b16 %v2760
    %v3991 = vunpack.c.h.b16 %v2760
    %v3992 = vunpack.c.l.b16 %v2761
    %v3993 = vunpack.c.h.b16 %v2761
    %v3994 = vunpack.c.l.b16 %v2762
    %v3995 = vunpack.c.h.b16 %v2762
    %v3996 = vunpack.c.l.b16 %v2763
    %v3997 = vunpack.c.h.b16 %v2763
    %v3998 = vunpack.c.l.b16 %v2764
    %v3999 = vunpack.c.h.b16 %v2764
    %v4000 = vunpack.c.l.b16 %v2765
    %v4001 = vunpack.c.h.b16 %v2765
    %v4002 = vunpack.c.l.b16 %v2766
    %v4003 = vunpack.c.h.b16 %v2766
    %v4004 = vunpack.c.l.b16 %v2767
    %v4005 = vunpack.c.h.b16 %v2767
    %v4006 = vunpack.c.l.b16 %v2768
    %v4007 = vunpack.c.h.b16 %v2768
    %v4008 = vunpack.c.l.b16 %v2769
    %v4009 = vunpack.c.h.b16 %v2769
    %v4010 = vunpack.c.l.b16 %v2770
    %v4011 = vunpack.c.h.b16 %v2770
    %v4012 = vunpack.c.l.b16 %v2771
    %v4013 = vunpack.c.h.b16 %v2771
    %v4014 = vunpack.c.l.b16 %v2772
    %v4015 = vunpack.c.h.b16 %v2772
    %v4016 = vunpack.c.l.b16 %v2773
    %v4017 = vunpack.c.h.b16 %v2773
    %v4018 = vunpack.c.l.b16 %v2774
    %v4019 = vunpack.c.h.b16 %v2774
    %v4020 = vunpack.c.l.b16 %v2775
    %v4021 = vunpack.c.h.b16 %v2775
    %v4022 = vunpack.c.l.b16 %v2776
    %v4023 = vunpack.c.h.b16 %v2776
    %v4024 = vunpack.c.l.b16 %v2777
    %v4025 = vunpack.c.h.b16 %v2777
    %v4026 = vunpack.c.l.b16 %v2778
    %v4027 = vunpack.c.h.b16 %v2778
    %v4028 = vunpack.c.l.b16 %v2779
    %v4029 = vunpack.c.h.b16 %v2779
    %v4030 = vunpack.c.l.b16 %v2780
    %v4031 = vunpack.c.h.b16 %v2780
    %v4032 = vunpack.c.l.b16 %v2781
    %v4033 = vunpack.c.h.b16 %v2781
    %v4034 = vunpack.c.l.b16 %v2782
    %v4035 = vunpack.c.h.b16 %v2782
    %v4036 = vunpack.c.l.b16 %v2783
    %v4037 = vunpack.c.h.b16 %v2783
    %v4038 = vunpack.c.l.b16 %v2784
    %v4039 = vunpack.c.h.b16 %v2784
    %v4040 = vunpack.c.l.b16 %v2785
    %v4041 = vunpack.c.h.b16 %v2785
    %v4042 = vunpack.c.l.b16 %v2786
    %v4043 = vunpack.c.h.b16 %v2786
    %v4044 = vunpack.c.l.b16 %v2787
    %v4045 = vunpack.c.h.b16 %v2787
    %v4046 = vunpack.c.l.b16 %v2788
    %v4047 = vunpack.c.h.b16 %v2788
    %v4048 = vunpack.c.l.b16 %v2789
    %v4049 = vunpack.c.h.b16 %v2789
    %v4050 = vunpack.c.l.b16 %v2790
    %v4051 = vunpack.c.h.b16 %v2790
    %v4052 = vunpack.c.l.b16 %v2791
    %v4053 = vunpack.c.h.b16 %v2791
    %v4054 = vunpack.c.l.b16 %v2792
    %v4055 = vunpack.c.h.b16 %v2792
    %v4056 = vunpack.c.l.b16 %v2793
    %v4057 = vunpack.c.h.b16 %v2793
    %v4058 = vunpack.c.l.b16 %v2794
    %v4059 = vunpack.c.h.b16 %v2794
    %v4060 = vunpack.c.l.b16 %v2795
    %v4061 = vunpack.c.h.b16 %v2795
    %v4062 = vunpack.c.l.b16 %v2796
    %v4063 = vunpack.c.h.b16 %v2796
    %v4064 = vunpack.c.l.b16 %v2797
    %v4065 = vunpack.c.h.b16 %v2797
    %v4066 = vunpack.c.l.b16 %v2798
    %v4067 = vunpack.c.h.b16 %v2798
    %v4068 = vunpack.c.l.b16 %v2799
    %v4069 = vunpack.c.h.b16 %v2799
    %v4070 = vunpack.c.l.b16 %v2800
    %v4071 = vunpack.c.h.b16 %v2800
    %v4072 = vunpack.c.l.b16 %v2801
    %v4073 = vunpack.c.h.b16 %v2801
    %v4074 = vunpack.c.l.b16 %v2802
    %v4075 = vunpack.c.h.b16 %v2802
    %v4076 = vunpack.c.l.b16 %v2803
    %v4077 = vunpack.c.h.b16 %v2803
    %v4078 = vunpack.c.l.b16 %v2804
    %v4079 = vunpack.c.h.b16 %v2804
    %v4080 = vunpack.c.l.b16 %v2805
    %v4081 = vunpack.c.h.b16 %v2805
    %v4082 = vunpack.c.l.b16 %v2806
    %v4083 = vunpack.c.h.b16 %v2806
    %v4084 = vunpack.c.l.b16 %v2807
    %v4085 = vunpack.c.h.b16 %v2807
    %v4086 = vunpack.c.l.b16 %v2808
    %v4087 = vunpack.c.h.b16 %v2808
    %v4088 = vunpack.c.l.b16 %v2809
    %v4089 = vunpack.c.h.b16 %v2809
    %v4090 = vunpack.c.l.b16 %v2810
    %v4091 = vunpack.c.h.b16 %v2810
    %v4092 = vunpack.c.l.b16 %v2811
    %v4093 = vunpack.c.h.b16 %v2811
    %v4094 = vunpack.c.l.b16 %v2812
    %v4095 = vunpack.c.h.b16 %v2812
    %v4096 = vunpack.c.l.b16 %v2813
    %v4097 = vunpack.c.h.b16 %v2813
    %v4098 = vunpack.c.l.b16 %v2814
    %v4099 = vunpack.c.h.b16 %v2814
    %v4100 = vunpack.c.l.b16 %v2815
    %v4101 = vunpack.c.h.b16 %v2815
    %v4102 = vunpack.c.l.b16 %v2816
    %v4103 = vunpack.c.h.b16 %v2816
    %v4104 = vunpack.c.l.b16 %v2817
    %v4105 = vunpack.c.h.b16 %v2817
    %v4106 = vunpack.c.l.b16 %v2818
    %v4107 = vunpack.c.h.b16 %v2818
    %v4108 = vunpack.c.l.b16 %v2819
    %v4109 = vunpack.c.h.b16 %v2819
    %v4110 = vunpack.c.l.b16 %v2820
    %v4111 = vunpack.c.h.b16 %v2820
    %v4112 = vunpack.c.l.b16 %v2821
    %v4113 = vunpack.c.h.b16 %v2821
    %v4114 = vunpack.c.l.b16 %v2822
    %v4115 = vunpack.c.h.b16 %v2822
    %v4116 = vunpack.c.l.b16 %v2823
    %v4117 = vunpack.c.h.b16 %v2823
    %v4118 = vunpack.c.l.b16 %v2824
    %v4119 = vunpack.c.h.b16 %v2824
    %v4120 = vunpack.c.l.b16 %v2825
    %v4121 = vunpack.c.h.b16 %v2825
    %v4122 = vunpack.c.l.b16 %v2826
    %v4123 = vunpack.c.h.b16 %v2826
    %v4124 = vunpack.c.l.b16 %v2827
    %v4125 = vunpack.c.h.b16 %v2827
    %v4126 = vunpack.c.l.b16 %v2828
    %v4127 = vunpack.c.h.b16 %v2828
    %v4128 = vunpack.c.l.b16 %v2829
    %v4129 = vunpack.c.h.b16 %v2829
    %v4130 = vunpack.c.l.b16 %v2830
    %v4131 = vunpack.c.h.b16 %v2830
    %v4132 = vunpack.c.l.b16 %v2831
    %v4133 = vunpack.c.h.b16 %v2831
    %v4134 = vunpack.c.l.b16 %v2832
    %v4135 = vunpack.c.h.b16 %v2832
    %v4136 = vunpack.c.l.b16 %v2833
    %v4137 = vunpack.c.h.b16 %v2833
    %v4138 = vunpack.c.l.b16 %v2834
    %v4139 = vunpack.c.h.b16 %v2834
    %v4140 = vunpack.c.l.b16 %v2835
    %v4141 = vunpack.c.h.b16 %v2835
    %v4142 = vunpack.c.l.b16 %v2836
    %v4143 = vunpack.c.h.b16 %v2836
    %v4144 = vunpack.c.l.b16 %v2837
    %v4145 = vunpack.c.h.b16 %v2837
    %v4146 = vunpack.c.l.b16 %v2838
    %v4147 = vunpack.c.h.b16 %v2838
    %v4148 = vunpack.c.l.b16 %v2839
    %v4149 = vunpack.c.h.b16 %v2839
    %v4150 = vunpack.c.l.b16 %v2840
    %v4151 = vunpack.c.h.b16 %v2840
    %v4152 = vunpack.c.l.b16 %v2841
    %v4153 = vunpack.c.h.b16 %v2841
    %v4154 = vunpack.c.l.b16 %v2842
    %v4155 = vunpack.c.h.b16 %v2842
    %v4156 = vunpack.c.l.b16 %v2843
    %v4157 = vunpack.c.h.b16 %v2843
    %v4158 = vunpack.c.l.b16 %v2844
    %v4159 = vunpack.c.h.b16 %v2844
    %v4160 = vunpack.c.l.b16 %v2845
    %v4161 = vunpack.c.h.b16 %v2845
    %v4162 = vunpack.c.l.b16 %v2846
    %v4163 = vunpack.c.h.b16 %v2846
    %v4164 = vunpack.c.l.b16 %v2847
    %v4165 = vunpack.c.h.b16 %v2847
    %v4166 = vunpack.c.l.b16 %v2848
    %v4167 = vunpack.c.h.b16 %v2848
    %v4168 = vunpack.c.l.b16 %v2849
    %v4169 = vunpack.c.h.b16 %v2849
    %v4170 = vunpack.c.l.b16 %v2850
    %v4171 = vunpack.c.h.b16 %v2850
    %v4172 = vunpack.c.l.b16 %v2851
    %v4173 = vunpack.c.h.b16 %v2851
    %v4174 = vunpack.c.l.b16 %v2852
    %v4175 = vunpack.c.h.b16 %v2852
    %v4176 = vunpack.c.l.b16 %v2853
    %v4177 = vunpack.c.h.b16 %v2853
    %v4178 = vunpack.c.l.b16 %v2854
    %v4179 = vunpack.c.h.b16 %v2854
    %v4180 = vunpack.c.l.b16 %v2855
    %v4181 = vunpack.c.h.b16 %v2855
    %v4182 = vunpack.c.l.b16 %v2856
    %v4183 = vunpack.c.h.b16 %v2856
    %v4184 = vunpack.c.l.b16 %v2857
    %v4185 = vunpack.c.h.b16 %v2857
    %v4186 = vunpack.c.l.b16 %v2858
    %v4187 = vunpack.c.h.b16 %v2858
    %v4188 = vunpack.c.l.b16 %v2859
    %v4189 = vunpack.c.h.b16 %v2859
    %v4190 = vunpack.c.l.b16 %v2860
    %v4191 = vunpack.c.h.b16 %v2860
    %v4192 = vunpack.c.l.b16 %v2861
    %v4193 = vunpack.c.h.b16 %v2861
    %v4194 = vunpack.c.l.b16 %v2862
    %v4195 = vunpack.c.h.b16 %v2862
    %v4196 = vunpack.c.l.b16 %v2863
    %v4197 = vunpack.c.h.b16 %v2863
    %v4198 = vunpack.c.l.b16 %v2864
    %v4199 = vunpack.c.h.b16 %v2864
    %v4200 = vunpack.c.l.b16 %v2865
    %v4201 = vunpack.c.h.b16 %v2865
    %v4202 = vunpack.c.l.b16 %v2866
    %v4203 = vunpack.c.h.b16 %v2866
    %v4204 = vunpack.c.l.b16 %v2867
    %v4205 = vunpack.c.h.b16 %v2867
    %v4206 = vunpack.c.l.b16 %v2868
    %v4207 = vunpack.c.h.b16 %v2868
    %v4208 = vunpack.c.l.b16 %v2869
    %v4209 = vunpack.c.h.b16 %v2869
    %v4210 = vunpack.c.l.b16 %v2870
    %v4211 = vunpack.c.h.b16 %v2870
    %v4212 = vunpack.c.l.b16 %v2871
    %v4213 = vunpack.c.h.b16 %v2871
    %v4214 = vunpack.c.l.b16 %v2872
    %v4215 = vunpack.c.h.b16 %v2872
    %v4216 = vunpack.c.l.b16 %v2873
    %v4217 = vunpack.c.h.b16 %v2873
    %v4218 = vunpack.c.l.b16 %v2874
    %v4219 = vunpack.c.h.b16 %v2874
    %v4220 = vunpack.c.l.b16 %v2875
    %v4221 = vunpack.c.h.b16 %v2875
    %v4222 = vunpack.c.l.b16 %v2876
    %v4223 = vunpack.c.h.b16 %v2876
    %v4224 = vunpack.c.l.b16 %v2877
    %v4225 = vunpack.c.h.b16 %v2877
    %v4226 = vunpack.c.l.b16 %v2878
    %v4227 = vunpack.c.h.b16 %v2878
    %v4228 = vunpack.c.l.b16 %v2879
    %v4229 = vunpack.c.h.b16 %v2879
    %v4230 = vunpack.c.l.b16 %v2880
    %v4231 = vunpack.c.h.b16 %v2880
    %v4232 = vunpack.c.l.b16 %v2881
    %v4233 = vunpack.c.h.b16 %v2881
    %v4234 = vunpack.c.l.b16 %v2882
    %v4235 = vunpack.c.h.b16 %v2882
    %v4236 = vunpack.c.l.b16 %v2883
    %v4237 = vunpack.c.h.b16 %v2883
    %v4238 = vunpack.c.l.b16 %v2884
    %v4239 = vunpack.c.h.b16 %v2884
    %v4240 = vunpack.c.l.b16 %v2885
    %v4241 = vunpack.c.h.b16 %v2885
    %v4242 = vunpack.c.l.b16 %v2886
    %v4243 = vunpack.c.h.b16 %v2886
    %v4244 = vunpack.c.l.b16 %v2887
    %v4245 = vunpack.c.h.b16 %v2887
    %v4246 = vunpack.c.l.b16 %v2888
    %v4247 = vunpack.c.h.b16 %v2888
    %v4248 = vunpack.c.l.b16 %v2889
    %v4249 = vunpack.c.h.b16 %v2889
    %v4250 = vunpack.c.l.b16 %v2890
    %v4251 = vunpack.c.h.b16 %v2890
    %v4252 = vunpack.c.l.b16 %v2891
    %v4253 = vunpack.c.h.b16 %v2891
    %v4254 = vunpack.c.l.b16 %v2892
    %v4255 = vunpack.c.h.b16 %v2892
    %v4256 = vunpack.c.l.b16 %v2893
    %v4257 = vunpack.c.h.b16 %v2893
    %v4258 = vunpack.c.l.b16 %v2894
    %v4259 = vunpack.c.h.b16 %v2894
    %v4260 = vunpack.c.l.b16 %v2895
    %v4261 = vunpack.c.h.b16 %v2895
    %v4262 = vunpack.c.l.b16 %v2896
    %v4263 = vunpack.c.h.b16 %v2896
    %v4264 = vunpack.c.l.b16 %v2897
    %v4265 = vunpack.c.h.b16 %v2897
    %v4266 = vunpack.c.l.b16 %v2898
    %v4267 = vunpack.c.h.b16 %v2898
    %v4268 = vunpack.c.l.b16 %v2899
    %v4269 = vunpack.c.h.b16 %v2899
    %v4270 = vunpack.c.l.b16 %v2900
    %v4271 = vunpack.c.h.b16 %v2900
    %v4272 = vunpack.c.l.b16 %v2901
    %v4273 = vunpack.c.h.b16 %v2901
    %v4274 = vunpack.c.l.b16 %v2902
    %v4275 = vunpack.c.h.b16 %v2902
    %v4276 = vunpack.c.l.b16 %v2903
    %v4277 = vunpack.c.h.b16 %v2903
    %v4278 = vunpack.c.l.b16 %v2904
    %v4279 = vunpack.c.h.b16 %v2904
    %v4280 = vunpack.c.l.b16 %v2905
    %v4281 = vunpack.c.h.b16 %v2905
    %v4282 = vunpack.c.l.b16 %v2906
    %v4283 = vunpack.c.h.b16 %v2906
    %v4284 = vunpack.c.l.b16 %v2907
    %v4285 = vunpack.c.h.b16 %v2907
    %v4286 = vunpack.c.l.b16 %v2908
    %v4287 = vunpack.c.h.b16 %v2908
    %v4288 = vunpack.c.l.b16 %v2909
    %v4289 = vunpack.c.h.b16 %v2909
    %v4290 = vunpack.c.l.b16 %v2910
    %v4291 = vunpack.c.h.b16 %v2910
    %v4292 = vunpack.c.l.b16 %v2911
    %v4293 = vunpack.c.h.b16 %v2911
    %v4294 = vunpack.c.l.b16 %v2912
    %v4295 = vunpack.c.h.b16 %v2912
    %v4296 = vunpack.c.l.b16 %v2913
    %v4297 = vunpack.c.h.b16 %v2913
    %v4298 = vunpack.c.l.b16 %v2914
    %v4299 = vunpack.c.h.b16 %v2914
    %v4300 = vunpack.c.l.b16 %v2915
    %v4301 = vunpack.c.h.b16 %v2915
    %v4302 = vunpack.c.l.b16 %v2916
    %v4303 = vunpack.c.h.b16 %v2916
    %v4304 = vunpack.c.l.b16 %v2917
    %v4305 = vunpack.c.h.b16 %v2917
    %v4306 = vunpack.c.l.b16 %v2918
    %v4307 = vunpack.c.h.b16 %v2918
    %v4308 = vunpack.c.l.b16 %v2919
    %v4309 = vunpack.c.h.b16 %v2919
    %v4310 = vunpack.c.l.b16 %v2920
    %v4311 = vunpack.c.h.b16 %v2920
    %v4312 = vunpack.c.l.b16 %v2921
    %v4313 = vunpack.c.h.b16 %v2921
    %v4314 = vunpack.c.l.b16 %v2922
    %v4315 = vunpack.c.h.b16 %v2922
    %v4316 = vunpack.c.l.b16 %v2923
    %v4317 = vunpack.c.h.b16 %v2923
    %v4318 = vunpack.c.l.b16 %v2924
    %v4319 = vunpack.c.h.b16 %v2924
    %v4320 = vunpack.c.l.b16 %v2925
    %v4321 = vunpack.c.h.b16 %v2925
    %v4322 = vunpack.c.l.b16 %v2926
    %v4323 = vunpack.c.h.b16 %v2926
    %v4324 = vunpack.c.l.b16 %v2927
    %v4325 = vunpack.c.h.b16 %v2927
    %v4326 = vunpack.c.l.b16 %v2928
    %v4327 = vunpack.c.h.b16 %v2928
    %v4328 = vunpack.c.l.b16 %v2929
    %v4329 = vunpack.c.h.b16 %v2929
    %v4330 = vunpack.c.l.b16 %v2930
    %v4331 = vunpack.c.h.b16 %v2930
    %v4332 = vunpack.c.l.b16 %v2931
    %v4333 = vunpack.c.h.b16 %v2931
    %v4334 = vunpack.c.l.b16 %v2932
    %v4335 = vunpack.c.h.b16 %v2932
    %v4336 = vunpack.c.l.b16 %v2933
    %v4337 = vunpack.c.h.b16 %v2933
    %v4338 = vunpack.c.l.b16 %v2934
    %v4339 = vunpack.c.h.b16 %v2934
    %v4340 = vunpack.c.l.b16 %v2935
    %v4341 = vunpack.c.h.b16 %v2935
    %v4342 = vunpack.c.l.b16 %v2936
    %v4343 = vunpack.c.h.b16 %v2936
    %v4344 = vunpack.c.l.b16 %v2937
    %v4345 = vunpack.c.h.b16 %v2937
    %v4346 = vunpack.c.l.b16 %v2938
    %v4347 = vunpack.c.h.b16 %v2938
    %v4348 = vunpack.c.l.b16 %v2939
    %v4349 = vunpack.c.h.b16 %v2939
    %v4350 = vunpack.c.l.b16 %v2940
    %v4351 = vunpack.c.h.b16 %v2940
    %v4352 = vunpack.c.l.b16 %v2941
    %v4353 = vunpack.c.h.b16 %v2941
    %v4354 = vunpack.c.l.b16 %v2942
    %v4355 = vunpack.c.h.b16 %v2942
    %v4356 = vunpack.c.l.b16 %v2943
    %v4357 = vunpack.c.h.b16 %v2943
    %v4358 = vunpack.c.l.b16 %v2944
    %v4359 = vunpack.c.h.b16 %v2944
    %v4360 = vunpack.c.l.b16 %v2945
    %v4361 = vunpack.c.h.b16 %v2945
    %v4362 = vunpack.c.l.b16 %v2946
    %v4363 = vunpack.c.h.b16 %v2946
    %v4364 = vunpack.c.l.b16 %v2947
    %v4365 = vunpack.c.h.b16 %v2947
    %v4366 = vunpack.c.l.b16 %v2948
    %v4367 = vunpack.c.h.b16 %v2948
    %v4368 = vunpack.c.l.b16 %v2949
    %v4369 = vunpack.c.h.b16 %v2949
    %v4370 = vunpack.c.l.b16 %v2950
    %v4371 = vunpack.c.h.b16 %v2950
    %v4372 = vunpack.c.l.b16 %v2951
    %v4373 = vunpack.c.h.b16 %v2951
    %v4374 = vunpack.c.l.b16 %v2952
    %v4375 = vunpack.c.h.b16 %v2952
    %v4376 = vunpack.c.l.b16 %v2953
    %v4377 = vunpack.c.h.b16 %v2953
    %v4378 = vunpack.c.l.b16 %v2954
    %v4379 = vunpack.c.h.b16 %v2954
    %v4380 = vunpack.c.l.b16 %v2955
    %v4381 = vunpack.c.h.b16 %v2955
    %v4382 = vunpack.c.l.b16 %v2956
    %v4383 = vunpack.c.h.b16 %v2956
    %v4384 = vunpack.c.l.b16 %v2957
    %v4385 = vunpack.c.h.b16 %v2957
    %v4386 = vunpack.c.l.b16 %v2958
    %v4387 = vunpack.c.h.b16 %v2958
    %v4388 = vunpack.c.l.b16 %v2959
    %v4389 = vunpack.c.h.b16 %v2959
    %v4390 = vunpack.c.l.b16 %v2960
    %v4391 = vunpack.c.h.b16 %v2960
    %v4392 = vunpack.c.l.b16 %v2961
    %v4393 = vunpack.c.h.b16 %v2961
    %v4394 = vunpack.c.l.b16 %v2962
    %v4395 = vunpack.c.h.b16 %v2962
    %v4396 = vunpack.c.l.b16 %v2963
    %v4397 = vunpack.c.h.b16 %v2963
    %v4398 = vunpack.c.l.b16 %v2964
    %v4399 = vunpack.c.h.b16 %v2964
    %v4400 = vunpack.c.l.b16 %v2965
    %v4401 = vunpack.c.h.b16 %v2965
    %v4402 = vunpack.c.l.b16 %v2966
    %v4403 = vunpack.c.h.b16 %v2966
    %v4404 = vunpack.c.l.b16 %v2967
    %v4405 = vunpack.c.h.b16 %v2967
    %v4406 = vunpack.c.l.b16 %v2968
    %v4407 = vunpack.c.h.b16 %v2968
    %v4408 = vunpack.c.l.b16 %v2969
    %v4409 = vunpack.c.h.b16 %v2969
    %v4410 = vunpack.c.l.b16 %v2970
    %v4411 = vunpack.c.h.b16 %v2970
    %v4412 = vunpack.c.l.b16 %v2971
    %v4413 = vunpack.c.h.b16 %v2971
    %v4414 = vunpack.c.l.b16 %v2972
    %v4415 = vunpack.c.h.b16 %v2972
    %v4416 = vunpack.c.l.b16 %v2973
    %v4417 = vunpack.c.h.b16 %v2973
    %v4418 = vunpack.c.l.b16 %v2974
    %v4419 = vunpack.c.h.b16 %v2974
    %v4420 = vunpack.c.l.b16 %v2975
    %v4421 = vunpack.c.h.b16 %v2975
    %v4422 = vunpack.c.l.b16 %v2976
    %v4423 = vunpack.c.h.b16 %v2976
    %v4424 = vunpack.c.l.b16 %v2977
    %v4425 = vunpack.c.h.b16 %v2977
    %v4426 = vunpack.c.l.b16 %v2978
    %v4427 = vunpack.c.h.b16 %v2978
    %v4428 = vunpack.c.l.b16 %v2979
    %v4429 = vunpack.c.h.b16 %v2979
    %v4430 = vunpack.c.l.b16 %v2980
    %v4431 = vunpack.c.h.b16 %v2980
    %v4432 = vunpack.c.l.b16 %v2981
    %v4433 = vunpack.c.h.b16 %v2981
    %v4434 = vunpack.c.l.b16 %v2982
    %v4435 = vunpack.c.h.b16 %v2982
    %v4436 = vunpack.c.l.b16 %v2983
    %v4437 = vunpack.c.h.b16 %v2983
    %v4438 = vunpack.c.l.b16 %v2984
    %v4439 = vunpack.c.h.b16 %v2984
    %v4440 = vunpack.c.l.b16 %v2985
    %v4441 = vunpack.c.h.b16 %v2985
    %v4442 = vunpack.c.l.b16 %v2986
    %v4443 = vunpack.c.h.b16 %v2986
    %v4444 = vunpack.c.l.b16 %v2987
    %v4445 = vunpack.c.h.b16 %v2987
    %v4446 = vunpack.c.l.b16 %v2988
    %v4447 = vunpack.c.h.b16 %v2988
    %v4448 = vunpack.c.l.b16 %v2989
    %v4449 = vunpack.c.h.b16 %v2989
    %v4450 = vunpack.c.l.b16 %v2990
    %v4451 = vunpack.c.h.b16 %v2990
    %v4452 = vunpack.c.l.b16 %v2991
    %v4453 = vunpack.c.h.b16 %v2991
    %v4454 = vunpack.c.l.b16 %v2992
    %v4455 = vunpack.c.h.b16 %v2992
    %v4456 = vunpack.c.l.b16 %v2993
    %v4457 = vunpack.c.h.b16 %v2993
    %v4458 = vunpack.c.l.b16 %v2994
    %v4459 = vunpack.c.h.b16 %v2994
    %v4460 = vunpack.c.l.b16 %v2995
    %v4461 = vunpack.c.h.b16 %v2995
    %v4462 = vunpack.c.l.b16 %v2996
    %v4463 = vunpack.c.h.b16 %v2996
    %v4464 = vunpack.c.l.b16 %v2997
    %v4465 = vunpack.c.h.b16 %v2997
    %v4466 = vunpack.c.l.b16 %v2998
    %v4467 = vunpack.c.h.b16 %v2998
    %v4468 = vunpack.c.l.b16 %v2999
    %v4469 = vunpack.c.h.b16 %v2999
    %v4470 = vunpack.c.l.b16 %v3000
    %v4471 = vunpack.c.h.b16 %v3000
    %v4472 = vunpack.c.l.b16 %v3001
    %v4473 = vunpack.c.h.b16 %v3001
    %v4474 = vunpack.c.l.b16 %v3002
    %v4475 = vunpack.c.h.b16 %v3002
    %v4476 = vunpack.c.l.b16 %v3003
    %v4477 = vunpack.c.h.b16 %v3003
    %v4478 = vunpack.c.l.b16 %v3004
    %v4479 = vunpack.c.h.b16 %v3004
    %v4480 = vunpack.c.l.b16 %v3005
    %v4481 = vunpack.c.h.b16 %v3005
    %v4482 = vunpack.c.l.b16 %v3006
    %v4483 = vunpack.c.h.b16 %v3006
    %v4484 = vunpack.c.l.b16 %v3007
    %v4485 = vunpack.c.h.b16 %v3007
    %v4486 = vunpack.c.l.b16 %v3008
    %v4487 = vunpack.c.h.b16 %v3008
    %v4488 = vunpack.c.l.b16 %v3009
    %v4489 = vunpack.c.h.b16 %v3009
    %v4490 = vunpack.c.l.b16 %v3010
    %v4491 = vunpack.c.h.b16 %v3010
    %v4492 = vunpack.c.l.b16 %v3011
    %v4493 = vunpack.c.h.b16 %v3011
    %v4494 = vunpack.c.l.b16 %v3012
    %v4495 = vunpack.c.h.b16 %v3012
    %v4496 = vunpack.c.l.b16 %v3013
    %v4497 = vunpack.c.h.b16 %v3013
    %v4498 = vunpack.c.l.b16 %v3014
    %v4499 = vunpack.c.h.b16 %v3014
    %v4500 = vunpack.c.l.b16 %v3015
    %v4501 = vunpack.c.h.b16 %v3015
    %v4502 = vunpack.c.l.b16 %v3016
    %v4503 = vunpack.c.h.b16 %v3016
    %v4504 = vunpack.c.l.b16 %v3017
    %v4505 = vunpack.c.h.b16 %v3017
    %v4506 = vunpack.c.l.b16 %v3018
    %v4507 = vunpack.c.h.b16 %v3018
    %v4508 = vunpack.c.l.b16 %v3019
    %v4509 = vunpack.c.h.b16 %v3019
    %v4510 = vunpack.c.l.b16 %v3020
    %v4511 = vunpack.c.h.b16 %v3020
    %v4512 = vunpack.c.l.b16 %v3021
    %v4513 = vunpack.c.h.b16 %v3021
    %v4514 = vunpack.c.l.b16 %v3022
    %v4515 = vunpack.c.h.b16 %v3022
    %v4516 = vunpack.c.l.b16 %v3023
    %v4517 = vunpack.c.h.b16 %v3023
    %v4518 = vunpack.c.l.b16 %v3024
    %v4519 = vunpack.c.h.b16 %v3024
    %v4520 = vunpack.c.l.b16 %v3025
    %v4521 = vunpack.c.h.b16 %v3025
    %v4522 = vunpack.c.l.b16 %v3026
    %v4523 = vunpack.c.h.b16 %v3026
    %v4524 = vunpack.c.l.b16 %v3027
    %v4525 = vunpack.c.h.b16 %v3027
    %v4526 = vunpack.c.l.b16 %v3028
    %v4527 = vunpack.c.h.b16 %v3028
    %v4528 = vunpack.c.l.b16 %v3029
    %v4529 = vunpack.c.h.b16 %v3029
    %v4530 = vunpack.c.l.b16 %v3030
    %v4531 = vunpack.c.h.b16 %v3030
    %v4532 = vunpack.c.l.b16 %v3031
    %v4533 = vunpack.c.h.b16 %v3031
    %v4534 = vunpack.c.l.b16 %v3032
    %v4535 = vunpack.c.h.b16 %v3032
    %v4536 = vunpack.c.l.b16 %v3033
    %v4537 = vunpack.c.h.b16 %v3033
    %v4538 = vunpack.c.l.b16 %v3034
    %v4539 = vunpack.c.h.b16 %v3034
    %v4540 = vunpack.c.l.b16 %v3035
    %v4541 = vunpack.c.h.b16 %v3035
    %v4542 = vunpack.c.l.b16 %v3036
    %v4543 = vunpack.c.h.b16 %v3036
    %v4544 = vunpack.c.l.b16 %v3037
    %v4545 = vunpack.c.h.b16 %v3037
    %v4546 = vunpack.c.l.b16 %v3038
    %v4547 = vunpack.c.h.b16 %v3038
    %v4548 = vunpack.c.l.b16 %v3039
    %v4549 = vunpack.c.h.b16 %v3039
    %v4550 = vunpack.c.l.b16 %v3040
    %v4551 = vunpack.c.h.b16 %v3040
    %v4552 = vunpack.c.l.b16 %v3041
    %v4553 = vunpack.c.h.b16 %v3041
    %v4554 = vunpack.c.l.b16 %v3042
    %v4555 = vunpack.c.h.b16 %v3042
    %v4556 = vunpack.c.l.b16 %v3043
    %v4557 = vunpack.c.h.b16 %v3043
    %v4558 = vunpack.c.l.b16 %v3044
    %v4559 = vunpack.c.h.b16 %v3044
    %v4560 = vunpack.c.l.b16 %v3045
    %v4561 = vunpack.c.h.b16 %v3045
    %v4562 = vunpack.c.l.b16 %v3046
    %v4563 = vunpack.c.h.b16 %v3046
    %v4564 = vunpack.c.l.b16 %v3047
    %v4565 = vunpack.c.h.b16 %v3047
    %v4566 = vunpack.c.l.b16 %v3048
    %v4567 = vunpack.c.h.b16 %v3048
    %v4568 = vunpack.c.l.b16 %v3049
    %v4569 = vunpack.c.h.b16 %v3049
    %v4570 = vunpack.c.l.b16 %v3050
    %v4571 = vunpack.c.h.b16 %v3050
    %v4572 = vunpack.c.l.b16 %v3051
    %v4573 = vunpack.c.h.b16 %v3051
    %v4574 = vunpack.c.l.b16 %v3052
    %v4575 = vunpack.c.h.b16 %v3052
    %v4576 = vunpack.c.l.b16 %v3053
    %v4577 = vunpack.c.h.b16 %v3053
    %v4578 = vunpack.c.l.b16 %v3054
    %v4579 = vunpack.c.h.b16 %v3054
    %v4580 = vunpack.c.l.b16 %v3055
    %v4581 = vunpack.c.h.b16 %v3055
    %v4582 = vunpack.c.l.b16 %v3056
    %v4583 = vunpack.c.h.b16 %v3056
    %v4584 = vunpack.c.l.b16 %v3057
    %v4585 = vunpack.c.h.b16 %v3057
    %v4586 = vunpack.c.l.b16 %v3058
    %v4587 = vunpack.c.h.b16 %v3058
    %v4588 = vunpack.c.l.b16 %v3059
    %v4589 = vunpack.c.h.b16 %v3059
    %v4590 = vunpack.c.l.b16 %v3060
    %v4591 = vunpack.c.h.b16 %v3060
    %v4592 = vunpack.c.l.b16 %v3061
    %v4593 = vunpack.c.h.b16 %v3061
    %v4594 = vunpack.c.l.b16 %v3062
    %v4595 = vunpack.c.h.b16 %v3062
    %v4596 = vunpack.c.l.b16 %v3063
    %v4597 = vunpack.c.h.b16 %v3063
    %v4598 = vunpack.c.l.b16 %v3064
    %v4599 = vunpack.c.h.b16 %v3064
    %v4600 = vunpack.c.l.b16 %v3065
    %v4601 = vunpack.c.h.b16 %v3065
    %v4602 = vunpack.c.l.b16 %v3066
    %v4603 = vunpack.c.h.b16 %v3066
    %v4604 = vunpack.c.l.b16 %v3067
    %v4605 = vunpack.c.h.b16 %v3067
    %v4606 = vunpack.c.l.b16 %v3068
    %v4607 = vunpack.c.h.b16 %v3068
    %v4608 = vunpack.c.l.b16 %v3069
    %v4609 = vunpack.c.h.b16 %v3069
    %v4610 = vunpack.c.l.b16 %v3070
    %v4611 = vunpack.c.h.b16 %v3070
    %v4612 = vunpack.c.l.b16 %v3071
    %v4613 = vunpack.c.h.b16 %v3071
    %v4614 = vunpack.c.l.b16 %v3072
    %v4615 = vunpack.c.h.b16 %v3072
    %v4616 = vunpack.c.l.b16 %v3073
    %v4617 = vunpack.c.h.b16 %v3073
    %v4618 = vunpack.c.l.b16 %v3074
    %v4619 = vunpack.c.h.b16 %v3074
    %v4620 = vunpack.c.l.b16 %v3075
    %v4621 = vunpack.c.h.b16 %v3075
    %v4622 = vunpack.c.l.b16 %v3076
    %v4623 = vunpack.c.h.b16 %v3076
    %v4624 = vunpack.c.l.b16 %v3077
    %v4625 = vunpack.c.h.b16 %v3077
    %v4626 = vunpack.c.l.b16 %v3078
    %v4627 = vunpack.c.h.b16 %v3078
    %v4628 = vunpack.c.l.b16 %v3079
    %v4629 = vunpack.c.h.b16 %v3079
    %v4630 = vunpack.c.l.b16 %v3080
    %v4631 = vunpack.c.h.b16 %v3080
    %v4632 = vunpack.c.l.b16 %v3081
    %v4633 = vunpack.c.h.b16 %v3081
    %v4634 = vunpack.c.l.b16 %v3082
    %v4635 = vunpack.c.h.b16 %v3082
    %v4636 = vunpack.c.l.b16 %v3083
    %v4637 = vunpack.c.h.b16 %v3083
    %v4638 = vunpack.c.l.b16 %v3084
    %v4639 = vunpack.c.h.b16 %v3084
    %v4640 = vunpack.c.l.b16 %v3085
    %v4641 = vunpack.c.h.b16 %v3085
    %v4642 = vunpack.c.l.b16 %v3086
    %v4643 = vunpack.c.h.b16 %v3086
    %v4644 = vunpack.c.l.b16 %v3087
    %v4645 = vunpack.c.h.b16 %v3087
    %v4646 = vunpack.c.l.b16 %v3088
    %v4647 = vunpack.c.h.b16 %v3088
    %v4648 = vunpack.c.l.b16 %v3089
    %v4649 = vunpack.c.h.b16 %v3089
    %v4650 = vunpack.c.l.b16 %v3090
    %v4651 = vunpack.c.h.b16 %v3090
    %v4652 = vunpack.c.l.b16 %v3091
    %v4653 = vunpack.c.h.b16 %v3091
    %v4654 = vunpack.c.l.b16 %v3092
    %v4655 = vunpack.c.h.b16 %v3092
    %v4656 = vunpack.c.l.b16 %v3093
    %v4657 = vunpack.c.h.b16 %v3093
    %v4658 = vunpack.c.l.b16 %v3094
    %v4659 = vunpack.c.h.b16 %v3094
    %v4660 = vunpack.c.l.b16 %v3095
    %v4661 = vunpack.c.h.b16 %v3095
    %v4662 = vunpack.c.l.b16 %v3096
    %v4663 = vunpack.c.h.b16 %v3096
    %v4664 = vunpack.c.l.b16 %v3097
    %v4665 = vunpack.c.h.b16 %v3097
    %v4666 = vunpack.c.l.b16 %v3098
    %v4667 = vunpack.c.h.b16 %v3098
    %v4668 = vunpack.c.l.b16 %v3099
    %v4669 = vunpack.c.h.b16 %v3099
    %v4670 = vunpack.c.l.b16 %v3100
    %v4671 = vunpack.c.h.b16 %v3100
    %v4672 = vunpack.c.l.b16 %v3101
    %v4673 = vunpack.c.h.b16 %v3101
    %v4674 = vunpack.c.l.b16 %v3102
    %v4675 = vunpack.c.h.b16 %v3102
    %v4676 = vunpack.c.l.b16 %v3103
    %v4677 = vunpack.c.h.b16 %v3103
    %v4678 = vunpack.c.l.b16 %v3104
    %v4679 = vunpack.c.h.b16 %v3104
    %v4680 = vunpack.c.l.b16 %v3105
    %v4681 = vunpack.c.h.b16 %v3105
    %v4682 = vunpack.c.l.b16 %v3106
    %v4683 = vunpack.c.h.b16 %v3106
    %v4684 = vunpack.c.l.b16 %v3107
    %v4685 = vunpack.c.h.b16 %v3107
    %v4686 = vunpack.c.l.b16 %v3108
    %v4687 = vunpack.c.h.b16 %v3108
    %v4688 = vunpack.c.l.b16 %v3109
    %v4689 = vunpack.c.h.b16 %v3109
    %v4690 = vunpack.c.l.b16 %v3110
    %v4691 = vunpack.c.h.b16 %v3110
    %v4692 = vunpack.c.l.b16 %v3111
    %v4693 = vunpack.c.h.b16 %v3111
    %v4694 = vunpack.c.l.b16 %v3112
    %v4695 = vunpack.c.h.b16 %v3112
    %v4696 = vunpack.c.l.b16 %v3113
    %v4697 = vunpack.c.h.b16 %v3113
    %v4698 = vunpack.c.l.b16 %v3114
    %v4699 = vunpack.c.h.b16 %v3114
    %v4700 = vunpack.c.l.b16 %v3115
    %v4701 = vunpack.c.h.b16 %v3115
    %v4702 = vunpack.c.l.b16 %v3116
    %v4703 = vunpack.c.h.b16 %v3116
    %v4704 = vunpack.c.l.b16 %v3117
    %v4705 = vunpack.c.h.b16 %v3117
    %v4706 = vunpack.c.l.b16 %v3118
    %v4707 = vunpack.c.h.b16 %v3118
    %v4708 = vpack.c.b16 %v3692, %v3684
    %v4709 = vpack.c.b16 %v3693, %v3685
    %v4710 = vpack.c.b16 %v3694, %v3686
    %v4711 = vpack.c.b16 %v3695, %v3687
    %v4712 = vpack.c.b16 %v3696, %v3688
    %v4713 = vpack.c.b16 %v3697, %v3689
    %v4714 = vpack.c.b16 %v3698, %v3690
    %v4715 = vpack.c.b16 %v3699, %v3691
    %v4716 = vpack.c.b16 %v3708, %v3700
    %v4717 = vpack.c.b16 %v3709, %v3701
    %v4718 = vpack.c.b16 %v3710, %v3702
    %v4719 = vpack.c.b16 %v3711, %v3703
    %v4720 = vpack.c.b16 %v3712, %v3704
    %v4721 = vpack.c.b16 %v3713, %v3705
    %v4722 = vpack.c.b16 %v3714, %v3706
    %v4723 = vpack.c.b16 %v3715, %v3707
    %v4724 = vpack.c.b16 %v3724, %v3716
    %v4725 = vpack.c.b16 %v3725, %v3717
    %v4726 = vpack.c.b16 %v3726, %v3718
    %v4727 = vpack.c.b16 %v3727, %v3719
    %v4728 = vpack.c.b16 %v3728, %v3720
    %v4729 = vpack.c.b16 %v3729, %v3721
    %v4730 = vpack.c.b16 %v3730, %v3722
    %v4731 = vpack.c.b16 %v3731, %v3723
    %v4732 = vpack.c.b16 %v3740, %v3732
    %v4733 = vpack.c.b16 %v3741, %v3733
    %v4734 = vpack.c.b16 %v3742, %v3734
    %v4735 = vpack.c.b16 %v3743, %v3735
    %v4736 = vpack.c.b16 %v3744, %v3736
    %v4737 = vpack.c.b16 %v3745, %v3737
    %v4738 = vpack.c.b16 %v3746, %v3738
    %v4739 = vpack.c.b16 %v3747, %v3739
    %v4740 = vpack.c.b16 %v3756, %v3748
    %v4741 = vpack.c.b16 %v3757, %v3749
    %v4742 = vpack.c.b16 %v3758, %v3750
    %v4743 = vpack.c.b16 %v3759, %v3751
    %v4744 = vpack.c.b16 %v3760, %v3752
    %v4745 = vpack.c.b16 %v3761, %v3753
    %v4746 = vpack.c.b16 %v3762, %v3754
    %v4747 = vpack.c.b16 %v3763, %v3755
    %v4748 = vpack.c.b16 %v3772, %v3764
    %v4749 = vpack.c.b16 %v3773, %v3765
    %v4750 = vpack.c.b16 %v3774, %v3766
    %v4751 = vpack.c.b16 %v3775, %v3767
    %v4752 = vpack.c.b16 %v3776, %v3768
    %v4753 = vpack.c.b16 %v3777, %v3769
    %v4754 = vpack.c.b16 %v3778, %v3770
    %v4755 = vpack.c.b16 %v3779, %v3771
    %v4756 = vpack.c.b16 %v3788, %v3780
    %v4757 = vpack.c.b16 %v3789, %v3781
    %v4758 = vpack.c.b16 %v3790, %v3782
    %v4759 = vpack.c.b16 %v3791, %v3783
    %v4760 = vpack.c.b16 %v3792, %v3784
    %v4761 = vpack.c.b16 %v3793, %v3785
    %v4762 = vpack.c.b16 %v3794, %v3786
    %v4763 = vpack.c.b16 %v3795, %v3787
    %v4764 = vpack.c.b16 %v3804, %v3796
    %v4765 = vpack.c.b16 %v3805, %v3797
    %v4766 = vpack.c.b16 %v3806, %v3798
    %v4767 = vpack.c.b16 %v3807, %v3799
    %v4768 = vpack.c.b16 %v3808, %v3800
    %v4769 = vpack.c.b16 %v3809, %v3801
    %v4770 = vpack.c.b16 %v3810, %v3802
    %v4771 = vpack.c.b16 %v3811, %v3803
    %v4772 = vpack.c.b16 %v3820, %v3812
    %v4773 = vpack.c.b16 %v3821, %v3813
    %v4774 = vpack.c.b16 %v3822, %v3814
    %v4775 = vpack.c.b16 %v3823, %v3815
    %v4776 = vpack.c.b16 %v3824, %v3816
    %v4777 = vpack.c.b16 %v3825, %v3817
    %v4778 = vpack.c.b16 %v3826, %v3818
    %v4779 = vpack.c.b16 %v3827, %v3819
    %v4780 = vpack.c.b16 %v3836, %v3828
    %v4781 = vpack.c.b16 %v3837, %v3829
    %v4782 = vpack.c.b16 %v3838, %v3830
    %v4783 = vpack.c.b16 %v3839, %v3831
    %v4784 = vpack.c.b16 %v3840, %v3832
    %v4785 = vpack.c.b16 %v3841, %v3833
    %v4786 = vpack.c.b16 %v3842, %v3834
    %v4787 = vpack.c.b16 %v3843, %v3835
    %v4788 = vpack.c.b16 %v3852, %v3844
    %v4789 = vpack.c.b16 %v3853, %v3845
    %v4790 = vpack.c.b16 %v3854, %v3846
    %v4791 = vpack.c.b16 %v3855, %v3847
    %v4792 = vpack.c.b16 %v3856, %v3848
    %v4793 = vpack.c.b16 %v3857, %v3849
    %v4794 = vpack.c.b16 %v3858, %v3850
    %v4795 = vpack.c.b16 %v3859, %v3851
    %v4796 = vpack.c.b16 %v3868, %v3860
    %v4797 = vpack.c.b16 %v3869, %v3861
    %v4798 = vpack.c.b16 %v3870, %v3862
    %v4799 = vpack.c.b16 %v3871, %v3863
    %v4800 = vpack.c.b16 %v3872, %v3864
    %v4801 = vpack.c.b16 %v3873, %v3865
    %v4802 = vpack.c.b16 %v3874, %v3866
    %v4803 = vpack.c.b16 %v3875, %v3867
    %v4804 = vpack.c.b16 %v3884, %v3876
    %v4805 = vpack.c.b16 %v3885, %v3877
    %v4806 = vpack.c.b16 %v3886, %v3878
    %v4807 = vpack.c.b16 %v3887, %v3879
    %v4808 = vpack.c.b16 %v3888, %v3880
    %v4809 = vpack.c.b16 %v3889, %v3881
    %v4810 = vpack.c.b16 %v3890, %v3882
    %v4811 = vpack.c.b16 %v3891, %v3883
    %v4812 = vpack.c.b16 %v3900, %v3892
    %v4813 = vpack.c.b16 %v3901, %v3893
    %v4814 = vpack.c.b16 %v3902, %v3894
    %v4815 = vpack.c.b16 %v3903, %v3895
    %v4816 = vpack.c.b16 %v3904, %v3896
    %v4817 = vpack.c.b16 %v3905, %v3897
    %v4818 = vpack.c.b16 %v3906, %v3898
    %v4819 = vpack.c.b16 %v3907, %v3899
    %v4820 = vpack.c.b16 %v3916, %v3908
    %v4821 = vpack.c.b16 %v3917, %v3909
    %v4822 = vpack.c.b16 %v3918, %v3910
    %v4823 = vpack.c.b16 %v3919, %v3911
    %v4824 = vpack.c.b16 %v3920, %v3912
    %v4825 = vpack.c.b16 %v3921, %v3913
    %v4826 = vpack.c.b16 %v3922, %v3914
    %v4827 = vpack.c.b16 %v3923, %v3915
    %v4828 = vpack.c.b16 %v3932, %v3924
    %v4829 = vpack.c.b16 %v3933, %v3925
    %v4830 = vpack.c.b16 %v3934, %v3926
    %v4831 = vpack.c.b16 %v3935, %v3927
    %v4832 = vpack.c.b16 %v3936, %v3928
    %v4833 = vpack.c.b16 %v3937, %v3929
    %v4834 = vpack.c.b16 %v3938, %v3930
    %v4835 = vpack.c.b16 %v3939, %v3931
    %v4836 = vpack.c.b16 %v3948, %v3940
    %v4837 = vpack.c.b16 %v3949, %v3941
    %v4838 = vpack.c.b16 %v3950, %v3942
    %v4839 = vpack.c.b16 %v3951, %v3943
    %v4840 = vpack.c.b16 %v3952, %v3944
    %v4841 = vpack.c.b16 %v3953, %v3945
    %v4842 = vpack.c.b16 %v3954, %v3946
    %v4843 = vpack.c.b16 %v3955, %v3947
    %v4844 = vpack.c.b16 %v3964, %v3956
    %v4845 = vpack.c.b16 %v3965, %v3957
    %v4846 = vpack.c.b16 %v3966, %v3958
    %v4847 = vpack.c.b16 %v3967, %v3959
    %v4848 = vpack.c.b16 %v3968, %v3960
    %v4849 = vpack.c.b16 %v3969, %v3961
    %v4850 = vpack.c.b16 %v3970, %v3962
    %v4851 = vpack.c.b16 %v3971, %v3963
    %v4852 = vpack.c.b16 %v3980, %v3972
    %v4853 = vpack.c.b16 %v3981, %v3973
    %v4854 = vpack.c.b16 %v3982, %v3974
    %v4855 = vpack.c.b16 %v3983, %v3975
    %v4856 = vpack.c.b16 %v3984, %v3976
    %v4857 = vpack.c.b16 %v3985, %v3977
    %v4858 = vpack.c.b16 %v3986, %v3978
    %v4859 = vpack.c.b16 %v3987, %v3979
    %v4860 = vpack.c.b16 %v3996, %v3988
    %v4861 = vpack.c.b16 %v3997, %v3989
    %v4862 = vpack.c.b16 %v3998, %v3990
    %v4863 = vpack.c.b16 %v3999, %v3991
    %v4864 = vpack.c.b16 %v4000, %v3992
    %v4865 = vpack.c.b16 %v4001, %v3993
    %v4866 = vpack.c.b16 %v4002, %v3994
    %v4867 = vpack.c.b16 %v4003, %v3995
    %v4868 = vpack.c.b16 %v4012, %v4004
    %v4869 = vpack.c.b16 %v4013, %v4005
    %v4870 = vpack.c.b16 %v4014, %v4006
    %v4871 = vpack.c.b16 %v4015, %v4007
    %v4872 = vpack.c.b16 %v4016, %v4008
    %v4873 = vpack.c.b16 %v4017, %v4009
    %v4874 = vpack.c.b16 %v4018, %v4010
    %v4875 = vpack.c.b16 %v4019, %v4011
    %v4876 = vpack.c.b16 %v4028, %v4020
    %v4877 = vpack.c.b16 %v4029, %v4021
    %v4878 = vpack.c.b16 %v4030, %v4022
    %v4879 = vpack.c.b16 %v4031, %v4023
    %v4880 = vpack.c.b16 %v4032, %v4024
    %v4881 = vpack.c.b16 %v4033, %v4025
    %v4882 = vpack.c.b16 %v4034, %v4026
    %v4883 = vpack.c.b16 %v4035, %v4027
    %v4884 = vpack.c.b16 %v4044, %v4036
    %v4885 = vpack.c.b16 %v4045, %v4037
    %v4886 = vpack.c.b16 %v4046, %v4038
    %v4887 = vpack.c.b16 %v4047, %v4039
    %v4888 = vpack.c.b16 %v4048, %v4040
    %v4889 = vpack.c.b16 %v4049, %v4041
    %v4890 = vpack.c.b16 %v4050, %v4042
    %v4891 = vpack.c.b16 %v4051, %v4043
    %v4892 = vpack.c.b16 %v4060, %v4052
    %v4893 = vpack.c.b16 %v4061, %v4053
    %v4894 = vpack.c.b16 %v4062, %v4054
    %v4895 = vpack.c.b16 %v4063, %v4055
    %v4896 = vpack.c.b16 %v4064, %v4056
    %v4897 = vpack.c.b16 %v4065, %v4057
    %v4898 = vpack.c.b16 %v4066, %v4058
    %v4899 = vpack.c.b16 %v4067, %v4059
    %v4900 = vpack.c.b16 %v4076, %v4068
    %v4901 = vpack.c.b16 %v4077, %v4069
    %v4902 = vpack.c.b16 %v4078, %v4070
    %v4903 = vpack.c.b16 %v4079, %v4071
    %v4904 = vpack.c.b16 %v4080, %v4072
    %v4905 = vpack.c.b16 %v4081, %v4073
    %v4906 = vpack.c.b16 %v4082, %v4074
    %v4907 = vpack.c.b16 %v4083, %v4075
    %v4908 = vpack.c.b16 %v4092, %v4084
    %v4909 = vpack.c.b16 %v4093, %v4085
    %v4910 = vpack.c.b16 %v4094, %v4086
    %v4911 = vpack.c.b16 %v4095, %v4087
    %v4912 = vpack.c.b16 %v4096, %v4088
    %v4913 = vpack.c.b16 %v4097, %v4089
    %v4914 = vpack.c.b16 %v4098, %v4090
    %v4915 = vpack.c.b16 %v4099, %v4091
    %v4916 = vpack.c.b16 %v4108, %v4100
    %v4917 = vpack.c.b16 %v4109, %v4101
    %v4918 = vpack.c.b16 %v4110, %v4102
    %v4919 = vpack.c.b16 %v4111, %v4103
    %v4920 = vpack.c.b16 %v4112, %v4104
    %v4921 = vpack.c.b16 %v4113, %v4105
    %v4922 = vpack.c.b16 %v4114, %v4106
    %v4923 = vpack.c.b16 %v4115, %v4107
    %v4924 = vpack.c.b16 %v4124, %v4116
    %v4925 = vpack.c.b16 %v4125, %v4117
    %v4926 = vpack.c.b16 %v4126, %v4118
    %v4927 = vpack.c.b16 %v4127, %v4119
    %v4928 = vpack.c.b16 %v4128, %v4120
    %v4929 = vpack.c.b16 %v4129, %v4121
    %v4930 = vpack.c.b16 %v4130, %v4122
    %v4931 = vpack.c.b16 %v4131, %v4123
    %v4932 = vpack.c.b16 %v4140, %v4132
    %v4933 = vpack.c.b16 %v4141, %v4133
    %v4934 = vpack.c.b16 %v4142, %v4134
    %v4935 = vpack.c.b16 %v4143, %v4135
    %v4936 = vpack.c.b16 %v4144, %v4136
    %v4937 = vpack.c.b16 %v4145, %v4137
    %v4938 = vpack.c.b16 %v4146, %v4138
    %v4939 = vpack.c.b16 %v4147, %v4139
    %v4940 = vpack.c.b16 %v4156, %v4148
    %v4941 = vpack.c.b16 %v4157, %v4149
    %v4942 = vpack.c.b16 %v4158, %v4150
    %v4943 = vpack.c.b16 %v4159, %v4151
    %v4944 = vpack.c.b16 %v4160, %v4152
    %v4945 = vpack.c.b16 %v4161, %v4153
    %v4946 = vpack.c.b16 %v4162, %v4154
    %v4947 = vpack.c.b16 %v4163, %v4155
    %v4948 = vpack.c.b16 %v4172, %v4164
    %v4949 = vpack.c.b16 %v4173, %v4165
    %v4950 = vpack.c.b16 %v4174, %v4166
    %v4951 = vpack.c.b16 %v4175, %v4167
    %v4952 = vpack.c.b16 %v4176, %v4168
    %v4953 = vpack.c.b16 %v4177, %v4169
    %v4954 = vpack.c.b16 %v4178, %v4170
    %v4955 = vpack.c.b16 %v4179, %v4171
    %v4956 = vpack.c.b16 %v4188, %v4180
    %v4957 = vpack.c.b16 %v4189, %v4181
    %v4958 = vpack.c.b16 %v4190, %v4182
    %v4959 = vpack.c.b16 %v4191, %v4183
    %v4960 = vpack.c.b16 %v4192, %v4184
    %v4961 = vpack.c.b16 %v4193, %v4185
    %v4962 = vpack.c.b16 %v4194, %v4186
    %v4963 = vpack.c.b16 %v4195, %v4187
    %v4964 = vpack.c.b16 %v4204, %v4196
    %v4965 = vpack.c.b16 %v4205, %v4197
    %v4966 = vpack.c.b16 %v4206, %v4198
    %v4967 = vpack.c.b16 %v4207, %v4199
    %v4968 = vpack.c.b16 %v4208, %v4200
    %v4969 = vpack.c.b16 %v4209, %v4201
    %v4970 = vpack.c.b16 %v4210, %v4202
    %v4971 = vpack.c.b16 %v4211, %v4203
    %v4972 = vpack.c.b16 %v4220, %v4212
    %v4973 = vpack.c.b16 %v4221, %v4213
    %v4974 = vpack.c.b16 %v4222, %v4214
    %v4975 = vpack.c.b16 %v4223, %v4215
    %v4976 = vpack.c.b16 %v4224, %v4216
    %v4977 = vpack.c.b16 %v4225, %v4217
    %v4978 = vpack.c.b16 %v4226, %v4218
    %v4979 = vpack.c.b16 %v4227, %v4219
    %v4980 = vpack.c.b16 %v4236, %v4228
    %v4981 = vpack.c.b16 %v4237, %v4229
    %v4982 = vpack.c.b16 %v4238, %v4230
    %v4983 = vpack.c.b16 %v4239, %v4231
    %v4984 = vpack.c.b16 %v4240, %v4232
    %v4985 = vpack.c.b16 %v4241, %v4233
    %v4986 = vpack.c.b16 %v4242, %v4234
    %v4987 = vpack.c.b16 %v4243, %v4235
    %v4988 = vpack.c.b16 %v4252, %v4244
    %v4989 = vpack.c.b16 %v4253, %v4245
    %v4990 = vpack.c.b16 %v4254, %v4246
    %v4991 = vpack.c.b16 %v4255, %v4247
    %v4992 = vpack.c.b16 %v4256, %v4248
    %v4993 = vpack.c.b16 %v4257, %v4249
    %v4994 = vpack.c.b16 %v4258, %v4250
    %v4995 = vpack.c.b16 %v4259, %v4251
    %v4996 = vpack.c.b16 %v4268, %v4260
    %v4997 = vpack.c.b16 %v4269, %v4261
    %v4998 = vpack.c.b16 %v4270, %v4262
    %v4999 = vpack.c.b16 %v4271, %v4263
    %v5000 = vpack.c.b16 %v4272, %v4264
    %v5001 = vpack.c.b16 %v4273, %v4265
    %v5002 = vpack.c.b16 %v4274, %v4266
    %v5003 = vpack.c.b16 %v4275, %v4267
    %v5004 = vpack.c.b16 %v4284, %v4276
    %v5005 = vpack.c.b16 %v4285, %v4277
    %v5006 = vpack.c.b16 %v4286, %v4278
    %v5007 = vpack.c.b16 %v4287, %v4279
    %v5008 = vpack.c.b16 %v4288, %v4280
    %v5009 = vpack.c.b16 %v4289, %v4281
    %v5010 = vpack.c.b16 %v4290, %v4282
    %v5011 = vpack.c.b16 %v4291, %v4283
    %v5012 = vpack.c.b16 %v4300, %v4292
    %v5013 = vpack.c.b16 %v4301, %v4293
    %v5014 = vpack.c.b16 %v4302, %v4294
    %v5015 = vpack.c.b16 %v4303, %v4295
    %v5016 = vpack.c.b16 %v4304, %v4296
    %v5017 = vpack.c.b16 %v4305, %v4297
    %v5018 = vpack.c.b16 %v4306, %v4298
    %v5019 = vpack.c.b16 %v4307, %v4299
    %v5020 = vpack.c.b16 %v4316, %v4308
    %v5021 = vpack.c.b16 %v4317, %v4309
    %v5022 = vpack.c.b16 %v4318, %v4310
    %v5023 = vpack.c.b16 %v4319, %v4311
    %v5024 = vpack.c.b16 %v4320, %v4312
    %v5025 = vpack.c.b16 %v4321, %v4313
    %v5026 = vpack.c.b16 %v4322, %v4314
    %v5027 = vpack.c.b16 %v4323, %v4315
    %v5028 = vpack.c.b16 %v4332, %v4324
    %v5029 = vpack.c.b16 %v4333, %v4325
    %v5030 = vpack.c.b16 %v4334, %v4326
    %v5031 = vpack.c.b16 %v4335, %v4327
    %v5032 = vpack.c.b16 %v4336, %v4328
    %v5033 = vpack.c.b16 %v4337, %v4329
    %v5034 = vpack.c.b16 %v4338, %v4330
    %v5035 = vpack.c.b16 %v4339, %v4331
    %v5036 = vpack.c.b16 %v4348, %v4340
    %v5037 = vpack.c.b16 %v4349, %v4341
    %v5038 = vpack.c.b16 %v4350, %v4342
    %v5039 = vpack.c.b16 %v4351, %v4343
    %v5040 = vpack.c.b16 %v4352, %v4344
    %v5041 = vpack.c.b16 %v4353, %v4345
    %v5042 = vpack.c.b16 %v4354, %v4346
    %v5043 = vpack.c.b16 %v4355, %v4347
    %v5044 = vpack.c.b16 %v4364, %v4356
    %v5045 = vpack.c.b16 %v4365, %v4357
    %v5046 = vpack.c.b16 %v4366, %v4358
    %v5047 = vpack.c.b16 %v4367, %v4359
    %v5048 = vpack.c.b16 %v4368, %v4360
    %v5049 = vpack.c.b16 %v4369, %v4361
    %v5050 = vpack.c.b16 %v4370, %v4362
    %v5051 = vpack.c.b16 %v4371, %v4363
    %v5052 = vpack.c.b16 %v4380, %v4372
    %v5053 = vpack.c.b16 %v4381, %v4373
    %v5054 = vpack.c.b16 %v4382, %v4374
    %v5055 = vpack.c.b16 %v4383, %v4375
    %v5056 = vpack.c.b16 %v4384, %v4376
    %v5057 = vpack.c.b16 %v4385, %v4377
    %v5058 = vpack.c.b16 %v4386, %v4378
    %v5059 = vpack.c.b16 %v4387, %v4379
    %v5060 = vpack.c.b16 %v4396, %v4388
    %v5061 = vpack.c.b16 %v4397, %v4389
    %v5062 = vpack.c.b16 %v4398, %v4390
    %v5063 = vpack.c.b16 %v4399, %v4391
    %v5064 = vpack.c.b16 %v4400, %v4392
    %v5065 = vpack.c.b16 %v4401, %v4393
    %v5066 = vpack.c.b16 %v4402, %v4394
    %v5067 = vpack.c.b16 %v4403, %v4395
    %v5068 = vpack.c.b16 %v4412, %v4404
    %v5069 = vpack.c.b16 %v4413, %v4405
    %v5070 = vpack.c.b16 %v4414, %v4406
    %v5071 = vpack.c.b16 %v4415, %v4407
    %v5072 = vpack.c.b16 %v4416, %v4408
    %v5073 = vpack.c.b16 %v4417, %v4409
    %v5074 = vpack.c.b16 %v4418, %v4410
    %v5075 = vpack.c.b16 %v4419, %v4411
    %v5076 = vpack.c.b16 %v4428, %v4420
    %v5077 = vpack.c.b16 %v4429, %v4421
    %v5078 = vpack.c.b16 %v4430, %v4422
    %v5079 = vpack.c.b16 %v4431, %v4423
    %v5080 = vpack.c.b16 %v4432, %v4424
    %v5081 = vpack.c.b16 %v4433, %v4425
    %v5082 = vpack.c.b16 %v4434, %v4426
    %v5083 = vpack.c.b16 %v4435, %v4427
    %v5084 = vpack.c.b16 %v4444, %v4436
    %v5085 = vpack.c.b16 %v4445, %v4437
    %v5086 = vpack.c.b16 %v4446, %v4438
    %v5087 = vpack.c.b16 %v4447, %v4439
    %v5088 = vpack.c.b16 %v4448, %v4440
    %v5089 = vpack.c.b16 %v4449, %v4441
    %v5090 = vpack.c.b16 %v4450, %v4442
    %v5091 = vpack.c.b16 %v4451, %v4443
    %v5092 = vpack.c.b16 %v4460, %v4452
    %v5093 = vpack.c.b16 %v4461, %v4453
    %v5094 = vpack.c.b16 %v4462, %v4454
    %v5095 = vpack.c.b16 %v4463, %v4455
    %v5096 = vpack.c.b16 %v4464, %v4456
    %v5097 = vpack.c.b16 %v4465, %v4457
    %v5098 = vpack.c.b16 %v4466, %v4458
    %v5099 = vpack.c.b16 %v4467, %v4459
    %v5100 = vpack.c.b16 %v4476, %v4468
    %v5101 = vpack.c.b16 %v4477, %v4469
    %v5102 = vpack.c.b16 %v4478, %v4470
    %v5103 = vpack.c.b16 %v4479, %v4471
    %v5104 = vpack.c.b16 %v4480, %v4472
    %v5105 = vpack.c.b16 %v4481, %v4473
    %v5106 = vpack.c.b16 %v4482, %v4474
    %v5107 = vpack.c.b16 %v4483, %v4475
    %v5108 = vpack.c.b16 %v4492, %v4484
    %v5109 = vpack.c.b16 %v4493, %v4485
    %v5110 = vpack.c.b16 %v4494, %v4486
    %v5111 = vpack.c.b16 %v4495, %v4487
    %v5112 = vpack.c.b16 %v4496, %v4488
    %v5113 = vpack.c.b16 %v4497, %v4489
    %v5114 = vpack.c.b16 %v4498, %v4490
    %v5115 = vpack.c.b16 %v4499, %v4491
    %v5116 = vpack.c.b16 %v4508, %v4500
    %v5117 = vpack.c.b16 %v4509, %v4501
    %v5118 = vpack.c.b16 %v4510, %v4502
    %v5119 = vpack.c.b16 %v4511, %v4503
    %v5120 = vpack.c.b16 %v4512, %v4504
    %v5121 = vpack.c.b16 %v4513, %v4505
    %v5122 = vpack.c.b16 %v4514, %v4506
    %v5123 = vpack.c.b16 %v4515, %v4507
    %v5124 = vpack.c.b16 %v4524, %v4516
    %v5125 = vpack.c.b16 %v4525, %v4517
    %v5126 = vpack.c.b16 %v4526, %v4518
    %v5127 = vpack.c.b16 %v4527, %v4519
    %v5128 = vpack.c.b16 %v4528, %v4520
    %v5129 = vpack.c.b16 %v4529, %v4521
    %v5130 = vpack.c.b16 %v4530, %v4522
    %v5131 = vpack.c.b16 %v4531, %v4523
    %v5132 = vpack.c.b16 %v4540, %v4532
    %v5133 = vpack.c.b16 %v4541, %v4533
    %v5134 = vpack.c.b16 %v4542, %v4534
    %v5135 = vpack.c.b16 %v4543, %v4535
    %v5136 = vpack.c.b16 %v4544, %v4536
    %v5137 = vpack.c.b16 %v4545, %v4537
    %v5138 = vpack.c.b16 %v4546, %v4538
    %v5139 = vpack.c.b16 %v4547, %v4539
    %v5140 = vpack.c.b16 %v4556, %v4548
    %v5141 = vpack.c.b16 %v4557, %v4549
    %v5142 = vpack.c.b16 %v4558, %v4550
    %v5143 = vpack.c.b16 %v4559, %v4551
    %v5144 = vpack.c.b16 %v4560, %v4552
    %v5145 = vpack.c.b16 %v4561, %v4553
    %v5146 = vpack.c.b16 %v4562, %v4554
    %v5147 = vpack.c.b16 %v4563, %v4555
    %v5148 = vpack.c.b16 %v4572, %v4564
    %v5149 = vpack.c.b16 %v4573, %v4565
    %v5150 = vpack.c.b16 %v4574, %v4566
    %v5151 = vpack.c.b16 %v4575, %v4567
    %v5152 = vpack.c.b16 %v4576, %v4568
    %v5153 = vpack.c.b16 %v4577, %v4569
    %v5154 = vpack.c.b16 %v4578, %v4570
    %v5155 = vpack.c.b16 %v4579, %v4571
    %v5156 = vpack.c.b16 %v4588, %v4580
    %v5157 = vpack.c.b16 %v4589, %v4581
    %v5158 = vpack.c.b16 %v4590, %v4582
    %v5159 = vpack.c.b16 %v4591, %v4583
    %v5160 = vpack.c.b16 %v4592, %v4584
    %v5161 = vpack.c.b16 %v4593, %v4585
    %v5162 = vpack.c.b16 %v4594, %v4586
    %v5163 = vpack.c.b16 %v4595, %v4587
    %v5164 = vpack.c.b16 %v4604, %v4596
    %v5165 = vpack.c.b16 %v4605, %v4597
    %v5166 = vpack.c.b16 %v4606, %v4598
    %v5167 = vpack.c.b16 %v4607, %v4599
    %v5168 = vpack.c.b16 %v4608, %v4600
    %v5169 = vpack.c.b16 %v4609, %v4601
    %v5170 = vpack.c.b16 %v4610, %v4602
    %v5171 = vpack.c.b16 %v4611, %v4603
    %v5172 = vpack.c.b16 %v4620, %v4612
    %v5173 = vpack.c.b16 %v4621, %v4613
    %v5174 = vpack.c.b16 %v4622, %v4614
    %v5175 = vpack.c.b16 %v4623, %v4615
    %v5176 = vpack.c.b16 %v4624, %v4616
    %v5177 = vpack.c.b16 %v4625, %v4617
    %v5178 = vpack.c.b16 %v4626, %v4618
    %v5179 = vpack.c.b16 %v4627, %v4619
    %v5180 = vpack.c.b16 %v4636, %v4628
    %v5181 = vpack.c.b16 %v4637, %v4629
    %v5182 = vpack.c.b16 %v4638, %v4630
    %v5183 = vpack.c.b16 %v4639, %v4631
    %v5184 = vpack.c.b16 %v4640, %v4632
    %v5185 = vpack.c.b16 %v4641, %v4633
    %v5186 = vpack.c.b16 %v4642, %v4634
    %v5187 = vpack.c.b16 %v4643, %v4635
    %v5188 = vpack.c.b16 %v4652, %v4644
    %v5189 = vpack.c.b16 %v4653, %v4645
    %v5190 = vpack.c.b16 %v4654, %v4646
    %v5191 = vpack.c.b16 %v4655, %v4647
    %v5192 = vpack.c.b16 %v4656, %v4648
    %v5193 = vpack.c.b16 %v4657, %v4649
    %v5194 = vpack.c.b16 %v4658, %v4650
    %v5195 = vpack.c.b16 %v4659, %v4651
    %v5196 = vpack.c.b16 %v4668, %v4660
    %v5197 = vpack.c.b16 %v4669, %v4661
    %v5198 = vpack.c.b16 %v4670, %v4662
    %v5199 = vpack.c.b16 %v4671, %v4663
    %v5200 = vpack.c.b16 %v4672, %v4664
    %v5201 = vpack.c.b16 %v4673, %v4665
    %v5202 = vpack.c.b16 %v4674, %v4666
    %v5203 = vpack.c.b16 %v4675, %v4667
    %v5204 = vpack.c.b16 %v4684, %v4676
    %v5205 = vpack.c.b16 %v4685, %v4677
    %v5206 = vpack.c.b16 %v4686, %v4678
    %v5207 = vpack.c.b16 %v4687, %v4679
    %v5208 = vpack.c.b16 %v4688, %v4680
    %v5209 = vpack.c.b16 %v4689, %v4681
    %v5210 = vpack.c.b16 %v4690, %v4682
    %v5211 = vpack.c.b16 %v4691, %v4683
    %v5212 = vpack.c.b16 %v4700, %v4692
    %v5213 = vpack.c.b16 %v4701, %v4693
    %v5214 = vpack.c.b16 %v4702, %v4694
    %v5215 = vpack.c.b16 %v4703, %v4695
    %v5216 = vpack.c.b16 %v4704, %v4696
    %v5217 = vpack.c.b16 %v4705, %v4697
    %v5218 = vpack.c.b16 %v4706, %v4698
    %v5219 = vpack.c.b16 %v4707, %v4699
    %5732 = vmatprep.subr.bf16.mxu0 %v4765
    %5733 = vmatpush1.bf16.msra.mxu0 %v4764
    %5734 = vmatprep.subr.bf16.mxu0 %v4757
    %5735 = vmatpush1.bf16.msra.mxu0 %v4756
    %5736 = vmatprep.subr.bf16.mxu0 %v4749
    %5737 = vmatpush1.bf16.msra.mxu0 %v4748
    %5738 = vmatprep.subr.bf16.mxu0 %v4741
    %5739 = vmatpush1.bf16.msra.mxu0 %v4740
    %5740 = vmatprep.subr.bf16.mxu0 %v4733
    %5741 = vmatpush1.bf16.msra.mxu0 %v4732
    %5742 = vmatprep.subr.bf16.mxu0 %v4725
    %5743 = vmatpush1.bf16.msra.mxu0 %v4724
    %5744 = vmatprep.subr.bf16.mxu0 %v4717
    %5745 = vmatpush1.bf16.msra.mxu0 %v4716
    %5746 = vmatprep.subr.bf16.mxu0 %v4709
    %5747 = vmatpush1.bf16.msra.mxu0 %v4708
    %5748 = vmatprep.subr.bf16.mxu0 %v4829
    %5749 = vmatpush2.bf16.msra.mxu0 %v4828
    %5750 = vmatprep.subr.bf16.mxu0 %v4821
    %5751 = vmatpush2.bf16.msra.mxu0 %v4820
    %5752 = vmatprep.subr.bf16.mxu0 %v4813
    %5753 = vmatpush2.bf16.msra.mxu0 %v4812
    %5754 = vmatprep.subr.bf16.mxu0 %v4805
    %5755 = vmatpush2.bf16.msra.mxu0 %v4804
    %5756 = vmatprep.subr.bf16.mxu0 %v4797
    %5757 = vmatpush2.bf16.msra.mxu0 %v4796
    %5758 = vmatprep.subr.bf16.mxu0 %v4789
    %5759 = vmatpush2.bf16.msra.mxu0 %v4788
    %5760 = vmatprep.subr.bf16.mxu0 %v4781
    %5761 = vmatpush2.bf16.msra.mxu0 %v4780
    %5762 = vmatprep.subr.bf16.mxu0 %v4773
    %5763 = vmatpush2.bf16.msra.mxu0 %v4772
    %5764 = vmatprep.mubr.bf16.mxu0 %v2600
    %5765 = vmatmul.mubr.bf16.gmra.mxu0 %v2599
    %v5766 = vpop.f32.mrf.mxu0
    %v5767 = vadd.f32 %v3135, %v5766
    %v5768 = vpop.f32.mrf.mxu0
    %v5769 = vadd.f32 %v3139, %v5768
    %v5770 = vpop.f32.mrf.mxu0
    %v5771 = vpop.f32.mrf.mxu0
    %5772 = vdwg.mxu0
    %5773 = vmatprep.subr.bf16.mxu0 %v4893
    %5774 = vmatpush1.bf16.msra.mxu0 %v4892
    %5775 = vmatprep.subr.bf16.mxu0 %v4885
    %5776 = vmatpush1.bf16.msra.mxu0 %v4884
    %5777 = vmatprep.subr.bf16.mxu0 %v4877
    %5778 = vmatpush1.bf16.msra.mxu0 %v4876
    %5779 = vmatprep.subr.bf16.mxu0 %v4869
    %5780 = vmatpush1.bf16.msra.mxu0 %v4868
    %5781 = vmatprep.subr.bf16.mxu0 %v4861
    %5782 = vmatpush1.bf16.msra.mxu0 %v4860
    %5783 = vmatprep.subr.bf16.mxu0 %v4853
    %5784 = vmatpush1.bf16.msra.mxu0 %v4852
    %5785 = vmatprep.subr.bf16.mxu0 %v4845
    %5786 = vmatpush1.bf16.msra.mxu0 %v4844
    %5787 = vmatprep.subr.bf16.mxu0 %v4837
    %5788 = vmatpush1.bf16.msra.mxu0 %v4836
    %5789 = vmatprep.subr.bf16.mxu0 %v4957
    %5790 = vmatpush2.bf16.msra.mxu0 %v4956
    %5791 = vmatprep.subr.bf16.mxu0 %v4949
    %5792 = vmatpush2.bf16.msra.mxu0 %v4948
    %5793 = vmatprep.subr.bf16.mxu0 %v4941
    %5794 = vmatpush2.bf16.msra.mxu0 %v4940
    %5795 = vmatprep.subr.bf16.mxu0 %v4933
    %5796 = vmatpush2.bf16.msra.mxu0 %v4932
    %5797 = vmatprep.subr.bf16.mxu0 %v4925
    %5798 = vmatpush2.bf16.msra.mxu0 %v4924
    %5799 = vmatprep.subr.bf16.mxu0 %v4917
    %5800 = vmatpush2.bf16.msra.mxu0 %v4916
    %5801 = vmatprep.subr.bf16.mxu0 %v4909
    %5802 = vmatpush2.bf16.msra.mxu0 %v4908
    %5803 = vmatprep.subr.bf16.mxu0 %v4901
    %5804 = vmatpush2.bf16.msra.mxu0 %v4900
    %5805 = vmatprep.mubr.bf16.mxu0 %v2602
    %5806 = vmatmul.mubr.bf16.gmra.mxu0 %v2601
    %v5807 = vpop.f32.mrf.mxu0
    %v5808 = vadd.f32 %v5767, %v5807
    %v5809 = vpop.f32.mrf.mxu0
    %v5810 = vadd.f32 %v5769, %v5809
    %v5811 = vpop.f32.mrf.mxu0
    %v5812 = vpop.f32.mrf.mxu0
    %5813 = vdwg.mxu0
    %5814 = vmatprep.subr.bf16.mxu0 %v5021
    %5815 = vmatpush1.bf16.msra.mxu0 %v5020
    %5816 = vmatprep.subr.bf16.mxu0 %v5013
    %5817 = vmatpush1.bf16.msra.mxu0 %v5012
    %5818 = vmatprep.subr.bf16.mxu0 %v5005
    %5819 = vmatpush1.bf16.msra.mxu0 %v5004
    %5820 = vmatprep.subr.bf16.mxu0 %v4997
    %5821 = vmatpush1.bf16.msra.mxu0 %v4996
    %5822 = vmatprep.subr.bf16.mxu0 %v4989
    %5823 = vmatpush1.bf16.msra.mxu0 %v4988
    %5824 = vmatprep.subr.bf16.mxu0 %v4981
    %5825 = vmatpush1.bf16.msra.mxu0 %v4980
    %5826 = vmatprep.subr.bf16.mxu0 %v4973
    %5827 = vmatpush1.bf16.msra.mxu0 %v4972
    %5828 = vmatprep.subr.bf16.mxu0 %v4965
    %5829 = vmatpush1.bf16.msra.mxu0 %v4964
    %5830 = vmatprep.subr.bf16.mxu0 %v5085
    %5831 = vmatpush2.bf16.msra.mxu0 %v5084
    %5832 = vmatprep.subr.bf16.mxu0 %v5077
    %5833 = vmatpush2.bf16.msra.mxu0 %v5076
    %5834 = vmatprep.subr.bf16.mxu0 %v5069
    %5835 = vmatpush2.bf16.msra.mxu0 %v5068
    %5836 = vmatprep.subr.bf16.mxu0 %v5061
    %5837 = vmatpush2.bf16.msra.mxu0 %v5060
    %5838 = vmatprep.subr.bf16.mxu0 %v5053
    %5839 = vmatpush2.bf16.msra.mxu0 %v5052
    %5840 = vmatprep.subr.bf16.mxu0 %v5045
    %5841 = vmatpush2.bf16.msra.mxu0 %v5044
    %5842 = vmatprep.subr.bf16.mxu0 %v5037
    %5843 = vmatpush2.bf16.msra.mxu0 %v5036
    %5844 = vmatprep.subr.bf16.mxu0 %v5029
    %5845 = vmatpush2.bf16.msra.mxu0 %v5028
    %5846 = vmatprep.mubr.bf16.mxu0 %v2604
    %5847 = vmatmul.mubr.bf16.gmra.mxu0 %v2603
    %v5848 = vpop.f32.mrf.mxu0
    %v5849 = vadd.f32 %v5808, %v5848
    %v5850 = vpop.f32.mrf.mxu0
    %v5851 = vadd.f32 %v5810, %v5850
    %v5852 = vpop.f32.mrf.mxu0
    %v5853 = vpop.f32.mrf.mxu0
    %5854 = vdwg.mxu0
    %5855 = vmatprep.subr.bf16.mxu0 %v5149
    %5856 = vmatpush1.bf16.msra.mxu0 %v5148
    %5857 = vmatprep.subr.bf16.mxu0 %v5141
    %5858 = vmatpush1.bf16.msra.mxu0 %v5140
    %5859 = vmatprep.subr.bf16.mxu0 %v5133
    %5860 = vmatpush1.bf16.msra.mxu0 %v5132
    %5861 = vmatprep.subr.bf16.mxu0 %v5125
    %5862 = vmatpush1.bf16.msra.mxu0 %v5124
    %5863 = vmatprep.subr.bf16.mxu0 %v5117
    %5864 = vmatpush1.bf16.msra.mxu0 %v5116
    %5865 = vmatprep.subr.bf16.mxu0 %v5109
    %5866 = vmatpush1.bf16.msra.mxu0 %v5108
    %5867 = vmatprep.subr.bf16.mxu0 %v5101
    %5868 = vmatpush1.bf16.msra.mxu0 %v5100
    %5869 = vmatprep.subr.bf16.mxu0 %v5093
    %5870 = vmatpush1.bf16.msra.mxu0 %v5092
    %5871 = vmatprep.subr.bf16.mxu0 %v5213
    %5872 = vmatpush2.bf16.msra.mxu0 %v5212
    %5873 = vmatprep.subr.bf16.mxu0 %v5205
    %5874 = vmatpush2.bf16.msra.mxu0 %v5204
    %5875 = vmatprep.subr.bf16.mxu0 %v5197
    %5876 = vmatpush2.bf16.msra.mxu0 %v5196
    %5877 = vmatprep.subr.bf16.mxu0 %v5189
    %5878 = vmatpush2.bf16.msra.mxu0 %v5188
    %5879 = vmatprep.subr.bf16.mxu0 %v5181
    %5880 = vmatpush2.bf16.msra.mxu0 %v5180
    %5881 = vmatprep.subr.bf16.mxu0 %v5173
    %5882 = vmatpush2.bf16.msra.mxu0 %v5172
    %5883 = vmatprep.subr.bf16.mxu0 %v5165
    %5884 = vmatpush2.bf16.msra.mxu0 %v5164
    %5885 = vmatprep.subr.bf16.mxu0 %v5157
    %5886 = vmatpush2.bf16.msra.mxu0 %v5156
    %5887 = vmatprep.mubr.bf16.mxu0 %v2606
    %5888 = vmatmul.mubr.bf16.gmra.mxu0 %v2605
    %v5889 = vpop.f32.mrf.mxu0
    %v5890 = vadd.f32 %v5849, %v5889
    %v5891 = vpop.f32.mrf.mxu0
    %v5892 = vadd.f32 %v5851, %v5891
    %v5893 = vpop.f32.mrf.mxu0
    %v5894 = vpop.f32.mrf.mxu0
    %5895 = vdwg.mxu0
    %5896 = vmatprep.subr.bf16.mxu0 %v4767
    %5897 = vmatpush1.bf16.msra.mxu0 %v4766
    %5898 = vmatprep.subr.bf16.mxu0 %v4759
    %5899 = vmatpush1.bf16.msra.mxu0 %v4758
    %5900 = vmatprep.subr.bf16.mxu0 %v4751
    %5901 = vmatpush1.bf16.msra.mxu0 %v4750
    %5902 = vmatprep.subr.bf16.mxu0 %v4743
    %5903 = vmatpush1.bf16.msra.mxu0 %v4742
    %5904 = vmatprep.subr.bf16.mxu0 %v4735
    %5905 = vmatpush1.bf16.msra.mxu0 %v4734
    %5906 = vmatprep.subr.bf16.mxu0 %v4727
    %5907 = vmatpush1.bf16.msra.mxu0 %v4726
    %5908 = vmatprep.subr.bf16.mxu0 %v4719
    %5909 = vmatpush1.bf16.msra.mxu0 %v4718
    %5910 = vmatprep.subr.bf16.mxu0 %v4711
    %5911 = vmatpush1.bf16.msra.mxu0 %v4710
    %5912 = vmatprep.subr.bf16.mxu0 %v4831
    %5913 = vmatpush2.bf16.msra.mxu0 %v4830
    %5914 = vmatprep.subr.bf16.mxu0 %v4823
    %5915 = vmatpush2.bf16.msra.mxu0 %v4822
    %5916 = vmatprep.subr.bf16.mxu0 %v4815
    %5917 = vmatpush2.bf16.msra.mxu0 %v4814
    %5918 = vmatprep.subr.bf16.mxu0 %v4807
    %5919 = vmatpush2.bf16.msra.mxu0 %v4806
    %5920 = vmatprep.subr.bf16.mxu0 %v4799
    %5921 = vmatpush2.bf16.msra.mxu0 %v4798
    %5922 = vmatprep.subr.bf16.mxu0 %v4791
    %5923 = vmatpush2.bf16.msra.mxu0 %v4790
    %5924 = vmatprep.subr.bf16.mxu0 %v4783
    %5925 = vmatpush2.bf16.msra.mxu0 %v4782
    %5926 = vmatprep.subr.bf16.mxu0 %v4775
    %5927 = vmatpush2.bf16.msra.mxu0 %v4774
    %5928 = vmatprep.mubr.bf16.mxu0 %v2600
    %5929 = vmatmul.mubr.bf16.gmra.mxu0 %v2599
    %v5930 = vpop.f32.mrf.mxu0
    %v5931 = vadd.f32 %v3143, %v5930
    %v5932 = vpop.f32.mrf.mxu0
    %v5933 = vadd.f32 %v3147, %v5932
    %v5934 = vpop.f32.mrf.mxu0
    %v5935 = vpop.f32.mrf.mxu0
    %5936 = vdwg.mxu0
    %5937 = vmatprep.subr.bf16.mxu0 %v4895
    %5938 = vmatpush1.bf16.msra.mxu0 %v4894
    %5939 = vmatprep.subr.bf16.mxu0 %v4887
    %5940 = vmatpush1.bf16.msra.mxu0 %v4886
    %5941 = vmatprep.subr.bf16.mxu0 %v4879
    %5942 = vmatpush1.bf16.msra.mxu0 %v4878
    %5943 = vmatprep.subr.bf16.mxu0 %v4871
    %5944 = vmatpush1.bf16.msra.mxu0 %v4870
    %5945 = vmatprep.subr.bf16.mxu0 %v4863
    %5946 = vmatpush1.bf16.msra.mxu0 %v4862
    %5947 = vmatprep.subr.bf16.mxu0 %v4855
    %5948 = vmatpush1.bf16.msra.mxu0 %v4854
    %5949 = vmatprep.subr.bf16.mxu0 %v4847
    %5950 = vmatpush1.bf16.msra.mxu0 %v4846
    %5951 = vmatprep.subr.bf16.mxu0 %v4839
    %5952 = vmatpush1.bf16.msra.mxu0 %v4838
    %5953 = vmatprep.subr.bf16.mxu0 %v4959
    %5954 = vmatpush2.bf16.msra.mxu0 %v4958
    %5955 = vmatprep.subr.bf16.mxu0 %v4951
    %5956 = vmatpush2.bf16.msra.mxu0 %v4950
    %5957 = vmatprep.subr.bf16.mxu0 %v4943
    %5958 = vmatpush2.bf16.msra.mxu0 %v4942
    %5959 = vmatprep.subr.bf16.mxu0 %v4935
    %5960 = vmatpush2.bf16.msra.mxu0 %v4934
    %5961 = vmatprep.subr.bf16.mxu0 %v4927
    %5962 = vmatpush2.bf16.msra.mxu0 %v4926
    %5963 = vmatprep.subr.bf16.mxu0 %v4919
    %5964 = vmatpush2.bf16.msra.mxu0 %v4918
    %5965 = vmatprep.subr.bf16.mxu0 %v4911
    %5966 = vmatpush2.bf16.msra.mxu0 %v4910
    %5967 = vmatprep.subr.bf16.mxu0 %v4903
    %5968 = vmatpush2.bf16.msra.mxu0 %v4902
    %5969 = vmatprep.mubr.bf16.mxu0 %v2602
    %5970 = vmatmul.mubr.bf16.gmra.mxu0 %v2601
    %v5971 = vpop.f32.mrf.mxu0
    %v5972 = vadd.f32 %v5931, %v5971
    %v5973 = vpop.f32.mrf.mxu0
    %v5974 = vadd.f32 %v5933, %v5973
    %v5975 = vpop.f32.mrf.mxu0
    %v5976 = vpop.f32.mrf.mxu0
    %5977 = vdwg.mxu0
    %5978 = vmatprep.subr.bf16.mxu0 %v5023
    %5979 = vmatpush1.bf16.msra.mxu0 %v5022
    %5980 = vmatprep.subr.bf16.mxu0 %v5015
    %5981 = vmatpush1.bf16.msra.mxu0 %v5014
    %5982 = vmatprep.subr.bf16.mxu0 %v5007
    %5983 = vmatpush1.bf16.msra.mxu0 %v5006
    %5984 = vmatprep.subr.bf16.mxu0 %v4999
    %5985 = vmatpush1.bf16.msra.mxu0 %v4998
    %5986 = vmatprep.subr.bf16.mxu0 %v4991
    %5987 = vmatpush1.bf16.msra.mxu0 %v4990
    %5988 = vmatprep.subr.bf16.mxu0 %v4983
    %5989 = vmatpush1.bf16.msra.mxu0 %v4982
    %5990 = vmatprep.subr.bf16.mxu0 %v4975
    %5991 = vmatpush1.bf16.msra.mxu0 %v4974
    %5992 = vmatprep.subr.bf16.mxu0 %v4967
    %5993 = vmatpush1.bf16.msra.mxu0 %v4966
    %5994 = vmatprep.subr.bf16.mxu0 %v5087
    %5995 = vmatpush2.bf16.msra.mxu0 %v5086
    %5996 = vmatprep.subr.bf16.mxu0 %v5079
    %5997 = vmatpush2.bf16.msra.mxu0 %v5078
    %5998 = vmatprep.subr.bf16.mxu0 %v5071
    %5999 = vmatpush2.bf16.msra.mxu0 %v5070
    %6000 = vmatprep.subr.bf16.mxu0 %v5063
    %6001 = vmatpush2.bf16.msra.mxu0 %v5062
    %6002 = vmatprep.subr.bf16.mxu0 %v5055
    %6003 = vmatpush2.bf16.msra.mxu0 %v5054
    %6004 = vmatprep.subr.bf16.mxu0 %v5047
    %6005 = vmatpush2.bf16.msra.mxu0 %v5046
    %6006 = vmatprep.subr.bf16.mxu0 %v5039
    %6007 = vmatpush2.bf16.msra.mxu0 %v5038
    %6008 = vmatprep.subr.bf16.mxu0 %v5031
    %6009 = vmatpush2.bf16.msra.mxu0 %v5030
    %6010 = vmatprep.mubr.bf16.mxu0 %v2604
    %6011 = vmatmul.mubr.bf16.gmra.mxu0 %v2603
    %v6012 = vpop.f32.mrf.mxu0
    %v6013 = vadd.f32 %v5972, %v6012
    %v6014 = vpop.f32.mrf.mxu0
    %v6015 = vadd.f32 %v5974, %v6014
    %v6016 = vpop.f32.mrf.mxu0
    %v6017 = vpop.f32.mrf.mxu0
    %6018 = vdwg.mxu0
    %6019 = vmatprep.subr.bf16.mxu0 %v5151
    %6020 = vmatpush1.bf16.msra.mxu0 %v5150
    %6021 = vmatprep.subr.bf16.mxu0 %v5143
    %6022 = vmatpush1.bf16.msra.mxu0 %v5142
    %6023 = vmatprep.subr.bf16.mxu0 %v5135
    %6024 = vmatpush1.bf16.msra.mxu0 %v5134
    %6025 = vmatprep.subr.bf16.mxu0 %v5127
    %6026 = vmatpush1.bf16.msra.mxu0 %v5126
    %6027 = vmatprep.subr.bf16.mxu0 %v5119
    %6028 = vmatpush1.bf16.msra.mxu0 %v5118
    %6029 = vmatprep.subr.bf16.mxu0 %v5111
    %6030 = vmatpush1.bf16.msra.mxu0 %v5110
    %6031 = vmatprep.subr.bf16.mxu0 %v5103
    %6032 = vmatpush1.bf16.msra.mxu0 %v5102
    %6033 = vmatprep.subr.bf16.mxu0 %v5095
    %6034 = vmatpush1.bf16.msra.mxu0 %v5094
    %6035 = vmatprep.subr.bf16.mxu0 %v5215
    %6036 = vmatpush2.bf16.msra.mxu0 %v5214
    %6037 = vmatprep.subr.bf16.mxu0 %v5207
    %6038 = vmatpush2.bf16.msra.mxu0 %v5206
    %6039 = vmatprep.subr.bf16.mxu0 %v5199
    %6040 = vmatpush2.bf16.msra.mxu0 %v5198
    %6041 = vmatprep.subr.bf16.mxu0 %v5191
    %6042 = vmatpush2.bf16.msra.mxu0 %v5190
    %6043 = vmatprep.subr.bf16.mxu0 %v5183
    %6044 = vmatpush2.bf16.msra.mxu0 %v5182
    %6045 = vmatprep.subr.bf16.mxu0 %v5175
    %6046 = vmatpush2.bf16.msra.mxu0 %v5174
    %6047 = vmatprep.subr.bf16.mxu0 %v5167
    %6048 = vmatpush2.bf16.msra.mxu0 %v5166
    %6049 = vmatprep.subr.bf16.mxu0 %v5159
    %6050 = vmatpush2.bf16.msra.mxu0 %v5158
    %6051 = vmatprep.mubr.bf16.mxu0 %v2606
    %6052 = vmatmul.mubr.bf16.gmra.mxu0 %v2605
    %v6053 = vpop.f32.mrf.mxu0
    %v6054 = vadd.f32 %v6013, %v6053
    %v6055 = vpop.f32.mrf.mxu0
    %v6056 = vadd.f32 %v6015, %v6055
    %v6057 = vpop.f32.mrf.mxu0
    %v6058 = vpop.f32.mrf.mxu0
    %6059 = vdwg.mxu0
    %6060 = vmatprep.subr.bf16.mxu0 %v4769
    %6061 = vmatpush1.bf16.msra.mxu0 %v4768
    %6062 = vmatprep.subr.bf16.mxu0 %v4761
    %6063 = vmatpush1.bf16.msra.mxu0 %v4760
    %6064 = vmatprep.subr.bf16.mxu0 %v4753
    %6065 = vmatpush1.bf16.msra.mxu0 %v4752
    %6066 = vmatprep.subr.bf16.mxu0 %v4745
    %6067 = vmatpush1.bf16.msra.mxu0 %v4744
    %6068 = vmatprep.subr.bf16.mxu0 %v4737
    %6069 = vmatpush1.bf16.msra.mxu0 %v4736
    %6070 = vmatprep.subr.bf16.mxu0 %v4729
    %6071 = vmatpush1.bf16.msra.mxu0 %v4728
    %6072 = vmatprep.subr.bf16.mxu0 %v4721
    %6073 = vmatpush1.bf16.msra.mxu0 %v4720
    %6074 = vmatprep.subr.bf16.mxu0 %v4713
    %6075 = vmatpush1.bf16.msra.mxu0 %v4712
    %6076 = vmatprep.subr.bf16.mxu0 %v4833
    %6077 = vmatpush2.bf16.msra.mxu0 %v4832
    %6078 = vmatprep.subr.bf16.mxu0 %v4825
    %6079 = vmatpush2.bf16.msra.mxu0 %v4824
    %6080 = vmatprep.subr.bf16.mxu0 %v4817
    %6081 = vmatpush2.bf16.msra.mxu0 %v4816
    %6082 = vmatprep.subr.bf16.mxu0 %v4809
    %6083 = vmatpush2.bf16.msra.mxu0 %v4808
    %6084 = vmatprep.subr.bf16.mxu0 %v4801
    %6085 = vmatpush2.bf16.msra.mxu0 %v4800
    %6086 = vmatprep.subr.bf16.mxu0 %v4793
    %6087 = vmatpush2.bf16.msra.mxu0 %v4792
    %6088 = vmatprep.subr.bf16.mxu0 %v4785
    %6089 = vmatpush2.bf16.msra.mxu0 %v4784
    %6090 = vmatprep.subr.bf16.mxu0 %v4777
    %6091 = vmatpush2.bf16.msra.mxu0 %v4776
    %6092 = vmatprep.mubr.bf16.mxu0 %v2600
    %6093 = vmatmul.mubr.bf16.gmra.mxu0 %v2599
    %v6094 = vpop.f32.mrf.mxu0
    %v6095 = vadd.f32 %v3151, %v6094
    %v6096 = vpop.f32.mrf.mxu0
    %v6097 = vadd.f32 %v3155, %v6096
    %v6098 = vpop.f32.mrf.mxu0
    %v6099 = vpop.f32.mrf.mxu0
    %6100 = vdwg.mxu0
    %6101 = vmatprep.subr.bf16.mxu0 %v4897
    %6102 = vmatpush1.bf16.msra.mxu0 %v4896
    %6103 = vmatprep.subr.bf16.mxu0 %v4889
    %6104 = vmatpush1.bf16.msra.mxu0 %v4888
    %6105 = vmatprep.subr.bf16.mxu0 %v4881
    %6106 = vmatpush1.bf16.msra.mxu0 %v4880
    %6107 = vmatprep.subr.bf16.mxu0 %v4873
    %6108 = vmatpush1.bf16.msra.mxu0 %v4872
    %6109 = vmatprep.subr.bf16.mxu0 %v4865
    %6110 = vmatpush1.bf16.msra.mxu0 %v4864
    %6111 = vmatprep.subr.bf16.mxu0 %v4857
    %6112 = vmatpush1.bf16.msra.mxu0 %v4856
    %6113 = vmatprep.subr.bf16.mxu0 %v4849
    %6114 = vmatpush1.bf16.msra.mxu0 %v4848
    %6115 = vmatprep.subr.bf16.mxu0 %v4841
    %6116 = vmatpush1.bf16.msra.mxu0 %v4840
    %6117 = vmatprep.subr.bf16.mxu0 %v4961
    %6118 = vmatpush2.bf16.msra.mxu0 %v4960
    %6119 = vmatprep.subr.bf16.mxu0 %v4953
    %6120 = vmatpush2.bf16.msra.mxu0 %v4952
    %6121 = vmatprep.subr.bf16.mxu0 %v4945
    %6122 = vmatpush2.bf16.msra.mxu0 %v4944
    %6123 = vmatprep.subr.bf16.mxu0 %v4937
    %6124 = vmatpush2.bf16.msra.mxu0 %v4936
    %6125 = vmatprep.subr.bf16.mxu0 %v4929
    %6126 = vmatpush2.bf16.msra.mxu0 %v4928
    %6127 = vmatprep.subr.bf16.mxu0 %v4921
    %6128 = vmatpush2.bf16.msra.mxu0 %v4920
    %6129 = vmatprep.subr.bf16.mxu0 %v4913
    %6130 = vmatpush2.bf16.msra.mxu0 %v4912
    %6131 = vmatprep.subr.bf16.mxu0 %v4905
    %6132 = vmatpush2.bf16.msra.mxu0 %v4904
    %6133 = vmatprep.mubr.bf16.mxu0 %v2602
    %6134 = vmatmul.mubr.bf16.gmra.mxu0 %v2601
    %v6135 = vpop.f32.mrf.mxu0
    %v6136 = vadd.f32 %v6095, %v6135
    %v6137 = vpop.f32.mrf.mxu0
    %v6138 = vadd.f32 %v6097, %v6137
    %v6139 = vpop.f32.mrf.mxu0
    %v6140 = vpop.f32.mrf.mxu0
    %6141 = vdwg.mxu0
    %6142 = vmatprep.subr.bf16.mxu0 %v5025
    %6143 = vmatpush1.bf16.msra.mxu0 %v5024
    %6144 = vmatprep.subr.bf16.mxu0 %v5017
    %6145 = vmatpush1.bf16.msra.mxu0 %v5016
    %6146 = vmatprep.subr.bf16.mxu0 %v5009
    %6147 = vmatpush1.bf16.msra.mxu0 %v5008
    %6148 = vmatprep.subr.bf16.mxu0 %v5001
    %6149 = vmatpush1.bf16.msra.mxu0 %v5000
    %6150 = vmatprep.subr.bf16.mxu0 %v4993
    %6151 = vmatpush1.bf16.msra.mxu0 %v4992
    %6152 = vmatprep.subr.bf16.mxu0 %v4985
    %6153 = vmatpush1.bf16.msra.mxu0 %v4984
    %6154 = vmatprep.subr.bf16.mxu0 %v4977
    %6155 = vmatpush1.bf16.msra.mxu0 %v4976
    %6156 = vmatprep.subr.bf16.mxu0 %v4969
    %6157 = vmatpush1.bf16.msra.mxu0 %v4968
    %6158 = vmatprep.subr.bf16.mxu0 %v5089
    %6159 = vmatpush2.bf16.msra.mxu0 %v5088
    %6160 = vmatprep.subr.bf16.mxu0 %v5081
    %6161 = vmatpush2.bf16.msra.mxu0 %v5080
    %6162 = vmatprep.subr.bf16.mxu0 %v5073
    %6163 = vmatpush2.bf16.msra.mxu0 %v5072
    %6164 = vmatprep.subr.bf16.mxu0 %v5065
    %6165 = vmatpush2.bf16.msra.mxu0 %v5064
    %6166 = vmatprep.subr.bf16.mxu0 %v5057
    %6167 = vmatpush2.bf16.msra.mxu0 %v5056
    %6168 = vmatprep.subr.bf16.mxu0 %v5049
    %6169 = vmatpush2.bf16.msra.mxu0 %v5048
    %6170 = vmatprep.subr.bf16.mxu0 %v5041
    %6171 = vmatpush2.bf16.msra.mxu0 %v5040
    %6172 = vmatprep.subr.bf16.mxu0 %v5033
    %6173 = vmatpush2.bf16.msra.mxu0 %v5032
    %6174 = vmatprep.mubr.bf16.mxu0 %v2604
    %6175 = vmatmul.mubr.bf16.gmra.mxu0 %v2603
    %v6176 = vpop.f32.mrf.mxu0
    %v6177 = vadd.f32 %v6136, %v6176
    %v6178 = vpop.f32.mrf.mxu0
    %v6179 = vadd.f32 %v6138, %v6178
    %v6180 = vpop.f32.mrf.mxu0
    %v6181 = vpop.f32.mrf.mxu0
    %6182 = vdwg.mxu0
    %6183 = vmatprep.subr.bf16.mxu0 %v5153
    %6184 = vmatpush1.bf16.msra.mxu0 %v5152
    %6185 = vmatprep.subr.bf16.mxu0 %v5145
    %6186 = vmatpush1.bf16.msra.mxu0 %v5144
    %6187 = vmatprep.subr.bf16.mxu0 %v5137
    %6188 = vmatpush1.bf16.msra.mxu0 %v5136
    %6189 = vmatprep.subr.bf16.mxu0 %v5129
    %6190 = vmatpush1.bf16.msra.mxu0 %v5128
    %6191 = vmatprep.subr.bf16.mxu0 %v5121
    %6192 = vmatpush1.bf16.msra.mxu0 %v5120
    %6193 = vmatprep.subr.bf16.mxu0 %v5113
    %6194 = vmatpush1.bf16.msra.mxu0 %v5112
    %6195 = vmatprep.subr.bf16.mxu0 %v5105
    %6196 = vmatpush1.bf16.msra.mxu0 %v5104
    %6197 = vmatprep.subr.bf16.mxu0 %v5097
    %6198 = vmatpush1.bf16.msra.mxu0 %v5096
    %6199 = vmatprep.subr.bf16.mxu0 %v5217
    %6200 = vmatpush2.bf16.msra.mxu0 %v5216
    %6201 = vmatprep.subr.bf16.mxu0 %v5209
    %6202 = vmatpush2.bf16.msra.mxu0 %v5208
    %6203 = vmatprep.subr.bf16.mxu0 %v5201
    %6204 = vmatpush2.bf16.msra.mxu0 %v5200
    %6205 = vmatprep.subr.bf16.mxu0 %v5193
    %6206 = vmatpush2.bf16.msra.mxu0 %v5192
    %6207 = vmatprep.subr.bf16.mxu0 %v5185
    %6208 = vmatpush2.bf16.msra.mxu0 %v5184
    %6209 = vmatprep.subr.bf16.mxu0 %v5177
    %6210 = vmatpush2.bf16.msra.mxu0 %v5176
    %6211 = vmatprep.subr.bf16.mxu0 %v5169
    %6212 = vmatpush2.bf16.msra.mxu0 %v5168
    %6213 = vmatprep.subr.bf16.mxu0 %v5161
    %6214 = vmatpush2.bf16.msra.mxu0 %v5160
    %6215 = vmatprep.mubr.bf16.mxu0 %v2606
    %6216 = vmatmul.mubr.bf16.gmra.mxu0 %v2605
    %v6217 = vpop.f32.mrf.mxu0
    %v6218 = vadd.f32 %v6177, %v6217
    %v6219 = vpop.f32.mrf.mxu0
    %v6220 = vadd.f32 %v6179, %v6219
    %v6221 = vpop.f32.mrf.mxu0
    %v6222 = vpop.f32.mrf.mxu0
    %6223 = vdwg.mxu0
    %6224 = vmatprep.subr.bf16.mxu0 %v4771
    %6225 = vmatpush1.bf16.msra.mxu0 %v4770
    %6226 = vmatprep.subr.bf16.mxu0 %v4763
    %6227 = vmatpush1.bf16.msra.mxu0 %v4762
    %6228 = vmatprep.subr.bf16.mxu0 %v4755
    %6229 = vmatpush1.bf16.msra.mxu0 %v4754
    %6230 = vmatprep.subr.bf16.mxu0 %v4747
    %6231 = vmatpush1.bf16.msra.mxu0 %v4746
    %6232 = vmatprep.subr.bf16.mxu0 %v4739
    %6233 = vmatpush1.bf16.msra.mxu0 %v4738
    %6234 = vmatprep.subr.bf16.mxu0 %v4731
    %6235 = vmatpush1.bf16.msra.mxu0 %v4730
    %6236 = vmatprep.subr.bf16.mxu0 %v4723
    %6237 = vmatpush1.bf16.msra.mxu0 %v4722
    %6238 = vmatprep.subr.bf16.mxu0 %v4715
    %6239 = vmatpush1.bf16.msra.mxu0 %v4714
    %6240 = vmatprep.subr.bf16.mxu0 %v4835
    %6241 = vmatpush2.bf16.msra.mxu0 %v4834
    %6242 = vmatprep.subr.bf16.mxu0 %v4827
    %6243 = vmatpush2.bf16.msra.mxu0 %v4826
    %6244 = vmatprep.subr.bf16.mxu0 %v4819
    %6245 = vmatpush2.bf16.msra.mxu0 %v4818
    %6246 = vmatprep.subr.bf16.mxu0 %v4811
    %6247 = vmatpush2.bf16.msra.mxu0 %v4810
    %6248 = vmatprep.subr.bf16.mxu0 %v4803
    %6249 = vmatpush2.bf16.msra.mxu0 %v4802
    %6250 = vmatprep.subr.bf16.mxu0 %v4795
    %6251 = vmatpush2.bf16.msra.mxu0 %v4794
    %6252 = vmatprep.subr.bf16.mxu0 %v4787
    %6253 = vmatpush2.bf16.msra.mxu0 %v4786
    %6254 = vmatprep.subr.bf16.mxu0 %v4779
    %6255 = vmatpush2.bf16.msra.mxu0 %v4778
    %6256 = vmatprep.mubr.bf16.mxu0 %v2600
    %6257 = vmatmul.mubr.bf16.gmra.mxu0 %v2599
    %v6258 = vpop.f32.mrf.mxu0
    %v6259 = vadd.f32 %v3159, %v6258
    %v6260 = vpop.f32.mrf.mxu0
    %v6261 = vadd.f32 %v3163, %v6260
    %v6262 = vpop.f32.mrf.mxu0
    %v6263 = vpop.f32.mrf.mxu0
    %6264 = vdwg.mxu0
    %6265 = vmatprep.subr.bf16.mxu0 %v4899
    %6266 = vmatpush1.bf16.msra.mxu0 %v4898
    %6267 = vmatprep.subr.bf16.mxu0 %v4891
    %6268 = vmatpush1.bf16.msra.mxu0 %v4890
    %6269 = vmatprep.subr.bf16.mxu0 %v4883
    %6270 = vmatpush1.bf16.msra.mxu0 %v4882
    %6271 = vmatprep.subr.bf16.mxu0 %v4875
    %6272 = vmatpush1.bf16.msra.mxu0 %v4874
    %6273 = vmatprep.subr.bf16.mxu0 %v4867
    %6274 = vmatpush1.bf16.msra.mxu0 %v4866
    %6275 = vmatprep.subr.bf16.mxu0 %v4859
    %6276 = vmatpush1.bf16.msra.mxu0 %v4858
    %6277 = vmatprep.subr.bf16.mxu0 %v4851
    %6278 = vmatpush1.bf16.msra.mxu0 %v4850
    %6279 = vmatprep.subr.bf16.mxu0 %v4843
    %6280 = vmatpush1.bf16.msra.mxu0 %v4842
    %6281 = vmatprep.subr.bf16.mxu0 %v4963
    %6282 = vmatpush2.bf16.msra.mxu0 %v4962
    %6283 = vmatprep.subr.bf16.mxu0 %v4955
    %6284 = vmatpush2.bf16.msra.mxu0 %v4954
    %6285 = vmatprep.subr.bf16.mxu0 %v4947
    %6286 = vmatpush2.bf16.msra.mxu0 %v4946
    %6287 = vmatprep.subr.bf16.mxu0 %v4939
    %6288 = vmatpush2.bf16.msra.mxu0 %v4938
    %6289 = vmatprep.subr.bf16.mxu0 %v4931
    %6290 = vmatpush2.bf16.msra.mxu0 %v4930
    %6291 = vmatprep.subr.bf16.mxu0 %v4923
    %6292 = vmatpush2.bf16.msra.mxu0 %v4922
    %6293 = vmatprep.subr.bf16.mxu0 %v4915
    %6294 = vmatpush2.bf16.msra.mxu0 %v4914
    %6295 = vmatprep.subr.bf16.mxu0 %v4907
    %6296 = vmatpush2.bf16.msra.mxu0 %v4906
    %6297 = vmatprep.mubr.bf16.mxu0 %v2602
    %6298 = vmatmul.mubr.bf16.gmra.mxu0 %v2601
    %v6299 = vpop.f32.mrf.mxu0
    %v6300 = vadd.f32 %v6259, %v6299
    %v6301 = vpop.f32.mrf.mxu0
    %v6302 = vadd.f32 %v6261, %v6301
    %v6303 = vpop.f32.mrf.mxu0
    %v6304 = vpop.f32.mrf.mxu0
    %6305 = vdwg.mxu0
    %6306 = vmatprep.subr.bf16.mxu0 %v5027
    %6307 = vmatpush1.bf16.msra.mxu0 %v5026
    %6308 = vmatprep.subr.bf16.mxu0 %v5019
    %6309 = vmatpush1.bf16.msra.mxu0 %v5018
    %6310 = vmatprep.subr.bf16.mxu0 %v5011
    %6311 = vmatpush1.bf16.msra.mxu0 %v5010
    %6312 = vmatprep.subr.bf16.mxu0 %v5003
    %6313 = vmatpush1.bf16.msra.mxu0 %v5002
    %6314 = vmatprep.subr.bf16.mxu0 %v4995
    %6315 = vmatpush1.bf16.msra.mxu0 %v4994
    %6316 = vmatprep.subr.bf16.mxu0 %v4987
    %6317 = vmatpush1.bf16.msra.mxu0 %v4986
    %6318 = vmatprep.subr.bf16.mxu0 %v4979
    %6319 = vmatpush1.bf16.msra.mxu0 %v4978
    %6320 = vmatprep.subr.bf16.mxu0 %v4971
    %6321 = vmatpush1.bf16.msra.mxu0 %v4970
    %6322 = vmatprep.subr.bf16.mxu0 %v5091
    %6323 = vmatpush2.bf16.msra.mxu0 %v5090
    %6324 = vmatprep.subr.bf16.mxu0 %v5083
    %6325 = vmatpush2.bf16.msra.mxu0 %v5082
    %6326 = vmatprep.subr.bf16.mxu0 %v5075
    %6327 = vmatpush2.bf16.msra.mxu0 %v5074
    %6328 = vmatprep.subr.bf16.mxu0 %v5067
    %6329 = vmatpush2.bf16.msra.mxu0 %v5066
    %6330 = vmatprep.subr.bf16.mxu0 %v5059
    %6331 = vmatpush2.bf16.msra.mxu0 %v5058
    %6332 = vmatprep.subr.bf16.mxu0 %v5051
    %6333 = vmatpush2.bf16.msra.mxu0 %v5050
    %6334 = vmatprep.subr.bf16.mxu0 %v5043
    %6335 = vmatpush2.bf16.msra.mxu0 %v5042
    %6336 = vmatprep.subr.bf16.mxu0 %v5035
    %6337 = vmatpush2.bf16.msra.mxu0 %v5034
    %6338 = vmatprep.mubr.bf16.mxu0 %v2604
    %6339 = vmatmul.mubr.bf16.gmra.mxu0 %v2603
    %v6340 = vpop.f32.mrf.mxu0
    %v6341 = vadd.f32 %v6300, %v6340
    %v6342 = vpop.f32.mrf.mxu0
    %v6343 = vadd.f32 %v6302, %v6342
    %v6344 = vpop.f32.mrf.mxu0
    %v6345 = vpop.f32.mrf.mxu0
    %6346 = vdwg.mxu0
    %6347 = vmatprep.subr.bf16.mxu0 %v5155
    %6348 = vmatpush1.bf16.msra.mxu0 %v5154
    %6349 = vmatprep.subr.bf16.mxu0 %v5147
    %6350 = vmatpush1.bf16.msra.mxu0 %v5146
    %6351 = vmatprep.subr.bf16.mxu0 %v5139
    %6352 = vmatpush1.bf16.msra.mxu0 %v5138
    %6353 = vmatprep.subr.bf16.mxu0 %v5131
    %6354 = vmatpush1.bf16.msra.mxu0 %v5130
    %6355 = vmatprep.subr.bf16.mxu0 %v5123
    %6356 = vmatpush1.bf16.msra.mxu0 %v5122
    %6357 = vmatprep.subr.bf16.mxu0 %v5115
    %6358 = vmatpush1.bf16.msra.mxu0 %v5114
    %6359 = vmatprep.subr.bf16.mxu0 %v5107
    %6360 = vmatpush1.bf16.msra.mxu0 %v5106
    %6361 = vmatprep.subr.bf16.mxu0 %v5099
    %6362 = vmatpush1.bf16.msra.mxu0 %v5098
    %6363 = vmatprep.subr.bf16.mxu0 %v5219
    %6364 = vmatpush2.bf16.msra.mxu0 %v5218
    %6365 = vmatprep.subr.bf16.mxu0 %v5211
    %6366 = vmatpush2.bf16.msra.mxu0 %v5210
    %6367 = vmatprep.subr.bf16.mxu0 %v5203
    %6368 = vmatpush2.bf16.msra.mxu0 %v5202
    %6369 = vmatprep.subr.bf16.mxu0 %v5195
    %6370 = vmatpush2.bf16.msra.mxu0 %v5194
    %6371 = vmatprep.subr.bf16.mxu0 %v5187
    %6372 = vmatpush2.bf16.msra.mxu0 %v5186
    %6373 = vmatprep.subr.bf16.mxu0 %v5179
    %6374 = vmatpush2.bf16.msra.mxu0 %v5178
    %6375 = vmatprep.subr.bf16.mxu0 %v5171
    %6376 = vmatpush2.bf16.msra.mxu0 %v5170
    %6377 = vmatprep.subr.bf16.mxu0 %v5163
    %6378 = vmatpush2.bf16.msra.mxu0 %v5162
    %6379 = vmatprep.mubr.bf16.mxu0 %v2606
    %6380 = vmatmul.mubr.bf16.gmra.mxu0 %v2605
    %v6381 = vpop.f32.mrf.mxu0
    %v6382 = vadd.f32 %v6341, %v6381
    %v6383 = vpop.f32.mrf.mxu0
    %v6384 = vadd.f32 %v6343, %v6383
    %v6385 = vpop.f32.mrf.mxu0
    %v6386 = vpop.f32.mrf.mxu0
    %6387 = vdwg.mxu0
    %v6388 = vmax.f32 %v5890, 0.0
    %v6389 = vmax.f32 %v5892, 0.0
    %v6390 = vmax.f32 %v6054, 0.0
    %v6391 = vmax.f32 %v6056, 0.0
    %v6392 = vmax.f32 %v6218, 0.0
    %v6393 = vmax.f32 %v6220, 0.0
    %v6394 = vmax.f32 %v6382, 0.0
    %v6395 = vmax.f32 %v6384, 0.0
    %v6396 = vrot.slane %v6388, 4
    %v6397 = vadd.f32 %v6388, %v6396
    %v6398 = vrot.slane %v6397, 2
    %v6399 = vadd.f32 %v6397, %v6398
    %v6400 = vrot.slane %v6399, 1
    %v6401 = vadd.f32 %v6399, %v6400
    %v6402 = vrot.slane %v6389, 4
    %v6403 = vadd.f32 %v6389, %v6402
    %v6404 = vrot.slane %v6403, 2
    %v6405 = vadd.f32 %v6403, %v6404
    %v6406 = vrot.slane %v6405, 1
    %v6407 = vadd.f32 %v6405, %v6406
    %v6408 = vrot.slane %v6390, 4
    %v6409 = vadd.f32 %v6390, %v6408
    %v6410 = vrot.slane %v6409, 2
    %v6411 = vadd.f32 %v6409, %v6410
    %v6412 = vrot.slane %v6411, 1
    %v6413 = vadd.f32 %v6411, %v6412
    %v6414 = vrot.slane %v6391, 4
    %v6415 = vadd.f32 %v6391, %v6414
    %v6416 = vrot.slane %v6415, 2
    %v6417 = vadd.f32 %v6415, %v6416
    %v6418 = vrot.slane %v6417, 1
    %v6419 = vadd.f32 %v6417, %v6418
    %v6420 = vrot.slane %v6392, 4
    %v6421 = vadd.f32 %v6392, %v6420
    %v6422 = vrot.slane %v6421, 2
    %v6423 = vadd.f32 %v6421, %v6422
    %v6424 = vrot.slane %v6423, 1
    %v6425 = vadd.f32 %v6423, %v6424
    %v6426 = vrot.slane %v6393, 4
    %v6427 = vadd.f32 %v6393, %v6426
    %v6428 = vrot.slane %v6427, 2
    %v6429 = vadd.f32 %v6427, %v6428
    %v6430 = vrot.slane %v6429, 1
    %v6431 = vadd.f32 %v6429, %v6430
    %v6432 = vrot.slane %v6394, 4
    %v6433 = vadd.f32 %v6394, %v6432
    %v6434 = vrot.slane %v6433, 2
    %v6435 = vadd.f32 %v6433, %v6434
    %v6436 = vrot.slane %v6435, 1
    %v6437 = vadd.f32 %v6435, %v6436
    %v6438 = vrot.slane %v6395, 4
    %v6439 = vadd.f32 %v6395, %v6438
    %v6440 = vrot.slane %v6439, 2
    %v6441 = vadd.f32 %v6439, %v6440
    %v6442 = vrot.slane %v6441, 1
    %v6443 = vadd.f32 %v6441, %v6442
    %v6444 = vmul.f32 %v6401, 0.125
    %v6445 = vmul.f32 %v6407, 0.125
    %v6446 = vmul.f32 %v6413, 0.125
    %v6447 = vmul.f32 %v6419, 0.125
    %v6448 = vmul.f32 %v6425, 0.125
    %v6449 = vmul.f32 %v6431, 0.125
    %v6450 = vmul.f32 %v6437, 0.125
    %v6451 = vmul.f32 %v6443, 0.125
    %v6452 = vmul.f32 %v6388, %v6388
    %v6453 = vmul.f32 %v6389, %v6389
    %v6454 = vmul.f32 %v6390, %v6390
    %v6455 = vmul.f32 %v6391, %v6391
    %v6456 = vmul.f32 %v6392, %v6392
    %v6457 = vmul.f32 %v6393, %v6393
    %v6458 = vmul.f32 %v6394, %v6394
    %v6459 = vmul.f32 %v6395, %v6395
    %v6460 = vrot.slane %v6452, 4
    %v6461 = vadd.f32 %v6452, %v6460
    %v6462 = vrot.slane %v6461, 2
    %v6463 = vadd.f32 %v6461, %v6462
    %v6464 = vrot.slane %v6463, 1
    %v6465 = vadd.f32 %v6463, %v6464
    %v6466 = vrot.slane %v6453, 4
    %v6467 = vadd.f32 %v6453, %v6466
    %v6468 = vrot.slane %v6467, 2
    %v6469 = vadd.f32 %v6467, %v6468
    %v6470 = vrot.slane %v6469, 1
    %v6471 = vadd.f32 %v6469, %v6470
    %v6472 = vrot.slane %v6454, 4
    %v6473 = vadd.f32 %v6454, %v6472
    %v6474 = vrot.slane %v6473, 2
    %v6475 = vadd.f32 %v6473, %v6474
    %v6476 = vrot.slane %v6475, 1
    %v6477 = vadd.f32 %v6475, %v6476
    %v6478 = vrot.slane %v6455, 4
    %v6479 = vadd.f32 %v6455, %v6478
    %v6480 = vrot.slane %v6479, 2
    %v6481 = vadd.f32 %v6479, %v6480
    %v6482 = vrot.slane %v6481, 1
    %v6483 = vadd.f32 %v6481, %v6482
    %v6484 = vrot.slane %v6456, 4
    %v6485 = vadd.f32 %v6456, %v6484
    %v6486 = vrot.slane %v6485, 2
    %v6487 = vadd.f32 %v6485, %v6486
    %v6488 = vrot.slane %v6487, 1
    %v6489 = vadd.f32 %v6487, %v6488
    %v6490 = vrot.slane %v6457, 4
    %v6491 = vadd.f32 %v6457, %v6490
    %v6492 = vrot.slane %v6491, 2
    %v6493 = vadd.f32 %v6491, %v6492
    %v6494 = vrot.slane %v6493, 1
    %v6495 = vadd.f32 %v6493, %v6494
    %v6496 = vrot.slane %v6458, 4
    %v6497 = vadd.f32 %v6458, %v6496
    %v6498 = vrot.slane %v6497, 2
    %v6499 = vadd.f32 %v6497, %v6498
    %v6500 = vrot.slane %v6499, 1
    %v6501 = vadd.f32 %v6499, %v6500
    %v6502 = vrot.slane %v6459, 4
    %v6503 = vadd.f32 %v6459, %v6502
    %v6504 = vrot.slane %v6503, 2
    %v6505 = vadd.f32 %v6503, %v6504
    %v6506 = vrot.slane %v6505, 1
    %v6507 = vadd.f32 %v6505, %v6506
    %v6508 = vmul.f32 %v6465, 0.125
    %v6509 = vmul.f32 %v6471, 0.125
    %v6510 = vmul.f32 %v6477, 0.125
    %v6511 = vmul.f32 %v6483, 0.125
    %v6512 = vmul.f32 %v6489, 0.125
    %v6513 = vmul.f32 %v6495, 0.125
    %v6514 = vmul.f32 %v6501, 0.125
    %v6515 = vmul.f32 %v6507, 0.125
    %v6516 = vmul.f32 %v6444, %v6444
    %v6517 = vmul.f32 %v6445, %v6445
    %v6518 = vmul.f32 %v6446, %v6446
    %v6519 = vmul.f32 %v6447, %v6447
    %v6520 = vmul.f32 %v6448, %v6448
    %v6521 = vmul.f32 %v6449, %v6449
    %v6522 = vmul.f32 %v6450, %v6450
    %v6523 = vmul.f32 %v6451, %v6451
    %v6524 = vsub.f32 %v6508, %v6516
    %v6525 = vsub.f32 %v6509, %v6517
    %v6526 = vsub.f32 %v6510, %v6518
    %v6527 = vsub.f32 %v6511, %v6519
    %v6528 = vsub.f32 %v6512, %v6520
    %v6529 = vsub.f32 %v6513, %v6521
    %v6530 = vsub.f32 %v6514, %v6522
    %v6531 = vsub.f32 %v6515, %v6523
    %v6532 = vadd.f32 %v6524, 1e-05
    %v6533 = vadd.f32 %v6525, 1e-05
    %v6534 = vadd.f32 %v6526, 1e-05
    %v6535 = vadd.f32 %v6527, 1e-05
    %v6536 = vadd.f32 %v6528, 1e-05
    %v6537 = vadd.f32 %v6529, 1e-05
    %v6538 = vadd.f32 %v6530, 1e-05
    %v6539 = vadd.f32 %v6531, 1e-05
    %v6540 = vrsqrt.pop %v6532
    %v6541 = vrsqrt.pop %v6533
    %v6542 = vrsqrt.pop %v6534
    %v6543 = vrsqrt.pop %v6535
    %v6544 = vrsqrt.pop %v6536
    %v6545 = vrsqrt.pop %v6537
    %v6546 = vrsqrt.pop %v6538
    %v6547 = vrsqrt.pop %v6539
    %v6556 = vcombine.low %v6540, %v6541
    %v6557 = vcombine.low %v6542, %v6543
    %v6558 = vcombine.low %v6544, %v6545
    %v6559 = vcombine.low %v6546, %v6547
    %v6561 = vunpack.c.l.s4 1966171168
    %v6562 = vunpack.c.0.s8 %v6561
    %v6563 = vlaneseq
    %v6564 = vshrl.u32 %v6563, 7
    %v6565 = vsub.s32 %v6562, %v6564
    %v6566 = vrot.slane %v6556, %v6565
    %v6568 = vunpack.c.l.s4 1966171168
    %v6569 = vunpack.c.0.s8 %v6568
    %v6570 = vlaneseq
    %v6571 = vshrl.u32 %v6570, 7
    %v6572 = vsub.s32 %v6569, %v6571
    %v6573 = vrot.slane %v6557, %v6572
    %v6575 = vunpack.c.l.s4 1966171168
    %v6576 = vunpack.c.0.s8 %v6575
    %v6577 = vlaneseq
    %v6578 = vshrl.u32 %v6577, 7
    %v6579 = vsub.s32 %v6576, %v6578
    %v6580 = vrot.slane %v6558, %v6579
    %v6582 = vunpack.c.l.s4 1966171168
    %v6583 = vunpack.c.0.s8 %v6582
    %v6584 = vlaneseq
    %v6585 = vshrl.u32 %v6584, 7
    %v6586 = vsub.s32 %v6583, %v6585
    %v6587 = vrot.slane %v6559, %v6586
    %v6588 = vcombine.low %v6566, %v6573
    %v6589 = vcombine.low %v6580, %v6587
    %v6591 = vunpack.c.l.s4 1966171168
    %v6592 = vunpack.c.0.s8 %v6591
    %v6593 = vlaneseq
    %v6594 = vshrl.u32 %v6593, 7
    %v6595 = vsub.s32 %v6592, %v6594
    %v6596 = vrot.slane %v6588, %v6595
    %v6598 = vunpack.c.l.s4 1966171168
    %v6599 = vunpack.c.0.s8 %v6598
    %v6600 = vlaneseq
    %v6601 = vshrl.u32 %v6600, 7
    %v6602 = vsub.s32 %v6599, %v6601
    %v6603 = vrot.slane %v6589, %v6602
    %v6604 = vcombine.low %v6596, %v6603
    %v6606 = vmul.f32 %v3126, %v6604
    %v6608 = vlaneseq
    %v6609 = vshrl.u32 %v6608, 7
    %v6610 = vsub.s32 0, %v6609
    %v6611 = vrot.slane %v6606, %v6610
    %v6612 = vlaneseq
    %v6613 = vshrl.u32 %v6612, 7
    %v6614 = vsub.s32 1, %v6613
    %v6615 = vrot.slane %v6606, %v6614
    %v6616 = vlaneseq
    %v6617 = vshrl.u32 %v6616, 7
    %v6618 = vsub.s32 2, %v6617
    %v6619 = vrot.slane %v6606, %v6618
    %v6620 = vlaneseq
    %v6621 = vshrl.u32 %v6620, 7
    %v6622 = vsub.s32 3, %v6621
    %v6623 = vrot.slane %v6606, %v6622
    %v6624 = vlaneseq
    %v6625 = vshrl.u32 %v6624, 7
    %v6626 = vsub.s32 4, %v6625
    %v6627 = vrot.slane %v6606, %v6626
    %v6628 = vlaneseq
    %v6629 = vshrl.u32 %v6628, 7
    %v6630 = vsub.s32 5, %v6629
    %v6631 = vrot.slane %v6606, %v6630
    %v6632 = vlaneseq
    %v6633 = vshrl.u32 %v6632, 7
    %v6634 = vsub.s32 6, %v6633
    %v6635 = vrot.slane %v6606, %v6634
    %v6636 = vlaneseq
    %v6637 = vshrl.u32 %v6636, 7
    %v6638 = vsub.s32 7, %v6637
    %v6639 = vrot.slane %v6606, %v6638
    %v6648 = vmul.f32 %v6444, %v6611
    %v6649 = vmul.f32 %v6445, %v6615
    %v6650 = vmul.f32 %v6446, %v6619
    %v6651 = vmul.f32 %v6447, %v6623
    %v6652 = vmul.f32 %v6448, %v6627
    %v6653 = vmul.f32 %v6449, %v6631
    %v6654 = vmul.f32 %v6450, %v6635
    %v6655 = vmul.f32 %v6451, %v6639
    %v6664 = vcombine.low %v6648, %v6649
    %v6665 = vcombine.low %v6650, %v6651
    %v6666 = vcombine.low %v6652, %v6653
    %v6667 = vcombine.low %v6654, %v6655
    %v6669 = vunpack.c.l.s4 1966171168
    %v6670 = vunpack.c.0.s8 %v6669
    %v6671 = vlaneseq
    %v6672 = vshrl.u32 %v6671, 7
    %v6673 = vsub.s32 %v6670, %v6672
    %v6674 = vrot.slane %v6664, %v6673
    %v6676 = vunpack.c.l.s4 1966171168
    %v6677 = vunpack.c.0.s8 %v6676
    %v6678 = vlaneseq
    %v6679 = vshrl.u32 %v6678, 7
    %v6680 = vsub.s32 %v6677, %v6679
    %v6681 = vrot.slane %v6665, %v6680
    %v6683 = vunpack.c.l.s4 1966171168
    %v6684 = vunpack.c.0.s8 %v6683
    %v6685 = vlaneseq
    %v6686 = vshrl.u32 %v6685, 7
    %v6687 = vsub.s32 %v6684, %v6686
    %v6688 = vrot.slane %v6666, %v6687
    %v6690 = vunpack.c.l.s4 1966171168
    %v6691 = vunpack.c.0.s8 %v6690
    %v6692 = vlaneseq
    %v6693 = vshrl.u32 %v6692, 7
    %v6694 = vsub.s32 %v6691, %v6693
    %v6695 = vrot.slane %v6667, %v6694
    %v6696 = vcombine.low %v6674, %v6681
    %v6697 = vcombine.low %v6688, %v6695
    %v6699 = vunpack.c.l.s4 1966171168
    %v6700 = vunpack.c.0.s8 %v6699
    %v6701 = vlaneseq
    %v6702 = vshrl.u32 %v6701, 7
    %v6703 = vsub.s32 %v6700, %v6702
    %v6704 = vrot.slane %v6696, %v6703
    %v6706 = vunpack.c.l.s4 1966171168
    %v6707 = vunpack.c.0.s8 %v6706
    %v6708 = vlaneseq
    %v6709 = vshrl.u32 %v6708, 7
    %v6710 = vsub.s32 %v6707, %v6709
    %v6711 = vrot.slane %v6697, %v6710
    %v6712 = vcombine.low %v6704, %v6711
    %v6714 = vsub.f32 %v3130, %v6712
    %v6715 = vmul.f32 %v6388, %v6611
    %v6716 = vmul.f32 %v6389, %v6615
    %v6717 = vmul.f32 %v6390, %v6619
    %v6718 = vmul.f32 %v6391, %v6623
    %v6719 = vmul.f32 %v6392, %v6627
    %v6720 = vmul.f32 %v6393, %v6631
    %v6721 = vmul.f32 %v6394, %v6635
    %v6722 = vmul.f32 %v6395, %v6639
    %v6724 = vlaneseq
    %v6725 = vshrl.u32 %v6724, 7
    %v6726 = vsub.s32 0, %v6725
    %v6727 = vrot.slane %v6714, %v6726
    %v6728 = vlaneseq
    %v6729 = vshrl.u32 %v6728, 7
    %v6730 = vsub.s32 1, %v6729
    %v6731 = vrot.slane %v6714, %v6730
    %v6732 = vlaneseq
    %v6733 = vshrl.u32 %v6732, 7
    %v6734 = vsub.s32 2, %v6733
    %v6735 = vrot.slane %v6714, %v6734
    %v6736 = vlaneseq
    %v6737 = vshrl.u32 %v6736, 7
    %v6738 = vsub.s32 3, %v6737
    %v6739 = vrot.slane %v6714, %v6738
    %v6740 = vlaneseq
    %v6741 = vshrl.u32 %v6740, 7
    %v6742 = vsub.s32 4, %v6741
    %v6743 = vrot.slane %v6714, %v6742
    %v6744 = vlaneseq
    %v6745 = vshrl.u32 %v6744, 7
    %v6746 = vsub.s32 5, %v6745
    %v6747 = vrot.slane %v6714, %v6746
    %v6748 = vlaneseq
    %v6749 = vshrl.u32 %v6748, 7
    %v6750 = vsub.s32 6, %v6749
    %v6751 = vrot.slane %v6714, %v6750
    %v6752 = vlaneseq
    %v6753 = vshrl.u32 %v6752, 7
    %v6754 = vsub.s32 7, %v6753
    %v6755 = vrot.slane %v6714, %v6754
    %v6764 = vadd.f32 %v6715, %v6727
    %v6765 = vadd.f32 %v6716, %v6731
    %v6766 = vadd.f32 %v6717, %v6735
    %v6767 = vadd.f32 %v6718, %v6739
    %v6768 = vadd.f32 %v6719, %v6743
    %v6769 = vadd.f32 %v6720, %v6747
    %v6770 = vadd.f32 %v6721, %v6751
    %v6771 = vadd.f32 %v6722, %v6755
    %s6772 = smul.u32 %s2041, 4
    %s6773 = sshll.u32 %s6772, 4
    %6774 = dma.done %s2045, %s6773
    %s6775 = scalar_lea.sflag [#allocation8], 4
    // Predicated region
    $region60: #{_lambda_.1} parent=1 // pred_check
      _
    $region61: #{_lambda_.1} parent=1 // pred_check_branch
      %6777 = sbr.rel target = $region63
    $region62: #{_lambda_.1} parent=1 // pred_region
      %6778 = sst [smem:[#allocation15]] [#allocation23]
      %6779 = sst [smem:[#allocation16]] [#allocation22]
    $region63: #{_lambda_.1} parent=1 // pred_fallthru
      _
    %6781 = shalt.err (0)
    %s6783 = sshll.u32 [#allocation5], 4
    %s6784 = int_to_ptr.vmem [resolvable:$true] %s6783
    %6786 = dma.hbm_to_vmem [thread:$0]  %s5, 16384, %s6784, %s6775
    %v6787 = vpack.c.bf16 %v6764, %v6764
    %v6788 = vpack.c.bf16 %v6765, %v6765
    %v6789 = vpack.c.bf16 %v6766, %v6766
    %v6790 = vpack.c.bf16 %v6767, %v6767
    %v6791 = vpack.c.bf16 %v6768, %v6768
    %v6792 = vpack.c.bf16 %v6769, %v6769
    %v6793 = vpack.c.bf16 %v6770, %v6770
    %v6794 = vpack.c.bf16 %v6771, %v6771
    %v6795 = vld [vmem:[#allocation4] sm:$0xff]
    %v6796 = vld [vmem:[#allocation4 + $0x8] sm:$0xff]
    %v6797 = vld [vmem:[#allocation4 + $0x10] sm:$0xff]
    %v6798 = vld [vmem:[#allocation4 + $0x18] sm:$0xff]
    %v6799 = vld [vmem:[#allocation4 + $0x20] sm:$0xff]
    %v6800 = vld [vmem:[#allocation4 + $0x28] sm:$0xff]
    %v6801 = vld [vmem:[#allocation4 + $0x30] sm:$0xff]
    %v6802 = vld [vmem:[#allocation4 + $0x38] sm:$0xff]
    %v6803 = vld [vmem:[#allocation4 + $0x40] sm:$0xff]
    %v6804 = vld [vmem:[#allocation4 + $0x48] sm:$0xff]
    %v6805 = vld [vmem:[#allocation4 + $0x50] sm:$0xff]
    %v6806 = vld [vmem:[#allocation4 + $0x58] sm:$0xff]
    %v6807 = vld [vmem:[#allocation4 + $0x60] sm:$0xff]
    %v6808 = vld [vmem:[#allocation4 + $0x68] sm:$0xff]
    %v6809 = vld [vmem:[#allocation4 + $0x70] sm:$0xff]
    %v6810 = vld [vmem:[#allocation4 + $0x78] sm:$0xff]
    %v6811 = vld [vmem:[#allocation4 + $0x80] sm:$0xff]
    %v6812 = vld [vmem:[#allocation4 + $0x88] sm:$0xff]
    %v6813 = vld [vmem:[#allocation4 + $0x90] sm:$0xff]
    %v6814 = vld [vmem:[#allocation4 + $0x98] sm:$0xff]
    %v6815 = vld [vmem:[#allocation4 + $0xa0] sm:$0xff]
    %v6816 = vld [vmem:[#allocation4 + $0xa8] sm:$0xff]
    %v6817 = vld [vmem:[#allocation4 + $0xb0] sm:$0xff]
    %v6818 = vld [vmem:[#allocation4 + $0xb8] sm:$0xff]
    %v6819 = vld [vmem:[#allocation4 + $0xc0] sm:$0xff]
    %v6820 = vld [vmem:[#allocation4 + $0xc8] sm:$0xff]
    %v6821 = vld [vmem:[#allocation4 + $0xd0] sm:$0xff]
    %v6822 = vld [vmem:[#allocation4 + $0xd8] sm:$0xff]
    %v6823 = vld [vmem:[#allocation4 + $0xe0] sm:$0xff]
    %v6824 = vld [vmem:[#allocation4 + $0xe8] sm:$0xff]
    %v6825 = vld [vmem:[#allocation4 + $0xf0] sm:$0xff]
    %v6826 = vld [vmem:[#allocation4 + $0xf8] sm:$0xff]
    %v6827 = vld [vmem:[#allocation4 + $0x100] sm:$0xff]
    %v6828 = vld [vmem:[#allocation4 + $0x108] sm:$0xff]
    %v6829 = vld [vmem:[#allocation4 + $0x110] sm:$0xff]
    %v6830 = vld [vmem:[#allocation4 + $0x118] sm:$0xff]
    %v6831 = vld [vmem:[#allocation4 + $0x120] sm:$0xff]
    %v6832 = vld [vmem:[#allocation4 + $0x128] sm:$0xff]
    %v6833 = vld [vmem:[#allocation4 + $0x130] sm:$0xff]
    %v6834 = vld [vmem:[#allocation4 + $0x138] sm:$0xff]
    %v6835 = vld [vmem:[#allocation4 + $0x140] sm:$0xff]
    %v6836 = vld [vmem:[#allocation4 + $0x148] sm:$0xff]
    %v6837 = vld [vmem:[#allocation4 + $0x150] sm:$0xff]
    %v6838 = vld [vmem:[#allocation4 + $0x158] sm:$0xff]
    %v6839 = vld [vmem:[#allocation4 + $0x160] sm:$0xff]
    %v6840 = vld [vmem:[#allocation4 + $0x168] sm:$0xff]
    %v6841 = vld [vmem:[#allocation4 + $0x170] sm:$0xff]
    %v6842 = vld [vmem:[#allocation4 + $0x178] sm:$0xff]
    %v6843 = vld [vmem:[#allocation4 + $0x180] sm:$0xff]
    %v6844 = vld [vmem:[#allocation4 + $0x188] sm:$0xff]
    %v6845 = vld [vmem:[#allocation4 + $0x190] sm:$0xff]
    %v6846 = vld [vmem:[#allocation4 + $0x198] sm:$0xff]
    %v6847 = vld [vmem:[#allocation4 + $0x1a0] sm:$0xff]
    %v6848 = vld [vmem:[#allocation4 + $0x1a8] sm:$0xff]
    %v6849 = vld [vmem:[#allocation4 + $0x1b0] sm:$0xff]
    %v6850 = vld [vmem:[#allocation4 + $0x1b8] sm:$0xff]
    %v6851 = vld [vmem:[#allocation4 + $0x1c0] sm:$0xff]
    %v6852 = vld [vmem:[#allocation4 + $0x1c8] sm:$0xff]
    %v6853 = vld [vmem:[#allocation4 + $0x1d0] sm:$0xff]
    %v6854 = vld [vmem:[#allocation4 + $0x1d8] sm:$0xff]
    %v6855 = vld [vmem:[#allocation4 + $0x1e0] sm:$0xff]
    %v6856 = vld [vmem:[#allocation4 + $0x1e8] sm:$0xff]
    %v6857 = vld [vmem:[#allocation4 + $0x1f0] sm:$0xff]
    %v6858 = vld [vmem:[#allocation4 + $0x1f8] sm:$0xff]
    %v6859 = vld [vmem:[#allocation4 + $0x200] sm:$0xff]
    %v6860 = vld [vmem:[#allocation4 + $0x208] sm:$0xff]
    %v6861 = vld [vmem:[#allocation4 + $0x210] sm:$0xff]
    %v6862 = vld [vmem:[#allocation4 + $0x218] sm:$0xff]
    %v6863 = vld [vmem:[#allocation4 + $0x220] sm:$0xff]
    %v6864 = vld [vmem:[#allocation4 + $0x228] sm:$0xff]
    %v6865 = vld [vmem:[#allocation4 + $0x230] sm:$0xff]
    %v6866 = vld [vmem:[#allocation4 + $0x238] sm:$0xff]
    %v6867 = vld [vmem:[#allocation4 + $0x240] sm:$0xff]
    %v6868 = vld [vmem:[#allocation4 + $0x248] sm:$0xff]
    %v6869 = vld [vmem:[#allocation4 + $0x250] sm:$0xff]
    %v6870 = vld [vmem:[#allocation4 + $0x258] sm:$0xff]
    %v6871 = vld [vmem:[#allocation4 + $0x260] sm:$0xff]
    %v6872 = vld [vmem:[#allocation4 + $0x268] sm:$0xff]
    %v6873 = vld [vmem:[#allocation4 + $0x270] sm:$0xff]
    %v6874 = vld [vmem:[#allocation4 + $0x278] sm:$0xff]
    %v6875 = vld [vmem:[#allocation4 + $0x280] sm:$0xff]
    %v6876 = vld [vmem:[#allocation4 + $0x288] sm:$0xff]
    %v6877 = vld [vmem:[#allocation4 + $0x290] sm:$0xff]
    %v6878 = vld [vmem:[#allocation4 + $0x298] sm:$0xff]
    %v6879 = vld [vmem:[#allocation4 + $0x2a0] sm:$0xff]
    %v6880 = vld [vmem:[#allocation4 + $0x2a8] sm:$0xff]
    %v6881 = vld [vmem:[#allocation4 + $0x2b0] sm:$0xff]
    %v6882 = vld [vmem:[#allocation4 + $0x2b8] sm:$0xff]
    %v6883 = vld [vmem:[#allocation4 + $0x2c0] sm:$0xff]
    %v6884 = vld [vmem:[#allocation4 + $0x2c8] sm:$0xff]
    %v6885 = vld [vmem:[#allocation4 + $0x2d0] sm:$0xff]
    %v6886 = vld [vmem:[#allocation4 + $0x2d8] sm:$0xff]
    %v6887 = vld [vmem:[#allocation4 + $0x2e0] sm:$0xff]
    %v6888 = vld [vmem:[#allocation4 + $0x2e8] sm:$0xff]
    %v6889 = vld [vmem:[#allocation4 + $0x2f0] sm:$0xff]
    %v6890 = vld [vmem:[#allocation4 + $0x2f8] sm:$0xff]
    %v6891 = vld [vmem:[#allocation4 + $0x300] sm:$0xff]
    %v6892 = vld [vmem:[#allocation4 + $0x308] sm:$0xff]
    %v6893 = vld [vmem:[#allocation4 + $0x310] sm:$0xff]
    %v6894 = vld [vmem:[#allocation4 + $0x318] sm:$0xff]
    %v6895 = vld [vmem:[#allocation4 + $0x320] sm:$0xff]
    %v6896 = vld [vmem:[#allocation4 + $0x328] sm:$0xff]
    %v6897 = vld [vmem:[#allocation4 + $0x330] sm:$0xff]
    %v6898 = vld [vmem:[#allocation4 + $0x338] sm:$0xff]
    %v6899 = vld [vmem:[#allocation4 + $0x340] sm:$0xff]
    %v6900 = vld [vmem:[#allocation4 + $0x348] sm:$0xff]
    %v6901 = vld [vmem:[#allocation4 + $0x350] sm:$0xff]
    %v6902 = vld [vmem:[#allocation4 + $0x358] sm:$0xff]
    %v6903 = vld [vmem:[#allocation4 + $0x360] sm:$0xff]
    %v6904 = vld [vmem:[#allocation4 + $0x368] sm:$0xff]
    %v6905 = vld [vmem:[#allocation4 + $0x370] sm:$0xff]
    %v6906 = vld [vmem:[#allocation4 + $0x378] sm:$0xff]
    %v6907 = vld [vmem:[#allocation4 + $0x380] sm:$0xff]
    %v6908 = vld [vmem:[#allocation4 + $0x388] sm:$0xff]
    %v6909 = vld [vmem:[#allocation4 + $0x390] sm:$0xff]
    %v6910 = vld [vmem:[#allocation4 + $0x398] sm:$0xff]
    %v6911 = vld [vmem:[#allocation4 + $0x3a0] sm:$0xff]
    %v6912 = vld [vmem:[#allocation4 + $0x3a8] sm:$0xff]
    %v6913 = vld [vmem:[#allocation4 + $0x3b0] sm:$0xff]
    %v6914 = vld [vmem:[#allocation4 + $0x3b8] sm:$0xff]
    %v6915 = vld [vmem:[#allocation4 + $0x3c0] sm:$0xff]
    %v6916 = vld [vmem:[#allocation4 + $0x3c8] sm:$0xff]
    %v6917 = vld [vmem:[#allocation4 + $0x3d0] sm:$0xff]
    %v6918 = vld [vmem:[#allocation4 + $0x3d8] sm:$0xff]
    %v6919 = vld [vmem:[#allocation4 + $0x3e0] sm:$0xff]
    %v6920 = vld [vmem:[#allocation4 + $0x3e8] sm:$0xff]
    %v6921 = vld [vmem:[#allocation4 + $0x3f0] sm:$0xff]
    %v6922 = vld [vmem:[#allocation4 + $0x3f8] sm:$0xff]
    %v6923 = vld [vmem:[#allocation4 + $0x400] sm:$0xff]
    %v6924 = vld [vmem:[#allocation4 + $0x408] sm:$0xff]
    %v6925 = vld [vmem:[#allocation4 + $0x410] sm:$0xff]
    %v6926 = vld [vmem:[#allocation4 + $0x418] sm:$0xff]
    %v6927 = vld [vmem:[#allocation4 + $0x420] sm:$0xff]
    %v6928 = vld [vmem:[#allocation4 + $0x428] sm:$0xff]
    %v6929 = vld [vmem:[#allocation4 + $0x430] sm:$0xff]
    %v6930 = vld [vmem:[#allocation4 + $0x438] sm:$0xff]
    %v6931 = vld [vmem:[#allocation4 + $0x440] sm:$0xff]
    %v6932 = vld [vmem:[#allocation4 + $0x448] sm:$0xff]
    %v6933 = vld [vmem:[#allocation4 + $0x450] sm:$0xff]
    %v6934 = vld [vmem:[#allocation4 + $0x458] sm:$0xff]
    %v6935 = vld [vmem:[#allocation4 + $0x460] sm:$0xff]
    %v6936 = vld [vmem:[#allocation4 + $0x468] sm:$0xff]
    %v6937 = vld [vmem:[#allocation4 + $0x470] sm:$0xff]
    %v6938 = vld [vmem:[#allocation4 + $0x478] sm:$0xff]
    %v6939 = vld [vmem:[#allocation4 + $0x480] sm:$0xff]
    %v6940 = vld [vmem:[#allocation4 + $0x488] sm:$0xff]
    %v6941 = vld [vmem:[#allocation4 + $0x490] sm:$0xff]
    %v6942 = vld [vmem:[#allocation4 + $0x498] sm:$0xff]
    %v6943 = vld [vmem:[#allocation4 + $0x4a0] sm:$0xff]
    %v6944 = vld [vmem:[#allocation4 + $0x4a8] sm:$0xff]
    %v6945 = vld [vmem:[#allocation4 + $0x4b0] sm:$0xff]
    %v6946 = vld [vmem:[#allocation4 + $0x4b8] sm:$0xff]
    %v6947 = vld [vmem:[#allocation4 + $0x4c0] sm:$0xff]
    %v6948 = vld [vmem:[#allocation4 + $0x4c8] sm:$0xff]
    %v6949 = vld [vmem:[#allocation4 + $0x4d0] sm:$0xff]
    %v6950 = vld [vmem:[#allocation4 + $0x4d8] sm:$0xff]
    %v6951 = vld [vmem:[#allocation4 + $0x4e0] sm:$0xff]
    %v6952 = vld [vmem:[#allocation4 + $0x4e8] sm:$0xff]
    %v6953 = vld [vmem:[#allocation4 + $0x4f0] sm:$0xff]
    %v6954 = vld [vmem:[#allocation4 + $0x4f8] sm:$0xff]
    %v6955 = vld [vmem:[#allocation4 + $0x500] sm:$0xff]
    %v6956 = vld [vmem:[#allocation4 + $0x508] sm:$0xff]
    %v6957 = vld [vmem:[#allocation4 + $0x510] sm:$0xff]
    %v6958 = vld [vmem:[#allocation4 + $0x518] sm:$0xff]
    %v6959 = vld [vmem:[#allocation4 + $0x520] sm:$0xff]
    %v6960 = vld [vmem:[#allocation4 + $0x528] sm:$0xff]
    %v6961 = vld [vmem:[#allocation4 + $0x530] sm:$0xff]
    %v6962 = vld [vmem:[#allocation4 + $0x538] sm:$0xff]
    %v6963 = vld [vmem:[#allocation4 + $0x540] sm:$0xff]
    %v6964 = vld [vmem:[#allocation4 + $0x548] sm:$0xff]
    %v6965 = vld [vmem:[#allocation4 + $0x550] sm:$0xff]
    %v6966 = vld [vmem:[#allocation4 + $0x558] sm:$0xff]
    %v6967 = vld [vmem:[#allocation4 + $0x560] sm:$0xff]
    %v6968 = vld [vmem:[#allocation4 + $0x568] sm:$0xff]
    %v6969 = vld [vmem:[#allocation4 + $0x570] sm:$0xff]
    %v6970 = vld [vmem:[#allocation4 + $0x578] sm:$0xff]
    %v6971 = vld [vmem:[#allocation4 + $0x580] sm:$0xff]
    %v6972 = vld [vmem:[#allocation4 + $0x588] sm:$0xff]
    %v6973 = vld [vmem:[#allocation4 + $0x590] sm:$0xff]
    %v6974 = vld [vmem:[#allocation4 + $0x598] sm:$0xff]
    %v6975 = vld [vmem:[#allocation4 + $0x5a0] sm:$0xff]
    %v6976 = vld [vmem:[#allocation4 + $0x5a8] sm:$0xff]
    %v6977 = vld [vmem:[#allocation4 + $0x5b0] sm:$0xff]
    %v6978 = vld [vmem:[#allocation4 + $0x5b8] sm:$0xff]
    %v6979 = vld [vmem:[#allocation4 + $0x5c0] sm:$0xff]
    %v6980 = vld [vmem:[#allocation4 + $0x5c8] sm:$0xff]
    %v6981 = vld [vmem:[#allocation4 + $0x5d0] sm:$0xff]
    %v6982 = vld [vmem:[#allocation4 + $0x5d8] sm:$0xff]
    %v6983 = vld [vmem:[#allocation4 + $0x5e0] sm:$0xff]
    %v6984 = vld [vmem:[#allocation4 + $0x5e8] sm:$0xff]
    %v6985 = vld [vmem:[#allocation4 + $0x5f0] sm:$0xff]
    %v6986 = vld [vmem:[#allocation4 + $0x5f8] sm:$0xff]
    %v6987 = vld [vmem:[#allocation4 + $0x600] sm:$0xff]
    %v6988 = vld [vmem:[#allocation4 + $0x608] sm:$0xff]
    %v6989 = vld [vmem:[#allocation4 + $0x610] sm:$0xff]
    %v6990 = vld [vmem:[#allocation4 + $0x618] sm:$0xff]
    %v6991 = vld [vmem:[#allocation4 + $0x620] sm:$0xff]
    %v6992 = vld [vmem:[#allocation4 + $0x628] sm:$0xff]
    %v6993 = vld [vmem:[#allocation4 + $0x630] sm:$0xff]
    %v6994 = vld [vmem:[#allocation4 + $0x638] sm:$0xff]
    %v6995 = vld [vmem:[#allocation4 + $0x640] sm:$0xff]
    %v6996 = vld [vmem:[#allocation4 + $0x648] sm:$0xff]
    %v6997 = vld [vmem:[#allocation4 + $0x650] sm:$0xff]
    %v6998 = vld [vmem:[#allocation4 + $0x658] sm:$0xff]
    %v6999 = vld [vmem:[#allocation4 + $0x660] sm:$0xff]
    %v7000 = vld [vmem:[#allocation4 + $0x668] sm:$0xff]
    %v7001 = vld [vmem:[#allocation4 + $0x670] sm:$0xff]
    %v7002 = vld [vmem:[#allocation4 + $0x678] sm:$0xff]
    %v7003 = vld [vmem:[#allocation4 + $0x680] sm:$0xff]
    %v7004 = vld [vmem:[#allocation4 + $0x688] sm:$0xff]
    %v7005 = vld [vmem:[#allocation4 + $0x690] sm:$0xff]
    %v7006 = vld [vmem:[#allocation4 + $0x698] sm:$0xff]
    %v7007 = vld [vmem:[#allocation4 + $0x6a0] sm:$0xff]
    %v7008 = vld [vmem:[#allocation4 + $0x6a8] sm:$0xff]
    %v7009 = vld [vmem:[#allocation4 + $0x6b0] sm:$0xff]
    %v7010 = vld [vmem:[#allocation4 + $0x6b8] sm:$0xff]
    %v7011 = vld [vmem:[#allocation4 + $0x6c0] sm:$0xff]
    %v7012 = vld [vmem:[#allocation4 + $0x6c8] sm:$0xff]
    %v7013 = vld [vmem:[#allocation4 + $0x6d0] sm:$0xff]
    %v7014 = vld [vmem:[#allocation4 + $0x6d8] sm:$0xff]
    %v7015 = vld [vmem:[#allocation4 + $0x6e0] sm:$0xff]
    %v7016 = vld [vmem:[#allocation4 + $0x6e8] sm:$0xff]
    %v7017 = vld [vmem:[#allocation4 + $0x6f0] sm:$0xff]
    %v7018 = vld [vmem:[#allocation4 + $0x6f8] sm:$0xff]
    %v7019 = vld [vmem:[#allocation4 + $0x700] sm:$0xff]
    %v7020 = vld [vmem:[#allocation4 + $0x708] sm:$0xff]
    %v7021 = vld [vmem:[#allocation4 + $0x710] sm:$0xff]
    %v7022 = vld [vmem:[#allocation4 + $0x718] sm:$0xff]
    %v7023 = vld [vmem:[#allocation4 + $0x720] sm:$0xff]
    %v7024 = vld [vmem:[#allocation4 + $0x728] sm:$0xff]
    %v7025 = vld [vmem:[#allocation4 + $0x730] sm:$0xff]
    %v7026 = vld [vmem:[#allocation4 + $0x738] sm:$0xff]
    %v7027 = vld [vmem:[#allocation4 + $0x740] sm:$0xff]
    %v7028 = vld [vmem:[#allocation4 + $0x748] sm:$0xff]
    %v7029 = vld [vmem:[#allocation4 + $0x750] sm:$0xff]
    %v7030 = vld [vmem:[#allocation4 + $0x758] sm:$0xff]
    %v7031 = vld [vmem:[#allocation4 + $0x760] sm:$0xff]
    %v7032 = vld [vmem:[#allocation4 + $0x768] sm:$0xff]
    %v7033 = vld [vmem:[#allocation4 + $0x770] sm:$0xff]
    %v7034 = vld [vmem:[#allocation4 + $0x778] sm:$0xff]
    %v7035 = vld [vmem:[#allocation4 + $0x780] sm:$0xff]
    %v7036 = vld [vmem:[#allocation4 + $0x788] sm:$0xff]
    %v7037 = vld [vmem:[#allocation4 + $0x790] sm:$0xff]
    %v7038 = vld [vmem:[#allocation4 + $0x798] sm:$0xff]
    %v7039 = vld [vmem:[#allocation4 + $0x7a0] sm:$0xff]
    %v7040 = vld [vmem:[#allocation4 + $0x7a8] sm:$0xff]
    %v7041 = vld [vmem:[#allocation4 + $0x7b0] sm:$0xff]
    %v7042 = vld [vmem:[#allocation4 + $0x7b8] sm:$0xff]
    %v7043 = vld [vmem:[#allocation4 + $0x7c0] sm:$0xff]
    %v7044 = vld [vmem:[#allocation4 + $0x7c8] sm:$0xff]
    %v7045 = vld [vmem:[#allocation4 + $0x7d0] sm:$0xff]
    %v7046 = vld [vmem:[#allocation4 + $0x7d8] sm:$0xff]
    %v7047 = vld [vmem:[#allocation4 + $0x7e0] sm:$0xff]
    %v7048 = vld [vmem:[#allocation4 + $0x7e8] sm:$0xff]
    %v7049 = vld [vmem:[#allocation4 + $0x7f0] sm:$0xff]
    %v7050 = vld [vmem:[#allocation4 + $0x7f8] sm:$0xff]
    %s7051 = scalar_lea.vmem [#allocation9], 2
    %v7052 = vld [vmem:[%s7051] ss:$8 sm:$0xf]
    %s7053 = scalar_lea.vmem [#allocation9], 7
    %v7054 = vld [vmem:[%s7053] ss:$8 sm:$0xf]
    %s7055 = scalar_lea.vmem [#allocation9], 68
    %v7056 = vld [vmem:[%s7055] ss:$8 sm:$0xf]
    %v7058 = vlaneseq
    %v7059 = vshrl.u32 %v7058, 7
    %v7060 = vsub.s32 0, %v7059
    %v7061 = vrot.slane %v7052, %v7060
    %v7062 = vlaneseq
    %v7063 = vshrl.u32 %v7062, 7
    %v7064 = vsub.s32 1, %v7063
    %v7065 = vrot.slane %v7052, %v7064
    %v7066 = vlaneseq
    %v7067 = vshrl.u32 %v7066, 7
    %v7068 = vsub.s32 2, %v7067
    %v7069 = vrot.slane %v7052, %v7068
    %v7070 = vlaneseq
    %v7071 = vshrl.u32 %v7070, 7
    %v7072 = vsub.s32 3, %v7071
    %v7073 = vrot.slane %v7052, %v7072
    %v7334 = vunpack.c.l.b16 %v6795
    %v7335 = vunpack.c.h.b16 %v6795
    %v7336 = vunpack.c.l.b16 %v6796
    %v7337 = vunpack.c.h.b16 %v6796
    %v7338 = vunpack.c.l.b16 %v6797
    %v7339 = vunpack.c.h.b16 %v6797
    %v7340 = vunpack.c.l.b16 %v6798
    %v7341 = vunpack.c.h.b16 %v6798
    %v7342 = vunpack.c.l.b16 %v6799
    %v7343 = vunpack.c.h.b16 %v6799
    %v7344 = vunpack.c.l.b16 %v6800
    %v7345 = vunpack.c.h.b16 %v6800
    %v7346 = vunpack.c.l.b16 %v6801
    %v7347 = vunpack.c.h.b16 %v6801
    %v7348 = vunpack.c.l.b16 %v6802
    %v7349 = vunpack.c.h.b16 %v6802
    %v7350 = vunpack.c.l.b16 %v6803
    %v7351 = vunpack.c.h.b16 %v6803
    %v7352 = vunpack.c.l.b16 %v6804
    %v7353 = vunpack.c.h.b16 %v6804
    %v7354 = vunpack.c.l.b16 %v6805
    %v7355 = vunpack.c.h.b16 %v6805
    %v7356 = vunpack.c.l.b16 %v6806
    %v7357 = vunpack.c.h.b16 %v6806
    %v7358 = vunpack.c.l.b16 %v6807
    %v7359 = vunpack.c.h.b16 %v6807
    %v7360 = vunpack.c.l.b16 %v6808
    %v7361 = vunpack.c.h.b16 %v6808
    %v7362 = vunpack.c.l.b16 %v6809
    %v7363 = vunpack.c.h.b16 %v6809
    %v7364 = vunpack.c.l.b16 %v6810
    %v7365 = vunpack.c.h.b16 %v6810
    %v7366 = vunpack.c.l.b16 %v6811
    %v7367 = vunpack.c.h.b16 %v6811
    %v7368 = vunpack.c.l.b16 %v6812
    %v7369 = vunpack.c.h.b16 %v6812
    %v7370 = vunpack.c.l.b16 %v6813
    %v7371 = vunpack.c.h.b16 %v6813
    %v7372 = vunpack.c.l.b16 %v6814
    %v7373 = vunpack.c.h.b16 %v6814
    %v7374 = vunpack.c.l.b16 %v6815
    %v7375 = vunpack.c.h.b16 %v6815
    %v7376 = vunpack.c.l.b16 %v6816
    %v7377 = vunpack.c.h.b16 %v6816
    %v7378 = vunpack.c.l.b16 %v6817
    %v7379 = vunpack.c.h.b16 %v6817
    %v7380 = vunpack.c.l.b16 %v6818
    %v7381 = vunpack.c.h.b16 %v6818
    %v7382 = vunpack.c.l.b16 %v6819
    %v7383 = vunpack.c.h.b16 %v6819
    %v7384 = vunpack.c.l.b16 %v6820
    %v7385 = vunpack.c.h.b16 %v6820
    %v7386 = vunpack.c.l.b16 %v6821
    %v7387 = vunpack.c.h.b16 %v6821
    %v7388 = vunpack.c.l.b16 %v6822
    %v7389 = vunpack.c.h.b16 %v6822
    %v7390 = vunpack.c.l.b16 %v6823
    %v7391 = vunpack.c.h.b16 %v6823
    %v7392 = vunpack.c.l.b16 %v6824
    %v7393 = vunpack.c.h.b16 %v6824
    %v7394 = vunpack.c.l.b16 %v6825
    %v7395 = vunpack.c.h.b16 %v6825
    %v7396 = vunpack.c.l.b16 %v6826
    %v7397 = vunpack.c.h.b16 %v6826
    %v7398 = vunpack.c.l.b16 %v6827
    %v7399 = vunpack.c.h.b16 %v6827
    %v7400 = vunpack.c.l.b16 %v6828
    %v7401 = vunpack.c.h.b16 %v6828
    %v7402 = vunpack.c.l.b16 %v6829
    %v7403 = vunpack.c.h.b16 %v6829
    %v7404 = vunpack.c.l.b16 %v6830
    %v7405 = vunpack.c.h.b16 %v6830
    %v7406 = vunpack.c.l.b16 %v6831
    %v7407 = vunpack.c.h.b16 %v6831
    %v7408 = vunpack.c.l.b16 %v6832
    %v7409 = vunpack.c.h.b16 %v6832
    %v7410 = vunpack.c.l.b16 %v6833
    %v7411 = vunpack.c.h.b16 %v6833
    %v7412 = vunpack.c.l.b16 %v6834
    %v7413 = vunpack.c.h.b16 %v6834
    %v7414 = vunpack.c.l.b16 %v6835
    %v7415 = vunpack.c.h.b16 %v6835
    %v7416 = vunpack.c.l.b16 %v6836
    %v7417 = vunpack.c.h.b16 %v6836
    %v7418 = vunpack.c.l.b16 %v6837
    %v7419 = vunpack.c.h.b16 %v6837
    %v7420 = vunpack.c.l.b16 %v6838
    %v7421 = vunpack.c.h.b16 %v6838
    %v7422 = vunpack.c.l.b16 %v6839
    %v7423 = vunpack.c.h.b16 %v6839
    %v7424 = vunpack.c.l.b16 %v6840
    %v7425 = vunpack.c.h.b16 %v6840
    %v7426 = vunpack.c.l.b16 %v6841
    %v7427 = vunpack.c.h.b16 %v6841
    %v7428 = vunpack.c.l.b16 %v6842
    %v7429 = vunpack.c.h.b16 %v6842
    %v7430 = vunpack.c.l.b16 %v6843
    %v7431 = vunpack.c.h.b16 %v6843
    %v7432 = vunpack.c.l.b16 %v6844
    %v7433 = vunpack.c.h.b16 %v6844
    %v7434 = vunpack.c.l.b16 %v6845
    %v7435 = vunpack.c.h.b16 %v6845
    %v7436 = vunpack.c.l.b16 %v6846
    %v7437 = vunpack.c.h.b16 %v6846
    %v7438 = vunpack.c.l.b16 %v6847
    %v7439 = vunpack.c.h.b16 %v6847
    %v7440 = vunpack.c.l.b16 %v6848
    %v7441 = vunpack.c.h.b16 %v6848
    %v7442 = vunpack.c.l.b16 %v6849
    %v7443 = vunpack.c.h.b16 %v6849
    %v7444 = vunpack.c.l.b16 %v6850
    %v7445 = vunpack.c.h.b16 %v6850
    %v7446 = vunpack.c.l.b16 %v6851
    %v7447 = vunpack.c.h.b16 %v6851
    %v7448 = vunpack.c.l.b16 %v6852
    %v7449 = vunpack.c.h.b16 %v6852
    %v7450 = vunpack.c.l.b16 %v6853
    %v7451 = vunpack.c.h.b16 %v6853
    %v7452 = vunpack.c.l.b16 %v6854
    %v7453 = vunpack.c.h.b16 %v6854
    %v7454 = vunpack.c.l.b16 %v6855
    %v7455 = vunpack.c.h.b16 %v6855
    %v7456 = vunpack.c.l.b16 %v6856
    %v7457 = vunpack.c.h.b16 %v6856
    %v7458 = vunpack.c.l.b16 %v6857
    %v7459 = vunpack.c.h.b16 %v6857
    %v7460 = vunpack.c.l.b16 %v6858
    %v7461 = vunpack.c.h.b16 %v6858
    %v7462 = vunpack.c.l.b16 %v6859
    %v7463 = vunpack.c.h.b16 %v6859
    %v7464 = vunpack.c.l.b16 %v6860
    %v7465 = vunpack.c.h.b16 %v6860
    %v7466 = vunpack.c.l.b16 %v6861
    %v7467 = vunpack.c.h.b16 %v6861
    %v7468 = vunpack.c.l.b16 %v6862
    %v7469 = vunpack.c.h.b16 %v6862
    %v7470 = vunpack.c.l.b16 %v6863
    %v7471 = vunpack.c.h.b16 %v6863
    %v7472 = vunpack.c.l.b16 %v6864
    %v7473 = vunpack.c.h.b16 %v6864
    %v7474 = vunpack.c.l.b16 %v6865
    %v7475 = vunpack.c.h.b16 %v6865
    %v7476 = vunpack.c.l.b16 %v6866
    %v7477 = vunpack.c.h.b16 %v6866
    %v7478 = vunpack.c.l.b16 %v6867
    %v7479 = vunpack.c.h.b16 %v6867
    %v7480 = vunpack.c.l.b16 %v6868
    %v7481 = vunpack.c.h.b16 %v6868
    %v7482 = vunpack.c.l.b16 %v6869
    %v7483 = vunpack.c.h.b16 %v6869
    %v7484 = vunpack.c.l.b16 %v6870
    %v7485 = vunpack.c.h.b16 %v6870
    %v7486 = vunpack.c.l.b16 %v6871
    %v7487 = vunpack.c.h.b16 %v6871
    %v7488 = vunpack.c.l.b16 %v6872
    %v7489 = vunpack.c.h.b16 %v6872
    %v7490 = vunpack.c.l.b16 %v6873
    %v7491 = vunpack.c.h.b16 %v6873
    %v7492 = vunpack.c.l.b16 %v6874
    %v7493 = vunpack.c.h.b16 %v6874
    %v7494 = vunpack.c.l.b16 %v6875
    %v7495 = vunpack.c.h.b16 %v6875
    %v7496 = vunpack.c.l.b16 %v6876
    %v7497 = vunpack.c.h.b16 %v6876
    %v7498 = vunpack.c.l.b16 %v6877
    %v7499 = vunpack.c.h.b16 %v6877
    %v7500 = vunpack.c.l.b16 %v6878
    %v7501 = vunpack.c.h.b16 %v6878
    %v7502 = vunpack.c.l.b16 %v6879
    %v7503 = vunpack.c.h.b16 %v6879
    %v7504 = vunpack.c.l.b16 %v6880
    %v7505 = vunpack.c.h.b16 %v6880
    %v7506 = vunpack.c.l.b16 %v6881
    %v7507 = vunpack.c.h.b16 %v6881
    %v7508 = vunpack.c.l.b16 %v6882
    %v7509 = vunpack.c.h.b16 %v6882
    %v7510 = vunpack.c.l.b16 %v6883
    %v7511 = vunpack.c.h.b16 %v6883
    %v7512 = vunpack.c.l.b16 %v6884
    %v7513 = vunpack.c.h.b16 %v6884
    %v7514 = vunpack.c.l.b16 %v6885
    %v7515 = vunpack.c.h.b16 %v6885
    %v7516 = vunpack.c.l.b16 %v6886
    %v7517 = vunpack.c.h.b16 %v6886
    %v7518 = vunpack.c.l.b16 %v6887
    %v7519 = vunpack.c.h.b16 %v6887
    %v7520 = vunpack.c.l.b16 %v6888
    %v7521 = vunpack.c.h.b16 %v6888
    %v7522 = vunpack.c.l.b16 %v6889
    %v7523 = vunpack.c.h.b16 %v6889
    %v7524 = vunpack.c.l.b16 %v6890
    %v7525 = vunpack.c.h.b16 %v6890
    %v7526 = vunpack.c.l.b16 %v6891
    %v7527 = vunpack.c.h.b16 %v6891
    %v7528 = vunpack.c.l.b16 %v6892
    %v7529 = vunpack.c.h.b16 %v6892
    %v7530 = vunpack.c.l.b16 %v6893
    %v7531 = vunpack.c.h.b16 %v6893
    %v7532 = vunpack.c.l.b16 %v6894
    %v7533 = vunpack.c.h.b16 %v6894
    %v7534 = vunpack.c.l.b16 %v6895
    %v7535 = vunpack.c.h.b16 %v6895
    %v7536 = vunpack.c.l.b16 %v6896
    %v7537 = vunpack.c.h.b16 %v6896
    %v7538 = vunpack.c.l.b16 %v6897
    %v7539 = vunpack.c.h.b16 %v6897
    %v7540 = vunpack.c.l.b16 %v6898
    %v7541 = vunpack.c.h.b16 %v6898
    %v7542 = vunpack.c.l.b16 %v6899
    %v7543 = vunpack.c.h.b16 %v6899
    %v7544 = vunpack.c.l.b16 %v6900
    %v7545 = vunpack.c.h.b16 %v6900
    %v7546 = vunpack.c.l.b16 %v6901
    %v7547 = vunpack.c.h.b16 %v6901
    %v7548 = vunpack.c.l.b16 %v6902
    %v7549 = vunpack.c.h.b16 %v6902
    %v7550 = vunpack.c.l.b16 %v6903
    %v7551 = vunpack.c.h.b16 %v6903
    %v7552 = vunpack.c.l.b16 %v6904
    %v7553 = vunpack.c.h.b16 %v6904
    %v7554 = vunpack.c.l.b16 %v6905
    %v7555 = vunpack.c.h.b16 %v6905
    %v7556 = vunpack.c.l.b16 %v6906
    %v7557 = vunpack.c.h.b16 %v6906
    %v7558 = vunpack.c.l.b16 %v6907
    %v7559 = vunpack.c.h.b16 %v6907
    %v7560 = vunpack.c.l.b16 %v6908
    %v7561 = vunpack.c.h.b16 %v6908
    %v7562 = vunpack.c.l.b16 %v6909
    %v7563 = vunpack.c.h.b16 %v6909
    %v7564 = vunpack.c.l.b16 %v6910
    %v7565 = vunpack.c.h.b16 %v6910
    %v7566 = vunpack.c.l.b16 %v6911
    %v7567 = vunpack.c.h.b16 %v6911
    %v7568 = vunpack.c.l.b16 %v6912
    %v7569 = vunpack.c.h.b16 %v6912
    %v7570 = vunpack.c.l.b16 %v6913
    %v7571 = vunpack.c.h.b16 %v6913
    %v7572 = vunpack.c.l.b16 %v6914
    %v7573 = vunpack.c.h.b16 %v6914
    %v7574 = vunpack.c.l.b16 %v6915
    %v7575 = vunpack.c.h.b16 %v6915
    %v7576 = vunpack.c.l.b16 %v6916
    %v7577 = vunpack.c.h.b16 %v6916
    %v7578 = vunpack.c.l.b16 %v6917
    %v7579 = vunpack.c.h.b16 %v6917
    %v7580 = vunpack.c.l.b16 %v6918
    %v7581 = vunpack.c.h.b16 %v6918
    %v7582 = vunpack.c.l.b16 %v6919
    %v7583 = vunpack.c.h.b16 %v6919
    %v7584 = vunpack.c.l.b16 %v6920
    %v7585 = vunpack.c.h.b16 %v6920
    %v7586 = vunpack.c.l.b16 %v6921
    %v7587 = vunpack.c.h.b16 %v6921
    %v7588 = vunpack.c.l.b16 %v6922
    %v7589 = vunpack.c.h.b16 %v6922
    %v7590 = vunpack.c.l.b16 %v6923
    %v7591 = vunpack.c.h.b16 %v6923
    %v7592 = vunpack.c.l.b16 %v6924
    %v7593 = vunpack.c.h.b16 %v6924
    %v7594 = vunpack.c.l.b16 %v6925
    %v7595 = vunpack.c.h.b16 %v6925
    %v7596 = vunpack.c.l.b16 %v6926
    %v7597 = vunpack.c.h.b16 %v6926
    %v7598 = vunpack.c.l.b16 %v6927
    %v7599 = vunpack.c.h.b16 %v6927
    %v7600 = vunpack.c.l.b16 %v6928
    %v7601 = vunpack.c.h.b16 %v6928
    %v7602 = vunpack.c.l.b16 %v6929
    %v7603 = vunpack.c.h.b16 %v6929
    %v7604 = vunpack.c.l.b16 %v6930
    %v7605 = vunpack.c.h.b16 %v6930
    %v7606 = vunpack.c.l.b16 %v6931
    %v7607 = vunpack.c.h.b16 %v6931
    %v7608 = vunpack.c.l.b16 %v6932
    %v7609 = vunpack.c.h.b16 %v6932
    %v7610 = vunpack.c.l.b16 %v6933
    %v7611 = vunpack.c.h.b16 %v6933
    %v7612 = vunpack.c.l.b16 %v6934
    %v7613 = vunpack.c.h.b16 %v6934
    %v7614 = vunpack.c.l.b16 %v6935
    %v7615 = vunpack.c.h.b16 %v6935
    %v7616 = vunpack.c.l.b16 %v6936
    %v7617 = vunpack.c.h.b16 %v6936
    %v7618 = vunpack.c.l.b16 %v6937
    %v7619 = vunpack.c.h.b16 %v6937
    %v7620 = vunpack.c.l.b16 %v6938
    %v7621 = vunpack.c.h.b16 %v6938
    %v7622 = vunpack.c.l.b16 %v6939
    %v7623 = vunpack.c.h.b16 %v6939
    %v7624 = vunpack.c.l.b16 %v6940
    %v7625 = vunpack.c.h.b16 %v6940
    %v7626 = vunpack.c.l.b16 %v6941
    %v7627 = vunpack.c.h.b16 %v6941
    %v7628 = vunpack.c.l.b16 %v6942
    %v7629 = vunpack.c.h.b16 %v6942
    %v7630 = vunpack.c.l.b16 %v6943
    %v7631 = vunpack.c.h.b16 %v6943
    %v7632 = vunpack.c.l.b16 %v6944
    %v7633 = vunpack.c.h.b16 %v6944
    %v7634 = vunpack.c.l.b16 %v6945
    %v7635 = vunpack.c.h.b16 %v6945
    %v7636 = vunpack.c.l.b16 %v6946
    %v7637 = vunpack.c.h.b16 %v6946
    %v7638 = vunpack.c.l.b16 %v6947
    %v7639 = vunpack.c.h.b16 %v6947
    %v7640 = vunpack.c.l.b16 %v6948
    %v7641 = vunpack.c.h.b16 %v6948
    %v7642 = vunpack.c.l.b16 %v6949
    %v7643 = vunpack.c.h.b16 %v6949
    %v7644 = vunpack.c.l.b16 %v6950
    %v7645 = vunpack.c.h.b16 %v6950
    %v7646 = vunpack.c.l.b16 %v6951
    %v7647 = vunpack.c.h.b16 %v6951
    %v7648 = vunpack.c.l.b16 %v6952
    %v7649 = vunpack.c.h.b16 %v6952
    %v7650 = vunpack.c.l.b16 %v6953
    %v7651 = vunpack.c.h.b16 %v6953
    %v7652 = vunpack.c.l.b16 %v6954
    %v7653 = vunpack.c.h.b16 %v6954
    %v7654 = vunpack.c.l.b16 %v6955
    %v7655 = vunpack.c.h.b16 %v6955
    %v7656 = vunpack.c.l.b16 %v6956
    %v7657 = vunpack.c.h.b16 %v6956
    %v7658 = vunpack.c.l.b16 %v6957
    %v7659 = vunpack.c.h.b16 %v6957
    %v7660 = vunpack.c.l.b16 %v6958
    %v7661 = vunpack.c.h.b16 %v6958
    %v7662 = vunpack.c.l.b16 %v6959
    %v7663 = vunpack.c.h.b16 %v6959
    %v7664 = vunpack.c.l.b16 %v6960
    %v7665 = vunpack.c.h.b16 %v6960
    %v7666 = vunpack.c.l.b16 %v6961
    %v7667 = vunpack.c.h.b16 %v6961
    %v7668 = vunpack.c.l.b16 %v6962
    %v7669 = vunpack.c.h.b16 %v6962
    %v7670 = vunpack.c.l.b16 %v6963
    %v7671 = vunpack.c.h.b16 %v6963
    %v7672 = vunpack.c.l.b16 %v6964
    %v7673 = vunpack.c.h.b16 %v6964
    %v7674 = vunpack.c.l.b16 %v6965
    %v7675 = vunpack.c.h.b16 %v6965
    %v7676 = vunpack.c.l.b16 %v6966
    %v7677 = vunpack.c.h.b16 %v6966
    %v7678 = vunpack.c.l.b16 %v6967
    %v7679 = vunpack.c.h.b16 %v6967
    %v7680 = vunpack.c.l.b16 %v6968
    %v7681 = vunpack.c.h.b16 %v6968
    %v7682 = vunpack.c.l.b16 %v6969
    %v7683 = vunpack.c.h.b16 %v6969
    %v7684 = vunpack.c.l.b16 %v6970
    %v7685 = vunpack.c.h.b16 %v6970
    %v7686 = vunpack.c.l.b16 %v6971
    %v7687 = vunpack.c.h.b16 %v6971
    %v7688 = vunpack.c.l.b16 %v6972
    %v7689 = vunpack.c.h.b16 %v6972
    %v7690 = vunpack.c.l.b16 %v6973
    %v7691 = vunpack.c.h.b16 %v6973
    %v7692 = vunpack.c.l.b16 %v6974
    %v7693 = vunpack.c.h.b16 %v6974
    %v7694 = vunpack.c.l.b16 %v6975
    %v7695 = vunpack.c.h.b16 %v6975
    %v7696 = vunpack.c.l.b16 %v6976
    %v7697 = vunpack.c.h.b16 %v6976
    %v7698 = vunpack.c.l.b16 %v6977
    %v7699 = vunpack.c.h.b16 %v6977
    %v7700 = vunpack.c.l.b16 %v6978
    %v7701 = vunpack.c.h.b16 %v6978
    %v7702 = vunpack.c.l.b16 %v6979
    %v7703 = vunpack.c.h.b16 %v6979
    %v7704 = vunpack.c.l.b16 %v6980
    %v7705 = vunpack.c.h.b16 %v6980
    %v7706 = vunpack.c.l.b16 %v6981
    %v7707 = vunpack.c.h.b16 %v6981
    %v7708 = vunpack.c.l.b16 %v6982
    %v7709 = vunpack.c.h.b16 %v6982
    %v7710 = vunpack.c.l.b16 %v6983
    %v7711 = vunpack.c.h.b16 %v6983
    %v7712 = vunpack.c.l.b16 %v6984
    %v7713 = vunpack.c.h.b16 %v6984
    %v7714 = vunpack.c.l.b16 %v6985
    %v7715 = vunpack.c.h.b16 %v6985
    %v7716 = vunpack.c.l.b16 %v6986
    %v7717 = vunpack.c.h.b16 %v6986
    %v7718 = vunpack.c.l.b16 %v6987
    %v7719 = vunpack.c.h.b16 %v6987
    %v7720 = vunpack.c.l.b16 %v6988
    %v7721 = vunpack.c.h.b16 %v6988
    %v7722 = vunpack.c.l.b16 %v6989
    %v7723 = vunpack.c.h.b16 %v6989
    %v7724 = vunpack.c.l.b16 %v6990
    %v7725 = vunpack.c.h.b16 %v6990
    %v7726 = vunpack.c.l.b16 %v6991
    %v7727 = vunpack.c.h.b16 %v6991
    %v7728 = vunpack.c.l.b16 %v6992
    %v7729 = vunpack.c.h.b16 %v6992
    %v7730 = vunpack.c.l.b16 %v6993
    %v7731 = vunpack.c.h.b16 %v6993
    %v7732 = vunpack.c.l.b16 %v6994
    %v7733 = vunpack.c.h.b16 %v6994
    %v7734 = vunpack.c.l.b16 %v6995
    %v7735 = vunpack.c.h.b16 %v6995
    %v7736 = vunpack.c.l.b16 %v6996
    %v7737 = vunpack.c.h.b16 %v6996
    %v7738 = vunpack.c.l.b16 %v6997
    %v7739 = vunpack.c.h.b16 %v6997
    %v7740 = vunpack.c.l.b16 %v6998
    %v7741 = vunpack.c.h.b16 %v6998
    %v7742 = vunpack.c.l.b16 %v6999
    %v7743 = vunpack.c.h.b16 %v6999
    %v7744 = vunpack.c.l.b16 %v7000
    %v7745 = vunpack.c.h.b16 %v7000
    %v7746 = vunpack.c.l.b16 %v7001
    %v7747 = vunpack.c.h.b16 %v7001
    %v7748 = vunpack.c.l.b16 %v7002
    %v7749 = vunpack.c.h.b16 %v7002
    %v7750 = vunpack.c.l.b16 %v7003
    %v7751 = vunpack.c.h.b16 %v7003
    %v7752 = vunpack.c.l.b16 %v7004
    %v7753 = vunpack.c.h.b16 %v7004
    %v7754 = vunpack.c.l.b16 %v7005
    %v7755 = vunpack.c.h.b16 %v7005
    %v7756 = vunpack.c.l.b16 %v7006
    %v7757 = vunpack.c.h.b16 %v7006
    %v7758 = vunpack.c.l.b16 %v7007
    %v7759 = vunpack.c.h.b16 %v7007
    %v7760 = vunpack.c.l.b16 %v7008
    %v7761 = vunpack.c.h.b16 %v7008
    %v7762 = vunpack.c.l.b16 %v7009
    %v7763 = vunpack.c.h.b16 %v7009
    %v7764 = vunpack.c.l.b16 %v7010
    %v7765 = vunpack.c.h.b16 %v7010
    %v7766 = vunpack.c.l.b16 %v7011
    %v7767 = vunpack.c.h.b16 %v7011
    %v7768 = vunpack.c.l.b16 %v7012
    %v7769 = vunpack.c.h.b16 %v7012
    %v7770 = vunpack.c.l.b16 %v7013
    %v7771 = vunpack.c.h.b16 %v7013
    %v7772 = vunpack.c.l.b16 %v7014
    %v7773 = vunpack.c.h.b16 %v7014
    %v7774 = vunpack.c.l.b16 %v7015
    %v7775 = vunpack.c.h.b16 %v7015
    %v7776 = vunpack.c.l.b16 %v7016
    %v7777 = vunpack.c.h.b16 %v7016
    %v7778 = vunpack.c.l.b16 %v7017
    %v7779 = vunpack.c.h.b16 %v7017
    %v7780 = vunpack.c.l.b16 %v7018
    %v7781 = vunpack.c.h.b16 %v7018
    %v7782 = vunpack.c.l.b16 %v7019
    %v7783 = vunpack.c.h.b16 %v7019
    %v7784 = vunpack.c.l.b16 %v7020
    %v7785 = vunpack.c.h.b16 %v7020
    %v7786 = vunpack.c.l.b16 %v7021
    %v7787 = vunpack.c.h.b16 %v7021
    %v7788 = vunpack.c.l.b16 %v7022
    %v7789 = vunpack.c.h.b16 %v7022
    %v7790 = vunpack.c.l.b16 %v7023
    %v7791 = vunpack.c.h.b16 %v7023
    %v7792 = vunpack.c.l.b16 %v7024
    %v7793 = vunpack.c.h.b16 %v7024
    %v7794 = vunpack.c.l.b16 %v7025
    %v7795 = vunpack.c.h.b16 %v7025
    %v7796 = vunpack.c.l.b16 %v7026
    %v7797 = vunpack.c.h.b16 %v7026
    %v7798 = vunpack.c.l.b16 %v7027
    %v7799 = vunpack.c.h.b16 %v7027
    %v7800 = vunpack.c.l.b16 %v7028
    %v7801 = vunpack.c.h.b16 %v7028
    %v7802 = vunpack.c.l.b16 %v7029
    %v7803 = vunpack.c.h.b16 %v7029
    %v7804 = vunpack.c.l.b16 %v7030
    %v7805 = vunpack.c.h.b16 %v7030
    %v7806 = vunpack.c.l.b16 %v7031
    %v7807 = vunpack.c.h.b16 %v7031
    %v7808 = vunpack.c.l.b16 %v7032
    %v7809 = vunpack.c.h.b16 %v7032
    %v7810 = vunpack.c.l.b16 %v7033
    %v7811 = vunpack.c.h.b16 %v7033
    %v7812 = vunpack.c.l.b16 %v7034
    %v7813 = vunpack.c.h.b16 %v7034
    %v7814 = vunpack.c.l.b16 %v7035
    %v7815 = vunpack.c.h.b16 %v7035
    %v7816 = vunpack.c.l.b16 %v7036
    %v7817 = vunpack.c.h.b16 %v7036
    %v7818 = vunpack.c.l.b16 %v7037
    %v7819 = vunpack.c.h.b16 %v7037
    %v7820 = vunpack.c.l.b16 %v7038
    %v7821 = vunpack.c.h.b16 %v7038
    %v7822 = vunpack.c.l.b16 %v7039
    %v7823 = vunpack.c.h.b16 %v7039
    %v7824 = vunpack.c.l.b16 %v7040
    %v7825 = vunpack.c.h.b16 %v7040
    %v7826 = vunpack.c.l.b16 %v7041
    %v7827 = vunpack.c.h.b16 %v7041
    %v7828 = vunpack.c.l.b16 %v7042
    %v7829 = vunpack.c.h.b16 %v7042
    %v7830 = vunpack.c.l.b16 %v7043
    %v7831 = vunpack.c.h.b16 %v7043
    %v7832 = vunpack.c.l.b16 %v7044
    %v7833 = vunpack.c.h.b16 %v7044
    %v7834 = vunpack.c.l.b16 %v7045
    %v7835 = vunpack.c.h.b16 %v7045
    %v7836 = vunpack.c.l.b16 %v7046
    %v7837 = vunpack.c.h.b16 %v7046
    %v7838 = vunpack.c.l.b16 %v7047
    %v7839 = vunpack.c.h.b16 %v7047
    %v7840 = vunpack.c.l.b16 %v7048
    %v7841 = vunpack.c.h.b16 %v7048
    %v7842 = vunpack.c.l.b16 %v7049
    %v7843 = vunpack.c.h.b16 %v7049
    %v7844 = vunpack.c.l.b16 %v7050
    %v7845 = vunpack.c.h.b16 %v7050
    %v7846 = vpack.c.b16 %v7338, %v7334
    %v7847 = vpack.c.b16 %v7339, %v7335
    %v7848 = vpack.c.b16 %v7340, %v7336
    %v7849 = vpack.c.b16 %v7341, %v7337
    %v7850 = vpack.c.b16 %v7346, %v7342
    %v7851 = vpack.c.b16 %v7347, %v7343
    %v7852 = vpack.c.b16 %v7348, %v7344
    %v7853 = vpack.c.b16 %v7349, %v7345
    %v7854 = vpack.c.b16 %v7354, %v7350
    %v7855 = vpack.c.b16 %v7355, %v7351
    %v7856 = vpack.c.b16 %v7356, %v7352
    %v7857 = vpack.c.b16 %v7357, %v7353
    %v7858 = vpack.c.b16 %v7362, %v7358
    %v7859 = vpack.c.b16 %v7363, %v7359
    %v7860 = vpack.c.b16 %v7364, %v7360
    %v7861 = vpack.c.b16 %v7365, %v7361
    %v7862 = vpack.c.b16 %v7370, %v7366
    %v7863 = vpack.c.b16 %v7371, %v7367
    %v7864 = vpack.c.b16 %v7372, %v7368
    %v7865 = vpack.c.b16 %v7373, %v7369
    %v7866 = vpack.c.b16 %v7378, %v7374
    %v7867 = vpack.c.b16 %v7379, %v7375
    %v7868 = vpack.c.b16 %v7380, %v7376
    %v7869 = vpack.c.b16 %v7381, %v7377
    %v7870 = vpack.c.b16 %v7386, %v7382
    %v7871 = vpack.c.b16 %v7387, %v7383
    %v7872 = vpack.c.b16 %v7388, %v7384
    %v7873 = vpack.c.b16 %v7389, %v7385
    %v7874 = vpack.c.b16 %v7394, %v7390
    %v7875 = vpack.c.b16 %v7395, %v7391
    %v7876 = vpack.c.b16 %v7396, %v7392
    %v7877 = vpack.c.b16 %v7397, %v7393
    %v7878 = vpack.c.b16 %v7402, %v7398
    %v7879 = vpack.c.b16 %v7403, %v7399
    %v7880 = vpack.c.b16 %v7404, %v7400
    %v7881 = vpack.c.b16 %v7405, %v7401
    %v7882 = vpack.c.b16 %v7410, %v7406
    %v7883 = vpack.c.b16 %v7411, %v7407
    %v7884 = vpack.c.b16 %v7412, %v7408
    %v7885 = vpack.c.b16 %v7413, %v7409
    %v7886 = vpack.c.b16 %v7418, %v7414
    %v7887 = vpack.c.b16 %v7419, %v7415
    %v7888 = vpack.c.b16 %v7420, %v7416
    %v7889 = vpack.c.b16 %v7421, %v7417
    %v7890 = vpack.c.b16 %v7426, %v7422
    %v7891 = vpack.c.b16 %v7427, %v7423
    %v7892 = vpack.c.b16 %v7428, %v7424
    %v7893 = vpack.c.b16 %v7429, %v7425
    %v7894 = vpack.c.b16 %v7434, %v7430
    %v7895 = vpack.c.b16 %v7435, %v7431
    %v7896 = vpack.c.b16 %v7436, %v7432
    %v7897 = vpack.c.b16 %v7437, %v7433
    %v7898 = vpack.c.b16 %v7442, %v7438
    %v7899 = vpack.c.b16 %v7443, %v7439
    %v7900 = vpack.c.b16 %v7444, %v7440
    %v7901 = vpack.c.b16 %v7445, %v7441
    %v7902 = vpack.c.b16 %v7450, %v7446
    %v7903 = vpack.c.b16 %v7451, %v7447
    %v7904 = vpack.c.b16 %v7452, %v7448
    %v7905 = vpack.c.b16 %v7453, %v7449
    %v7906 = vpack.c.b16 %v7458, %v7454
    %v7907 = vpack.c.b16 %v7459, %v7455
    %v7908 = vpack.c.b16 %v7460, %v7456
    %v7909 = vpack.c.b16 %v7461, %v7457
    %v7910 = vpack.c.b16 %v7466, %v7462
    %v7911 = vpack.c.b16 %v7467, %v7463
    %v7912 = vpack.c.b16 %v7468, %v7464
    %v7913 = vpack.c.b16 %v7469, %v7465
    %v7914 = vpack.c.b16 %v7474, %v7470
    %v7915 = vpack.c.b16 %v7475, %v7471
    %v7916 = vpack.c.b16 %v7476, %v7472
    %v7917 = vpack.c.b16 %v7477, %v7473
    %v7918 = vpack.c.b16 %v7482, %v7478
    %v7919 = vpack.c.b16 %v7483, %v7479
    %v7920 = vpack.c.b16 %v7484, %v7480
    %v7921 = vpack.c.b16 %v7485, %v7481
    %v7922 = vpack.c.b16 %v7490, %v7486
    %v7923 = vpack.c.b16 %v7491, %v7487
    %v7924 = vpack.c.b16 %v7492, %v7488
    %v7925 = vpack.c.b16 %v7493, %v7489
    %v7926 = vpack.c.b16 %v7498, %v7494
    %v7927 = vpack.c.b16 %v7499, %v7495
    %v7928 = vpack.c.b16 %v7500, %v7496
    %v7929 = vpack.c.b16 %v7501, %v7497
    %v7930 = vpack.c.b16 %v7506, %v7502
    %v7931 = vpack.c.b16 %v7507, %v7503
    %v7932 = vpack.c.b16 %v7508, %v7504
    %v7933 = vpack.c.b16 %v7509, %v7505
    %v7934 = vpack.c.b16 %v7514, %v7510
    %v7935 = vpack.c.b16 %v7515, %v7511
    %v7936 = vpack.c.b16 %v7516, %v7512
    %v7937 = vpack.c.b16 %v7517, %v7513
    %v7938 = vpack.c.b16 %v7522, %v7518
    %v7939 = vpack.c.b16 %v7523, %v7519
    %v7940 = vpack.c.b16 %v7524, %v7520
    %v7941 = vpack.c.b16 %v7525, %v7521
    %v7942 = vpack.c.b16 %v7530, %v7526
    %v7943 = vpack.c.b16 %v7531, %v7527
    %v7944 = vpack.c.b16 %v7532, %v7528
    %v7945 = vpack.c.b16 %v7533, %v7529
    %v7946 = vpack.c.b16 %v7538, %v7534
    %v7947 = vpack.c.b16 %v7539, %v7535
    %v7948 = vpack.c.b16 %v7540, %v7536
    %v7949 = vpack.c.b16 %v7541, %v7537
    %v7950 = vpack.c.b16 %v7546, %v7542
    %v7951 = vpack.c.b16 %v7547, %v7543
    %v7952 = vpack.c.b16 %v7548, %v7544
    %v7953 = vpack.c.b16 %v7549, %v7545
    %v7954 = vpack.c.b16 %v7554, %v7550
    %v7955 = vpack.c.b16 %v7555, %v7551
    %v7956 = vpack.c.b16 %v7556, %v7552
    %v7957 = vpack.c.b16 %v7557, %v7553
    %v7958 = vpack.c.b16 %v7562, %v7558
    %v7959 = vpack.c.b16 %v7563, %v7559
    %v7960 = vpack.c.b16 %v7564, %v7560
    %v7961 = vpack.c.b16 %v7565, %v7561
    %v7962 = vpack.c.b16 %v7570, %v7566
    %v7963 = vpack.c.b16 %v7571, %v7567
    %v7964 = vpack.c.b16 %v7572, %v7568
    %v7965 = vpack.c.b16 %v7573, %v7569
    %v7966 = vpack.c.b16 %v7578, %v7574
    %v7967 = vpack.c.b16 %v7579, %v7575
    %v7968 = vpack.c.b16 %v7580, %v7576
    %v7969 = vpack.c.b16 %v7581, %v7577
    %v7970 = vpack.c.b16 %v7586, %v7582
    %v7971 = vpack.c.b16 %v7587, %v7583
    %v7972 = vpack.c.b16 %v7588, %v7584
    %v7973 = vpack.c.b16 %v7589, %v7585
    %v7974 = vpack.c.b16 %v7594, %v7590
    %v7975 = vpack.c.b16 %v7595, %v7591
    %v7976 = vpack.c.b16 %v7596, %v7592
    %v7977 = vpack.c.b16 %v7597, %v7593
    %v7978 = vpack.c.b16 %v7602, %v7598
    %v7979 = vpack.c.b16 %v7603, %v7599
    %v7980 = vpack.c.b16 %v7604, %v7600
    %v7981 = vpack.c.b16 %v7605, %v7601
    %v7982 = vpack.c.b16 %v7610, %v7606
    %v7983 = vpack.c.b16 %v7611, %v7607
    %v7984 = vpack.c.b16 %v7612, %v7608
    %v7985 = vpack.c.b16 %v7613, %v7609
    %v7986 = vpack.c.b16 %v7618, %v7614
    %v7987 = vpack.c.b16 %v7619, %v7615
    %v7988 = vpack.c.b16 %v7620, %v7616
    %v7989 = vpack.c.b16 %v7621, %v7617
    %v7990 = vpack.c.b16 %v7626, %v7622
    %v7991 = vpack.c.b16 %v7627, %v7623
    %v7992 = vpack.c.b16 %v7628, %v7624
    %v7993 = vpack.c.b16 %v7629, %v7625
    %v7994 = vpack.c.b16 %v7634, %v7630
    %v7995 = vpack.c.b16 %v7635, %v7631
    %v7996 = vpack.c.b16 %v7636, %v7632
    %v7997 = vpack.c.b16 %v7637, %v7633
    %v7998 = vpack.c.b16 %v7642, %v7638
    %v7999 = vpack.c.b16 %v7643, %v7639
    %v8000 = vpack.c.b16 %v7644, %v7640
    %v8001 = vpack.c.b16 %v7645, %v7641
    %v8002 = vpack.c.b16 %v7650, %v7646
    %v8003 = vpack.c.b16 %v7651, %v7647
    %v8004 = vpack.c.b16 %v7652, %v7648
    %v8005 = vpack.c.b16 %v7653, %v7649
    %v8006 = vpack.c.b16 %v7658, %v7654
    %v8007 = vpack.c.b16 %v7659, %v7655
    %v8008 = vpack.c.b16 %v7660, %v7656
    %v8009 = vpack.c.b16 %v7661, %v7657
    %v8010 = vpack.c.b16 %v7666, %v7662
    %v8011 = vpack.c.b16 %v7667, %v7663
    %v8012 = vpack.c.b16 %v7668, %v7664
    %v8013 = vpack.c.b16 %v7669, %v7665
    %v8014 = vpack.c.b16 %v7674, %v7670
    %v8015 = vpack.c.b16 %v7675, %v7671
    %v8016 = vpack.c.b16 %v7676, %v7672
    %v8017 = vpack.c.b16 %v7677, %v7673
    %v8018 = vpack.c.b16 %v7682, %v7678
    %v8019 = vpack.c.b16 %v7683, %v7679
    %v8020 = vpack.c.b16 %v7684, %v7680
    %v8021 = vpack.c.b16 %v7685, %v7681
    %v8022 = vpack.c.b16 %v7690, %v7686
    %v8023 = vpack.c.b16 %v7691, %v7687
    %v8024 = vpack.c.b16 %v7692, %v7688
    %v8025 = vpack.c.b16 %v7693, %v7689
    %v8026 = vpack.c.b16 %v7698, %v7694
    %v8027 = vpack.c.b16 %v7699, %v7695
    %v8028 = vpack.c.b16 %v7700, %v7696
    %v8029 = vpack.c.b16 %v7701, %v7697
    %v8030 = vpack.c.b16 %v7706, %v7702
    %v8031 = vpack.c.b16 %v7707, %v7703
    %v8032 = vpack.c.b16 %v7708, %v7704
    %v8033 = vpack.c.b16 %v7709, %v7705
    %v8034 = vpack.c.b16 %v7714, %v7710
    %v8035 = vpack.c.b16 %v7715, %v7711
    %v8036 = vpack.c.b16 %v7716, %v7712
    %v8037 = vpack.c.b16 %v7717, %v7713
    %v8038 = vpack.c.b16 %v7722, %v7718
    %v8039 = vpack.c.b16 %v7723, %v7719
    %v8040 = vpack.c.b16 %v7724, %v7720
    %v8041 = vpack.c.b16 %v7725, %v7721
    %v8042 = vpack.c.b16 %v7730, %v7726
    %v8043 = vpack.c.b16 %v7731, %v7727
    %v8044 = vpack.c.b16 %v7732, %v7728
    %v8045 = vpack.c.b16 %v7733, %v7729
    %v8046 = vpack.c.b16 %v7738, %v7734
    %v8047 = vpack.c.b16 %v7739, %v7735
    %v8048 = vpack.c.b16 %v7740, %v7736
    %v8049 = vpack.c.b16 %v7741, %v7737
    %v8050 = vpack.c.b16 %v7746, %v7742
    %v8051 = vpack.c.b16 %v7747, %v7743
    %v8052 = vpack.c.b16 %v7748, %v7744
    %v8053 = vpack.c.b16 %v7749, %v7745
    %v8054 = vpack.c.b16 %v7754, %v7750
    %v8055 = vpack.c.b16 %v7755, %v7751
    %v8056 = vpack.c.b16 %v7756, %v7752
    %v8057 = vpack.c.b16 %v7757, %v7753
    %v8058 = vpack.c.b16 %v7762, %v7758
    %v8059 = vpack.c.b16 %v7763, %v7759
    %v8060 = vpack.c.b16 %v7764, %v7760
    %v8061 = vpack.c.b16 %v7765, %v7761
    %v8062 = vpack.c.b16 %v7770, %v7766
    %v8063 = vpack.c.b16 %v7771, %v7767
    %v8064 = vpack.c.b16 %v7772, %v7768
    %v8065 = vpack.c.b16 %v7773, %v7769
    %v8066 = vpack.c.b16 %v7778, %v7774
    %v8067 = vpack.c.b16 %v7779, %v7775
    %v8068 = vpack.c.b16 %v7780, %v7776
    %v8069 = vpack.c.b16 %v7781, %v7777
    %v8070 = vpack.c.b16 %v7786, %v7782
    %v8071 = vpack.c.b16 %v7787, %v7783
    %v8072 = vpack.c.b16 %v7788, %v7784
    %v8073 = vpack.c.b16 %v7789, %v7785
    %v8074 = vpack.c.b16 %v7794, %v7790
    %v8075 = vpack.c.b16 %v7795, %v7791
    %v8076 = vpack.c.b16 %v7796, %v7792
    %v8077 = vpack.c.b16 %v7797, %v7793
    %v8078 = vpack.c.b16 %v7802, %v7798
    %v8079 = vpack.c.b16 %v7803, %v7799
    %v8080 = vpack.c.b16 %v7804, %v7800
    %v8081 = vpack.c.b16 %v7805, %v7801
    %v8082 = vpack.c.b16 %v7810, %v7806
    %v8083 = vpack.c.b16 %v7811, %v7807
    %v8084 = vpack.c.b16 %v7812, %v7808
    %v8085 = vpack.c.b16 %v7813, %v7809
    %v8086 = vpack.c.b16 %v7818, %v7814
    %v8087 = vpack.c.b16 %v7819, %v7815
    %v8088 = vpack.c.b16 %v7820, %v7816
    %v8089 = vpack.c.b16 %v7821, %v7817
    %v8090 = vpack.c.b16 %v7826, %v7822
    %v8091 = vpack.c.b16 %v7827, %v7823
    %v8092 = vpack.c.b16 %v7828, %v7824
    %v8093 = vpack.c.b16 %v7829, %v7825
    %v8094 = vpack.c.b16 %v7834, %v7830
    %v8095 = vpack.c.b16 %v7835, %v7831
    %v8096 = vpack.c.b16 %v7836, %v7832
    %v8097 = vpack.c.b16 %v7837, %v7833
    %v8098 = vpack.c.b16 %v7842, %v7838
    %v8099 = vpack.c.b16 %v7843, %v7839
    %v8100 = vpack.c.b16 %v7844, %v7840
    %v8101 = vpack.c.b16 %v7845, %v7841
    %8358 = vmatprep.subr.bf16.mxu0 %v7875
    %8359 = vmatpush1.bf16.msra.mxu0 %v7874
    %8360 = vmatprep.subr.bf16.mxu0 %v7871
    %8361 = vmatpush1.bf16.msra.mxu0 %v7870
    %8362 = vmatprep.subr.bf16.mxu0 %v7867
    %8363 = vmatpush1.bf16.msra.mxu0 %v7866
    %8364 = vmatprep.subr.bf16.mxu0 %v7863
    %8365 = vmatpush1.bf16.msra.mxu0 %v7862
    %8366 = vmatprep.subr.bf16.mxu0 %v7859
    %8367 = vmatpush1.bf16.msra.mxu0 %v7858
    %8368 = vmatprep.subr.bf16.mxu0 %v7855
    %8369 = vmatpush1.bf16.msra.mxu0 %v7854
    %8370 = vmatprep.subr.bf16.mxu0 %v7851
    %8371 = vmatpush1.bf16.msra.mxu0 %v7850
    %8372 = vmatprep.subr.bf16.mxu0 %v7847
    %8373 = vmatpush1.bf16.msra.mxu0 %v7846
    %8374 = vmatprep.subr.bf16.mxu0 %v7907
    %8375 = vmatpush2.bf16.msra.mxu0 %v7906
    %8376 = vmatprep.subr.bf16.mxu0 %v7903
    %8377 = vmatpush2.bf16.msra.mxu0 %v7902
    %8378 = vmatprep.subr.bf16.mxu0 %v7899
    %8379 = vmatpush2.bf16.msra.mxu0 %v7898
    %8380 = vmatprep.subr.bf16.mxu0 %v7895
    %8381 = vmatpush2.bf16.msra.mxu0 %v7894
    %8382 = vmatprep.subr.bf16.mxu0 %v7891
    %8383 = vmatpush2.bf16.msra.mxu0 %v7890
    %8384 = vmatprep.subr.bf16.mxu0 %v7887
    %8385 = vmatpush2.bf16.msra.mxu0 %v7886
    %8386 = vmatprep.subr.bf16.mxu0 %v7883
    %8387 = vmatpush2.bf16.msra.mxu0 %v7882
    %8388 = vmatprep.subr.bf16.mxu0 %v7879
    %8389 = vmatpush2.bf16.msra.mxu0 %v7878
    %8390 = vmatprep.mubr.bf16.mxu0 %v6788
    %8391 = vmatmul.mubr.bf16.gmra.mxu0 %v6787
    %v8392 = vpop.f32.mrf.mxu0
    %v8393 = vadd.f32 %v7061, %v8392
    %v8394 = vpop.f32.mrf.mxu0
    %v8395 = vadd.f32 %v7065, %v8394
    %v8396 = vpop.f32.mrf.mxu0
    %v8397 = vpop.f32.mrf.mxu0
    %8398 = vdwg.mxu0
    %8399 = vmatprep.subr.bf16.mxu0 %v7939
    %8400 = vmatpush1.bf16.msra.mxu0 %v7938
    %8401 = vmatprep.subr.bf16.mxu0 %v7935
    %8402 = vmatpush1.bf16.msra.mxu0 %v7934
    %8403 = vmatprep.subr.bf16.mxu0 %v7931
    %8404 = vmatpush1.bf16.msra.mxu0 %v7930
    %8405 = vmatprep.subr.bf16.mxu0 %v7927
    %8406 = vmatpush1.bf16.msra.mxu0 %v7926
    %8407 = vmatprep.subr.bf16.mxu0 %v7923
    %8408 = vmatpush1.bf16.msra.mxu0 %v7922
    %8409 = vmatprep.subr.bf16.mxu0 %v7919
    %8410 = vmatpush1.bf16.msra.mxu0 %v7918
    %8411 = vmatprep.subr.bf16.mxu0 %v7915
    %8412 = vmatpush1.bf16.msra.mxu0 %v7914
    %8413 = vmatprep.subr.bf16.mxu0 %v7911
    %8414 = vmatpush1.bf16.msra.mxu0 %v7910
    %8415 = vmatprep.subr.bf16.mxu0 %v7971
    %8416 = vmatpush2.bf16.msra.mxu0 %v7970
    %8417 = vmatprep.subr.bf16.mxu0 %v7967
    %8418 = vmatpush2.bf16.msra.mxu0 %v7966
    %8419 = vmatprep.subr.bf16.mxu0 %v7963
    %8420 = vmatpush2.bf16.msra.mxu0 %v7962
    %8421 = vmatprep.subr.bf16.mxu0 %v7959
    %8422 = vmatpush2.bf16.msra.mxu0 %v7958
    %8423 = vmatprep.subr.bf16.mxu0 %v7955
    %8424 = vmatpush2.bf16.msra.mxu0 %v7954
    %8425 = vmatprep.subr.bf16.mxu0 %v7951
    %8426 = vmatpush2.bf16.msra.mxu0 %v7950
    %8427 = vmatprep.subr.bf16.mxu0 %v7947
    %8428 = vmatpush2.bf16.msra.mxu0 %v7946
    %8429 = vmatprep.subr.bf16.mxu0 %v7943
    %8430 = vmatpush2.bf16.msra.mxu0 %v7942
    %8431 = vmatprep.mubr.bf16.mxu0 %v6790
    %8432 = vmatmul.mubr.bf16.gmra.mxu0 %v6789
    %v8433 = vpop.f32.mrf.mxu0
    %v8434 = vadd.f32 %v8393, %v8433
    %v8435 = vpop.f32.mrf.mxu0
    %v8436 = vadd.f32 %v8395, %v8435
    %v8437 = vpop.f32.mrf.mxu0
    %v8438 = vpop.f32.mrf.mxu0
    %8439 = vdwg.mxu0
    %8440 = vmatprep.subr.bf16.mxu0 %v8003
    %8441 = vmatpush1.bf16.msra.mxu0 %v8002
    %8442 = vmatprep.subr.bf16.mxu0 %v7999
    %8443 = vmatpush1.bf16.msra.mxu0 %v7998
    %8444 = vmatprep.subr.bf16.mxu0 %v7995
    %8445 = vmatpush1.bf16.msra.mxu0 %v7994
    %8446 = vmatprep.subr.bf16.mxu0 %v7991
    %8447 = vmatpush1.bf16.msra.mxu0 %v7990
    %8448 = vmatprep.subr.bf16.mxu0 %v7987
    %8449 = vmatpush1.bf16.msra.mxu0 %v7986
    %8450 = vmatprep.subr.bf16.mxu0 %v7983
    %8451 = vmatpush1.bf16.msra.mxu0 %v7982
    %8452 = vmatprep.subr.bf16.mxu0 %v7979
    %8453 = vmatpush1.bf16.msra.mxu0 %v7978
    %8454 = vmatprep.subr.bf16.mxu0 %v7975
    %8455 = vmatpush1.bf16.msra.mxu0 %v7974
    %8456 = vmatprep.subr.bf16.mxu0 %v8035
    %8457 = vmatpush2.bf16.msra.mxu0 %v8034
    %8458 = vmatprep.subr.bf16.mxu0 %v8031
    %8459 = vmatpush2.bf16.msra.mxu0 %v8030
    %8460 = vmatprep.subr.bf16.mxu0 %v8027
    %8461 = vmatpush2.bf16.msra.mxu0 %v8026
    %8462 = vmatprep.subr.bf16.mxu0 %v8023
    %8463 = vmatpush2.bf16.msra.mxu0 %v8022
    %8464 = vmatprep.subr.bf16.mxu0 %v8019
    %8465 = vmatpush2.bf16.msra.mxu0 %v8018
    %8466 = vmatprep.subr.bf16.mxu0 %v8015
    %8467 = vmatpush2.bf16.msra.mxu0 %v8014
    %8468 = vmatprep.subr.bf16.mxu0 %v8011
    %8469 = vmatpush2.bf16.msra.mxu0 %v8010
    %8470 = vmatprep.subr.bf16.mxu0 %v8007
    %8471 = vmatpush2.bf16.msra.mxu0 %v8006
    %8472 = vmatprep.mubr.bf16.mxu0 %v6792
    %8473 = vmatmul.mubr.bf16.gmra.mxu0 %v6791
    %v8474 = vpop.f32.mrf.mxu0
    %v8475 = vadd.f32 %v8434, %v8474
    %v8476 = vpop.f32.mrf.mxu0
    %v8477 = vadd.f32 %v8436, %v8476
    %v8478 = vpop.f32.mrf.mxu0
    %v8479 = vpop.f32.mrf.mxu0
    %8480 = vdwg.mxu0
    %8481 = vmatprep.subr.bf16.mxu0 %v8067
    %8482 = vmatpush1.bf16.msra.mxu0 %v8066
    %8483 = vmatprep.subr.bf16.mxu0 %v8063
    %8484 = vmatpush1.bf16.msra.mxu0 %v8062
    %8485 = vmatprep.subr.bf16.mxu0 %v8059
    %8486 = vmatpush1.bf16.msra.mxu0 %v8058
    %8487 = vmatprep.subr.bf16.mxu0 %v8055
    %8488 = vmatpush1.bf16.msra.mxu0 %v8054
    %8489 = vmatprep.subr.bf16.mxu0 %v8051
    %8490 = vmatpush1.bf16.msra.mxu0 %v8050
    %8491 = vmatprep.subr.bf16.mxu0 %v8047
    %8492 = vmatpush1.bf16.msra.mxu0 %v8046
    %8493 = vmatprep.subr.bf16.mxu0 %v8043
    %8494 = vmatpush1.bf16.msra.mxu0 %v8042
    %8495 = vmatprep.subr.bf16.mxu0 %v8039
    %8496 = vmatpush1.bf16.msra.mxu0 %v8038
    %8497 = vmatprep.subr.bf16.mxu0 %v8099
    %8498 = vmatpush2.bf16.msra.mxu0 %v8098
    %8499 = vmatprep.subr.bf16.mxu0 %v8095
    %8500 = vmatpush2.bf16.msra.mxu0 %v8094
    %8501 = vmatprep.subr.bf16.mxu0 %v8091
    %8502 = vmatpush2.bf16.msra.mxu0 %v8090
    %8503 = vmatprep.subr.bf16.mxu0 %v8087
    %8504 = vmatpush2.bf16.msra.mxu0 %v8086
    %8505 = vmatprep.subr.bf16.mxu0 %v8083
    %8506 = vmatpush2.bf16.msra.mxu0 %v8082
    %8507 = vmatprep.subr.bf16.mxu0 %v8079
    %8508 = vmatpush2.bf16.msra.mxu0 %v8078
    %8509 = vmatprep.subr.bf16.mxu0 %v8075
    %8510 = vmatpush2.bf16.msra.mxu0 %v8074
    %8511 = vmatprep.subr.bf16.mxu0 %v8071
    %8512 = vmatpush2.bf16.msra.mxu0 %v8070
    %8513 = vmatprep.mubr.bf16.mxu0 %v6794
    %8514 = vmatmul.mubr.bf16.gmra.mxu0 %v6793
    %v8515 = vpop.f32.mrf.mxu0
    %v8516 = vadd.f32 %v8475, %v8515
    %v8517 = vpop.f32.mrf.mxu0
    %v8518 = vadd.f32 %v8477, %v8517
    %v8519 = vpop.f32.mrf.mxu0
    %v8520 = vpop.f32.mrf.mxu0
    %8521 = vdwg.mxu0
    %8522 = vmatprep.subr.bf16.mxu0 %v7877
    %8523 = vmatpush1.bf16.msra.mxu0 %v7876
    %8524 = vmatprep.subr.bf16.mxu0 %v7873
    %8525 = vmatpush1.bf16.msra.mxu0 %v7872
    %8526 = vmatprep.subr.bf16.mxu0 %v7869
    %8527 = vmatpush1.bf16.msra.mxu0 %v7868
    %8528 = vmatprep.subr.bf16.mxu0 %v7865
    %8529 = vmatpush1.bf16.msra.mxu0 %v7864
    %8530 = vmatprep.subr.bf16.mxu0 %v7861
    %8531 = vmatpush1.bf16.msra.mxu0 %v7860
    %8532 = vmatprep.subr.bf16.mxu0 %v7857
    %8533 = vmatpush1.bf16.msra.mxu0 %v7856
    %8534 = vmatprep.subr.bf16.mxu0 %v7853
    %8535 = vmatpush1.bf16.msra.mxu0 %v7852
    %8536 = vmatprep.subr.bf16.mxu0 %v7849
    %8537 = vmatpush1.bf16.msra.mxu0 %v7848
    %8538 = vmatprep.subr.bf16.mxu0 %v7909
    %8539 = vmatpush2.bf16.msra.mxu0 %v7908
    %8540 = vmatprep.subr.bf16.mxu0 %v7905
    %8541 = vmatpush2.bf16.msra.mxu0 %v7904
    %8542 = vmatprep.subr.bf16.mxu0 %v7901
    %8543 = vmatpush2.bf16.msra.mxu0 %v7900
    %8544 = vmatprep.subr.bf16.mxu0 %v7897
    %8545 = vmatpush2.bf16.msra.mxu0 %v7896
    %8546 = vmatprep.subr.bf16.mxu0 %v7893
    %8547 = vmatpush2.bf16.msra.mxu0 %v7892
    %8548 = vmatprep.subr.bf16.mxu0 %v7889
    %8549 = vmatpush2.bf16.msra.mxu0 %v7888
    %8550 = vmatprep.subr.bf16.mxu0 %v7885
    %8551 = vmatpush2.bf16.msra.mxu0 %v7884
    %8552 = vmatprep.subr.bf16.mxu0 %v7881
    %8553 = vmatpush2.bf16.msra.mxu0 %v7880
    %8554 = vmatprep.mubr.bf16.mxu0 %v6788
    %8555 = vmatmul.mubr.bf16.gmra.mxu0 %v6787
    %v8556 = vpop.f32.mrf.mxu0
    %v8557 = vadd.f32 %v7069, %v8556
    %v8558 = vpop.f32.mrf.mxu0
    %v8559 = vadd.f32 %v7073, %v8558
    %v8560 = vpop.f32.mrf.mxu0
    %v8561 = vpop.f32.mrf.mxu0
    %8562 = vdwg.mxu0
    %8563 = vmatprep.subr.bf16.mxu0 %v7941
    %8564 = vmatpush1.bf16.msra.mxu0 %v7940
    %8565 = vmatprep.subr.bf16.mxu0 %v7937
    %8566 = vmatpush1.bf16.msra.mxu0 %v7936
    %8567 = vmatprep.subr.bf16.mxu0 %v7933
    %8568 = vmatpush1.bf16.msra.mxu0 %v7932
    %8569 = vmatprep.subr.bf16.mxu0 %v7929
    %8570 = vmatpush1.bf16.msra.mxu0 %v7928
    %8571 = vmatprep.subr.bf16.mxu0 %v7925
    %8572 = vmatpush1.bf16.msra.mxu0 %v7924
    %8573 = vmatprep.subr.bf16.mxu0 %v7921
    %8574 = vmatpush1.bf16.msra.mxu0 %v7920
    %8575 = vmatprep.subr.bf16.mxu0 %v7917
    %8576 = vmatpush1.bf16.msra.mxu0 %v7916
    %8577 = vmatprep.subr.bf16.mxu0 %v7913
    %8578 = vmatpush1.bf16.msra.mxu0 %v7912
    %8579 = vmatprep.subr.bf16.mxu0 %v7973
    %8580 = vmatpush2.bf16.msra.mxu0 %v7972
    %8581 = vmatprep.subr.bf16.mxu0 %v7969
    %8582 = vmatpush2.bf16.msra.mxu0 %v7968
    %8583 = vmatprep.subr.bf16.mxu0 %v7965
    %8584 = vmatpush2.bf16.msra.mxu0 %v7964
    %8585 = vmatprep.subr.bf16.mxu0 %v7961
    %8586 = vmatpush2.bf16.msra.mxu0 %v7960
    %8587 = vmatprep.subr.bf16.mxu0 %v7957
    %8588 = vmatpush2.bf16.msra.mxu0 %v7956
    %8589 = vmatprep.subr.bf16.mxu0 %v7953
    %8590 = vmatpush2.bf16.msra.mxu0 %v7952
    %8591 = vmatprep.subr.bf16.mxu0 %v7949
    %8592 = vmatpush2.bf16.msra.mxu0 %v7948
    %8593 = vmatprep.subr.bf16.mxu0 %v7945
    %8594 = vmatpush2.bf16.msra.mxu0 %v7944
    %8595 = vmatprep.mubr.bf16.mxu0 %v6790
    %8596 = vmatmul.mubr.bf16.gmra.mxu0 %v6789
    %v8597 = vpop.f32.mrf.mxu0
    %v8598 = vadd.f32 %v8557, %v8597
    %v8599 = vpop.f32.mrf.mxu0
    %v8600 = vadd.f32 %v8559, %v8599
    %v8601 = vpop.f32.mrf.mxu0
    %v8602 = vpop.f32.mrf.mxu0
    %8603 = vdwg.mxu0
    %8604 = vmatprep.subr.bf16.mxu0 %v8005
    %8605 = vmatpush1.bf16.msra.mxu0 %v8004
    %8606 = vmatprep.subr.bf16.mxu0 %v8001
    %8607 = vmatpush1.bf16.msra.mxu0 %v8000
    %8608 = vmatprep.subr.bf16.mxu0 %v7997
    %8609 = vmatpush1.bf16.msra.mxu0 %v7996
    %8610 = vmatprep.subr.bf16.mxu0 %v7993
    %8611 = vmatpush1.bf16.msra.mxu0 %v7992
    %8612 = vmatprep.subr.bf16.mxu0 %v7989
    %8613 = vmatpush1.bf16.msra.mxu0 %v7988
    %8614 = vmatprep.subr.bf16.mxu0 %v7985
    %8615 = vmatpush1.bf16.msra.mxu0 %v7984
    %8616 = vmatprep.subr.bf16.mxu0 %v7981
    %8617 = vmatpush1.bf16.msra.mxu0 %v7980
    %8618 = vmatprep.subr.bf16.mxu0 %v7977
    %8619 = vmatpush1.bf16.msra.mxu0 %v7976
    %8620 = vmatprep.subr.bf16.mxu0 %v8037
    %8621 = vmatpush2.bf16.msra.mxu0 %v8036
    %8622 = vmatprep.subr.bf16.mxu0 %v8033
    %8623 = vmatpush2.bf16.msra.mxu0 %v8032
    %8624 = vmatprep.subr.bf16.mxu0 %v8029
    %8625 = vmatpush2.bf16.msra.mxu0 %v8028
    %8626 = vmatprep.subr.bf16.mxu0 %v8025
    %8627 = vmatpush2.bf16.msra.mxu0 %v8024
    %8628 = vmatprep.subr.bf16.mxu0 %v8021
    %8629 = vmatpush2.bf16.msra.mxu0 %v8020
    %8630 = vmatprep.subr.bf16.mxu0 %v8017
    %8631 = vmatpush2.bf16.msra.mxu0 %v8016
    %8632 = vmatprep.subr.bf16.mxu0 %v8013
    %8633 = vmatpush2.bf16.msra.mxu0 %v8012
    %8634 = vmatprep.subr.bf16.mxu0 %v8009
    %8635 = vmatpush2.bf16.msra.mxu0 %v8008
    %8636 = vmatprep.mubr.bf16.mxu0 %v6792
    %8637 = vmatmul.mubr.bf16.gmra.mxu0 %v6791
    %v8638 = vpop.f32.mrf.mxu0
    %v8639 = vadd.f32 %v8598, %v8638
    %v8640 = vpop.f32.mrf.mxu0
    %v8641 = vadd.f32 %v8600, %v8640
    %v8642 = vpop.f32.mrf.mxu0
    %v8643 = vpop.f32.mrf.mxu0
    %8644 = vdwg.mxu0
    %8645 = vmatprep.subr.bf16.mxu0 %v8069
    %8646 = vmatpush1.bf16.msra.mxu0 %v8068
    %8647 = vmatprep.subr.bf16.mxu0 %v8065
    %8648 = vmatpush1.bf16.msra.mxu0 %v8064
    %8649 = vmatprep.subr.bf16.mxu0 %v8061
    %8650 = vmatpush1.bf16.msra.mxu0 %v8060
    %8651 = vmatprep.subr.bf16.mxu0 %v8057
    %8652 = vmatpush1.bf16.msra.mxu0 %v8056
    %8653 = vmatprep.subr.bf16.mxu0 %v8053
    %8654 = vmatpush1.bf16.msra.mxu0 %v8052
    %8655 = vmatprep.subr.bf16.mxu0 %v8049
    %8656 = vmatpush1.bf16.msra.mxu0 %v8048
    %8657 = vmatprep.subr.bf16.mxu0 %v8045
    %8658 = vmatpush1.bf16.msra.mxu0 %v8044
    %8659 = vmatprep.subr.bf16.mxu0 %v8041
    %8660 = vmatpush1.bf16.msra.mxu0 %v8040
    %8661 = vmatprep.subr.bf16.mxu0 %v8101
    %8662 = vmatpush2.bf16.msra.mxu0 %v8100
    %8663 = vmatprep.subr.bf16.mxu0 %v8097
    %8664 = vmatpush2.bf16.msra.mxu0 %v8096
    %8665 = vmatprep.subr.bf16.mxu0 %v8093
    %8666 = vmatpush2.bf16.msra.mxu0 %v8092
    %8667 = vmatprep.subr.bf16.mxu0 %v8089
    %8668 = vmatpush2.bf16.msra.mxu0 %v8088
    %8669 = vmatprep.subr.bf16.mxu0 %v8085
    %8670 = vmatpush2.bf16.msra.mxu0 %v8084
    %8671 = vmatprep.subr.bf16.mxu0 %v8081
    %8672 = vmatpush2.bf16.msra.mxu0 %v8080
    %8673 = vmatprep.subr.bf16.mxu0 %v8077
    %8674 = vmatpush2.bf16.msra.mxu0 %v8076
    %8675 = vmatprep.subr.bf16.mxu0 %v8073
    %8676 = vmatpush2.bf16.msra.mxu0 %v8072
    %8677 = vmatprep.mubr.bf16.mxu0 %v6794
    %8678 = vmatmul.mubr.bf16.gmra.mxu0 %v6793
    %v8679 = vpop.f32.mrf.mxu0
    %v8680 = vadd.f32 %v8639, %v8679
    %v8681 = vpop.f32.mrf.mxu0
    %v8682 = vadd.f32 %v8641, %v8681
    %v8683 = vpop.f32.mrf.mxu0
    %v8684 = vpop.f32.mrf.mxu0
    %8685 = vdwg.mxu0
    %v8686 = vmax.f32 %v8516, 0.0
    %v8687 = vmax.f32 %v8518, 0.0
    %v8688 = vmax.f32 %v8680, 0.0
    %v8689 = vmax.f32 %v8682, 0.0
    %v8690 = vrot.slane %v8686, 4
    %v8691 = vadd.f32 %v8686, %v8690
    %v8692 = vrot.slane %v8691, 2
    %v8693 = vadd.f32 %v8691, %v8692
    %v8694 = vrot.slane %v8693, 1
    %v8695 = vadd.f32 %v8693, %v8694
    %v8696 = vrot.slane %v8687, 4
    %v8697 = vadd.f32 %v8687, %v8696
    %v8698 = vrot.slane %v8697, 2
    %v8699 = vadd.f32 %v8697, %v8698
    %v8700 = vrot.slane %v8699, 1
    %v8701 = vadd.f32 %v8699, %v8700
    %v8702 = vrot.slane %v8688, 4
    %v8703 = vadd.f32 %v8688, %v8702
    %v8704 = vrot.slane %v8703, 2
    %v8705 = vadd.f32 %v8703, %v8704
    %v8706 = vrot.slane %v8705, 1
    %v8707 = vadd.f32 %v8705, %v8706
    %v8708 = vrot.slane %v8689, 4
    %v8709 = vadd.f32 %v8689, %v8708
    %v8710 = vrot.slane %v8709, 2
    %v8711 = vadd.f32 %v8709, %v8710
    %v8712 = vrot.slane %v8711, 1
    %v8713 = vadd.f32 %v8711, %v8712
    %v8714 = vmul.f32 %v8695, 0.125
    %v8715 = vmul.f32 %v8701, 0.125
    %v8716 = vmul.f32 %v8707, 0.125
    %v8717 = vmul.f32 %v8713, 0.125
    %v8718 = vmul.f32 %v8686, %v8686
    %v8719 = vmul.f32 %v8687, %v8687
    %v8720 = vmul.f32 %v8688, %v8688
    %v8721 = vmul.f32 %v8689, %v8689
    %v8722 = vrot.slane %v8718, 4
    %v8723 = vadd.f32 %v8718, %v8722
    %v8724 = vrot.slane %v8723, 2
    %v8725 = vadd.f32 %v8723, %v8724
    %v8726 = vrot.slane %v8725, 1
    %v8727 = vadd.f32 %v8725, %v8726
    %v8728 = vrot.slane %v8719, 4
    %v8729 = vadd.f32 %v8719, %v8728
    %v8730 = vrot.slane %v8729, 2
    %v8731 = vadd.f32 %v8729, %v8730
    %v8732 = vrot.slane %v8731, 1
    %v8733 = vadd.f32 %v8731, %v8732
    %v8734 = vrot.slane %v8720, 4
    %v8735 = vadd.f32 %v8720, %v8734
    %v8736 = vrot.slane %v8735, 2
    %v8737 = vadd.f32 %v8735, %v8736
    %v8738 = vrot.slane %v8737, 1
    %v8739 = vadd.f32 %v8737, %v8738
    %v8740 = vrot.slane %v8721, 4
    %v8741 = vadd.f32 %v8721, %v8740
    %v8742 = vrot.slane %v8741, 2
    %v8743 = vadd.f32 %v8741, %v8742
    %v8744 = vrot.slane %v8743, 1
    %v8745 = vadd.f32 %v8743, %v8744
    %v8746 = vmul.f32 %v8727, 0.125
    %v8747 = vmul.f32 %v8733, 0.125
    %v8748 = vmul.f32 %v8739, 0.125
    %v8749 = vmul.f32 %v8745, 0.125
    %v8750 = vmul.f32 %v8714, %v8714
    %v8751 = vmul.f32 %v8715, %v8715
    %v8752 = vmul.f32 %v8716, %v8716
    %v8753 = vmul.f32 %v8717, %v8717
    %v8754 = vsub.f32 %v8746, %v8750
    %v8755 = vsub.f32 %v8747, %v8751
    %v8756 = vsub.f32 %v8748, %v8752
    %v8757 = vsub.f32 %v8749, %v8753
    %v8758 = vadd.f32 %v8754, 1e-05
    %v8759 = vadd.f32 %v8755, 1e-05
    %v8760 = vadd.f32 %v8756, 1e-05
    %v8761 = vadd.f32 %v8757, 1e-05
    %v8762 = vrsqrt.pop %v8758
    %v8763 = vrsqrt.pop %v8759
    %v8764 = vrsqrt.pop %v8760
    %v8765 = vrsqrt.pop %v8761
    %v8770 = vcombine.low %v8762, %v8763
    %v8771 = vcombine.low %v8764, %v8765
    %v8773 = vunpack.c.l.s4 1966171168
    %v8774 = vunpack.c.0.s8 %v8773
    %v8775 = vlaneseq
    %v8776 = vshrl.u32 %v8775, 7
    %v8777 = vsub.s32 %v8774, %v8776
    %v8778 = vrot.slane %v8770, %v8777
    %v8780 = vunpack.c.l.s4 1966171168
    %v8781 = vunpack.c.0.s8 %v8780
    %v8782 = vlaneseq
    %v8783 = vshrl.u32 %v8782, 7
    %v8784 = vsub.s32 %v8781, %v8783
    %v8785 = vrot.slane %v8771, %v8784
    %v8786 = vcombine.low %v8778, %v8785
    %v8788 = vunpack.c.l.s4 1966171168
    %v8789 = vunpack.c.0.s8 %v8788
    %v8790 = vlaneseq
    %v8791 = vshrl.u32 %v8790, 7
    %v8792 = vsub.s32 %v8789, %v8791
    %v8793 = vrot.slane %v8786, %v8792
    %v8795 = vmul.f32 %v7054, %v8793
    %v8797 = vlaneseq
    %v8798 = vshrl.u32 %v8797, 7
    %v8799 = vsub.s32 0, %v8798
    %v8800 = vrot.slane %v8795, %v8799
    %v8801 = vlaneseq
    %v8802 = vshrl.u32 %v8801, 7
    %v8803 = vsub.s32 1, %v8802
    %v8804 = vrot.slane %v8795, %v8803
    %v8805 = vlaneseq
    %v8806 = vshrl.u32 %v8805, 7
    %v8807 = vsub.s32 2, %v8806
    %v8808 = vrot.slane %v8795, %v8807
    %v8809 = vlaneseq
    %v8810 = vshrl.u32 %v8809, 7
    %v8811 = vsub.s32 3, %v8810
    %v8812 = vrot.slane %v8795, %v8811
    %v8817 = vmul.f32 %v8714, %v8800
    %v8818 = vmul.f32 %v8715, %v8804
    %v8819 = vmul.f32 %v8716, %v8808
    %v8820 = vmul.f32 %v8717, %v8812
    %v8825 = vcombine.low %v8817, %v8818
    %v8826 = vcombine.low %v8819, %v8820
    %v8828 = vunpack.c.l.s4 1966171168
    %v8829 = vunpack.c.0.s8 %v8828
    %v8830 = vlaneseq
    %v8831 = vshrl.u32 %v8830, 7
    %v8832 = vsub.s32 %v8829, %v8831
    %v8833 = vrot.slane %v8825, %v8832
    %v8835 = vunpack.c.l.s4 1966171168
    %v8836 = vunpack.c.0.s8 %v8835
    %v8837 = vlaneseq
    %v8838 = vshrl.u32 %v8837, 7
    %v8839 = vsub.s32 %v8836, %v8838
    %v8840 = vrot.slane %v8826, %v8839
    %v8841 = vcombine.low %v8833, %v8840
    %v8843 = vunpack.c.l.s4 1966171168
    %v8844 = vunpack.c.0.s8 %v8843
    %v8845 = vlaneseq
    %v8846 = vshrl.u32 %v8845, 7
    %v8847 = vsub.s32 %v8844, %v8846
    %v8848 = vrot.slane %v8841, %v8847
    %v8850 = vsub.f32 %v7056, %v8848
    %v8851 = vmul.f32 %v8686, %v8800
    %v8852 = vmul.f32 %v8687, %v8804
    %v8853 = vmul.f32 %v8688, %v8808
    %v8854 = vmul.f32 %v8689, %v8812
    %v8856 = vlaneseq
    %v8857 = vshrl.u32 %v8856, 7
    %v8858 = vsub.s32 0, %v8857
    %v8859 = vrot.slane %v8850, %v8858
    %v8860 = vlaneseq
    %v8861 = vshrl.u32 %v8860, 7
    %v8862 = vsub.s32 1, %v8861
    %v8863 = vrot.slane %v8850, %v8862
    %v8864 = vlaneseq
    %v8865 = vshrl.u32 %v8864, 7
    %v8866 = vsub.s32 2, %v8865
    %v8867 = vrot.slane %v8850, %v8866
    %v8868 = vlaneseq
    %v8869 = vshrl.u32 %v8868, 7
    %v8870 = vsub.s32 3, %v8869
    %v8871 = vrot.slane %v8850, %v8870
    %v8876 = vadd.f32 %v8851, %v8859
    %v8877 = vadd.f32 %v8852, %v8863
    %v8878 = vadd.f32 %v8853, %v8867
    %v8879 = vadd.f32 %v8854, %v8871
    %s8880 = sshll.u32 %s44, 4
    %8881 = dma.done %s6775, %s8880
    %s8882 = scalar_lea.sflag [#allocation8], 5
    // Predicated region
    $region64: #{_lambda_.1} parent=1 // pred_check
      _
    $region65: #{_lambda_.1} parent=1 // pred_check_branch
      %8884 = sbr.rel target = $region67
    $region66: #{_lambda_.1} parent=1 // pred_region
      %8885 = sst [smem:[#allocation15]] [#allocation25]
      %8886 = sst [smem:[#allocation16]] [#allocation24]
    $region67: #{_lambda_.1} parent=1 // pred_fallthru
      _
    %8888 = shalt.err (0)
    %s8890 = sshll.u32 [#allocation6], 4
    %s8891 = int_to_ptr.vmem [resolvable:$true] %s8890
    %8893 = dma.hbm_to_vmem [thread:$0]  %s6, 16384, %s8891, %s8882
    %v8894 = vpack.c.bf16 %v8876, %v8876
    %v8895 = vpack.c.bf16 %v8877, %v8877
    %v8896 = vpack.c.bf16 %v8878, %v8878
    %v8897 = vpack.c.bf16 %v8879, %v8879
    %v8898 = vld [vmem:[#allocation5] sm:$0xff]
    %v8899 = vld [vmem:[#allocation5 + $0x8] sm:$0xff]
    %v8900 = vld [vmem:[#allocation5 + $0x10] sm:$0xff]
    %v8901 = vld [vmem:[#allocation5 + $0x18] sm:$0xff]
    %v8902 = vld [vmem:[#allocation5 + $0x20] sm:$0xff]
    %v8903 = vld [vmem:[#allocation5 + $0x28] sm:$0xff]
    %v8904 = vld [vmem:[#allocation5 + $0x30] sm:$0xff]
    %v8905 = vld [vmem:[#allocation5 + $0x38] sm:$0xff]
    %v8906 = vld [vmem:[#allocation5 + $0x40] sm:$0xff]
    %v8907 = vld [vmem:[#allocation5 + $0x48] sm:$0xff]
    %v8908 = vld [vmem:[#allocation5 + $0x50] sm:$0xff]
    %v8909 = vld [vmem:[#allocation5 + $0x58] sm:$0xff]
    %v8910 = vld [vmem:[#allocation5 + $0x60] sm:$0xff]
    %v8911 = vld [vmem:[#allocation5 + $0x68] sm:$0xff]
    %v8912 = vld [vmem:[#allocation5 + $0x70] sm:$0xff]
    %v8913 = vld [vmem:[#allocation5 + $0x78] sm:$0xff]
    %v8914 = vld [vmem:[#allocation5 + $0x80] sm:$0xff]
    %v8915 = vld [vmem:[#allocation5 + $0x88] sm:$0xff]
    %v8916 = vld [vmem:[#allocation5 + $0x90] sm:$0xff]
    %v8917 = vld [vmem:[#allocation5 + $0x98] sm:$0xff]
    %v8918 = vld [vmem:[#allocation5 + $0xa0] sm:$0xff]
    %v8919 = vld [vmem:[#allocation5 + $0xa8] sm:$0xff]
    %v8920 = vld [vmem:[#allocation5 + $0xb0] sm:$0xff]
    %v8921 = vld [vmem:[#allocation5 + $0xb8] sm:$0xff]
    %v8922 = vld [vmem:[#allocation5 + $0xc0] sm:$0xff]
    %v8923 = vld [vmem:[#allocation5 + $0xc8] sm:$0xff]
    %v8924 = vld [vmem:[#allocation5 + $0xd0] sm:$0xff]
    %v8925 = vld [vmem:[#allocation5 + $0xd8] sm:$0xff]
    %v8926 = vld [vmem:[#allocation5 + $0xe0] sm:$0xff]
    %v8927 = vld [vmem:[#allocation5 + $0xe8] sm:$0xff]
    %v8928 = vld [vmem:[#allocation5 + $0xf0] sm:$0xff]
    %v8929 = vld [vmem:[#allocation5 + $0xf8] sm:$0xff]
    %v8930 = vld [vmem:[#allocation5 + $0x100] sm:$0xff]
    %v8931 = vld [vmem:[#allocation5 + $0x108] sm:$0xff]
    %v8932 = vld [vmem:[#allocation5 + $0x110] sm:$0xff]
    %v8933 = vld [vmem:[#allocation5 + $0x118] sm:$0xff]
    %v8934 = vld [vmem:[#allocation5 + $0x120] sm:$0xff]
    %v8935 = vld [vmem:[#allocation5 + $0x128] sm:$0xff]
    %v8936 = vld [vmem:[#allocation5 + $0x130] sm:$0xff]
    %v8937 = vld [vmem:[#allocation5 + $0x138] sm:$0xff]
    %v8938 = vld [vmem:[#allocation5 + $0x140] sm:$0xff]
    %v8939 = vld [vmem:[#allocation5 + $0x148] sm:$0xff]
    %v8940 = vld [vmem:[#allocation5 + $0x150] sm:$0xff]
    %v8941 = vld [vmem:[#allocation5 + $0x158] sm:$0xff]
    %v8942 = vld [vmem:[#allocation5 + $0x160] sm:$0xff]
    %v8943 = vld [vmem:[#allocation5 + $0x168] sm:$0xff]
    %v8944 = vld [vmem:[#allocation5 + $0x170] sm:$0xff]
    %v8945 = vld [vmem:[#allocation5 + $0x178] sm:$0xff]
    %v8946 = vld [vmem:[#allocation5 + $0x180] sm:$0xff]
    %v8947 = vld [vmem:[#allocation5 + $0x188] sm:$0xff]
    %v8948 = vld [vmem:[#allocation5 + $0x190] sm:$0xff]
    %v8949 = vld [vmem:[#allocation5 + $0x198] sm:$0xff]
    %v8950 = vld [vmem:[#allocation5 + $0x1a0] sm:$0xff]
    %v8951 = vld [vmem:[#allocation5 + $0x1a8] sm:$0xff]
    %v8952 = vld [vmem:[#allocation5 + $0x1b0] sm:$0xff]
    %v8953 = vld [vmem:[#allocation5 + $0x1b8] sm:$0xff]
    %v8954 = vld [vmem:[#allocation5 + $0x1c0] sm:$0xff]
    %v8955 = vld [vmem:[#allocation5 + $0x1c8] sm:$0xff]
    %v8956 = vld [vmem:[#allocation5 + $0x1d0] sm:$0xff]
    %v8957 = vld [vmem:[#allocation5 + $0x1d8] sm:$0xff]
    %v8958 = vld [vmem:[#allocation5 + $0x1e0] sm:$0xff]
    %v8959 = vld [vmem:[#allocation5 + $0x1e8] sm:$0xff]
    %v8960 = vld [vmem:[#allocation5 + $0x1f0] sm:$0xff]
    %v8961 = vld [vmem:[#allocation5 + $0x1f8] sm:$0xff]
    %v8962 = vld [vmem:[#allocation5 + $0x200] sm:$0xff]
    %v8963 = vld [vmem:[#allocation5 + $0x208] sm:$0xff]
    %v8964 = vld [vmem:[#allocation5 + $0x210] sm:$0xff]
    %v8965 = vld [vmem:[#allocation5 + $0x218] sm:$0xff]
    %v8966 = vld [vmem:[#allocation5 + $0x220] sm:$0xff]
    %v8967 = vld [vmem:[#allocation5 + $0x228] sm:$0xff]
    %v8968 = vld [vmem:[#allocation5 + $0x230] sm:$0xff]
    %v8969 = vld [vmem:[#allocation5 + $0x238] sm:$0xff]
    %v8970 = vld [vmem:[#allocation5 + $0x240] sm:$0xff]
    %v8971 = vld [vmem:[#allocation5 + $0x248] sm:$0xff]
    %v8972 = vld [vmem:[#allocation5 + $0x250] sm:$0xff]
    %v8973 = vld [vmem:[#allocation5 + $0x258] sm:$0xff]
    %v8974 = vld [vmem:[#allocation5 + $0x260] sm:$0xff]
    %v8975 = vld [vmem:[#allocation5 + $0x268] sm:$0xff]
    %v8976 = vld [vmem:[#allocation5 + $0x270] sm:$0xff]
    %v8977 = vld [vmem:[#allocation5 + $0x278] sm:$0xff]
    %v8978 = vld [vmem:[#allocation5 + $0x280] sm:$0xff]
    %v8979 = vld [vmem:[#allocation5 + $0x288] sm:$0xff]
    %v8980 = vld [vmem:[#allocation5 + $0x290] sm:$0xff]
    %v8981 = vld [vmem:[#allocation5 + $0x298] sm:$0xff]
    %v8982 = vld [vmem:[#allocation5 + $0x2a0] sm:$0xff]
    %v8983 = vld [vmem:[#allocation5 + $0x2a8] sm:$0xff]
    %v8984 = vld [vmem:[#allocation5 + $0x2b0] sm:$0xff]
    %v8985 = vld [vmem:[#allocation5 + $0x2b8] sm:$0xff]
    %v8986 = vld [vmem:[#allocation5 + $0x2c0] sm:$0xff]
    %v8987 = vld [vmem:[#allocation5 + $0x2c8] sm:$0xff]
    %v8988 = vld [vmem:[#allocation5 + $0x2d0] sm:$0xff]
    %v8989 = vld [vmem:[#allocation5 + $0x2d8] sm:$0xff]
    %v8990 = vld [vmem:[#allocation5 + $0x2e0] sm:$0xff]
    %v8991 = vld [vmem:[#allocation5 + $0x2e8] sm:$0xff]
    %v8992 = vld [vmem:[#allocation5 + $0x2f0] sm:$0xff]
    %v8993 = vld [vmem:[#allocation5 + $0x2f8] sm:$0xff]
    %v8994 = vld [vmem:[#allocation5 + $0x300] sm:$0xff]
    %v8995 = vld [vmem:[#allocation5 + $0x308] sm:$0xff]
    %v8996 = vld [vmem:[#allocation5 + $0x310] sm:$0xff]
    %v8997 = vld [vmem:[#allocation5 + $0x318] sm:$0xff]
    %v8998 = vld [vmem:[#allocation5 + $0x320] sm:$0xff]
    %v8999 = vld [vmem:[#allocation5 + $0x328] sm:$0xff]
    %v9000 = vld [vmem:[#allocation5 + $0x330] sm:$0xff]
    %v9001 = vld [vmem:[#allocation5 + $0x338] sm:$0xff]
    %v9002 = vld [vmem:[#allocation5 + $0x340] sm:$0xff]
    %v9003 = vld [vmem:[#allocation5 + $0x348] sm:$0xff]
    %v9004 = vld [vmem:[#allocation5 + $0x350] sm:$0xff]
    %v9005 = vld [vmem:[#allocation5 + $0x358] sm:$0xff]
    %v9006 = vld [vmem:[#allocation5 + $0x360] sm:$0xff]
    %v9007 = vld [vmem:[#allocation5 + $0x368] sm:$0xff]
    %v9008 = vld [vmem:[#allocation5 + $0x370] sm:$0xff]
    %v9009 = vld [vmem:[#allocation5 + $0x378] sm:$0xff]
    %v9010 = vld [vmem:[#allocation5 + $0x380] sm:$0xff]
    %v9011 = vld [vmem:[#allocation5 + $0x388] sm:$0xff]
    %v9012 = vld [vmem:[#allocation5 + $0x390] sm:$0xff]
    %v9013 = vld [vmem:[#allocation5 + $0x398] sm:$0xff]
    %v9014 = vld [vmem:[#allocation5 + $0x3a0] sm:$0xff]
    %v9015 = vld [vmem:[#allocation5 + $0x3a8] sm:$0xff]
    %v9016 = vld [vmem:[#allocation5 + $0x3b0] sm:$0xff]
    %v9017 = vld [vmem:[#allocation5 + $0x3b8] sm:$0xff]
    %v9018 = vld [vmem:[#allocation5 + $0x3c0] sm:$0xff]
    %v9019 = vld [vmem:[#allocation5 + $0x3c8] sm:$0xff]
    %v9020 = vld [vmem:[#allocation5 + $0x3d0] sm:$0xff]
    %v9021 = vld [vmem:[#allocation5 + $0x3d8] sm:$0xff]
    %v9022 = vld [vmem:[#allocation5 + $0x3e0] sm:$0xff]
    %v9023 = vld [vmem:[#allocation5 + $0x3e8] sm:$0xff]
    %v9024 = vld [vmem:[#allocation5 + $0x3f0] sm:$0xff]
    %v9025 = vld [vmem:[#allocation5 + $0x3f8] sm:$0xff]
    %s9026 = scalar_lea.vmem [#allocation9], 3
    %v9027 = vld [vmem:[%s9026] ss:$8 sm:$0xf]
    %s9028 = scalar_lea.vmem [#allocation9], 64
    %v9029 = vld [vmem:[%s9028] ss:$8 sm:$0xf]
    %s9030 = scalar_lea.vmem [#allocation9], 69
    %v9031 = vld [vmem:[%s9030] ss:$8 sm:$0xf]
    %v9033 = vlaneseq
    %v9034 = vshrl.u32 %v9033, 7
    %v9035 = vsub.s32 0, %v9034
    %v9036 = vrot.slane %v9027, %v9035
    %v9037 = vlaneseq
    %v9038 = vshrl.u32 %v9037, 7
    %v9039 = vsub.s32 1, %v9038
    %v9040 = vrot.slane %v9027, %v9039
    %v9041 = vlaneseq
    %v9042 = vshrl.u32 %v9041, 7
    %v9043 = vsub.s32 2, %v9042
    %v9044 = vrot.slane %v9027, %v9043
    %v9045 = vlaneseq
    %v9046 = vshrl.u32 %v9045, 7
    %v9047 = vsub.s32 3, %v9046
    %v9048 = vrot.slane %v9027, %v9047
    %v9181 = vunpack.c.l.b16 %v8898
    %v9182 = vunpack.c.h.b16 %v8898
    %v9183 = vunpack.c.l.b16 %v8899
    %v9184 = vunpack.c.h.b16 %v8899
    %v9185 = vunpack.c.l.b16 %v8900
    %v9186 = vunpack.c.h.b16 %v8900
    %v9187 = vunpack.c.l.b16 %v8901
    %v9188 = vunpack.c.h.b16 %v8901
    %v9189 = vunpack.c.l.b16 %v8902
    %v9190 = vunpack.c.h.b16 %v8902
    %v9191 = vunpack.c.l.b16 %v8903
    %v9192 = vunpack.c.h.b16 %v8903
    %v9193 = vunpack.c.l.b16 %v8904
    %v9194 = vunpack.c.h.b16 %v8904
    %v9195 = vunpack.c.l.b16 %v8905
    %v9196 = vunpack.c.h.b16 %v8905
    %v9197 = vunpack.c.l.b16 %v8906
    %v9198 = vunpack.c.h.b16 %v8906
    %v9199 = vunpack.c.l.b16 %v8907
    %v9200 = vunpack.c.h.b16 %v8907
    %v9201 = vunpack.c.l.b16 %v8908
    %v9202 = vunpack.c.h.b16 %v8908
    %v9203 = vunpack.c.l.b16 %v8909
    %v9204 = vunpack.c.h.b16 %v8909
    %v9205 = vunpack.c.l.b16 %v8910
    %v9206 = vunpack.c.h.b16 %v8910
    %v9207 = vunpack.c.l.b16 %v8911
    %v9208 = vunpack.c.h.b16 %v8911
    %v9209 = vunpack.c.l.b16 %v8912
    %v9210 = vunpack.c.h.b16 %v8912
    %v9211 = vunpack.c.l.b16 %v8913
    %v9212 = vunpack.c.h.b16 %v8913
    %v9213 = vunpack.c.l.b16 %v8914
    %v9214 = vunpack.c.h.b16 %v8914
    %v9215 = vunpack.c.l.b16 %v8915
    %v9216 = vunpack.c.h.b16 %v8915
    %v9217 = vunpack.c.l.b16 %v8916
    %v9218 = vunpack.c.h.b16 %v8916
    %v9219 = vunpack.c.l.b16 %v8917
    %v9220 = vunpack.c.h.b16 %v8917
    %v9221 = vunpack.c.l.b16 %v8918
    %v9222 = vunpack.c.h.b16 %v8918
    %v9223 = vunpack.c.l.b16 %v8919
    %v9224 = vunpack.c.h.b16 %v8919
    %v9225 = vunpack.c.l.b16 %v8920
    %v9226 = vunpack.c.h.b16 %v8920
    %v9227 = vunpack.c.l.b16 %v8921
    %v9228 = vunpack.c.h.b16 %v8921
    %v9229 = vunpack.c.l.b16 %v8922
    %v9230 = vunpack.c.h.b16 %v8922
    %v9231 = vunpack.c.l.b16 %v8923
    %v9232 = vunpack.c.h.b16 %v8923
    %v9233 = vunpack.c.l.b16 %v8924
    %v9234 = vunpack.c.h.b16 %v8924
    %v9235 = vunpack.c.l.b16 %v8925
    %v9236 = vunpack.c.h.b16 %v8925
    %v9237 = vunpack.c.l.b16 %v8926
    %v9238 = vunpack.c.h.b16 %v8926
    %v9239 = vunpack.c.l.b16 %v8927
    %v9240 = vunpack.c.h.b16 %v8927
    %v9241 = vunpack.c.l.b16 %v8928
    %v9242 = vunpack.c.h.b16 %v8928
    %v9243 = vunpack.c.l.b16 %v8929
    %v9244 = vunpack.c.h.b16 %v8929
    %v9245 = vunpack.c.l.b16 %v8930
    %v9246 = vunpack.c.h.b16 %v8930
    %v9247 = vunpack.c.l.b16 %v8931
    %v9248 = vunpack.c.h.b16 %v8931
    %v9249 = vunpack.c.l.b16 %v8932
    %v9250 = vunpack.c.h.b16 %v8932
    %v9251 = vunpack.c.l.b16 %v8933
    %v9252 = vunpack.c.h.b16 %v8933
    %v9253 = vunpack.c.l.b16 %v8934
    %v9254 = vunpack.c.h.b16 %v8934
    %v9255 = vunpack.c.l.b16 %v8935
    %v9256 = vunpack.c.h.b16 %v8935
    %v9257 = vunpack.c.l.b16 %v8936
    %v9258 = vunpack.c.h.b16 %v8936
    %v9259 = vunpack.c.l.b16 %v8937
    %v9260 = vunpack.c.h.b16 %v8937
    %v9261 = vunpack.c.l.b16 %v8938
    %v9262 = vunpack.c.h.b16 %v8938
    %v9263 = vunpack.c.l.b16 %v8939
    %v9264 = vunpack.c.h.b16 %v8939
    %v9265 = vunpack.c.l.b16 %v8940
    %v9266 = vunpack.c.h.b16 %v8940
    %v9267 = vunpack.c.l.b16 %v8941
    %v9268 = vunpack.c.h.b16 %v8941
    %v9269 = vunpack.c.l.b16 %v8942
    %v9270 = vunpack.c.h.b16 %v8942
    %v9271 = vunpack.c.l.b16 %v8943
    %v9272 = vunpack.c.h.b16 %v8943
    %v9273 = vunpack.c.l.b16 %v8944
    %v9274 = vunpack.c.h.b16 %v8944
    %v9275 = vunpack.c.l.b16 %v8945
    %v9276 = vunpack.c.h.b16 %v8945
    %v9277 = vunpack.c.l.b16 %v8946
    %v9278 = vunpack.c.h.b16 %v8946
    %v9279 = vunpack.c.l.b16 %v8947
    %v9280 = vunpack.c.h.b16 %v8947
    %v9281 = vunpack.c.l.b16 %v8948
    %v9282 = vunpack.c.h.b16 %v8948
    %v9283 = vunpack.c.l.b16 %v8949
    %v9284 = vunpack.c.h.b16 %v8949
    %v9285 = vunpack.c.l.b16 %v8950
    %v9286 = vunpack.c.h.b16 %v8950
    %v9287 = vunpack.c.l.b16 %v8951
    %v9288 = vunpack.c.h.b16 %v8951
    %v9289 = vunpack.c.l.b16 %v8952
    %v9290 = vunpack.c.h.b16 %v8952
    %v9291 = vunpack.c.l.b16 %v8953
    %v9292 = vunpack.c.h.b16 %v8953
    %v9293 = vunpack.c.l.b16 %v8954
    %v9294 = vunpack.c.h.b16 %v8954
    %v9295 = vunpack.c.l.b16 %v8955
    %v9296 = vunpack.c.h.b16 %v8955
    %v9297 = vunpack.c.l.b16 %v8956
    %v9298 = vunpack.c.h.b16 %v8956
    %v9299 = vunpack.c.l.b16 %v8957
    %v9300 = vunpack.c.h.b16 %v8957
    %v9301 = vunpack.c.l.b16 %v8958
    %v9302 = vunpack.c.h.b16 %v8958
    %v9303 = vunpack.c.l.b16 %v8959
    %v9304 = vunpack.c.h.b16 %v8959
    %v9305 = vunpack.c.l.b16 %v8960
    %v9306 = vunpack.c.h.b16 %v8960
    %v9307 = vunpack.c.l.b16 %v8961
    %v9308 = vunpack.c.h.b16 %v8961
    %v9309 = vunpack.c.l.b16 %v8962
    %v9310 = vunpack.c.h.b16 %v8962
    %v9311 = vunpack.c.l.b16 %v8963
    %v9312 = vunpack.c.h.b16 %v8963
    %v9313 = vunpack.c.l.b16 %v8964
    %v9314 = vunpack.c.h.b16 %v8964
    %v9315 = vunpack.c.l.b16 %v8965
    %v9316 = vunpack.c.h.b16 %v8965
    %v9317 = vunpack.c.l.b16 %v8966
    %v9318 = vunpack.c.h.b16 %v8966
    %v9319 = vunpack.c.l.b16 %v8967
    %v9320 = vunpack.c.h.b16 %v8967
    %v9321 = vunpack.c.l.b16 %v8968
    %v9322 = vunpack.c.h.b16 %v8968
    %v9323 = vunpack.c.l.b16 %v8969
    %v9324 = vunpack.c.h.b16 %v8969
    %v9325 = vunpack.c.l.b16 %v8970
    %v9326 = vunpack.c.h.b16 %v8970
    %v9327 = vunpack.c.l.b16 %v8971
    %v9328 = vunpack.c.h.b16 %v8971
    %v9329 = vunpack.c.l.b16 %v8972
    %v9330 = vunpack.c.h.b16 %v8972
    %v9331 = vunpack.c.l.b16 %v8973
    %v9332 = vunpack.c.h.b16 %v8973
    %v9333 = vunpack.c.l.b16 %v8974
    %v9334 = vunpack.c.h.b16 %v8974
    %v9335 = vunpack.c.l.b16 %v8975
    %v9336 = vunpack.c.h.b16 %v8975
    %v9337 = vunpack.c.l.b16 %v8976
    %v9338 = vunpack.c.h.b16 %v8976
    %v9339 = vunpack.c.l.b16 %v8977
    %v9340 = vunpack.c.h.b16 %v8977
    %v9341 = vunpack.c.l.b16 %v8978
    %v9342 = vunpack.c.h.b16 %v8978
    %v9343 = vunpack.c.l.b16 %v8979
    %v9344 = vunpack.c.h.b16 %v8979
    %v9345 = vunpack.c.l.b16 %v8980
    %v9346 = vunpack.c.h.b16 %v8980
    %v9347 = vunpack.c.l.b16 %v8981
    %v9348 = vunpack.c.h.b16 %v8981
    %v9349 = vunpack.c.l.b16 %v8982
    %v9350 = vunpack.c.h.b16 %v8982
    %v9351 = vunpack.c.l.b16 %v8983
    %v9352 = vunpack.c.h.b16 %v8983
    %v9353 = vunpack.c.l.b16 %v8984
    %v9354 = vunpack.c.h.b16 %v8984
    %v9355 = vunpack.c.l.b16 %v8985
    %v9356 = vunpack.c.h.b16 %v8985
    %v9357 = vunpack.c.l.b16 %v8986
    %v9358 = vunpack.c.h.b16 %v8986
    %v9359 = vunpack.c.l.b16 %v8987
    %v9360 = vunpack.c.h.b16 %v8987
    %v9361 = vunpack.c.l.b16 %v8988
    %v9362 = vunpack.c.h.b16 %v8988
    %v9363 = vunpack.c.l.b16 %v8989
    %v9364 = vunpack.c.h.b16 %v8989
    %v9365 = vunpack.c.l.b16 %v8990
    %v9366 = vunpack.c.h.b16 %v8990
    %v9367 = vunpack.c.l.b16 %v8991
    %v9368 = vunpack.c.h.b16 %v8991
    %v9369 = vunpack.c.l.b16 %v8992
    %v9370 = vunpack.c.h.b16 %v8992
    %v9371 = vunpack.c.l.b16 %v8993
    %v9372 = vunpack.c.h.b16 %v8993
    %v9373 = vunpack.c.l.b16 %v8994
    %v9374 = vunpack.c.h.b16 %v8994
    %v9375 = vunpack.c.l.b16 %v8995
    %v9376 = vunpack.c.h.b16 %v8995
    %v9377 = vunpack.c.l.b16 %v8996
    %v9378 = vunpack.c.h.b16 %v8996
    %v9379 = vunpack.c.l.b16 %v8997
    %v9380 = vunpack.c.h.b16 %v8997
    %v9381 = vunpack.c.l.b16 %v8998
    %v9382 = vunpack.c.h.b16 %v8998
    %v9383 = vunpack.c.l.b16 %v8999
    %v9384 = vunpack.c.h.b16 %v8999
    %v9385 = vunpack.c.l.b16 %v9000
    %v9386 = vunpack.c.h.b16 %v9000
    %v9387 = vunpack.c.l.b16 %v9001
    %v9388 = vunpack.c.h.b16 %v9001
    %v9389 = vunpack.c.l.b16 %v9002
    %v9390 = vunpack.c.h.b16 %v9002
    %v9391 = vunpack.c.l.b16 %v9003
    %v9392 = vunpack.c.h.b16 %v9003
    %v9393 = vunpack.c.l.b16 %v9004
    %v9394 = vunpack.c.h.b16 %v9004
    %v9395 = vunpack.c.l.b16 %v9005
    %v9396 = vunpack.c.h.b16 %v9005
    %v9397 = vunpack.c.l.b16 %v9006
    %v9398 = vunpack.c.h.b16 %v9006
    %v9399 = vunpack.c.l.b16 %v9007
    %v9400 = vunpack.c.h.b16 %v9007
    %v9401 = vunpack.c.l.b16 %v9008
    %v9402 = vunpack.c.h.b16 %v9008
    %v9403 = vunpack.c.l.b16 %v9009
    %v9404 = vunpack.c.h.b16 %v9009
    %v9405 = vunpack.c.l.b16 %v9010
    %v9406 = vunpack.c.h.b16 %v9010
    %v9407 = vunpack.c.l.b16 %v9011
    %v9408 = vunpack.c.h.b16 %v9011
    %v9409 = vunpack.c.l.b16 %v9012
    %v9410 = vunpack.c.h.b16 %v9012
    %v9411 = vunpack.c.l.b16 %v9013
    %v9412 = vunpack.c.h.b16 %v9013
    %v9413 = vunpack.c.l.b16 %v9014
    %v9414 = vunpack.c.h.b16 %v9014
    %v9415 = vunpack.c.l.b16 %v9015
    %v9416 = vunpack.c.h.b16 %v9015
    %v9417 = vunpack.c.l.b16 %v9016
    %v9418 = vunpack.c.h.b16 %v9016
    %v9419 = vunpack.c.l.b16 %v9017
    %v9420 = vunpack.c.h.b16 %v9017
    %v9421 = vunpack.c.l.b16 %v9018
    %v9422 = vunpack.c.h.b16 %v9018
    %v9423 = vunpack.c.l.b16 %v9019
    %v9424 = vunpack.c.h.b16 %v9019
    %v9425 = vunpack.c.l.b16 %v9020
    %v9426 = vunpack.c.h.b16 %v9020
    %v9427 = vunpack.c.l.b16 %v9021
    %v9428 = vunpack.c.h.b16 %v9021
    %v9429 = vunpack.c.l.b16 %v9022
    %v9430 = vunpack.c.h.b16 %v9022
    %v9431 = vunpack.c.l.b16 %v9023
    %v9432 = vunpack.c.h.b16 %v9023
    %v9433 = vunpack.c.l.b16 %v9024
    %v9434 = vunpack.c.h.b16 %v9024
    %v9435 = vunpack.c.l.b16 %v9025
    %v9436 = vunpack.c.h.b16 %v9025
    %v9437 = vpack.c.b16 %v9185, %v9181
    %v9438 = vpack.c.b16 %v9186, %v9182
    %v9439 = vpack.c.b16 %v9187, %v9183
    %v9440 = vpack.c.b16 %v9188, %v9184
    %v9441 = vpack.c.b16 %v9193, %v9189
    %v9442 = vpack.c.b16 %v9194, %v9190
    %v9443 = vpack.c.b16 %v9195, %v9191
    %v9444 = vpack.c.b16 %v9196, %v9192
    %v9445 = vpack.c.b16 %v9201, %v9197
    %v9446 = vpack.c.b16 %v9202, %v9198
    %v9447 = vpack.c.b16 %v9203, %v9199
    %v9448 = vpack.c.b16 %v9204, %v9200
    %v9449 = vpack.c.b16 %v9209, %v9205
    %v9450 = vpack.c.b16 %v9210, %v9206
    %v9451 = vpack.c.b16 %v9211, %v9207
    %v9452 = vpack.c.b16 %v9212, %v9208
    %v9453 = vpack.c.b16 %v9217, %v9213
    %v9454 = vpack.c.b16 %v9218, %v9214
    %v9455 = vpack.c.b16 %v9219, %v9215
    %v9456 = vpack.c.b16 %v9220, %v9216
    %v9457 = vpack.c.b16 %v9225, %v9221
    %v9458 = vpack.c.b16 %v9226, %v9222
    %v9459 = vpack.c.b16 %v9227, %v9223
    %v9460 = vpack.c.b16 %v9228, %v9224
    %v9461 = vpack.c.b16 %v9233, %v9229
    %v9462 = vpack.c.b16 %v9234, %v9230
    %v9463 = vpack.c.b16 %v9235, %v9231
    %v9464 = vpack.c.b16 %v9236, %v9232
    %v9465 = vpack.c.b16 %v9241, %v9237
    %v9466 = vpack.c.b16 %v9242, %v9238
    %v9467 = vpack.c.b16 %v9243, %v9239
    %v9468 = vpack.c.b16 %v9244, %v9240
    %v9469 = vpack.c.b16 %v9249, %v9245
    %v9470 = vpack.c.b16 %v9250, %v9246
    %v9471 = vpack.c.b16 %v9251, %v9247
    %v9472 = vpack.c.b16 %v9252, %v9248
    %v9473 = vpack.c.b16 %v9257, %v9253
    %v9474 = vpack.c.b16 %v9258, %v9254
    %v9475 = vpack.c.b16 %v9259, %v9255
    %v9476 = vpack.c.b16 %v9260, %v9256
    %v9477 = vpack.c.b16 %v9265, %v9261
    %v9478 = vpack.c.b16 %v9266, %v9262
    %v9479 = vpack.c.b16 %v9267, %v9263
    %v9480 = vpack.c.b16 %v9268, %v9264
    %v9481 = vpack.c.b16 %v9273, %v9269
    %v9482 = vpack.c.b16 %v9274, %v9270
    %v9483 = vpack.c.b16 %v9275, %v9271
    %v9484 = vpack.c.b16 %v9276, %v9272
    %v9485 = vpack.c.b16 %v9281, %v9277
    %v9486 = vpack.c.b16 %v9282, %v9278
    %v9487 = vpack.c.b16 %v9283, %v9279
    %v9488 = vpack.c.b16 %v9284, %v9280
    %v9489 = vpack.c.b16 %v9289, %v9285
    %v9490 = vpack.c.b16 %v9290, %v9286
    %v9491 = vpack.c.b16 %v9291, %v9287
    %v9492 = vpack.c.b16 %v9292, %v9288
    %v9493 = vpack.c.b16 %v9297, %v9293
    %v9494 = vpack.c.b16 %v9298, %v9294
    %v9495 = vpack.c.b16 %v9299, %v9295
    %v9496 = vpack.c.b16 %v9300, %v9296
    %v9497 = vpack.c.b16 %v9305, %v9301
    %v9498 = vpack.c.b16 %v9306, %v9302
    %v9499 = vpack.c.b16 %v9307, %v9303
    %v9500 = vpack.c.b16 %v9308, %v9304
    %v9501 = vpack.c.b16 %v9313, %v9309
    %v9502 = vpack.c.b16 %v9314, %v9310
    %v9503 = vpack.c.b16 %v9315, %v9311
    %v9504 = vpack.c.b16 %v9316, %v9312
    %v9505 = vpack.c.b16 %v9321, %v9317
    %v9506 = vpack.c.b16 %v9322, %v9318
    %v9507 = vpack.c.b16 %v9323, %v9319
    %v9508 = vpack.c.b16 %v9324, %v9320
    %v9509 = vpack.c.b16 %v9329, %v9325
    %v9510 = vpack.c.b16 %v9330, %v9326
    %v9511 = vpack.c.b16 %v9331, %v9327
    %v9512 = vpack.c.b16 %v9332, %v9328
    %v9513 = vpack.c.b16 %v9337, %v9333
    %v9514 = vpack.c.b16 %v9338, %v9334
    %v9515 = vpack.c.b16 %v9339, %v9335
    %v9516 = vpack.c.b16 %v9340, %v9336
    %v9517 = vpack.c.b16 %v9345, %v9341
    %v9518 = vpack.c.b16 %v9346, %v9342
    %v9519 = vpack.c.b16 %v9347, %v9343
    %v9520 = vpack.c.b16 %v9348, %v9344
    %v9521 = vpack.c.b16 %v9353, %v9349
    %v9522 = vpack.c.b16 %v9354, %v9350
    %v9523 = vpack.c.b16 %v9355, %v9351
    %v9524 = vpack.c.b16 %v9356, %v9352
    %v9525 = vpack.c.b16 %v9361, %v9357
    %v9526 = vpack.c.b16 %v9362, %v9358
    %v9527 = vpack.c.b16 %v9363, %v9359
    %v9528 = vpack.c.b16 %v9364, %v9360
    %v9529 = vpack.c.b16 %v9369, %v9365
    %v9530 = vpack.c.b16 %v9370, %v9366
    %v9531 = vpack.c.b16 %v9371, %v9367
    %v9532 = vpack.c.b16 %v9372, %v9368
    %v9533 = vpack.c.b16 %v9377, %v9373
    %v9534 = vpack.c.b16 %v9378, %v9374
    %v9535 = vpack.c.b16 %v9379, %v9375
    %v9536 = vpack.c.b16 %v9380, %v9376
    %v9537 = vpack.c.b16 %v9385, %v9381
    %v9538 = vpack.c.b16 %v9386, %v9382
    %v9539 = vpack.c.b16 %v9387, %v9383
    %v9540 = vpack.c.b16 %v9388, %v9384
    %v9541 = vpack.c.b16 %v9393, %v9389
    %v9542 = vpack.c.b16 %v9394, %v9390
    %v9543 = vpack.c.b16 %v9395, %v9391
    %v9544 = vpack.c.b16 %v9396, %v9392
    %v9545 = vpack.c.b16 %v9401, %v9397
    %v9546 = vpack.c.b16 %v9402, %v9398
    %v9547 = vpack.c.b16 %v9403, %v9399
    %v9548 = vpack.c.b16 %v9404, %v9400
    %v9549 = vpack.c.b16 %v9409, %v9405
    %v9550 = vpack.c.b16 %v9410, %v9406
    %v9551 = vpack.c.b16 %v9411, %v9407
    %v9552 = vpack.c.b16 %v9412, %v9408
    %v9553 = vpack.c.b16 %v9417, %v9413
    %v9554 = vpack.c.b16 %v9418, %v9414
    %v9555 = vpack.c.b16 %v9419, %v9415
    %v9556 = vpack.c.b16 %v9420, %v9416
    %v9557 = vpack.c.b16 %v9425, %v9421
    %v9558 = vpack.c.b16 %v9426, %v9422
    %v9559 = vpack.c.b16 %v9427, %v9423
    %v9560 = vpack.c.b16 %v9428, %v9424
    %v9561 = vpack.c.b16 %v9433, %v9429
    %v9562 = vpack.c.b16 %v9434, %v9430
    %v9563 = vpack.c.b16 %v9435, %v9431
    %v9564 = vpack.c.b16 %v9436, %v9432
    %9693 = vmatprep.subr.bf16.mxu0 %v9466
    %9694 = vmatpush1.bf16.msra.mxu0 %v9465
    %9695 = vmatprep.subr.bf16.mxu0 %v9462
    %9696 = vmatpush1.bf16.msra.mxu0 %v9461
    %9697 = vmatprep.subr.bf16.mxu0 %v9458
    %9698 = vmatpush1.bf16.msra.mxu0 %v9457
    %9699 = vmatprep.subr.bf16.mxu0 %v9454
    %9700 = vmatpush1.bf16.msra.mxu0 %v9453
    %9701 = vmatprep.subr.bf16.mxu0 %v9450
    %9702 = vmatpush1.bf16.msra.mxu0 %v9449
    %9703 = vmatprep.subr.bf16.mxu0 %v9446
    %9704 = vmatpush1.bf16.msra.mxu0 %v9445
    %9705 = vmatprep.subr.bf16.mxu0 %v9442
    %9706 = vmatpush1.bf16.msra.mxu0 %v9441
    %9707 = vmatprep.subr.bf16.mxu0 %v9438
    %9708 = vmatpush1.bf16.msra.mxu0 %v9437
    %9709 = vmatprep.subr.bf16.mxu0 %v9498
    %9710 = vmatpush2.bf16.msra.mxu0 %v9497
    %9711 = vmatprep.subr.bf16.mxu0 %v9494
    %9712 = vmatpush2.bf16.msra.mxu0 %v9493
    %9713 = vmatprep.subr.bf16.mxu0 %v9490
    %9714 = vmatpush2.bf16.msra.mxu0 %v9489
    %9715 = vmatprep.subr.bf16.mxu0 %v9486
    %9716 = vmatpush2.bf16.msra.mxu0 %v9485
    %9717 = vmatprep.subr.bf16.mxu0 %v9482
    %9718 = vmatpush2.bf16.msra.mxu0 %v9481
    %9719 = vmatprep.subr.bf16.mxu0 %v9478
    %9720 = vmatpush2.bf16.msra.mxu0 %v9477
    %9721 = vmatprep.subr.bf16.mxu0 %v9474
    %9722 = vmatpush2.bf16.msra.mxu0 %v9473
    %9723 = vmatprep.subr.bf16.mxu0 %v9470
    %9724 = vmatpush2.bf16.msra.mxu0 %v9469
    %9725 = vmatprep.mubr.bf16.mxu0 %v8895
    %9726 = vmatmul.mubr.bf16.gmra.mxu0 %v8894
    %v9727 = vpop.f32.mrf.mxu0
    %v9728 = vadd.f32 %v9036, %v9727
    %v9729 = vpop.f32.mrf.mxu0
    %v9730 = vadd.f32 %v9040, %v9729
    %v9731 = vpop.f32.mrf.mxu0
    %v9732 = vpop.f32.mrf.mxu0
    %9733 = vdwg.mxu0
    %9734 = vmatprep.subr.bf16.mxu0 %v9530
    %9735 = vmatpush1.bf16.msra.mxu0 %v9529
    %9736 = vmatprep.subr.bf16.mxu0 %v9526
    %9737 = vmatpush1.bf16.msra.mxu0 %v9525
    %9738 = vmatprep.subr.bf16.mxu0 %v9522
    %9739 = vmatpush1.bf16.msra.mxu0 %v9521
    %9740 = vmatprep.subr.bf16.mxu0 %v9518
    %9741 = vmatpush1.bf16.msra.mxu0 %v9517
    %9742 = vmatprep.subr.bf16.mxu0 %v9514
    %9743 = vmatpush1.bf16.msra.mxu0 %v9513
    %9744 = vmatprep.subr.bf16.mxu0 %v9510
    %9745 = vmatpush1.bf16.msra.mxu0 %v9509
    %9746 = vmatprep.subr.bf16.mxu0 %v9506
    %9747 = vmatpush1.bf16.msra.mxu0 %v9505
    %9748 = vmatprep.subr.bf16.mxu0 %v9502
    %9749 = vmatpush1.bf16.msra.mxu0 %v9501
    %9750 = vmatprep.subr.bf16.mxu0 %v9562
    %9751 = vmatpush2.bf16.msra.mxu0 %v9561
    %9752 = vmatprep.subr.bf16.mxu0 %v9558
    %9753 = vmatpush2.bf16.msra.mxu0 %v9557
    %9754 = vmatprep.subr.bf16.mxu0 %v9554
    %9755 = vmatpush2.bf16.msra.mxu0 %v9553
    %9756 = vmatprep.subr.bf16.mxu0 %v9550
    %9757 = vmatpush2.bf16.msra.mxu0 %v9549
    %9758 = vmatprep.subr.bf16.mxu0 %v9546
    %9759 = vmatpush2.bf16.msra.mxu0 %v9545
    %9760 = vmatprep.subr.bf16.mxu0 %v9542
    %9761 = vmatpush2.bf16.msra.mxu0 %v9541
    %9762 = vmatprep.subr.bf16.mxu0 %v9538
    %9763 = vmatpush2.bf16.msra.mxu0 %v9537
    %9764 = vmatprep.subr.bf16.mxu0 %v9534
    %9765 = vmatpush2.bf16.msra.mxu0 %v9533
    %9766 = vmatprep.mubr.bf16.mxu0 %v8897
    %9767 = vmatmul.mubr.bf16.gmra.mxu0 %v8896
    %v9768 = vpop.f32.mrf.mxu0
    %v9769 = vadd.f32 %v9728, %v9768
    %v9770 = vpop.f32.mrf.mxu0
    %v9771 = vadd.f32 %v9730, %v9770
    %v9772 = vpop.f32.mrf.mxu0
    %v9773 = vpop.f32.mrf.mxu0
    %9774 = vdwg.mxu0
    %9775 = vmatprep.subr.bf16.mxu0 %v9468
    %9776 = vmatpush1.bf16.msra.mxu0 %v9467
    %9777 = vmatprep.subr.bf16.mxu0 %v9464
    %9778 = vmatpush1.bf16.msra.mxu0 %v9463
    %9779 = vmatprep.subr.bf16.mxu0 %v9460
    %9780 = vmatpush1.bf16.msra.mxu0 %v9459
    %9781 = vmatprep.subr.bf16.mxu0 %v9456
    %9782 = vmatpush1.bf16.msra.mxu0 %v9455
    %9783 = vmatprep.subr.bf16.mxu0 %v9452
    %9784 = vmatpush1.bf16.msra.mxu0 %v9451
    %9785 = vmatprep.subr.bf16.mxu0 %v9448
    %9786 = vmatpush1.bf16.msra.mxu0 %v9447
    %9787 = vmatprep.subr.bf16.mxu0 %v9444
    %9788 = vmatpush1.bf16.msra.mxu0 %v9443
    %9789 = vmatprep.subr.bf16.mxu0 %v9440
    %9790 = vmatpush1.bf16.msra.mxu0 %v9439
    %9791 = vmatprep.subr.bf16.mxu0 %v9500
    %9792 = vmatpush2.bf16.msra.mxu0 %v9499
    %9793 = vmatprep.subr.bf16.mxu0 %v9496
    %9794 = vmatpush2.bf16.msra.mxu0 %v9495
    %9795 = vmatprep.subr.bf16.mxu0 %v9492
    %9796 = vmatpush2.bf16.msra.mxu0 %v9491
    %9797 = vmatprep.subr.bf16.mxu0 %v9488
    %9798 = vmatpush2.bf16.msra.mxu0 %v9487
    %9799 = vmatprep.subr.bf16.mxu0 %v9484
    %9800 = vmatpush2.bf16.msra.mxu0 %v9483
    %9801 = vmatprep.subr.bf16.mxu0 %v9480
    %9802 = vmatpush2.bf16.msra.mxu0 %v9479
    %9803 = vmatprep.subr.bf16.mxu0 %v9476
    %9804 = vmatpush2.bf16.msra.mxu0 %v9475
    %9805 = vmatprep.subr.bf16.mxu0 %v9472
    %9806 = vmatpush2.bf16.msra.mxu0 %v9471
    %9807 = vmatprep.mubr.bf16.mxu0 %v8895
    %9808 = vmatmul.mubr.bf16.gmra.mxu0 %v8894
    %v9809 = vpop.f32.mrf.mxu0
    %v9810 = vadd.f32 %v9044, %v9809
    %v9811 = vpop.f32.mrf.mxu0
    %v9812 = vadd.f32 %v9048, %v9811
    %v9813 = vpop.f32.mrf.mxu0
    %v9814 = vpop.f32.mrf.mxu0
    %9815 = vdwg.mxu0
    %9816 = vmatprep.subr.bf16.mxu0 %v9532
    %9817 = vmatpush1.bf16.msra.mxu0 %v9531
    %9818 = vmatprep.subr.bf16.mxu0 %v9528
    %9819 = vmatpush1.bf16.msra.mxu0 %v9527
    %9820 = vmatprep.subr.bf16.mxu0 %v9524
    %9821 = vmatpush1.bf16.msra.mxu0 %v9523
    %9822 = vmatprep.subr.bf16.mxu0 %v9520
    %9823 = vmatpush1.bf16.msra.mxu0 %v9519
    %9824 = vmatprep.subr.bf16.mxu0 %v9516
    %9825 = vmatpush1.bf16.msra.mxu0 %v9515
    %9826 = vmatprep.subr.bf16.mxu0 %v9512
    %9827 = vmatpush1.bf16.msra.mxu0 %v9511
    %9828 = vmatprep.subr.bf16.mxu0 %v9508
    %9829 = vmatpush1.bf16.msra.mxu0 %v9507
    %9830 = vmatprep.subr.bf16.mxu0 %v9504
    %9831 = vmatpush1.bf16.msra.mxu0 %v9503
    %9832 = vmatprep.subr.bf16.mxu0 %v9564
    %9833 = vmatpush2.bf16.msra.mxu0 %v9563
    %9834 = vmatprep.subr.bf16.mxu0 %v9560
    %9835 = vmatpush2.bf16.msra.mxu0 %v9559
    %9836 = vmatprep.subr.bf16.mxu0 %v9556
    %9837 = vmatpush2.bf16.msra.mxu0 %v9555
    %9838 = vmatprep.subr.bf16.mxu0 %v9552
    %9839 = vmatpush2.bf16.msra.mxu0 %v9551
    %9840 = vmatprep.subr.bf16.mxu0 %v9548
    %9841 = vmatpush2.bf16.msra.mxu0 %v9547
    %9842 = vmatprep.subr.bf16.mxu0 %v9544
    %9843 = vmatpush2.bf16.msra.mxu0 %v9543
    %9844 = vmatprep.subr.bf16.mxu0 %v9540
    %9845 = vmatpush2.bf16.msra.mxu0 %v9539
    %9846 = vmatprep.subr.bf16.mxu0 %v9536
    %9847 = vmatpush2.bf16.msra.mxu0 %v9535
    %9848 = vmatprep.mubr.bf16.mxu0 %v8897
    %9849 = vmatmul.mubr.bf16.gmra.mxu0 %v8896
    %v9850 = vpop.f32.mrf.mxu0
    %v9851 = vadd.f32 %v9810, %v9850
    %v9852 = vpop.f32.mrf.mxu0
    %v9853 = vadd.f32 %v9812, %v9852
    %v9854 = vpop.f32.mrf.mxu0
    %v9855 = vpop.f32.mrf.mxu0
    %9856 = vdwg.mxu0
    %v9857 = vmax.f32 %v9769, 0.0
    %v9858 = vmax.f32 %v9771, 0.0
    %v9859 = vmax.f32 %v9851, 0.0
    %v9860 = vmax.f32 %v9853, 0.0
    %v9861 = vrot.slane %v9857, 4
    %v9862 = vadd.f32 %v9857, %v9861
    %v9863 = vrot.slane %v9862, 2
    %v9864 = vadd.f32 %v9862, %v9863
    %v9865 = vrot.slane %v9864, 1
    %v9866 = vadd.f32 %v9864, %v9865
    %v9867 = vrot.slane %v9858, 4
    %v9868 = vadd.f32 %v9858, %v9867
    %v9869 = vrot.slane %v9868, 2
    %v9870 = vadd.f32 %v9868, %v9869
    %v9871 = vrot.slane %v9870, 1
    %v9872 = vadd.f32 %v9870, %v9871
    %v9873 = vrot.slane %v9859, 4
    %v9874 = vadd.f32 %v9859, %v9873
    %v9875 = vrot.slane %v9874, 2
    %v9876 = vadd.f32 %v9874, %v9875
    %v9877 = vrot.slane %v9876, 1
    %v9878 = vadd.f32 %v9876, %v9877
    %v9879 = vrot.slane %v9860, 4
    %v9880 = vadd.f32 %v9860, %v9879
    %v9881 = vrot.slane %v9880, 2
    %v9882 = vadd.f32 %v9880, %v9881
    %v9883 = vrot.slane %v9882, 1
    %v9884 = vadd.f32 %v9882, %v9883
    %v9885 = vmul.f32 %v9866, 0.125
    %v9886 = vmul.f32 %v9872, 0.125
    %v9887 = vmul.f32 %v9878, 0.125
    %v9888 = vmul.f32 %v9884, 0.125
    %v9889 = vmul.f32 %v9857, %v9857
    %v9890 = vmul.f32 %v9858, %v9858
    %v9891 = vmul.f32 %v9859, %v9859
    %v9892 = vmul.f32 %v9860, %v9860
    %v9893 = vrot.slane %v9889, 4
    %v9894 = vadd.f32 %v9889, %v9893
    %v9895 = vrot.slane %v9894, 2
    %v9896 = vadd.f32 %v9894, %v9895
    %v9897 = vrot.slane %v9896, 1
    %v9898 = vadd.f32 %v9896, %v9897
    %v9899 = vrot.slane %v9890, 4
    %v9900 = vadd.f32 %v9890, %v9899
    %v9901 = vrot.slane %v9900, 2
    %v9902 = vadd.f32 %v9900, %v9901
    %v9903 = vrot.slane %v9902, 1
    %v9904 = vadd.f32 %v9902, %v9903
    %v9905 = vrot.slane %v9891, 4
    %v9906 = vadd.f32 %v9891, %v9905
    %v9907 = vrot.slane %v9906, 2
    %v9908 = vadd.f32 %v9906, %v9907
    %v9909 = vrot.slane %v9908, 1
    %v9910 = vadd.f32 %v9908, %v9909
    %v9911 = vrot.slane %v9892, 4
    %v9912 = vadd.f32 %v9892, %v9911
    %v9913 = vrot.slane %v9912, 2
    %v9914 = vadd.f32 %v9912, %v9913
    %v9915 = vrot.slane %v9914, 1
    %v9916 = vadd.f32 %v9914, %v9915
    %v9917 = vmul.f32 %v9898, 0.125
    %v9918 = vmul.f32 %v9904, 0.125
    %v9919 = vmul.f32 %v9910, 0.125
    %v9920 = vmul.f32 %v9916, 0.125
    %v9921 = vmul.f32 %v9885, %v9885
    %v9922 = vmul.f32 %v9886, %v9886
    %v9923 = vmul.f32 %v9887, %v9887
    %v9924 = vmul.f32 %v9888, %v9888
    %v9925 = vsub.f32 %v9917, %v9921
    %v9926 = vsub.f32 %v9918, %v9922
    %v9927 = vsub.f32 %v9919, %v9923
    %v9928 = vsub.f32 %v9920, %v9924
    %v9929 = vadd.f32 %v9925, 1e-05
    %v9930 = vadd.f32 %v9926, 1e-05
    %v9931 = vadd.f32 %v9927, 1e-05
    %v9932 = vadd.f32 %v9928, 1e-05
    %v9933 = vrsqrt.pop %v9929
    %v9934 = vrsqrt.pop %v9930
    %v9935 = vrsqrt.pop %v9931
    %v9936 = vrsqrt.pop %v9932
    %v9941 = vcombine.low %v9933, %v9934
    %v9942 = vcombine.low %v9935, %v9936
    %v9944 = vunpack.c.l.s4 1966171168
    %v9945 = vunpack.c.0.s8 %v9944
    %v9946 = vlaneseq
    %v9947 = vshrl.u32 %v9946, 7
    %v9948 = vsub.s32 %v9945, %v9947
    %v9949 = vrot.slane %v9941, %v9948
    %v9951 = vunpack.c.l.s4 1966171168
    %v9952 = vunpack.c.0.s8 %v9951
    %v9953 = vlaneseq
    %v9954 = vshrl.u32 %v9953, 7
    %v9955 = vsub.s32 %v9952, %v9954
    %v9956 = vrot.slane %v9942, %v9955
    %v9957 = vcombine.low %v9949, %v9956
    %v9959 = vunpack.c.l.s4 1966171168
    %v9960 = vunpack.c.0.s8 %v9959
    %v9961 = vlaneseq
    %v9962 = vshrl.u32 %v9961, 7
    %v9963 = vsub.s32 %v9960, %v9962
    %v9964 = vrot.slane %v9957, %v9963
    %v9966 = vmul.f32 %v9029, %v9964
    %v9968 = vlaneseq
    %v9969 = vshrl.u32 %v9968, 7
    %v9970 = vsub.s32 0, %v9969
    %v9971 = vrot.slane %v9966, %v9970
    %v9972 = vlaneseq
    %v9973 = vshrl.u32 %v9972, 7
    %v9974 = vsub.s32 1, %v9973
    %v9975 = vrot.slane %v9966, %v9974
    %v9976 = vlaneseq
    %v9977 = vshrl.u32 %v9976, 7
    %v9978 = vsub.s32 2, %v9977
    %v9979 = vrot.slane %v9966, %v9978
    %v9980 = vlaneseq
    %v9981 = vshrl.u32 %v9980, 7
    %v9982 = vsub.s32 3, %v9981
    %v9983 = vrot.slane %v9966, %v9982
    %v9988 = vmul.f32 %v9885, %v9971
    %v9989 = vmul.f32 %v9886, %v9975
    %v9990 = vmul.f32 %v9887, %v9979
    %v9991 = vmul.f32 %v9888, %v9983
    %v9996 = vcombine.low %v9988, %v9989
    %v9997 = vcombine.low %v9990, %v9991
    %v9999 = vunpack.c.l.s4 1966171168
    %v10000 = vunpack.c.0.s8 %v9999
    %v10001 = vlaneseq
    %v10002 = vshrl.u32 %v10001, 7
    %v10003 = vsub.s32 %v10000, %v10002
    %v10004 = vrot.slane %v9996, %v10003
    %v10006 = vunpack.c.l.s4 1966171168
    %v10007 = vunpack.c.0.s8 %v10006
    %v10008 = vlaneseq
    %v10009 = vshrl.u32 %v10008, 7
    %v10010 = vsub.s32 %v10007, %v10009
    %v10011 = vrot.slane %v9997, %v10010
    %v10012 = vcombine.low %v10004, %v10011
    %v10014 = vunpack.c.l.s4 1966171168
    %v10015 = vunpack.c.0.s8 %v10014
    %v10016 = vlaneseq
    %v10017 = vshrl.u32 %v10016, 7
    %v10018 = vsub.s32 %v10015, %v10017
    %v10019 = vrot.slane %v10012, %v10018
    %v10021 = vsub.f32 %v9031, %v10019
    %v10022 = vmul.f32 %v9857, %v9971
    %v10023 = vmul.f32 %v9858, %v9975
    %v10024 = vmul.f32 %v9859, %v9979
    %v10025 = vmul.f32 %v9860, %v9983
    %v10027 = vlaneseq
    %v10028 = vshrl.u32 %v10027, 7
    %v10029 = vsub.s32 0, %v10028
    %v10030 = vrot.slane %v10021, %v10029
    %v10031 = vlaneseq
    %v10032 = vshrl.u32 %v10031, 7
    %v10033 = vsub.s32 1, %v10032
    %v10034 = vrot.slane %v10021, %v10033
    %v10035 = vlaneseq
    %v10036 = vshrl.u32 %v10035, 7
    %v10037 = vsub.s32 2, %v10036
    %v10038 = vrot.slane %v10021, %v10037
    %v10039 = vlaneseq
    %v10040 = vshrl.u32 %v10039, 7
    %v10041 = vsub.s32 3, %v10040
    %v10042 = vrot.slane %v10021, %v10041
    %v10047 = vadd.f32 %v10022, %v10030
    %v10048 = vadd.f32 %v10023, %v10034
    %v10049 = vadd.f32 %v10024, %v10038
    %v10050 = vadd.f32 %v10025, %v10042
    %s10051 = sshll.u32 %s44, 4
    %10052 = dma.done %s8882, %s10051
    %s10053 = scalar_lea.sflag [#allocation8], 6
    // Predicated region
    $region68: #{_lambda_.1} parent=1 // pred_check
      _
    $region69: #{_lambda_.1} parent=1 // pred_check_branch
      %10055 = sbr.rel target = $region71
    $region70: #{_lambda_.1} parent=1 // pred_region
      %10056 = sst [smem:[#allocation15]] [#allocation27]
      %10057 = sst [smem:[#allocation16]] [#allocation26]
    $region71: #{_lambda_.1} parent=1 // pred_fallthru
      _
    %10059 = shalt.err (0)
    %s10061 = sshll.u32 [#allocation7], 4
    %s10062 = int_to_ptr.vmem [resolvable:$true] %s10061
    %10064 = dma.hbm_to_vmem [thread:$0]  %s7, 8192, %s10062, %s10053
    %v10065 = vpack.c.bf16 %v10047, %v10047
    %v10066 = vpack.c.bf16 %v10048, %v10048
    %v10067 = vpack.c.bf16 %v10049, %v10049
    %v10068 = vpack.c.bf16 %v10050, %v10050
    %v10069 = vld [vmem:[#allocation6] sm:$0xff]
    %v10070 = vld [vmem:[#allocation6 + $0x8] sm:$0xff]
    %v10071 = vld [vmem:[#allocation6 + $0x10] sm:$0xff]
    %v10072 = vld [vmem:[#allocation6 + $0x18] sm:$0xff]
    %v10073 = vld [vmem:[#allocation6 + $0x20] sm:$0xff]
    %v10074 = vld [vmem:[#allocation6 + $0x28] sm:$0xff]
    %v10075 = vld [vmem:[#allocation6 + $0x30] sm:$0xff]
    %v10076 = vld [vmem:[#allocation6 + $0x38] sm:$0xff]
    %v10077 = vld [vmem:[#allocation6 + $0x40] sm:$0xff]
    %v10078 = vld [vmem:[#allocation6 + $0x48] sm:$0xff]
    %v10079 = vld [vmem:[#allocation6 + $0x50] sm:$0xff]
    %v10080 = vld [vmem:[#allocation6 + $0x58] sm:$0xff]
    %v10081 = vld [vmem:[#allocation6 + $0x60] sm:$0xff]
    %v10082 = vld [vmem:[#allocation6 + $0x68] sm:$0xff]
    %v10083 = vld [vmem:[#allocation6 + $0x70] sm:$0xff]
    %v10084 = vld [vmem:[#allocation6 + $0x78] sm:$0xff]
    %v10085 = vld [vmem:[#allocation6 + $0x80] sm:$0xff]
    %v10086 = vld [vmem:[#allocation6 + $0x88] sm:$0xff]
    %v10087 = vld [vmem:[#allocation6 + $0x90] sm:$0xff]
    %v10088 = vld [vmem:[#allocation6 + $0x98] sm:$0xff]
    %v10089 = vld [vmem:[#allocation6 + $0xa0] sm:$0xff]
    %v10090 = vld [vmem:[#allocation6 + $0xa8] sm:$0xff]
    %v10091 = vld [vmem:[#allocation6 + $0xb0] sm:$0xff]
    %v10092 = vld [vmem:[#allocation6 + $0xb8] sm:$0xff]
    %v10093 = vld [vmem:[#allocation6 + $0xc0] sm:$0xff]
    %v10094 = vld [vmem:[#allocation6 + $0xc8] sm:$0xff]
    %v10095 = vld [vmem:[#allocation6 + $0xd0] sm:$0xff]
    %v10096 = vld [vmem:[#allocation6 + $0xd8] sm:$0xff]
    %v10097 = vld [vmem:[#allocation6 + $0xe0] sm:$0xff]
    %v10098 = vld [vmem:[#allocation6 + $0xe8] sm:$0xff]
    %v10099 = vld [vmem:[#allocation6 + $0xf0] sm:$0xff]
    %v10100 = vld [vmem:[#allocation6 + $0xf8] sm:$0xff]
    %v10101 = vld [vmem:[#allocation6 + $0x100] sm:$0xff]
    %v10102 = vld [vmem:[#allocation6 + $0x108] sm:$0xff]
    %v10103 = vld [vmem:[#allocation6 + $0x110] sm:$0xff]
    %v10104 = vld [vmem:[#allocation6 + $0x118] sm:$0xff]
    %v10105 = vld [vmem:[#allocation6 + $0x120] sm:$0xff]
    %v10106 = vld [vmem:[#allocation6 + $0x128] sm:$0xff]
    %v10107 = vld [vmem:[#allocation6 + $0x130] sm:$0xff]
    %v10108 = vld [vmem:[#allocation6 + $0x138] sm:$0xff]
    %v10109 = vld [vmem:[#allocation6 + $0x140] sm:$0xff]
    %v10110 = vld [vmem:[#allocation6 + $0x148] sm:$0xff]
    %v10111 = vld [vmem:[#allocation6 + $0x150] sm:$0xff]
    %v10112 = vld [vmem:[#allocation6 + $0x158] sm:$0xff]
    %v10113 = vld [vmem:[#allocation6 + $0x160] sm:$0xff]
    %v10114 = vld [vmem:[#allocation6 + $0x168] sm:$0xff]
    %v10115 = vld [vmem:[#allocation6 + $0x170] sm:$0xff]
    %v10116 = vld [vmem:[#allocation6 + $0x178] sm:$0xff]
    %v10117 = vld [vmem:[#allocation6 + $0x180] sm:$0xff]
    %v10118 = vld [vmem:[#allocation6 + $0x188] sm:$0xff]
    %v10119 = vld [vmem:[#allocation6 + $0x190] sm:$0xff]
    %v10120 = vld [vmem:[#allocation6 + $0x198] sm:$0xff]
    %v10121 = vld [vmem:[#allocation6 + $0x1a0] sm:$0xff]
    %v10122 = vld [vmem:[#allocation6 + $0x1a8] sm:$0xff]
    %v10123 = vld [vmem:[#allocation6 + $0x1b0] sm:$0xff]
    %v10124 = vld [vmem:[#allocation6 + $0x1b8] sm:$0xff]
    %v10125 = vld [vmem:[#allocation6 + $0x1c0] sm:$0xff]
    %v10126 = vld [vmem:[#allocation6 + $0x1c8] sm:$0xff]
    %v10127 = vld [vmem:[#allocation6 + $0x1d0] sm:$0xff]
    %v10128 = vld [vmem:[#allocation6 + $0x1d8] sm:$0xff]
    %v10129 = vld [vmem:[#allocation6 + $0x1e0] sm:$0xff]
    %v10130 = vld [vmem:[#allocation6 + $0x1e8] sm:$0xff]
    %v10131 = vld [vmem:[#allocation6 + $0x1f0] sm:$0xff]
    %v10132 = vld [vmem:[#allocation6 + $0x1f8] sm:$0xff]
    %v10133 = vld [vmem:[#allocation6 + $0x200] sm:$0xff]
    %v10134 = vld [vmem:[#allocation6 + $0x208] sm:$0xff]
    %v10135 = vld [vmem:[#allocation6 + $0x210] sm:$0xff]
    %v10136 = vld [vmem:[#allocation6 + $0x218] sm:$0xff]
    %v10137 = vld [vmem:[#allocation6 + $0x220] sm:$0xff]
    %v10138 = vld [vmem:[#allocation6 + $0x228] sm:$0xff]
    %v10139 = vld [vmem:[#allocation6 + $0x230] sm:$0xff]
    %v10140 = vld [vmem:[#allocation6 + $0x238] sm:$0xff]
    %v10141 = vld [vmem:[#allocation6 + $0x240] sm:$0xff]
    %v10142 = vld [vmem:[#allocation6 + $0x248] sm:$0xff]
    %v10143 = vld [vmem:[#allocation6 + $0x250] sm:$0xff]
    %v10144 = vld [vmem:[#allocation6 + $0x258] sm:$0xff]
    %v10145 = vld [vmem:[#allocation6 + $0x260] sm:$0xff]
    %v10146 = vld [vmem:[#allocation6 + $0x268] sm:$0xff]
    %v10147 = vld [vmem:[#allocation6 + $0x270] sm:$0xff]
    %v10148 = vld [vmem:[#allocation6 + $0x278] sm:$0xff]
    %v10149 = vld [vmem:[#allocation6 + $0x280] sm:$0xff]
    %v10150 = vld [vmem:[#allocation6 + $0x288] sm:$0xff]
    %v10151 = vld [vmem:[#allocation6 + $0x290] sm:$0xff]
    %v10152 = vld [vmem:[#allocation6 + $0x298] sm:$0xff]
    %v10153 = vld [vmem:[#allocation6 + $0x2a0] sm:$0xff]
    %v10154 = vld [vmem:[#allocation6 + $0x2a8] sm:$0xff]
    %v10155 = vld [vmem:[#allocation6 + $0x2b0] sm:$0xff]
    %v10156 = vld [vmem:[#allocation6 + $0x2b8] sm:$0xff]
    %v10157 = vld [vmem:[#allocation6 + $0x2c0] sm:$0xff]
    %v10158 = vld [vmem:[#allocation6 + $0x2c8] sm:$0xff]
    %v10159 = vld [vmem:[#allocation6 + $0x2d0] sm:$0xff]
    %v10160 = vld [vmem:[#allocation6 + $0x2d8] sm:$0xff]
    %v10161 = vld [vmem:[#allocation6 + $0x2e0] sm:$0xff]
    %v10162 = vld [vmem:[#allocation6 + $0x2e8] sm:$0xff]
    %v10163 = vld [vmem:[#allocation6 + $0x2f0] sm:$0xff]
    %v10164 = vld [vmem:[#allocation6 + $0x2f8] sm:$0xff]
    %v10165 = vld [vmem:[#allocation6 + $0x300] sm:$0xff]
    %v10166 = vld [vmem:[#allocation6 + $0x308] sm:$0xff]
    %v10167 = vld [vmem:[#allocation6 + $0x310] sm:$0xff]
    %v10168 = vld [vmem:[#allocation6 + $0x318] sm:$0xff]
    %v10169 = vld [vmem:[#allocation6 + $0x320] sm:$0xff]
    %v10170 = vld [vmem:[#allocation6 + $0x328] sm:$0xff]
    %v10171 = vld [vmem:[#allocation6 + $0x330] sm:$0xff]
    %v10172 = vld [vmem:[#allocation6 + $0x338] sm:$0xff]
    %v10173 = vld [vmem:[#allocation6 + $0x340] sm:$0xff]
    %v10174 = vld [vmem:[#allocation6 + $0x348] sm:$0xff]
    %v10175 = vld [vmem:[#allocation6 + $0x350] sm:$0xff]
    %v10176 = vld [vmem:[#allocation6 + $0x358] sm:$0xff]
    %v10177 = vld [vmem:[#allocation6 + $0x360] sm:$0xff]
    %v10178 = vld [vmem:[#allocation6 + $0x368] sm:$0xff]
    %v10179 = vld [vmem:[#allocation6 + $0x370] sm:$0xff]
    %v10180 = vld [vmem:[#allocation6 + $0x378] sm:$0xff]
    %v10181 = vld [vmem:[#allocation6 + $0x380] sm:$0xff]
    %v10182 = vld [vmem:[#allocation6 + $0x388] sm:$0xff]
    %v10183 = vld [vmem:[#allocation6 + $0x390] sm:$0xff]
    %v10184 = vld [vmem:[#allocation6 + $0x398] sm:$0xff]
    %v10185 = vld [vmem:[#allocation6 + $0x3a0] sm:$0xff]
    %v10186 = vld [vmem:[#allocation6 + $0x3a8] sm:$0xff]
    %v10187 = vld [vmem:[#allocation6 + $0x3b0] sm:$0xff]
    %v10188 = vld [vmem:[#allocation6 + $0x3b8] sm:$0xff]
    %v10189 = vld [vmem:[#allocation6 + $0x3c0] sm:$0xff]
    %v10190 = vld [vmem:[#allocation6 + $0x3c8] sm:$0xff]
    %v10191 = vld [vmem:[#allocation6 + $0x3d0] sm:$0xff]
    %v10192 = vld [vmem:[#allocation6 + $0x3d8] sm:$0xff]
    %v10193 = vld [vmem:[#allocation6 + $0x3e0] sm:$0xff]
    %v10194 = vld [vmem:[#allocation6 + $0x3e8] sm:$0xff]
    %v10195 = vld [vmem:[#allocation6 + $0x3f0] sm:$0xff]
    %v10196 = vld [vmem:[#allocation6 + $0x3f8] sm:$0xff]
    %s10197 = scalar_lea.vmem [#allocation9], 4
    %v10198 = vld [vmem:[%s10197] ss:$8 sm:$0xf]
    %s10199 = scalar_lea.vmem [#allocation9], 65
    %v10200 = vld [vmem:[%s10199] ss:$8 sm:$0xf]
    %s10201 = scalar_lea.vmem [#allocation9], 70
    %v10202 = vld [vmem:[%s10201] ss:$8 sm:$0xf]
    %v10204 = vlaneseq
    %v10205 = vshrl.u32 %v10204, 7
    %v10206 = vsub.s32 0, %v10205
    %v10207 = vrot.slane %v10198, %v10206
    %v10208 = vlaneseq
    %v10209 = vshrl.u32 %v10208, 7
    %v10210 = vsub.s32 1, %v10209
    %v10211 = vrot.slane %v10198, %v10210
    %v10212 = vlaneseq
    %v10213 = vshrl.u32 %v10212, 7
    %v10214 = vsub.s32 2, %v10213
    %v10215 = vrot.slane %v10198, %v10214
    %v10216 = vlaneseq
    %v10217 = vshrl.u32 %v10216, 7
    %v10218 = vsub.s32 3, %v10217
    %v10219 = vrot.slane %v10198, %v10218
    %v10352 = vunpack.c.l.b16 %v10069
    %v10353 = vunpack.c.h.b16 %v10069
    %v10354 = vunpack.c.l.b16 %v10070
    %v10355 = vunpack.c.h.b16 %v10070
    %v10356 = vunpack.c.l.b16 %v10071
    %v10357 = vunpack.c.h.b16 %v10071
    %v10358 = vunpack.c.l.b16 %v10072
    %v10359 = vunpack.c.h.b16 %v10072
    %v10360 = vunpack.c.l.b16 %v10073
    %v10361 = vunpack.c.h.b16 %v10073
    %v10362 = vunpack.c.l.b16 %v10074
    %v10363 = vunpack.c.h.b16 %v10074
    %v10364 = vunpack.c.l.b16 %v10075
    %v10365 = vunpack.c.h.b16 %v10075
    %v10366 = vunpack.c.l.b16 %v10076
    %v10367 = vunpack.c.h.b16 %v10076
    %v10368 = vunpack.c.l.b16 %v10077
    %v10369 = vunpack.c.h.b16 %v10077
    %v10370 = vunpack.c.l.b16 %v10078
    %v10371 = vunpack.c.h.b16 %v10078
    %v10372 = vunpack.c.l.b16 %v10079
    %v10373 = vunpack.c.h.b16 %v10079
    %v10374 = vunpack.c.l.b16 %v10080
    %v10375 = vunpack.c.h.b16 %v10080
    %v10376 = vunpack.c.l.b16 %v10081
    %v10377 = vunpack.c.h.b16 %v10081
    %v10378 = vunpack.c.l.b16 %v10082
    %v10379 = vunpack.c.h.b16 %v10082
    %v10380 = vunpack.c.l.b16 %v10083
    %v10381 = vunpack.c.h.b16 %v10083
    %v10382 = vunpack.c.l.b16 %v10084
    %v10383 = vunpack.c.h.b16 %v10084
    %v10384 = vunpack.c.l.b16 %v10085
    %v10385 = vunpack.c.h.b16 %v10085
    %v10386 = vunpack.c.l.b16 %v10086
    %v10387 = vunpack.c.h.b16 %v10086
    %v10388 = vunpack.c.l.b16 %v10087
    %v10389 = vunpack.c.h.b16 %v10087
    %v10390 = vunpack.c.l.b16 %v10088
    %v10391 = vunpack.c.h.b16 %v10088
    %v10392 = vunpack.c.l.b16 %v10089
    %v10393 = vunpack.c.h.b16 %v10089
    %v10394 = vunpack.c.l.b16 %v10090
    %v10395 = vunpack.c.h.b16 %v10090
    %v10396 = vunpack.c.l.b16 %v10091
    %v10397 = vunpack.c.h.b16 %v10091
    %v10398 = vunpack.c.l.b16 %v10092
    %v10399 = vunpack.c.h.b16 %v10092
    %v10400 = vunpack.c.l.b16 %v10093
    %v10401 = vunpack.c.h.b16 %v10093
    %v10402 = vunpack.c.l.b16 %v10094
    %v10403 = vunpack.c.h.b16 %v10094
    %v10404 = vunpack.c.l.b16 %v10095
    %v10405 = vunpack.c.h.b16 %v10095
    %v10406 = vunpack.c.l.b16 %v10096
    %v10407 = vunpack.c.h.b16 %v10096
    %v10408 = vunpack.c.l.b16 %v10097
    %v10409 = vunpack.c.h.b16 %v10097
    %v10410 = vunpack.c.l.b16 %v10098
    %v10411 = vunpack.c.h.b16 %v10098
    %v10412 = vunpack.c.l.b16 %v10099
    %v10413 = vunpack.c.h.b16 %v10099
    %v10414 = vunpack.c.l.b16 %v10100
    %v10415 = vunpack.c.h.b16 %v10100
    %v10416 = vunpack.c.l.b16 %v10101
    %v10417 = vunpack.c.h.b16 %v10101
    %v10418 = vunpack.c.l.b16 %v10102
    %v10419 = vunpack.c.h.b16 %v10102
    %v10420 = vunpack.c.l.b16 %v10103
    %v10421 = vunpack.c.h.b16 %v10103
    %v10422 = vunpack.c.l.b16 %v10104
    %v10423 = vunpack.c.h.b16 %v10104
    %v10424 = vunpack.c.l.b16 %v10105
    %v10425 = vunpack.c.h.b16 %v10105
    %v10426 = vunpack.c.l.b16 %v10106
    %v10427 = vunpack.c.h.b16 %v10106
    %v10428 = vunpack.c.l.b16 %v10107
    %v10429 = vunpack.c.h.b16 %v10107
    %v10430 = vunpack.c.l.b16 %v10108
    %v10431 = vunpack.c.h.b16 %v10108
    %v10432 = vunpack.c.l.b16 %v10109
    %v10433 = vunpack.c.h.b16 %v10109
    %v10434 = vunpack.c.l.b16 %v10110
    %v10435 = vunpack.c.h.b16 %v10110
    %v10436 = vunpack.c.l.b16 %v10111
    %v10437 = vunpack.c.h.b16 %v10111
    %v10438 = vunpack.c.l.b16 %v10112
    %v10439 = vunpack.c.h.b16 %v10112
    %v10440 = vunpack.c.l.b16 %v10113
    %v10441 = vunpack.c.h.b16 %v10113
    %v10442 = vunpack.c.l.b16 %v10114
    %v10443 = vunpack.c.h.b16 %v10114
    %v10444 = vunpack.c.l.b16 %v10115
    %v10445 = vunpack.c.h.b16 %v10115
    %v10446 = vunpack.c.l.b16 %v10116
    %v10447 = vunpack.c.h.b16 %v10116
    %v10448 = vunpack.c.l.b16 %v10117
    %v10449 = vunpack.c.h.b16 %v10117
    %v10450 = vunpack.c.l.b16 %v10118
    %v10451 = vunpack.c.h.b16 %v10118
    %v10452 = vunpack.c.l.b16 %v10119
    %v10453 = vunpack.c.h.b16 %v10119
    %v10454 = vunpack.c.l.b16 %v10120
    %v10455 = vunpack.c.h.b16 %v10120
    %v10456 = vunpack.c.l.b16 %v10121
    %v10457 = vunpack.c.h.b16 %v10121
    %v10458 = vunpack.c.l.b16 %v10122
    %v10459 = vunpack.c.h.b16 %v10122
    %v10460 = vunpack.c.l.b16 %v10123
    %v10461 = vunpack.c.h.b16 %v10123
    %v10462 = vunpack.c.l.b16 %v10124
    %v10463 = vunpack.c.h.b16 %v10124
    %v10464 = vunpack.c.l.b16 %v10125
    %v10465 = vunpack.c.h.b16 %v10125
    %v10466 = vunpack.c.l.b16 %v10126
    %v10467 = vunpack.c.h.b16 %v10126
    %v10468 = vunpack.c.l.b16 %v10127
    %v10469 = vunpack.c.h.b16 %v10127
    %v10470 = vunpack.c.l.b16 %v10128
    %v10471 = vunpack.c.h.b16 %v10128
    %v10472 = vunpack.c.l.b16 %v10129
    %v10473 = vunpack.c.h.b16 %v10129
    %v10474 = vunpack.c.l.b16 %v10130
    %v10475 = vunpack.c.h.b16 %v10130
    %v10476 = vunpack.c.l.b16 %v10131
    %v10477 = vunpack.c.h.b16 %v10131
    %v10478 = vunpack.c.l.b16 %v10132
    %v10479 = vunpack.c.h.b16 %v10132
    %v10480 = vunpack.c.l.b16 %v10133
    %v10481 = vunpack.c.h.b16 %v10133
    %v10482 = vunpack.c.l.b16 %v10134
    %v10483 = vunpack.c.h.b16 %v10134
    %v10484 = vunpack.c.l.b16 %v10135
    %v10485 = vunpack.c.h.b16 %v10135
    %v10486 = vunpack.c.l.b16 %v10136
    %v10487 = vunpack.c.h.b16 %v10136
    %v10488 = vunpack.c.l.b16 %v10137
    %v10489 = vunpack.c.h.b16 %v10137
    %v10490 = vunpack.c.l.b16 %v10138
    %v10491 = vunpack.c.h.b16 %v10138
    %v10492 = vunpack.c.l.b16 %v10139
    %v10493 = vunpack.c.h.b16 %v10139
    %v10494 = vunpack.c.l.b16 %v10140
    %v10495 = vunpack.c.h.b16 %v10140
    %v10496 = vunpack.c.l.b16 %v10141
    %v10497 = vunpack.c.h.b16 %v10141
    %v10498 = vunpack.c.l.b16 %v10142
    %v10499 = vunpack.c.h.b16 %v10142
    %v10500 = vunpack.c.l.b16 %v10143
    %v10501 = vunpack.c.h.b16 %v10143
    %v10502 = vunpack.c.l.b16 %v10144
    %v10503 = vunpack.c.h.b16 %v10144
    %v10504 = vunpack.c.l.b16 %v10145
    %v10505 = vunpack.c.h.b16 %v10145
    %v10506 = vunpack.c.l.b16 %v10146
    %v10507 = vunpack.c.h.b16 %v10146
    %v10508 = vunpack.c.l.b16 %v10147
    %v10509 = vunpack.c.h.b16 %v10147
    %v10510 = vunpack.c.l.b16 %v10148
    %v10511 = vunpack.c.h.b16 %v10148
    %v10512 = vunpack.c.l.b16 %v10149
    %v10513 = vunpack.c.h.b16 %v10149
    %v10514 = vunpack.c.l.b16 %v10150
    %v10515 = vunpack.c.h.b16 %v10150
    %v10516 = vunpack.c.l.b16 %v10151
    %v10517 = vunpack.c.h.b16 %v10151
    %v10518 = vunpack.c.l.b16 %v10152
    %v10519 = vunpack.c.h.b16 %v10152
    %v10520 = vunpack.c.l.b16 %v10153
    %v10521 = vunpack.c.h.b16 %v10153
    %v10522 = vunpack.c.l.b16 %v10154
    %v10523 = vunpack.c.h.b16 %v10154
    %v10524 = vunpack.c.l.b16 %v10155
    %v10525 = vunpack.c.h.b16 %v10155
    %v10526 = vunpack.c.l.b16 %v10156
    %v10527 = vunpack.c.h.b16 %v10156
    %v10528 = vunpack.c.l.b16 %v10157
    %v10529 = vunpack.c.h.b16 %v10157
    %v10530 = vunpack.c.l.b16 %v10158
    %v10531 = vunpack.c.h.b16 %v10158
    %v10532 = vunpack.c.l.b16 %v10159
    %v10533 = vunpack.c.h.b16 %v10159
    %v10534 = vunpack.c.l.b16 %v10160
    %v10535 = vunpack.c.h.b16 %v10160
    %v10536 = vunpack.c.l.b16 %v10161
    %v10537 = vunpack.c.h.b16 %v10161
    %v10538 = vunpack.c.l.b16 %v10162
    %v10539 = vunpack.c.h.b16 %v10162
    %v10540 = vunpack.c.l.b16 %v10163
    %v10541 = vunpack.c.h.b16 %v10163
    %v10542 = vunpack.c.l.b16 %v10164
    %v10543 = vunpack.c.h.b16 %v10164
    %v10544 = vunpack.c.l.b16 %v10165
    %v10545 = vunpack.c.h.b16 %v10165
    %v10546 = vunpack.c.l.b16 %v10166
    %v10547 = vunpack.c.h.b16 %v10166
    %v10548 = vunpack.c.l.b16 %v10167
    %v10549 = vunpack.c.h.b16 %v10167
    %v10550 = vunpack.c.l.b16 %v10168
    %v10551 = vunpack.c.h.b16 %v10168
    %v10552 = vunpack.c.l.b16 %v10169
    %v10553 = vunpack.c.h.b16 %v10169
    %v10554 = vunpack.c.l.b16 %v10170
    %v10555 = vunpack.c.h.b16 %v10170
    %v10556 = vunpack.c.l.b16 %v10171
    %v10557 = vunpack.c.h.b16 %v10171
    %v10558 = vunpack.c.l.b16 %v10172
    %v10559 = vunpack.c.h.b16 %v10172
    %v10560 = vunpack.c.l.b16 %v10173
    %v10561 = vunpack.c.h.b16 %v10173
    %v10562 = vunpack.c.l.b16 %v10174
    %v10563 = vunpack.c.h.b16 %v10174
    %v10564 = vunpack.c.l.b16 %v10175
    %v10565 = vunpack.c.h.b16 %v10175
    %v10566 = vunpack.c.l.b16 %v10176
    %v10567 = vunpack.c.h.b16 %v10176
    %v10568 = vunpack.c.l.b16 %v10177
    %v10569 = vunpack.c.h.b16 %v10177
    %v10570 = vunpack.c.l.b16 %v10178
    %v10571 = vunpack.c.h.b16 %v10178
    %v10572 = vunpack.c.l.b16 %v10179
    %v10573 = vunpack.c.h.b16 %v10179
    %v10574 = vunpack.c.l.b16 %v10180
    %v10575 = vunpack.c.h.b16 %v10180
    %v10576 = vunpack.c.l.b16 %v10181
    %v10577 = vunpack.c.h.b16 %v10181
    %v10578 = vunpack.c.l.b16 %v10182
    %v10579 = vunpack.c.h.b16 %v10182
    %v10580 = vunpack.c.l.b16 %v10183
    %v10581 = vunpack.c.h.b16 %v10183
    %v10582 = vunpack.c.l.b16 %v10184
    %v10583 = vunpack.c.h.b16 %v10184
    %v10584 = vunpack.c.l.b16 %v10185
    %v10585 = vunpack.c.h.b16 %v10185
    %v10586 = vunpack.c.l.b16 %v10186
    %v10587 = vunpack.c.h.b16 %v10186
    %v10588 = vunpack.c.l.b16 %v10187
    %v10589 = vunpack.c.h.b16 %v10187
    %v10590 = vunpack.c.l.b16 %v10188
    %v10591 = vunpack.c.h.b16 %v10188
    %v10592 = vunpack.c.l.b16 %v10189
    %v10593 = vunpack.c.h.b16 %v10189
    %v10594 = vunpack.c.l.b16 %v10190
    %v10595 = vunpack.c.h.b16 %v10190
    %v10596 = vunpack.c.l.b16 %v10191
    %v10597 = vunpack.c.h.b16 %v10191
    %v10598 = vunpack.c.l.b16 %v10192
    %v10599 = vunpack.c.h.b16 %v10192
    %v10600 = vunpack.c.l.b16 %v10193
    %v10601 = vunpack.c.h.b16 %v10193
    %v10602 = vunpack.c.l.b16 %v10194
    %v10603 = vunpack.c.h.b16 %v10194
    %v10604 = vunpack.c.l.b16 %v10195
    %v10605 = vunpack.c.h.b16 %v10195
    %v10606 = vunpack.c.l.b16 %v10196
    %v10607 = vunpack.c.h.b16 %v10196
    %v10608 = vpack.c.b16 %v10356, %v10352
    %v10609 = vpack.c.b16 %v10357, %v10353
    %v10610 = vpack.c.b16 %v10358, %v10354
    %v10611 = vpack.c.b16 %v10359, %v10355
    %v10612 = vpack.c.b16 %v10364, %v10360
    %v10613 = vpack.c.b16 %v10365, %v10361
    %v10614 = vpack.c.b16 %v10366, %v10362
    %v10615 = vpack.c.b16 %v10367, %v10363
    %v10616 = vpack.c.b16 %v10372, %v10368
    %v10617 = vpack.c.b16 %v10373, %v10369
    %v10618 = vpack.c.b16 %v10374, %v10370
    %v10619 = vpack.c.b16 %v10375, %v10371
    %v10620 = vpack.c.b16 %v10380, %v10376
    %v10621 = vpack.c.b16 %v10381, %v10377
    %v10622 = vpack.c.b16 %v10382, %v10378
    %v10623 = vpack.c.b16 %v10383, %v10379
    %v10624 = vpack.c.b16 %v10388, %v10384
    %v10625 = vpack.c.b16 %v10389, %v10385
    %v10626 = vpack.c.b16 %v10390, %v10386
    %v10627 = vpack.c.b16 %v10391, %v10387
    %v10628 = vpack.c.b16 %v10396, %v10392
    %v10629 = vpack.c.b16 %v10397, %v10393
    %v10630 = vpack.c.b16 %v10398, %v10394
    %v10631 = vpack.c.b16 %v10399, %v10395
    %v10632 = vpack.c.b16 %v10404, %v10400
    %v10633 = vpack.c.b16 %v10405, %v10401
    %v10634 = vpack.c.b16 %v10406, %v10402
    %v10635 = vpack.c.b16 %v10407, %v10403
    %v10636 = vpack.c.b16 %v10412, %v10408
    %v10637 = vpack.c.b16 %v10413, %v10409
    %v10638 = vpack.c.b16 %v10414, %v10410
    %v10639 = vpack.c.b16 %v10415, %v10411
    %v10640 = vpack.c.b16 %v10420, %v10416
    %v10641 = vpack.c.b16 %v10421, %v10417
    %v10642 = vpack.c.b16 %v10422, %v10418
    %v10643 = vpack.c.b16 %v10423, %v10419
    %v10644 = vpack.c.b16 %v10428, %v10424
    %v10645 = vpack.c.b16 %v10429, %v10425
    %v10646 = vpack.c.b16 %v10430, %v10426
    %v10647 = vpack.c.b16 %v10431, %v10427
    %v10648 = vpack.c.b16 %v10436, %v10432
    %v10649 = vpack.c.b16 %v10437, %v10433
    %v10650 = vpack.c.b16 %v10438, %v10434
    %v10651 = vpack.c.b16 %v10439, %v10435
    %v10652 = vpack.c.b16 %v10444, %v10440
    %v10653 = vpack.c.b16 %v10445, %v10441
    %v10654 = vpack.c.b16 %v10446, %v10442
    %v10655 = vpack.c.b16 %v10447, %v10443
    %v10656 = vpack.c.b16 %v10452, %v10448
    %v10657 = vpack.c.b16 %v10453, %v10449
    %v10658 = vpack.c.b16 %v10454, %v10450
    %v10659 = vpack.c.b16 %v10455, %v10451
    %v10660 = vpack.c.b16 %v10460, %v10456
    %v10661 = vpack.c.b16 %v10461, %v10457
    %v10662 = vpack.c.b16 %v10462, %v10458
    %v10663 = vpack.c.b16 %v10463, %v10459
    %v10664 = vpack.c.b16 %v10468, %v10464
    %v10665 = vpack.c.b16 %v10469, %v10465
    %v10666 = vpack.c.b16 %v10470, %v10466
    %v10667 = vpack.c.b16 %v10471, %v10467
    %v10668 = vpack.c.b16 %v10476, %v10472
    %v10669 = vpack.c.b16 %v10477, %v10473
    %v10670 = vpack.c.b16 %v10478, %v10474
    %v10671 = vpack.c.b16 %v10479, %v10475
    %v10672 = vpack.c.b16 %v10484, %v10480
    %v10673 = vpack.c.b16 %v10485, %v10481
    %v10674 = vpack.c.b16 %v10486, %v10482
    %v10675 = vpack.c.b16 %v10487, %v10483
    %v10676 = vpack.c.b16 %v10492, %v10488
    %v10677 = vpack.c.b16 %v10493, %v10489
    %v10678 = vpack.c.b16 %v10494, %v10490
    %v10679 = vpack.c.b16 %v10495, %v10491
    %v10680 = vpack.c.b16 %v10500, %v10496
    %v10681 = vpack.c.b16 %v10501, %v10497
    %v10682 = vpack.c.b16 %v10502, %v10498
    %v10683 = vpack.c.b16 %v10503, %v10499
    %v10684 = vpack.c.b16 %v10508, %v10504
    %v10685 = vpack.c.b16 %v10509, %v10505
    %v10686 = vpack.c.b16 %v10510, %v10506
    %v10687 = vpack.c.b16 %v10511, %v10507
    %v10688 = vpack.c.b16 %v10516, %v10512
    %v10689 = vpack.c.b16 %v10517, %v10513
    %v10690 = vpack.c.b16 %v10518, %v10514
    %v10691 = vpack.c.b16 %v10519, %v10515
    %v10692 = vpack.c.b16 %v10524, %v10520
    %v10693 = vpack.c.b16 %v10525, %v10521
    %v10694 = vpack.c.b16 %v10526, %v10522
    %v10695 = vpack.c.b16 %v10527, %v10523
    %v10696 = vpack.c.b16 %v10532, %v10528
    %v10697 = vpack.c.b16 %v10533, %v10529
    %v10698 = vpack.c.b16 %v10534, %v10530
    %v10699 = vpack.c.b16 %v10535, %v10531
    %v10700 = vpack.c.b16 %v10540, %v10536
    %v10701 = vpack.c.b16 %v10541, %v10537
    %v10702 = vpack.c.b16 %v10542, %v10538
    %v10703 = vpack.c.b16 %v10543, %v10539
    %v10704 = vpack.c.b16 %v10548, %v10544
    %v10705 = vpack.c.b16 %v10549, %v10545
    %v10706 = vpack.c.b16 %v10550, %v10546
    %v10707 = vpack.c.b16 %v10551, %v10547
    %v10708 = vpack.c.b16 %v10556, %v10552
    %v10709 = vpack.c.b16 %v10557, %v10553
    %v10710 = vpack.c.b16 %v10558, %v10554
    %v10711 = vpack.c.b16 %v10559, %v10555
    %v10712 = vpack.c.b16 %v10564, %v10560
    %v10713 = vpack.c.b16 %v10565, %v10561
    %v10714 = vpack.c.b16 %v10566, %v10562
    %v10715 = vpack.c.b16 %v10567, %v10563
    %v10716 = vpack.c.b16 %v10572, %v10568
    %v10717 = vpack.c.b16 %v10573, %v10569
    %v10718 = vpack.c.b16 %v10574, %v10570
    %v10719 = vpack.c.b16 %v10575, %v10571
    %v10720 = vpack.c.b16 %v10580, %v10576
    %v10721 = vpack.c.b16 %v10581, %v10577
    %v10722 = vpack.c.b16 %v10582, %v10578
    %v10723 = vpack.c.b16 %v10583, %v10579
    %v10724 = vpack.c.b16 %v10588, %v10584
    %v10725 = vpack.c.b16 %v10589, %v10585
    %v10726 = vpack.c.b16 %v10590, %v10586
    %v10727 = vpack.c.b16 %v10591, %v10587
    %v10728 = vpack.c.b16 %v10596, %v10592
    %v10729 = vpack.c.b16 %v10597, %v10593
    %v10730 = vpack.c.b16 %v10598, %v10594
    %v10731 = vpack.c.b16 %v10599, %v10595
    %v10732 = vpack.c.b16 %v10604, %v10600
    %v10733 = vpack.c.b16 %v10605, %v10601
    %v10734 = vpack.c.b16 %v10606, %v10602
    %v10735 = vpack.c.b16 %v10607, %v10603
    %10864 = vmatprep.subr.bf16.mxu0 %v10637
    %10865 = vmatpush1.bf16.msra.mxu0 %v10636
    %10866 = vmatprep.subr.bf16.mxu0 %v10633
    %10867 = vmatpush1.bf16.msra.mxu0 %v10632
    %10868 = vmatprep.subr.bf16.mxu0 %v10629
    %10869 = vmatpush1.bf16.msra.mxu0 %v10628
    %10870 = vmatprep.subr.bf16.mxu0 %v10625
    %10871 = vmatpush1.bf16.msra.mxu0 %v10624
    %10872 = vmatprep.subr.bf16.mxu0 %v10621
    %10873 = vmatpush1.bf16.msra.mxu0 %v10620
    %10874 = vmatprep.subr.bf16.mxu0 %v10617
    %10875 = vmatpush1.bf16.msra.mxu0 %v10616
    %10876 = vmatprep.subr.bf16.mxu0 %v10613
    %10877 = vmatpush1.bf16.msra.mxu0 %v10612
    %10878 = vmatprep.subr.bf16.mxu0 %v10609
    %10879 = vmatpush1.bf16.msra.mxu0 %v10608
    %10880 = vmatprep.subr.bf16.mxu0 %v10669
    %10881 = vmatpush2.bf16.msra.mxu0 %v10668
    %10882 = vmatprep.subr.bf16.mxu0 %v10665
    %10883 = vmatpush2.bf16.msra.mxu0 %v10664
    %10884 = vmatprep.subr.bf16.mxu0 %v10661
    %10885 = vmatpush2.bf16.msra.mxu0 %v10660
    %10886 = vmatprep.subr.bf16.mxu0 %v10657
    %10887 = vmatpush2.bf16.msra.mxu0 %v10656
    %10888 = vmatprep.subr.bf16.mxu0 %v10653
    %10889 = vmatpush2.bf16.msra.mxu0 %v10652
    %10890 = vmatprep.subr.bf16.mxu0 %v10649
    %10891 = vmatpush2.bf16.msra.mxu0 %v10648
    %10892 = vmatprep.subr.bf16.mxu0 %v10645
    %10893 = vmatpush2.bf16.msra.mxu0 %v10644
    %10894 = vmatprep.subr.bf16.mxu0 %v10641
    %10895 = vmatpush2.bf16.msra.mxu0 %v10640
    %10896 = vmatprep.mubr.bf16.mxu0 %v10066
    %10897 = vmatmul.mubr.bf16.gmra.mxu0 %v10065
    %v10898 = vpop.f32.mrf.mxu0
    %v10899 = vadd.f32 %v10207, %v10898
    %v10900 = vpop.f32.mrf.mxu0
    %v10901 = vadd.f32 %v10211, %v10900
    %v10902 = vpop.f32.mrf.mxu0
    %v10903 = vpop.f32.mrf.mxu0
    %10904 = vdwg.mxu0
    %10905 = vmatprep.subr.bf16.mxu0 %v10701
    %10906 = vmatpush1.bf16.msra.mxu0 %v10700
    %10907 = vmatprep.subr.bf16.mxu0 %v10697
    %10908 = vmatpush1.bf16.msra.mxu0 %v10696
    %10909 = vmatprep.subr.bf16.mxu0 %v10693
    %10910 = vmatpush1.bf16.msra.mxu0 %v10692
    %10911 = vmatprep.subr.bf16.mxu0 %v10689
    %10912 = vmatpush1.bf16.msra.mxu0 %v10688
    %10913 = vmatprep.subr.bf16.mxu0 %v10685
    %10914 = vmatpush1.bf16.msra.mxu0 %v10684
    %10915 = vmatprep.subr.bf16.mxu0 %v10681
    %10916 = vmatpush1.bf16.msra.mxu0 %v10680
    %10917 = vmatprep.subr.bf16.mxu0 %v10677
    %10918 = vmatpush1.bf16.msra.mxu0 %v10676
    %10919 = vmatprep.subr.bf16.mxu0 %v10673
    %10920 = vmatpush1.bf16.msra.mxu0 %v10672
    %10921 = vmatprep.subr.bf16.mxu0 %v10733
    %10922 = vmatpush2.bf16.msra.mxu0 %v10732
    %10923 = vmatprep.subr.bf16.mxu0 %v10729
    %10924 = vmatpush2.bf16.msra.mxu0 %v10728
    %10925 = vmatprep.subr.bf16.mxu0 %v10725
    %10926 = vmatpush2.bf16.msra.mxu0 %v10724
    %10927 = vmatprep.subr.bf16.mxu0 %v10721
    %10928 = vmatpush2.bf16.msra.mxu0 %v10720
    %10929 = vmatprep.subr.bf16.mxu0 %v10717
    %10930 = vmatpush2.bf16.msra.mxu0 %v10716
    %10931 = vmatprep.subr.bf16.mxu0 %v10713
    %10932 = vmatpush2.bf16.msra.mxu0 %v10712
    %10933 = vmatprep.subr.bf16.mxu0 %v10709
    %10934 = vmatpush2.bf16.msra.mxu0 %v10708
    %10935 = vmatprep.subr.bf16.mxu0 %v10705
    %10936 = vmatpush2.bf16.msra.mxu0 %v10704
    %10937 = vmatprep.mubr.bf16.mxu0 %v10068
    %10938 = vmatmul.mubr.bf16.gmra.mxu0 %v10067
    %v10939 = vpop.f32.mrf.mxu0
    %v10940 = vadd.f32 %v10899, %v10939
    %v10941 = vpop.f32.mrf.mxu0
    %v10942 = vadd.f32 %v10901, %v10941
    %v10943 = vpop.f32.mrf.mxu0
    %v10944 = vpop.f32.mrf.mxu0
    %10945 = vdwg.mxu0
    %10946 = vmatprep.subr.bf16.mxu0 %v10639
    %10947 = vmatpush1.bf16.msra.mxu0 %v10638
    %10948 = vmatprep.subr.bf16.mxu0 %v10635
    %10949 = vmatpush1.bf16.msra.mxu0 %v10634
    %10950 = vmatprep.subr.bf16.mxu0 %v10631
    %10951 = vmatpush1.bf16.msra.mxu0 %v10630
    %10952 = vmatprep.subr.bf16.mxu0 %v10627
    %10953 = vmatpush1.bf16.msra.mxu0 %v10626
    %10954 = vmatprep.subr.bf16.mxu0 %v10623
    %10955 = vmatpush1.bf16.msra.mxu0 %v10622
    %10956 = vmatprep.subr.bf16.mxu0 %v10619
    %10957 = vmatpush1.bf16.msra.mxu0 %v10618
    %10958 = vmatprep.subr.bf16.mxu0 %v10615
    %10959 = vmatpush1.bf16.msra.mxu0 %v10614
    %10960 = vmatprep.subr.bf16.mxu0 %v10611
    %10961 = vmatpush1.bf16.msra.mxu0 %v10610
    %10962 = vmatprep.subr.bf16.mxu0 %v10671
    %10963 = vmatpush2.bf16.msra.mxu0 %v10670
    %10964 = vmatprep.subr.bf16.mxu0 %v10667
    %10965 = vmatpush2.bf16.msra.mxu0 %v10666
    %10966 = vmatprep.subr.bf16.mxu0 %v10663
    %10967 = vmatpush2.bf16.msra.mxu0 %v10662
    %10968 = vmatprep.subr.bf16.mxu0 %v10659
    %10969 = vmatpush2.bf16.msra.mxu0 %v10658
    %10970 = vmatprep.subr.bf16.mxu0 %v10655
    %10971 = vmatpush2.bf16.msra.mxu0 %v10654
    %10972 = vmatprep.subr.bf16.mxu0 %v10651
    %10973 = vmatpush2.bf16.msra.mxu0 %v10650
    %10974 = vmatprep.subr.bf16.mxu0 %v10647
    %10975 = vmatpush2.bf16.msra.mxu0 %v10646
    %10976 = vmatprep.subr.bf16.mxu0 %v10643
    %10977 = vmatpush2.bf16.msra.mxu0 %v10642
    %10978 = vmatprep.mubr.bf16.mxu0 %v10066
    %10979 = vmatmul.mubr.bf16.gmra.mxu0 %v10065
    %v10980 = vpop.f32.mrf.mxu0
    %v10981 = vadd.f32 %v10215, %v10980
    %v10982 = vpop.f32.mrf.mxu0
    %v10983 = vadd.f32 %v10219, %v10982
    %v10984 = vpop.f32.mrf.mxu0
    %v10985 = vpop.f32.mrf.mxu0
    %10986 = vdwg.mxu0
    %10987 = vmatprep.subr.bf16.mxu0 %v10703
    %10988 = vmatpush1.bf16.msra.mxu0 %v10702
    %10989 = vmatprep.subr.bf16.mxu0 %v10699
    %10990 = vmatpush1.bf16.msra.mxu0 %v10698
    %10991 = vmatprep.subr.bf16.mxu0 %v10695
    %10992 = vmatpush1.bf16.msra.mxu0 %v10694
    %10993 = vmatprep.subr.bf16.mxu0 %v10691
    %10994 = vmatpush1.bf16.msra.mxu0 %v10690
    %10995 = vmatprep.subr.bf16.mxu0 %v10687
    %10996 = vmatpush1.bf16.msra.mxu0 %v10686
    %10997 = vmatprep.subr.bf16.mxu0 %v10683
    %10998 = vmatpush1.bf16.msra.mxu0 %v10682
    %10999 = vmatprep.subr.bf16.mxu0 %v10679
    %11000 = vmatpush1.bf16.msra.mxu0 %v10678
    %11001 = vmatprep.subr.bf16.mxu0 %v10675
    %11002 = vmatpush1.bf16.msra.mxu0 %v10674
    %11003 = vmatprep.subr.bf16.mxu0 %v10735
    %11004 = vmatpush2.bf16.msra.mxu0 %v10734
    %11005 = vmatprep.subr.bf16.mxu0 %v10731
    %11006 = vmatpush2.bf16.msra.mxu0 %v10730
    %11007 = vmatprep.subr.bf16.mxu0 %v10727
    %11008 = vmatpush2.bf16.msra.mxu0 %v10726
    %11009 = vmatprep.subr.bf16.mxu0 %v10723
    %11010 = vmatpush2.bf16.msra.mxu0 %v10722
    %11011 = vmatprep.subr.bf16.mxu0 %v10719
    %11012 = vmatpush2.bf16.msra.mxu0 %v10718
    %11013 = vmatprep.subr.bf16.mxu0 %v10715
    %11014 = vmatpush2.bf16.msra.mxu0 %v10714
    %11015 = vmatprep.subr.bf16.mxu0 %v10711
    %11016 = vmatpush2.bf16.msra.mxu0 %v10710
    %11017 = vmatprep.subr.bf16.mxu0 %v10707
    %11018 = vmatpush2.bf16.msra.mxu0 %v10706
    %11019 = vmatprep.mubr.bf16.mxu0 %v10068
    %11020 = vmatmul.mubr.bf16.gmra.mxu0 %v10067
    %v11021 = vpop.f32.mrf.mxu0
    %v11022 = vadd.f32 %v10981, %v11021
    %v11023 = vpop.f32.mrf.mxu0
    %v11024 = vadd.f32 %v10983, %v11023
    %v11025 = vpop.f32.mrf.mxu0
    %v11026 = vpop.f32.mrf.mxu0
    %11027 = vdwg.mxu0
    %v11028 = vmax.f32 %v10940, 0.0
    %v11029 = vmax.f32 %v10942, 0.0
    %v11030 = vmax.f32 %v11022, 0.0
    %v11031 = vmax.f32 %v11024, 0.0
    %v11032 = vrot.slane %v11028, 4
    %v11033 = vadd.f32 %v11028, %v11032
    %v11034 = vrot.slane %v11033, 2
    %v11035 = vadd.f32 %v11033, %v11034
    %v11036 = vrot.slane %v11035, 1
    %v11037 = vadd.f32 %v11035, %v11036
    %v11038 = vrot.slane %v11029, 4
    %v11039 = vadd.f32 %v11029, %v11038
    %v11040 = vrot.slane %v11039, 2
    %v11041 = vadd.f32 %v11039, %v11040
    %v11042 = vrot.slane %v11041, 1
    %v11043 = vadd.f32 %v11041, %v11042
    %v11044 = vrot.slane %v11030, 4
    %v11045 = vadd.f32 %v11030, %v11044
    %v11046 = vrot.slane %v11045, 2
    %v11047 = vadd.f32 %v11045, %v11046
    %v11048 = vrot.slane %v11047, 1
    %v11049 = vadd.f32 %v11047, %v11048
    %v11050 = vrot.slane %v11031, 4
    %v11051 = vadd.f32 %v11031, %v11050
    %v11052 = vrot.slane %v11051, 2
    %v11053 = vadd.f32 %v11051, %v11052
    %v11054 = vrot.slane %v11053, 1
    %v11055 = vadd.f32 %v11053, %v11054
    %v11056 = vmul.f32 %v11037, 0.125
    %v11057 = vmul.f32 %v11043, 0.125
    %v11058 = vmul.f32 %v11049, 0.125
    %v11059 = vmul.f32 %v11055, 0.125
    %v11060 = vmul.f32 %v11028, %v11028
    %v11061 = vmul.f32 %v11029, %v11029
    %v11062 = vmul.f32 %v11030, %v11030
    %v11063 = vmul.f32 %v11031, %v11031
    %v11064 = vrot.slane %v11060, 4
    %v11065 = vadd.f32 %v11060, %v11064
    %v11066 = vrot.slane %v11065, 2
    %v11067 = vadd.f32 %v11065, %v11066
    %v11068 = vrot.slane %v11067, 1
    %v11069 = vadd.f32 %v11067, %v11068
    %v11070 = vrot.slane %v11061, 4
    %v11071 = vadd.f32 %v11061, %v11070
    %v11072 = vrot.slane %v11071, 2
    %v11073 = vadd.f32 %v11071, %v11072
    %v11074 = vrot.slane %v11073, 1
    %v11075 = vadd.f32 %v11073, %v11074
    %v11076 = vrot.slane %v11062, 4
    %v11077 = vadd.f32 %v11062, %v11076
    %v11078 = vrot.slane %v11077, 2
    %v11079 = vadd.f32 %v11077, %v11078
    %v11080 = vrot.slane %v11079, 1
    %v11081 = vadd.f32 %v11079, %v11080
    %v11082 = vrot.slane %v11063, 4
    %v11083 = vadd.f32 %v11063, %v11082
    %v11084 = vrot.slane %v11083, 2
    %v11085 = vadd.f32 %v11083, %v11084
    %v11086 = vrot.slane %v11085, 1
    %v11087 = vadd.f32 %v11085, %v11086
    %v11088 = vmul.f32 %v11069, 0.125
    %v11089 = vmul.f32 %v11075, 0.125
    %v11090 = vmul.f32 %v11081, 0.125
    %v11091 = vmul.f32 %v11087, 0.125
    %v11092 = vmul.f32 %v11056, %v11056
    %v11093 = vmul.f32 %v11057, %v11057
    %v11094 = vmul.f32 %v11058, %v11058
    %v11095 = vmul.f32 %v11059, %v11059
    %v11096 = vsub.f32 %v11088, %v11092
    %v11097 = vsub.f32 %v11089, %v11093
    %v11098 = vsub.f32 %v11090, %v11094
    %v11099 = vsub.f32 %v11091, %v11095
    %v11100 = vadd.f32 %v11096, 1e-05
    %v11101 = vadd.f32 %v11097, 1e-05
    %v11102 = vadd.f32 %v11098, 1e-05
    %v11103 = vadd.f32 %v11099, 1e-05
    %v11104 = vrsqrt.pop %v11100
    %v11105 = vrsqrt.pop %v11101
    %v11106 = vrsqrt.pop %v11102
    %v11107 = vrsqrt.pop %v11103
    %v11112 = vcombine.low %v11104, %v11105
    %v11113 = vcombine.low %v11106, %v11107
    %v11115 = vunpack.c.l.s4 1966171168
    %v11116 = vunpack.c.0.s8 %v11115
    %v11117 = vlaneseq
    %v11118 = vshrl.u32 %v11117, 7
    %v11119 = vsub.s32 %v11116, %v11118
    %v11120 = vrot.slane %v11112, %v11119
    %v11122 = vunpack.c.l.s4 1966171168
    %v11123 = vunpack.c.0.s8 %v11122
    %v11124 = vlaneseq
    %v11125 = vshrl.u32 %v11124, 7
    %v11126 = vsub.s32 %v11123, %v11125
    %v11127 = vrot.slane %v11113, %v11126
    %v11128 = vcombine.low %v11120, %v11127
    %v11130 = vunpack.c.l.s4 1966171168
    %v11131 = vunpack.c.0.s8 %v11130
    %v11132 = vlaneseq
    %v11133 = vshrl.u32 %v11132, 7
    %v11134 = vsub.s32 %v11131, %v11133
    %v11135 = vrot.slane %v11128, %v11134
    %v11137 = vmul.f32 %v10200, %v11135
    %v11139 = vlaneseq
    %v11140 = vshrl.u32 %v11139, 7
    %v11141 = vsub.s32 0, %v11140
    %v11142 = vrot.slane %v11137, %v11141
    %v11143 = vlaneseq
    %v11144 = vshrl.u32 %v11143, 7
    %v11145 = vsub.s32 1, %v11144
    %v11146 = vrot.slane %v11137, %v11145
    %v11147 = vlaneseq
    %v11148 = vshrl.u32 %v11147, 7
    %v11149 = vsub.s32 2, %v11148
    %v11150 = vrot.slane %v11137, %v11149
    %v11151 = vlaneseq
    %v11152 = vshrl.u32 %v11151, 7
    %v11153 = vsub.s32 3, %v11152
    %v11154 = vrot.slane %v11137, %v11153
    %v11159 = vmul.f32 %v11056, %v11142
    %v11160 = vmul.f32 %v11057, %v11146
    %v11161 = vmul.f32 %v11058, %v11150
    %v11162 = vmul.f32 %v11059, %v11154
    %v11167 = vcombine.low %v11159, %v11160
    %v11168 = vcombine.low %v11161, %v11162
    %v11170 = vunpack.c.l.s4 1966171168
    %v11171 = vunpack.c.0.s8 %v11170
    %v11172 = vlaneseq
    %v11173 = vshrl.u32 %v11172, 7
    %v11174 = vsub.s32 %v11171, %v11173
    %v11175 = vrot.slane %v11167, %v11174
    %v11177 = vunpack.c.l.s4 1966171168
    %v11178 = vunpack.c.0.s8 %v11177
    %v11179 = vlaneseq
    %v11180 = vshrl.u32 %v11179, 7
    %v11181 = vsub.s32 %v11178, %v11180
    %v11182 = vrot.slane %v11168, %v11181
    %v11183 = vcombine.low %v11175, %v11182
    %v11185 = vunpack.c.l.s4 1966171168
    %v11186 = vunpack.c.0.s8 %v11185
    %v11187 = vlaneseq
    %v11188 = vshrl.u32 %v11187, 7
    %v11189 = vsub.s32 %v11186, %v11188
    %v11190 = vrot.slane %v11183, %v11189
    %v11192 = vsub.f32 %v10202, %v11190
    %v11193 = vmul.f32 %v11028, %v11142
    %v11194 = vmul.f32 %v11029, %v11146
    %v11195 = vmul.f32 %v11030, %v11150
    %v11196 = vmul.f32 %v11031, %v11154
    %v11198 = vlaneseq
    %v11199 = vshrl.u32 %v11198, 7
    %v11200 = vsub.s32 0, %v11199
    %v11201 = vrot.slane %v11192, %v11200
    %v11202 = vlaneseq
    %v11203 = vshrl.u32 %v11202, 7
    %v11204 = vsub.s32 1, %v11203
    %v11205 = vrot.slane %v11192, %v11204
    %v11206 = vlaneseq
    %v11207 = vshrl.u32 %v11206, 7
    %v11208 = vsub.s32 2, %v11207
    %v11209 = vrot.slane %v11192, %v11208
    %v11210 = vlaneseq
    %v11211 = vshrl.u32 %v11210, 7
    %v11212 = vsub.s32 3, %v11211
    %v11213 = vrot.slane %v11192, %v11212
    %v11218 = vadd.f32 %v11193, %v11201
    %v11219 = vadd.f32 %v11194, %v11205
    %v11220 = vadd.f32 %v11195, %v11209
    %v11221 = vadd.f32 %v11196, %v11213
    %s11222 = smul.u32 %s43, 2
    %s11223 = sshll.u32 %s11222, 4
    %11224 = dma.done %s10053, %s11223
    %v11225 = vpack.c.bf16 %v11218, %v11218
    %v11226 = vpack.c.bf16 %v11219, %v11219
    %v11227 = vpack.c.bf16 %v11220, %v11220
    %v11228 = vpack.c.bf16 %v11221, %v11221
    %v11229 = vld [vmem:[#allocation7] sm:$0xff]
    %v11230 = vld [vmem:[#allocation7 + $0x8] sm:$0xff]
    %v11231 = vld [vmem:[#allocation7 + $0x10] sm:$0xff]
    %v11232 = vld [vmem:[#allocation7 + $0x18] sm:$0xff]
    %v11233 = vld [vmem:[#allocation7 + $0x20] sm:$0xff]
    %v11234 = vld [vmem:[#allocation7 + $0x28] sm:$0xff]
    %v11235 = vld [vmem:[#allocation7 + $0x30] sm:$0xff]
    %v11236 = vld [vmem:[#allocation7 + $0x38] sm:$0xff]
    %v11237 = vld [vmem:[#allocation7 + $0x40] sm:$0xff]
    %v11238 = vld [vmem:[#allocation7 + $0x48] sm:$0xff]
    %v11239 = vld [vmem:[#allocation7 + $0x50] sm:$0xff]
    %v11240 = vld [vmem:[#allocation7 + $0x58] sm:$0xff]
    %v11241 = vld [vmem:[#allocation7 + $0x60] sm:$0xff]
    %v11242 = vld [vmem:[#allocation7 + $0x68] sm:$0xff]
    %v11243 = vld [vmem:[#allocation7 + $0x70] sm:$0xff]
    %v11244 = vld [vmem:[#allocation7 + $0x78] sm:$0xff]
    %v11245 = vld [vmem:[#allocation7 + $0x80] sm:$0xff]
    %v11246 = vld [vmem:[#allocation7 + $0x88] sm:$0xff]
    %v11247 = vld [vmem:[#allocation7 + $0x90] sm:$0xff]
    %v11248 = vld [vmem:[#allocation7 + $0x98] sm:$0xff]
    %v11249 = vld [vmem:[#allocation7 + $0xa0] sm:$0xff]
    %v11250 = vld [vmem:[#allocation7 + $0xa8] sm:$0xff]
    %v11251 = vld [vmem:[#allocation7 + $0xb0] sm:$0xff]
    %v11252 = vld [vmem:[#allocation7 + $0xb8] sm:$0xff]
    %v11253 = vld [vmem:[#allocation7 + $0xc0] sm:$0xff]
    %v11254 = vld [vmem:[#allocation7 + $0xc8] sm:$0xff]
    %v11255 = vld [vmem:[#allocation7 + $0xd0] sm:$0xff]
    %v11256 = vld [vmem:[#allocation7 + $0xd8] sm:$0xff]
    %v11257 = vld [vmem:[#allocation7 + $0xe0] sm:$0xff]
    %v11258 = vld [vmem:[#allocation7 + $0xe8] sm:$0xff]
    %v11259 = vld [vmem:[#allocation7 + $0xf0] sm:$0xff]
    %v11260 = vld [vmem:[#allocation7 + $0xf8] sm:$0xff]
    %v11261 = vld [vmem:[#allocation7 + $0x100] sm:$0xff]
    %v11262 = vld [vmem:[#allocation7 + $0x108] sm:$0xff]
    %v11263 = vld [vmem:[#allocation7 + $0x110] sm:$0xff]
    %v11264 = vld [vmem:[#allocation7 + $0x118] sm:$0xff]
    %v11265 = vld [vmem:[#allocation7 + $0x120] sm:$0xff]
    %v11266 = vld [vmem:[#allocation7 + $0x128] sm:$0xff]
    %v11267 = vld [vmem:[#allocation7 + $0x130] sm:$0xff]
    %v11268 = vld [vmem:[#allocation7 + $0x138] sm:$0xff]
    %v11269 = vld [vmem:[#allocation7 + $0x140] sm:$0xff]
    %v11270 = vld [vmem:[#allocation7 + $0x148] sm:$0xff]
    %v11271 = vld [vmem:[#allocation7 + $0x150] sm:$0xff]
    %v11272 = vld [vmem:[#allocation7 + $0x158] sm:$0xff]
    %v11273 = vld [vmem:[#allocation7 + $0x160] sm:$0xff]
    %v11274 = vld [vmem:[#allocation7 + $0x168] sm:$0xff]
    %v11275 = vld [vmem:[#allocation7 + $0x170] sm:$0xff]
    %v11276 = vld [vmem:[#allocation7 + $0x178] sm:$0xff]
    %v11277 = vld [vmem:[#allocation7 + $0x180] sm:$0xff]
    %v11278 = vld [vmem:[#allocation7 + $0x188] sm:$0xff]
    %v11279 = vld [vmem:[#allocation7 + $0x190] sm:$0xff]
    %v11280 = vld [vmem:[#allocation7 + $0x198] sm:$0xff]
    %v11281 = vld [vmem:[#allocation7 + $0x1a0] sm:$0xff]
    %v11282 = vld [vmem:[#allocation7 + $0x1a8] sm:$0xff]
    %v11283 = vld [vmem:[#allocation7 + $0x1b0] sm:$0xff]
    %v11284 = vld [vmem:[#allocation7 + $0x1b8] sm:$0xff]
    %v11285 = vld [vmem:[#allocation7 + $0x1c0] sm:$0xff]
    %v11286 = vld [vmem:[#allocation7 + $0x1c8] sm:$0xff]
    %v11287 = vld [vmem:[#allocation7 + $0x1d0] sm:$0xff]
    %v11288 = vld [vmem:[#allocation7 + $0x1d8] sm:$0xff]
    %v11289 = vld [vmem:[#allocation7 + $0x1e0] sm:$0xff]
    %v11290 = vld [vmem:[#allocation7 + $0x1e8] sm:$0xff]
    %v11291 = vld [vmem:[#allocation7 + $0x1f0] sm:$0xff]
    %v11292 = vld [vmem:[#allocation7 + $0x1f8] sm:$0xff]
    %s11293 = scalar_lea.vmem [#allocation9], 5
    %v11294 = vld [vmem:[%s11293] ss:$8 sm:$0x3]
    %s11295 = scalar_lea.vmem [#allocation9], 66
    %v11296 = vld [vmem:[%s11295] ss:$8 sm:$0x3]
    %s11297 = scalar_lea.vmem [#allocation9], 71
    %v11298 = vld [vmem:[%s11297] ss:$8 sm:$0x3]
    %v11300 = vlaneseq
    %v11301 = vshrl.u32 %v11300, 7
    %v11302 = vsub.s32 0, %v11301
    %v11303 = vrot.slane %v11294, %v11302
    %v11304 = vlaneseq
    %v11305 = vshrl.u32 %v11304, 7
    %v11306 = vsub.s32 1, %v11305
    %v11307 = vrot.slane %v11294, %v11306
    %v11374 = vunpack.c.l.b16 %v11229
    %v11375 = vunpack.c.h.b16 %v11229
    %v11376 = vunpack.c.l.b16 %v11230
    %v11377 = vunpack.c.h.b16 %v11230
    %v11378 = vunpack.c.l.b16 %v11231
    %v11379 = vunpack.c.h.b16 %v11231
    %v11380 = vunpack.c.l.b16 %v11232
    %v11381 = vunpack.c.h.b16 %v11232
    %v11382 = vunpack.c.l.b16 %v11233
    %v11383 = vunpack.c.h.b16 %v11233
    %v11384 = vunpack.c.l.b16 %v11234
    %v11385 = vunpack.c.h.b16 %v11234
    %v11386 = vunpack.c.l.b16 %v11235
    %v11387 = vunpack.c.h.b16 %v11235
    %v11388 = vunpack.c.l.b16 %v11236
    %v11389 = vunpack.c.h.b16 %v11236
    %v11390 = vunpack.c.l.b16 %v11237
    %v11391 = vunpack.c.h.b16 %v11237
    %v11392 = vunpack.c.l.b16 %v11238
    %v11393 = vunpack.c.h.b16 %v11238
    %v11394 = vunpack.c.l.b16 %v11239
    %v11395 = vunpack.c.h.b16 %v11239
    %v11396 = vunpack.c.l.b16 %v11240
    %v11397 = vunpack.c.h.b16 %v11240
    %v11398 = vunpack.c.l.b16 %v11241
    %v11399 = vunpack.c.h.b16 %v11241
    %v11400 = vunpack.c.l.b16 %v11242
    %v11401 = vunpack.c.h.b16 %v11242
    %v11402 = vunpack.c.l.b16 %v11243
    %v11403 = vunpack.c.h.b16 %v11243
    %v11404 = vunpack.c.l.b16 %v11244
    %v11405 = vunpack.c.h.b16 %v11244
    %v11406 = vunpack.c.l.b16 %v11245
    %v11407 = vunpack.c.h.b16 %v11245
    %v11408 = vunpack.c.l.b16 %v11246
    %v11409 = vunpack.c.h.b16 %v11246
    %v11410 = vunpack.c.l.b16 %v11247
    %v11411 = vunpack.c.h.b16 %v11247
    %v11412 = vunpack.c.l.b16 %v11248
    %v11413 = vunpack.c.h.b16 %v11248
    %v11414 = vunpack.c.l.b16 %v11249
    %v11415 = vunpack.c.h.b16 %v11249
    %v11416 = vunpack.c.l.b16 %v11250
    %v11417 = vunpack.c.h.b16 %v11250
    %v11418 = vunpack.c.l.b16 %v11251
    %v11419 = vunpack.c.h.b16 %v11251
    %v11420 = vunpack.c.l.b16 %v11252
    %v11421 = vunpack.c.h.b16 %v11252
    %v11422 = vunpack.c.l.b16 %v11253
    %v11423 = vunpack.c.h.b16 %v11253
    %v11424 = vunpack.c.l.b16 %v11254
    %v11425 = vunpack.c.h.b16 %v11254
    %v11426 = vunpack.c.l.b16 %v11255
    %v11427 = vunpack.c.h.b16 %v11255
    %v11428 = vunpack.c.l.b16 %v11256
    %v11429 = vunpack.c.h.b16 %v11256
    %v11430 = vunpack.c.l.b16 %v11257
    %v11431 = vunpack.c.h.b16 %v11257
    %v11432 = vunpack.c.l.b16 %v11258
    %v11433 = vunpack.c.h.b16 %v11258
    %v11434 = vunpack.c.l.b16 %v11259
    %v11435 = vunpack.c.h.b16 %v11259
    %v11436 = vunpack.c.l.b16 %v11260
    %v11437 = vunpack.c.h.b16 %v11260
    %v11438 = vunpack.c.l.b16 %v11261
    %v11439 = vunpack.c.h.b16 %v11261
    %v11440 = vunpack.c.l.b16 %v11262
    %v11441 = vunpack.c.h.b16 %v11262
    %v11442 = vunpack.c.l.b16 %v11263
    %v11443 = vunpack.c.h.b16 %v11263
    %v11444 = vunpack.c.l.b16 %v11264
    %v11445 = vunpack.c.h.b16 %v11264
    %v11446 = vunpack.c.l.b16 %v11265
    %v11447 = vunpack.c.h.b16 %v11265
    %v11448 = vunpack.c.l.b16 %v11266
    %v11449 = vunpack.c.h.b16 %v11266
    %v11450 = vunpack.c.l.b16 %v11267
    %v11451 = vunpack.c.h.b16 %v11267
    %v11452 = vunpack.c.l.b16 %v11268
    %v11453 = vunpack.c.h.b16 %v11268
    %v11454 = vunpack.c.l.b16 %v11269
    %v11455 = vunpack.c.h.b16 %v11269
    %v11456 = vunpack.c.l.b16 %v11270
    %v11457 = vunpack.c.h.b16 %v11270
    %v11458 = vunpack.c.l.b16 %v11271
    %v11459 = vunpack.c.h.b16 %v11271
    %v11460 = vunpack.c.l.b16 %v11272
    %v11461 = vunpack.c.h.b16 %v11272
    %v11462 = vunpack.c.l.b16 %v11273
    %v11463 = vunpack.c.h.b16 %v11273
    %v11464 = vunpack.c.l.b16 %v11274
    %v11465 = vunpack.c.h.b16 %v11274
    %v11466 = vunpack.c.l.b16 %v11275
    %v11467 = vunpack.c.h.b16 %v11275
    %v11468 = vunpack.c.l.b16 %v11276
    %v11469 = vunpack.c.h.b16 %v11276
    %v11470 = vunpack.c.l.b16 %v11277
    %v11471 = vunpack.c.h.b16 %v11277
    %v11472 = vunpack.c.l.b16 %v11278
    %v11473 = vunpack.c.h.b16 %v11278
    %v11474 = vunpack.c.l.b16 %v11279
    %v11475 = vunpack.c.h.b16 %v11279
    %v11476 = vunpack.c.l.b16 %v11280
    %v11477 = vunpack.c.h.b16 %v11280
    %v11478 = vunpack.c.l.b16 %v11281
    %v11479 = vunpack.c.h.b16 %v11281
    %v11480 = vunpack.c.l.b16 %v11282
    %v11481 = vunpack.c.h.b16 %v11282
    %v11482 = vunpack.c.l.b16 %v11283
    %v11483 = vunpack.c.h.b16 %v11283
    %v11484 = vunpack.c.l.b16 %v11284
    %v11485 = vunpack.c.h.b16 %v11284
    %v11486 = vunpack.c.l.b16 %v11285
    %v11487 = vunpack.c.h.b16 %v11285
    %v11488 = vunpack.c.l.b16 %v11286
    %v11489 = vunpack.c.h.b16 %v11286
    %v11490 = vunpack.c.l.b16 %v11287
    %v11491 = vunpack.c.h.b16 %v11287
    %v11492 = vunpack.c.l.b16 %v11288
    %v11493 = vunpack.c.h.b16 %v11288
    %v11494 = vunpack.c.l.b16 %v11289
    %v11495 = vunpack.c.h.b16 %v11289
    %v11496 = vunpack.c.l.b16 %v11290
    %v11497 = vunpack.c.h.b16 %v11290
    %v11498 = vunpack.c.l.b16 %v11291
    %v11499 = vunpack.c.h.b16 %v11291
    %v11500 = vunpack.c.l.b16 %v11292
    %v11501 = vunpack.c.h.b16 %v11292
    %v11502 = vpack.c.b16 %v11376, %v11374
    %v11503 = vpack.c.b16 %v11377, %v11375
    %v11504 = vpack.c.b16 %v11380, %v11378
    %v11505 = vpack.c.b16 %v11381, %v11379
    %v11506 = vpack.c.b16 %v11384, %v11382
    %v11507 = vpack.c.b16 %v11385, %v11383
    %v11508 = vpack.c.b16 %v11388, %v11386
    %v11509 = vpack.c.b16 %v11389, %v11387
    %v11510 = vpack.c.b16 %v11392, %v11390
    %v11511 = vpack.c.b16 %v11393, %v11391
    %v11512 = vpack.c.b16 %v11396, %v11394
    %v11513 = vpack.c.b16 %v11397, %v11395
    %v11514 = vpack.c.b16 %v11400, %v11398
    %v11515 = vpack.c.b16 %v11401, %v11399
    %v11516 = vpack.c.b16 %v11404, %v11402
    %v11517 = vpack.c.b16 %v11405, %v11403
    %v11518 = vpack.c.b16 %v11408, %v11406
    %v11519 = vpack.c.b16 %v11409, %v11407
    %v11520 = vpack.c.b16 %v11412, %v11410
    %v11521 = vpack.c.b16 %v11413, %v11411
    %v11522 = vpack.c.b16 %v11416, %v11414
    %v11523 = vpack.c.b16 %v11417, %v11415
    %v11524 = vpack.c.b16 %v11420, %v11418
    %v11525 = vpack.c.b16 %v11421, %v11419
    %v11526 = vpack.c.b16 %v11424, %v11422
    %v11527 = vpack.c.b16 %v11425, %v11423
    %v11528 = vpack.c.b16 %v11428, %v11426
    %v11529 = vpack.c.b16 %v11429, %v11427
    %v11530 = vpack.c.b16 %v11432, %v11430
    %v11531 = vpack.c.b16 %v11433, %v11431
    %v11532 = vpack.c.b16 %v11436, %v11434
    %v11533 = vpack.c.b16 %v11437, %v11435
    %v11534 = vpack.c.b16 %v11440, %v11438
    %v11535 = vpack.c.b16 %v11441, %v11439
    %v11536 = vpack.c.b16 %v11444, %v11442
    %v11537 = vpack.c.b16 %v11445, %v11443
    %v11538 = vpack.c.b16 %v11448, %v11446
    %v11539 = vpack.c.b16 %v11449, %v11447
    %v11540 = vpack.c.b16 %v11452, %v11450
    %v11541 = vpack.c.b16 %v11453, %v11451
    %v11542 = vpack.c.b16 %v11456, %v11454
    %v11543 = vpack.c.b16 %v11457, %v11455
    %v11544 = vpack.c.b16 %v11460, %v11458
    %v11545 = vpack.c.b16 %v11461, %v11459
    %v11546 = vpack.c.b16 %v11464, %v11462
    %v11547 = vpack.c.b16 %v11465, %v11463
    %v11548 = vpack.c.b16 %v11468, %v11466
    %v11549 = vpack.c.b16 %v11469, %v11467
    %v11550 = vpack.c.b16 %v11472, %v11470
    %v11551 = vpack.c.b16 %v11473, %v11471
    %v11552 = vpack.c.b16 %v11476, %v11474
    %v11553 = vpack.c.b16 %v11477, %v11475
    %v11554 = vpack.c.b16 %v11480, %v11478
    %v11555 = vpack.c.b16 %v11481, %v11479
    %v11556 = vpack.c.b16 %v11484, %v11482
    %v11557 = vpack.c.b16 %v11485, %v11483
    %v11558 = vpack.c.b16 %v11488, %v11486
    %v11559 = vpack.c.b16 %v11489, %v11487
    %v11560 = vpack.c.b16 %v11492, %v11490
    %v11561 = vpack.c.b16 %v11493, %v11491
    %v11562 = vpack.c.b16 %v11496, %v11494
    %v11563 = vpack.c.b16 %v11497, %v11495
    %v11564 = vpack.c.b16 %v11500, %v11498
    %v11565 = vpack.c.b16 %v11501, %v11499
    %11630 = vmatprep.subr.bf16.mxu0 %v11517
    %11631 = vmatpush1.bf16.msra.mxu0 %v11516
    %11632 = vmatprep.subr.bf16.mxu0 %v11515
    %11633 = vmatpush1.bf16.msra.mxu0 %v11514
    %11634 = vmatprep.subr.bf16.mxu0 %v11513
    %11635 = vmatpush1.bf16.msra.mxu0 %v11512
    %11636 = vmatprep.subr.bf16.mxu0 %v11511
    %11637 = vmatpush1.bf16.msra.mxu0 %v11510
    %11638 = vmatprep.subr.bf16.mxu0 %v11509
    %11639 = vmatpush1.bf16.msra.mxu0 %v11508
    %11640 = vmatprep.subr.bf16.mxu0 %v11507
    %11641 = vmatpush1.bf16.msra.mxu0 %v11506
    %11642 = vmatprep.subr.bf16.mxu0 %v11505
    %11643 = vmatpush1.bf16.msra.mxu0 %v11504
    %11644 = vmatprep.subr.bf16.mxu0 %v11503
    %11645 = vmatpush1.bf16.msra.mxu0 %v11502
    %11646 = vmatprep.subr.bf16.mxu0 %v11533
    %11647 = vmatpush2.bf16.msra.mxu0 %v11532
    %11648 = vmatprep.subr.bf16.mxu0 %v11531
    %11649 = vmatpush2.bf16.msra.mxu0 %v11530
    %11650 = vmatprep.subr.bf16.mxu0 %v11529
    %11651 = vmatpush2.bf16.msra.mxu0 %v11528
    %11652 = vmatprep.subr.bf16.mxu0 %v11527
    %11653 = vmatpush2.bf16.msra.mxu0 %v11526
    %11654 = vmatprep.subr.bf16.mxu0 %v11525
    %11655 = vmatpush2.bf16.msra.mxu0 %v11524
    %11656 = vmatprep.subr.bf16.mxu0 %v11523
    %11657 = vmatpush2.bf16.msra.mxu0 %v11522
    %11658 = vmatprep.subr.bf16.mxu0 %v11521
    %11659 = vmatpush2.bf16.msra.mxu0 %v11520
    %11660 = vmatprep.subr.bf16.mxu0 %v11519
    %11661 = vmatpush2.bf16.msra.mxu0 %v11518
    %11662 = vmatprep.mubr.bf16.mxu0 %v11226
    %11663 = vmatmul.mubr.bf16.gmra.mxu0 %v11225
    %v11664 = vpop.f32.mrf.mxu0
    %v11665 = vadd.f32 %v11303, %v11664
    %v11666 = vpop.f32.mrf.mxu0
    %v11667 = vadd.f32 %v11307, %v11666
    %v11668 = vpop.f32.mrf.mxu0
    %v11669 = vpop.f32.mrf.mxu0
    %11670 = vdwg.mxu0
    %11671 = vmatprep.subr.bf16.mxu0 %v11549
    %11672 = vmatpush1.bf16.msra.mxu0 %v11548
    %11673 = vmatprep.subr.bf16.mxu0 %v11547
    %11674 = vmatpush1.bf16.msra.mxu0 %v11546
    %11675 = vmatprep.subr.bf16.mxu0 %v11545
    %11676 = vmatpush1.bf16.msra.mxu0 %v11544
    %11677 = vmatprep.subr.bf16.mxu0 %v11543
    %11678 = vmatpush1.bf16.msra.mxu0 %v11542
    %11679 = vmatprep.subr.bf16.mxu0 %v11541
    %11680 = vmatpush1.bf16.msra.mxu0 %v11540
    %11681 = vmatprep.subr.bf16.mxu0 %v11539
    %11682 = vmatpush1.bf16.msra.mxu0 %v11538
    %11683 = vmatprep.subr.bf16.mxu0 %v11537
    %11684 = vmatpush1.bf16.msra.mxu0 %v11536
    %11685 = vmatprep.subr.bf16.mxu0 %v11535
    %11686 = vmatpush1.bf16.msra.mxu0 %v11534
    %11687 = vmatprep.subr.bf16.mxu0 %v11565
    %11688 = vmatpush2.bf16.msra.mxu0 %v11564
    %11689 = vmatprep.subr.bf16.mxu0 %v11563
    %11690 = vmatpush2.bf16.msra.mxu0 %v11562
    %11691 = vmatprep.subr.bf16.mxu0 %v11561
    %11692 = vmatpush2.bf16.msra.mxu0 %v11560
    %11693 = vmatprep.subr.bf16.mxu0 %v11559
    %11694 = vmatpush2.bf16.msra.mxu0 %v11558
    %11695 = vmatprep.subr.bf16.mxu0 %v11557
    %11696 = vmatpush2.bf16.msra.mxu0 %v11556
    %11697 = vmatprep.subr.bf16.mxu0 %v11555
    %11698 = vmatpush2.bf16.msra.mxu0 %v11554
    %11699 = vmatprep.subr.bf16.mxu0 %v11553
    %11700 = vmatpush2.bf16.msra.mxu0 %v11552
    %11701 = vmatprep.subr.bf16.mxu0 %v11551
    %11702 = vmatpush2.bf16.msra.mxu0 %v11550
    %11703 = vmatprep.mubr.bf16.mxu0 %v11228
    %11704 = vmatmul.mubr.bf16.gmra.mxu0 %v11227
    %v11705 = vpop.f32.mrf.mxu0
    %v11706 = vadd.f32 %v11665, %v11705
    %v11707 = vpop.f32.mrf.mxu0
    %v11708 = vadd.f32 %v11667, %v11707
    %v11709 = vpop.f32.mrf.mxu0
    %v11710 = vpop.f32.mrf.mxu0
    %11711 = vdwg.mxu0
    %v11712 = vmax.f32 %v11706, 0.0
    %v11713 = vmax.f32 %v11708, 0.0
    %v11714 = vrot.slane %v11712, 4
    %v11715 = vadd.f32 %v11712, %v11714
    %v11716 = vrot.slane %v11715, 2
    %v11717 = vadd.f32 %v11715, %v11716
    %v11718 = vrot.slane %v11717, 1
    %v11719 = vadd.f32 %v11717, %v11718
    %v11720 = vrot.slane %v11713, 4
    %v11721 = vadd.f32 %v11713, %v11720
    %v11722 = vrot.slane %v11721, 2
    %v11723 = vadd.f32 %v11721, %v11722
    %v11724 = vrot.slane %v11723, 1
    %v11725 = vadd.f32 %v11723, %v11724
    %v11726 = vmul.f32 %v11719, 0.125
    %v11727 = vmul.f32 %v11725, 0.125
    %v11728 = vmul.f32 %v11712, %v11712
    %v11729 = vmul.f32 %v11713, %v11713
    %v11730 = vrot.slane %v11728, 4
    %v11731 = vadd.f32 %v11728, %v11730
    %v11732 = vrot.slane %v11731, 2
    %v11733 = vadd.f32 %v11731, %v11732
    %v11734 = vrot.slane %v11733, 1
    %v11735 = vadd.f32 %v11733, %v11734
    %v11736 = vrot.slane %v11729, 4
    %v11737 = vadd.f32 %v11729, %v11736
    %v11738 = vrot.slane %v11737, 2
    %v11739 = vadd.f32 %v11737, %v11738
    %v11740 = vrot.slane %v11739, 1
    %v11741 = vadd.f32 %v11739, %v11740
    %v11742 = vmul.f32 %v11735, 0.125
    %v11743 = vmul.f32 %v11741, 0.125
    %v11744 = vmul.f32 %v11726, %v11726
    %v11745 = vmul.f32 %v11727, %v11727
    %v11746 = vsub.f32 %v11742, %v11744
    %v11747 = vsub.f32 %v11743, %v11745
    %v11748 = vadd.f32 %v11746, 1e-05
    %v11749 = vadd.f32 %v11747, 1e-05
    %v11750 = vrsqrt.pop %v11748
    %v11751 = vrsqrt.pop %v11749
    %v11754 = vcombine.low %v11750, %v11751
    %v11756 = vunpack.c.l.s4 1966171168
    %v11757 = vunpack.c.0.s8 %v11756
    %v11758 = vlaneseq
    %v11759 = vshrl.u32 %v11758, 7
    %v11760 = vsub.s32 %v11757, %v11759
    %v11761 = vrot.slane %v11754, %v11760
    %v11763 = vunpack.c.l.s4 1966171168
    %v11764 = vunpack.c.0.s8 %v11763
    %v11765 = vlaneseq
    %v11766 = vshrl.u32 %v11765, 7
    %v11767 = vsub.s32 %v11764, %v11766
    %v11768 = vrot.slane %v11761, %v11767
    %v11770 = vmul.f32 %v11296, %v11768
    %v11772 = vlaneseq
    %v11773 = vshrl.u32 %v11772, 7
    %v11774 = vsub.s32 0, %v11773
    %v11775 = vrot.slane %v11770, %v11774
    %v11776 = vlaneseq
    %v11777 = vshrl.u32 %v11776, 7
    %v11778 = vsub.s32 1, %v11777
    %v11779 = vrot.slane %v11770, %v11778
    %v11782 = vmul.f32 %v11726, %v11775
    %v11783 = vmul.f32 %v11727, %v11779
    %v11786 = vcombine.low %v11782, %v11783
    %v11788 = vunpack.c.l.s4 1966171168
    %v11789 = vunpack.c.0.s8 %v11788
    %v11790 = vlaneseq
    %v11791 = vshrl.u32 %v11790, 7
    %v11792 = vsub.s32 %v11789, %v11791
    %v11793 = vrot.slane %v11786, %v11792
    %v11795 = vunpack.c.l.s4 1966171168
    %v11796 = vunpack.c.0.s8 %v11795
    %v11797 = vlaneseq
    %v11798 = vshrl.u32 %v11797, 7
    %v11799 = vsub.s32 %v11796, %v11798
    %v11800 = vrot.slane %v11793, %v11799
    %v11802 = vsub.f32 %v11298, %v11800
    %v11803 = vmul.f32 %v11712, %v11775
    %v11804 = vmul.f32 %v11713, %v11779
    %v11806 = vlaneseq
    %v11807 = vshrl.u32 %v11806, 7
    %v11808 = vsub.s32 0, %v11807
    %v11809 = vrot.slane %v11802, %v11808
    %v11810 = vlaneseq
    %v11811 = vshrl.u32 %v11810, 7
    %v11812 = vsub.s32 1, %v11811
    %v11813 = vrot.slane %v11802, %v11812
    %v11816 = vadd.f32 %v11803, %v11809
    %v11817 = vadd.f32 %v11804, %v11813
    %11818 = vst [vmem:[#allocation12] sm:$0xff] %v11816
    %11819 = vst [vmem:[#allocation12 + $0x8] sm:$0xff] %v11817
    // Predicated region
    $region72: #{_lambda_.1} parent=1 // pred_check
      _
    $region73: #{_lambda_.1} parent=1 // pred_check_branch
      %11821 = sbr.rel (0) target = $region75
    $region74: #{_lambda_.1} parent=1 // pred_region
      %s11823 = ssub.s32 256, 256
      %11824 = vsyncadd [#allocation11], %s11823
      %s11826 = sshll.u32 [#allocation12], 4
      %s11827 = int_to_ptr.vmem [resolvable:$true] %s11826
      %11829 = dma.vmem_to_hbm [thread:$0]  %s11827, 256, %s8, [#allocation11]
    $region75: #{_lambda_.1} parent=1 // pred_fallthru
      _
    // Predicated region
    $region76: #{_lambda_.1} parent=1 // pred_check
      _
    $region77: #{_lambda_.1} parent=1 // pred_check_branch
      %11831 = sbr.rel (0) target = $region79
    $region78: #{_lambda_.1} parent=1 // pred_region
      %11832 = dma.done [#allocation11], 256
    $region79: #{_lambda_.1} parent=1 // pred_fallthru
      _
    %11833 = vsyncpa [#allocation10], 1
    %11834 = vsyncpa [#allocation11], 1
  %11835 = vsyncmov [#allocation8]
  %s11836 = vpop.sfrf %11835
  %p11837 = scmp.eq.s32.totalorder %s11836, 0
  %p11838 = pneg %p11837
  %11840 = shalt.err (%p11838)
  %s11841 = scalar_lea.sflag [#allocation8], 1
  %11842 = vsyncmov %s11841
  %s11843 = vpop.sfrf %11842
  %p11844 = scmp.eq.s32.totalorder %s11843, 0
  %p11845 = pneg %p11844
  %11847 = shalt.err (%p11845)
  %s11848 = scalar_lea.sflag [#allocation8], 2
  %11849 = vsyncmov %s11848
  %s11850 = vpop.sfrf %11849
  %p11851 = scmp.eq.s32.totalorder %s11850, 0
  %p11852 = pneg %p11851
  %11854 = shalt.err (%p11852)
  %s11855 = scalar_lea.sflag [#allocation8], 3
  %11856 = vsyncmov %s11855
  %s11857 = vpop.sfrf %11856
  %p11858 = scmp.eq.s32.totalorder %s11857, 0
  %p11859 = pneg %p11858
  %11861 = shalt.err (%p11859)
  %s11862 = scalar_lea.sflag [#allocation8], 4
  %11863 = vsyncmov %s11862
  %s11864 = vpop.sfrf %11863
  %p11865 = scmp.eq.s32.totalorder %s11864, 0
  %p11866 = pneg %p11865
  %11868 = shalt.err (%p11866)
  %s11869 = scalar_lea.sflag [#allocation8], 5
  %11870 = vsyncmov %s11869
  %s11871 = vpop.sfrf %11870
  %p11872 = scmp.eq.s32.totalorder %s11871, 0
  %p11873 = pneg %p11872
  %11875 = shalt.err (%p11873)
  %s11876 = scalar_lea.sflag [#allocation8], 6
  %11877 = vsyncmov %s11876
  %s11878 = vpop.sfrf %11877
  %p11879 = scmp.eq.s32.totalorder %s11878, 0
  %p11880 = pneg %p11879
  %11882 = shalt.err (%p11880)

</llo_original>
